<compile_context>
chip_gen: v7x
topology: tpu7x:2x2x1
jax: 0.10.0
libtpu: 0.0.40
codegen_flags: <defaults>
</compile_context>

<pallas_src>
import functools
from itertools import product

import jax
import jax.numpy as jnp
from jax.experimental import pallas as pl
from jax.experimental.pallas import tpu as pltpu

_VMEM = pl.BlockSpec(memory_space=pltpu.MemorySpace.VMEM)


# ------------------------------ in-kernel helpers ----------------------------

def _lstm_recur(xg_all, whh, h, c, steps, B, H):
    """LSTM recurrence; xg_all holds precomputed x @ wih + b for all steps."""
    for t in steps:
        gates = xg_all[t * B:(t + 1) * B] + jnp.dot(
            h.astype(jnp.bfloat16), whh, preferred_element_type=jnp.float32)
        i = jax.nn.sigmoid(gates[:, 0 * H:1 * H])
        f = jax.nn.sigmoid(gates[:, 1 * H:2 * H])
        g = jnp.tanh(gates[:, 2 * H:3 * H])
        o = jax.nn.sigmoid(gates[:, 3 * H:4 * H])
        c = f * c + i * g
        h = o * jnp.tanh(c)
    return h, c


# ------------------------------ the fused kernel ------------------------------

def _mgcvae_fused_kernel(*refs, meta):
    B, T, H = meta["B"], meta["T"], meta["H"]
    it = iter(refs)

    # -------- data --------
    xs_hist = next(it)                       # (T*B, Ds)  bf16
    if meta["use_edges"]:
        xs_edges = next(it)                  # (E, T*B, dmax) bf16
        ev = next(it)                        # (E, B, 1) f32
    if meta["use_maps"]:
        p1 = next(it)                        # (npos1*B, F1) bf16 (pos-major rows)
    if meta["include_robot"]:
        fs = next(it)                        # (B, Dr) bf16
        fut = next(it)                       # (Tf*B, Dr) bf16
    a0 = next(it)                            # (B, 2) f32
    pos0 = next(it)                          # (B, 2) f32

    # -------- weights --------
    wih_h = next(it); whh_h = next(it); b_h = next(it)
    if meta["use_edges"]:
        we_ih = next(it); we_hh = next(it); be = next(it)
        wq = next(it); wk = next(it); v_at = next(it)
    if meta["use_maps"]:
        w1 = next(it); b1 = next(it); w2 = next(it); b2 = next(it)
        wfc = next(it); bfc = next(it)
    if meta["include_robot"]:
        w_rh = next(it); b_rh = next(it); w_rc = next(it); b_rc = next(it)
        wf_ih = next(it); wf_hh = next(it); b_rf = next(it)
        wb_ih = next(it); wb_hh = next(it); b_rb = next(it)
    w_fc1 = next(it); b_fc1 = next(it); w_fc2 = next(it); b_fc2 = next(it)
    wd = next(it); bd = next(it)
    wih_xz = next(it); wih_a = next(it); whh_g = next(it)
    bih_g = next(it); bhh_g = next(it)
    wp = next(it); bp = next(it)

    # -------- outputs --------
    g_out = next(it)                         # (B, ph*6)
    pred_out = next(it)                      # (B, ph*2)

    # ---- history LSTM: input projection batched over all timesteps ----
    xg = jnp.dot(xs_hist[...], wih_h[...],
                 preferred_element_type=jnp.float32) + b_h[...]
    node_hist, _ = _lstm_recur(xg, whh_h[...],
                               jnp.zeros((B, H), jnp.float32),
                               jnp.zeros((B, H), jnp.float32),
                               range(T), B, H)
    parts = [node_hist]

    # ---- edge-type LSTMs + additive attention combine ----
    if meta["use_edges"]:
        E, He = meta["E"], meta["He"]
        edge_hs = []
        for e in range(E):
            xg_e = jnp.dot(xs_edges[e], we_ih[e],
                           preferred_element_type=jnp.float32) + be[e]
            he, _ = _lstm_recur(xg_e, we_hh[e],
                                jnp.zeros((B, He), jnp.float32),
                                jnp.zeros((B, He), jnp.float32),
                                range(T), B, He)
            edge_hs.append(he * ev[e])
        q = jnp.dot(node_hist.astype(jnp.bfloat16), wq[...],
                    preferred_element_type=jnp.float32)
        stacked = jnp.concatenate(edge_hs, axis=0).astype(jnp.bfloat16)
        keys = jnp.dot(stacked, wk[...], preferred_element_type=jnp.float32)
        v = v_at[...]
        scores = [jnp.sum(jnp.tanh(q + keys[e * B:(e + 1) * B]) * v,
                          axis=-1, keepdims=True) for e in range(E)]
        mx = scores[0]
        for s in scores[1:]:
            mx = jnp.maximum(mx, s)
        exps = [jnp.exp(s - mx) for s in scores]
        denom = exps[0]
        for ex in exps[1:]:
            denom = denom + ex
        comb = exps[0] * edge_hs[0]
        for ex, eh in zip(exps[1:], edge_hs[1:]):
            comb = comb + ex * eh
        parts.append(comb * pl.reciprocal(denom, approx=True))

    # ---- map CNN: conv1 GEMM -> in-kernel im2col -> conv2 GEMM -> map_fc ----
    if meta["use_maps"]:
        OH1, OW1 = meta["OH1"], meta["OW1"]
        OH2, OW2 = meta["OH2"], meta["OW2"]
        K2, S2 = meta["K2"], meta["S2"]
        y1 = jnp.maximum(jnp.dot(p1[...], w1[...],
                                 preferred_element_type=jnp.float32) + b1[...],
                         0.0)                                   # (npos1*B, C1)
        patches = []
        for i2 in range(OH2):
            for j2 in range(OW2):
                blocks = []
                for di in range(K2):
                    for dj in range(K2):
                        pos = (S2 * i2 + di) * OW1 + (S2 * j2 + dj)
                        blocks.append(y1[pos * B:(pos + 1) * B])
                patches.append(jnp.concatenate(blocks, axis=-1))
        p2 = jnp.concatenate(patches, axis=0).astype(jnp.bfloat16)
        y2 = jnp.maximum(jnp.dot(p2, w2[...],
                                 preferred_element_type=jnp.float32) + b2[...],
                         0.0)                                   # (npos2*B, C2)
        npos2 = OH2 * OW2
        flat = jnp.concatenate([y2[p * B:(p + 1) * B] for p in range(npos2)],
                               axis=-1).astype(jnp.bfloat16)    # (B, npos2*C2)
        parts.append(jnp.maximum(
            jnp.dot(flat, wfc[...], preferred_element_type=jnp.float32)
            + bfc[...], 0.0))

    # ---- robot future bidirectional LSTM (init linears fused) ----
    if meta["include_robot"]:
        Tf, F = meta["Tf"], meta["F"]
        fsv = fs[...]
        h0r = jnp.dot(fsv, w_rh[...], preferred_element_type=jnp.float32) + b_rh[...]
        c0r = jnp.dot(fsv, w_rc[...], preferred_element_type=jnp.float32) + b_rc[...]
        futv = fut[...]
        xgf = jnp.dot(futv, wf_ih[...], preferred_element_type=jnp.float32) + b_rf[...]
        xgb = jnp.dot(futv, wb_ih[...], preferred_element_type=jnp.float32) + b_rb[...]
        hf, cf = _lstm_recur(xgf, wf_hh[...], h0r, c0r, range(Tf), B, F)
        hb, cb = _lstm_recur(xgb, wb_hh[...], h0r, c0r,
                             range(Tf - 1, -1, -1), B, F)
        parts.append(jnp.concatenate([hf, hb, cf, cb], axis=-1))

    # ---- latent p(z|x) MLP -> one-hot(argmax) z -> decoder init hidden ----
    # TODO(synk): training-mode q(z|x,y) / KL term not implemented (inference only).
    x = jnp.concatenate(parts, axis=-1) if len(parts) > 1 else parts[0]
    xb = x.astype(jnp.bfloat16)
    hz = jnp.maximum(jnp.dot(xb, w_fc1[...],
                             preferred_element_type=jnp.float32) + b_fc1[...], 0.0)
    logits = jnp.dot(hz.astype(jnp.bfloat16), w_fc2[...],
                     preferred_element_type=jnp.float32) + b_fc2[...]
    Kz = meta["K"]
    mxl = jnp.max(logits, axis=-1, keepdims=True)
    idx = jax.lax.broadcasted_iota(jnp.int32, logits.shape, 1)
    first = jnp.min(jnp.where(logits >= mxl, idx, Kz), axis=-1, keepdims=True)
    z = (idx == first).astype(jnp.float32)          # one-hot of (first) argmax
    xz = jnp.concatenate([x, z], axis=-1)
    xzb = xz.astype(jnp.bfloat16)
    h = jnp.tanh(jnp.dot(xzb, wd[...], preferred_element_type=jnp.float32)
                 + bd[...])

    # ---- decoder rollout: GRU + GMM projection + single-integrator dynamics ----
    Hd, ph, dt = meta["Hd"], meta["ph"], meta["dt"]
    whh_gv = whh_g[...]
    wpv = wp[...]
    # loop-invariant xz gate projection, computed once
    xg_const = jnp.dot(xzb, wih_xz[...],
                       preferred_element_type=jnp.float32) + bih_g[...]
    # hoisted broadcasts / casts
    bhh_bcast = jnp.broadcast_to(bhh_g[...], (B, 3 * Hd))
    bp_bcast = jnp.broadcast_to(bp[...], (B, wpv.shape[-1]))
    wih_a_f32 = wih_a[...].astype(jnp.float32)               # (Dp, 3Hd)
    wa_rows = [jnp.broadcast_to(wih_a_f32[j:j + 1, :], (B, 3 * Hd))
               for j in range(wih_a_f32.shape[0])]
    a = a0[...]
    pos = pos0[...]
    gs, ps = [], []
    for _ in range(ph):
        xg_t = xg_const
        for j, wa in enumerate(wa_rows):                      # 2-wide action: VPU math
            xg_t = xg_t + a[:, j:j + 1] * wa
        hg_t = jnp.dot(h.astype(jnp.bfloat16), whh_gv,
                       preferred_element_type=jnp.float32) + bhh_bcast
        r = jax.nn.sigmoid(xg_t[:, 0:Hd] + hg_t[:, 0:Hd])
        u = jax.nn.sigmoid(xg_t[:, Hd:2 * Hd] + hg_t[:, Hd:2 * Hd])
        n = jnp.tanh(xg_t[:, 2 * Hd:3 * Hd] + r * hg_t[:, 2 * Hd:3 * Hd])
        h = (1.0 - u) * n + u * h
        g = jnp.dot(h.astype(jnp.bfloat16), wpv,
                    preferred_element_type=jnp.float32) + bp_bcast
        # TODO(synk): GMM slicing assumes gmm_components == 1 (gmm_mode path).
        mu = g[:, 1:3]
        a = mu
        pos = pos + mu * dt
        gs.append(g)
        ps.append(pos)
    g_out[...] = jnp.concatenate(gs, axis=-1)       # (B, ph*6): one lane-dense store
    pred_out[...] = jnp.concatenate(ps, axis=-1)    # (B, ph*2): one lane-dense store


# ------------------------------ param builders --------------------------------

class KeyGen:
    def __init__(self, key):
        self._key = key

    def __call__(self):
        self._key, sub = jax.random.split(self._key)
        return sub


def _dense(kg, din, dout, scale=0.1):
    return {"w": (scale * jax.random.normal(kg(), (din, dout), jnp.float32)
                  ).astype(jnp.bfloat16),
            "b": jnp.zeros((1, dout), jnp.float32)}


def _lstm(kg, din, h, scale=0.1):
    return {"wih": (scale * jax.random.normal(kg(), (din, 4 * h), jnp.float32)
                    ).astype(jnp.bfloat16),
            "whh": (scale * jax.random.normal(kg(), (h, 4 * h), jnp.float32)
                    ).astype(jnp.bfloat16),
            "b": jnp.zeros((1, 4 * h), jnp.float32),
            "hidden": h}


def build_trajectron(agent_types, robot_agent_type, state, pred_state,
                     include_robot, use_edges, use_maps, config, key):
    kg = KeyGen(key)
    len_state = {a: sum(len(ax) for ax in state[a].values()) for a in agent_types}
    len_pred = {a: sum(len(ax) for ax in pred_state[a].values()) for a in agent_types}
    edge_types = list(product(agent_types, repeat=2))
    enc, dec = config["encoder"], config["decoder"]

    params = {"node_models": {}, "robot_future_encoder": None}
    if include_robot:
        rd = len_state[robot_agent_type]
        F = enc["future_dim"]
        params["robot_future_encoder"] = {
            "init_h": _dense(kg, rd, F),
            "init_c": _dense(kg, rd, F),
            "lstm_fwd": _lstm(kg, rd, F),
            "lstm_bwd": _lstm(kg, rd, F),
        }

    for a in agent_types:
        x_dim = enc["rnn_hist_dim"]
        m = {"history_lstm": _lstm(kg, len_state[a], enc["rnn_hist_dim"])}
        if use_edges:
            He = enc["rnn_edge_dim"]
            order = [et for et in edge_types if et[0] == a]
            dins = [len_state[et[1]] + len_state[a] for et in order]
            dmax = max(dins)
            wihs, whhs, bs = [], [], []
            for din in dins:
                wih = 0.1 * jax.random.normal(kg(), (din, 4 * He), jnp.float32)
                wihs.append(jnp.pad(wih, ((0, dmax - din), (0, 0))))
                whhs.append(0.1 * jax.random.normal(kg(), (He, 4 * He), jnp.float32))
                bs.append(jnp.zeros((1, 4 * He), jnp.float32))
            m["edge_wih"] = jnp.stack(wihs, 0).astype(jnp.bfloat16)   # (E, dmax, 4He)
            m["edge_whh"] = jnp.stack(whhs, 0).astype(jnp.bfloat16)   # (E, He, 4He)
            m["edge_b"] = jnp.stack(bs, 0)                            # (E, 1, 4He)
            m["edge_order"] = order
            m["edge_dmax"] = dmax
            m["attn"] = {
                "wq": (0.1 * jax.random.normal(
                    kg(), (enc["rnn_hist_dim"], enc["attention_dim"]), jnp.float32)
                    ).astype(jnp.bfloat16),
                "wk": (0.1 * jax.random.normal(
                    kg(), (He, enc["attention_dim"]), jnp.float32)).astype(jnp.bfloat16),
                "v": 0.1 * jax.random.normal(kg(), (1, enc["attention_dim"]), jnp.float32),
            }
            x_dim += He
        if use_maps:
            m["map_conv1"] = _dense(kg, 3 * 5 * 5, 8)      # 3->8, k=5, s=2
            m["map_conv2"] = _dense(kg, 8 * 3 * 3, 16)     # 8->16, k=3, s=2
            m["map_fc"] = _dense(kg, 16 * 2 * 2, enc["map_enc_dim"])
            x_dim += enc["map_enc_dim"]
        if include_robot:
            x_dim += 4 * enc["future_dim"]

        K = enc["latent_dim"]
        Hd = dec["rnn_dim"]
        m["p_z_x_fc1"] = _dense(kg, x_dim, 32)
        m["p_z_x_fc2"] = _dense(kg, 32, K)
        m["dec_init_h"] = _dense(kg, x_dim + K, Hd)
        m["dec_gru"] = {
            "wih_xz": (0.1 * jax.random.normal(kg(), (x_dim + K, 3 * Hd), jnp.float32)
                       ).astype(jnp.bfloat16),
            "wih_a": (0.1 * jax.random.normal(kg(), (len_pred[a], 3 * Hd), jnp.float32)
                      ).astype(jnp.bfloat16),
            "whh": (0.1 * jax.random.normal(kg(), (Hd, 3 * Hd), jnp.float32)
                    ).astype(jnp.bfloat16),
            "bih": jnp.zeros((1, 3 * Hd), jnp.float32),
            "bhh": jnp.zeros((1, 3 * Hd), jnp.float32),
            "hidden": Hd,
        }
        m["dec_proj"] = _dense(kg, Hd, 6 * dec["gmm_components"])
        m["x_dim"] = x_dim
        params["node_models"][a] = m

    return {"params": params, "len_state": len_state, "len_pred": len_pred,
            "edge_types": edge_types, "config": config,
            "include_robot": include_robot, "use_edges": use_edges,
            "use_maps": use_maps, "robot_agent_type": robot_agent_type}


# ----------------------------- MGCVAE / Trajectron -----------------------------

def mgcvae_forward(model, agent_type, inputs, inputs_st, neighbors_data_st,
                   neighbors_edge_value, robot_future_st, maps,
                   prediction_horizon, n_samples, gmm_mode):
    m = model["params"]["node_models"][agent_type]
    cfg = model["config"]
    enc, dec = cfg["encoder"], cfg["decoder"]
    B, T = inputs_st.shape[0], inputs_st.shape[1]
    H, Hd, K = enc["rnn_hist_dim"], dec["rnn_dim"], enc["latent_dim"]
    ph = prediction_horizon
    meta = {"B": B, "T": T, "H": H, "Hd": Hd, "K": K, "ph": ph, "dt": cfg["dt"],
            "use_edges": model["use_edges"], "use_maps": model["use_maps"],
            "include_robot": model["include_robot"] and robot_future_st is not None}

    # --------- data tensors (time-major, flattened, pre-cast to bf16) ---------
    data = [jnp.transpose(inputs_st, (1, 0, 2)).reshape(T * B, -1)
            .astype(jnp.bfloat16)]
    if meta["use_edges"]:
        order, dmax = m["edge_order"], m["edge_dmax"]
        xs_list, ev_list = [], []
        for et in order:
            # TODO(synk): neighbors are pre-aggregated (B,T,Dn) tensors instead of
            # ragged per-sample neighbor lists as in the original implementation.
            joint = jnp.concatenate([neighbors_data_st[et], inputs_st], axis=-1)
            pad = dmax - joint.shape[-1]
            if pad:
                joint = jnp.pad(joint, ((0, 0), (0, 0), (0, pad)))
            xs_list.append(jnp.transpose(joint, (1, 0, 2)).reshape(T * B, dmax))
            ev_list.append(neighbors_edge_value[et])
        data.append(jnp.stack(xs_list, 0).astype(jnp.bfloat16))
        data.append(jnp.stack(ev_list, 0))
        meta.update(E=len(order), He=enc["rnn_edge_dim"])
    if meta["use_maps"]:
        p1 = jax.lax.conv_general_dilated_patches(maps, (5, 5), (2, 2), "VALID")
        _, F1, OH1, OW1 = p1.shape
        data.append(jnp.transpose(p1, (2, 3, 0, 1)).reshape(OH1 * OW1 * B, F1)
                    .astype(jnp.bfloat16))
        meta.update(OH1=int(OH1), OW1=int(OW1),
                    OH2=(int(OH1) - 3) // 2 + 1, OW2=(int(OW1) - 3) // 2 + 1,
                    K2=3, S2=2)
    if meta["include_robot"]:
        fut = robot_future_st[..., 1:, :]
        Tf = fut.shape[1]
        data.append(robot_future_st[..., 0, :].astype(jnp.bfloat16))
        data.append(jnp.transpose(fut, (1, 0, 2)).reshape(Tf * B, -1)
                    .astype(jnp.bfloat16))
        meta.update(Tf=int(Tf), F=enc["future_dim"])
    data.append(inputs_st[:, -1, 2:4])        # a0: current standardized velocity
    data.append(inputs[:, -1, 0:2])           # pos0: current raw position
    # TODO(synk): first_timesteps / variable-length history masking not implemented.
    # TODO(synk): dynamics integrates decoder mus directly with dt (no
    #             unstandardization of the decoder output).

    # -------------------------------- weights ---------------------------------
    w = [m["history_lstm"]["wih"], m["history_lstm"]["whh"], m["history_lstm"]["b"]]
    if meta["use_edges"]:
        w += [m["edge_wih"], m["edge_whh"], m["edge_b"],
              m["attn"]["wq"], m["attn"]["wk"], m["attn"]["v"]]
    if meta["use_maps"]:
        w += [m["map_conv1"]["w"], m["map_conv1"]["b"],
              m["map_conv2"]["w"], m["map_conv2"]["b"],
              m["map_fc"]["w"], m["map_fc"]["b"]]
    if meta["include_robot"]:
        rp = model["params"]["robot_future_encoder"]
        w += [rp["init_h"]["w"], rp["init_h"]["b"],
              rp["init_c"]["w"], rp["init_c"]["b"],
              rp["lstm_fwd"]["wih"], rp["lstm_fwd"]["whh"], rp["lstm_fwd"]["b"],
              rp["lstm_bwd"]["wih"], rp["lstm_bwd"]["whh"], rp["lstm_bwd"]["b"]]
    w += [m["p_z_x_fc1"]["w"], m["p_z_x_fc1"]["b"],
          m["p_z_x_fc2"]["w"], m["p_z_x_fc2"]["b"],
          m["dec_init_h"]["w"], m["dec_init_h"]["b"],
          m["dec_gru"]["wih_xz"], m["dec_gru"]["wih_a"], m["dec_gru"]["whh"],
          m["dec_gru"]["bih"], m["dec_gru"]["bhh"],
          m["dec_proj"]["w"], m["dec_proj"]["b"]]

    G = m["dec_proj"]["w"].shape[1]

    # Advisory (coarse) cost estimate for XLA scheduling around the custom call.
    w_elems = sum(int(a.size) for a in w)
    flops = 2 * B * max(T, ph) * w_elems
    trans = B * (T * 6 * H * (1 + meta.get("E", 0))
                 + 2 * meta.get("Tf", 0) * 6 * meta.get("F", 0)
                 + ph * 4 * Hd)
    bytes_acc = (sum(int(a.size) * a.dtype.itemsize for a in data)
                 + sum(int(a.size) * a.dtype.itemsize for a in w)
                 + B * ph * (G + 2) * 4)

    g_flat, pred_flat = pl.pallas_call(
        functools.partial(_mgcvae_fused_kernel, meta=meta),
        out_shape=(jax.ShapeDtypeStruct((B, ph * G), jnp.float32),
                   jax.ShapeDtypeStruct((B, ph * 2), jnp.float32)),
        in_specs=[_VMEM] * (len(data) + len(w)),
        out_specs=(_VMEM, _VMEM),
        cost_estimate=pl.CostEstimate(flops=flops, transcendentals=trans,
                                      bytes_accessed=bytes_acc),
    )(*data, *w)

    g = g_flat.reshape(B, ph, G)
    y_dist = {"log_pis": g[..., 0:1], "mus": g[..., 1:3],
              "log_sigmas": g[..., 3:5], "corrs": jnp.tanh(g[..., 5:6])}
    preds = pred_flat.reshape(B, ph, 2)[:, None]
    preds = jnp.broadcast_to(preds, (B, n_samples, ph, 2))
    return y_dist, preds


def _pad_batch(x, bp):
    if x is None:
        return None
    pad = bp - x.shape[0]
    if pad == 0:
        return x
    return jnp.pad(x, ((0, pad),) + ((0, 0),) * (x.ndim - 1))


def trajectron_forward(model, first_timesteps, inputs, inputs_st, labels, labels_st,
                       neighbors_data_st, neighbors_edge_value, robot_future_st, maps,
                       prediction_horizon, n_samples=1, mode=None, gmm_mode=True):
    agent_type = list(neighbors_data_st)[0][0]     # get_agent_type equivalent
    B = inputs.shape[0]
    bp = ((B + 7) // 8) * 8                        # sublane-dense batch padding
    inputs_p = _pad_batch(inputs, bp)
    inputs_st_p = _pad_batch(inputs_st, bp)
    nb_p = {k: _pad_batch(v, bp) for k, v in neighbors_data_st.items()}
    ev_p = {k: _pad_batch(v, bp) for k, v in neighbors_edge_value.items()}
    maps_p = _pad_batch(maps, bp)
    rob_p = _pad_batch(robot_future_st, bp)

    y_dist, preds = mgcvae_forward(model, agent_type, inputs_p, inputs_st_p, nb_p,
                                   ev_p, rob_p, maps_p, prediction_horizon,
                                   n_samples, gmm_mode)
    y_dist = {k: v[:B] for k, v in y_dist.items()}
    return y_dist, preds[:B]


# ------------------------------------ main -------------------------------------

if __name__ == "__main__":
    AGENT_TYPES = ["PEDESTRIAN", "VEHICLE"]
    ROBOT = "VEHICLE"
    STATE = {
        "PEDESTRIAN": {"position": ["x", "y"], "velocity": ["x", "y"],
                       "acceleration": ["x", "y"]},
        "VEHICLE": {"position": ["x", "y"], "velocity": ["x", "y"],
                    "acceleration": ["x", "y"], "heading": ["deg", "d_deg"]},
    }
    PRED_STATE = {"PEDESTRIAN": {"position": ["x", "y"]},
                  "VEHICLE": {"position": ["x", "y"]}}
    CONFIG = {
        "encoder": {"rnn_hist_dim": 32, "rnn_edge_dim": 32, "future_dim": 32,
                    "attention_dim": 32, "map_enc_dim": 32, "latent_dim": 5,
                    "p_dropout": 0.0},   # dropout is a no-op at inference
        "decoder": {"rnn_dim": 32, "gmm_components": 1},
        "dt": 0.4,
    }

    key = jax.random.PRNGKey(0)
    model = build_trajectron(AGENT_TYPES, ROBOT, STATE, PRED_STATE,
                             include_robot=True, use_edges=True, use_maps=True,
                             config=CONFIG, key=key)

    B, T_HIST, PH = 2, 8, 6
    k = KeyGen(jax.random.PRNGKey(0))
    inputs = jax.random.normal(k(), (B, T_HIST, 6), jnp.float32)
    inputs_st = jax.random.normal(k(), (B, T_HIST, 6), jnp.float32)
    neighbors_data_st = {
        ("PEDESTRIAN", "PEDESTRIAN"): jax.random.normal(k(), (B, T_HIST, 6), jnp.float32),
        ("PEDESTRIAN", "VEHICLE"): jax.random.normal(k(), (B, T_HIST, 8), jnp.float32),
    }
    neighbors_edge_value = {
        ("PEDESTRIAN", "PEDESTRIAN"): jnp.ones((B, 1), jnp.float32),
        ("PEDESTRIAN", "VEHICLE"): 0.5 * jnp.ones((B, 1), jnp.float32),
    }
    robot_future_st = jax.random.normal(k(), (B, PH + 1, 8), jnp.float32)
    maps = jax.random.normal(k(), (B, 3, 16, 16), jnp.float32)   # NCHW
    first_timesteps = jnp.zeros((B,), jnp.int32)

    y_dist, preds = trajectron_forward(
        model, first_timesteps, inputs, inputs_st, None, None,
        neighbors_data_st, neighbors_edge_value, robot_future_st, maps,
        prediction_horizon=PH, n_samples=1, mode=None, gmm_mode=True)

    jax.block_until_ready(preds)
    jax.block_until_ready(y_dist["mus"])
    assert preds.shape == (B, 1, PH, 2)
    assert y_dist["mus"].shape == (B, PH, 2)
    print("KERNEL_OK")
</pallas_src>

<mosaic_0001>
module attributes {stable_mosaic.version = 11 : i64} {
  func.func @_mgcvae_fused_kernel(%arg0: memref<64x6xbf16, #tpu.memory_space<vmem>>, %arg1: memref<2x64x14xbf16, #tpu.memory_space<vmem>>, %arg2: memref<2x8x1xf32, #tpu.memory_space<vmem>>, %arg3: memref<288x75xbf16, #tpu.memory_space<vmem>>, %arg4: memref<8x8xbf16, #tpu.memory_space<vmem>>, %arg5: memref<48x8xbf16, #tpu.memory_space<vmem>>, %arg6: memref<8x2xf32, #tpu.memory_space<vmem>>, %arg7: memref<8x2xf32, #tpu.memory_space<vmem>>, %arg8: memref<6x128xbf16, #tpu.memory_space<vmem>>, %arg9: memref<32x128xbf16, #tpu.memory_space<vmem>>, %arg10: memref<1x128xf32, #tpu.memory_space<vmem>>, %arg11: memref<2x14x128xbf16, #tpu.memory_space<vmem>>, %arg12: memref<2x32x128xbf16, #tpu.memory_space<vmem>>, %arg13: memref<2x1x128xf32, #tpu.memory_space<vmem>>, %arg14: memref<32x32xbf16, #tpu.memory_space<vmem>>, %arg15: memref<32x32xbf16, #tpu.memory_space<vmem>>, %arg16: memref<1x32xf32, #tpu.memory_space<vmem>>, %arg17: memref<75x8xbf16, #tpu.memory_space<vmem>>, %arg18: memref<1x8xf32, #tpu.memory_space<vmem>>, %arg19: memref<72x16xbf16, #tpu.memory_space<vmem>>, %arg20: memref<1x16xf32, #tpu.memory_space<vmem>>, %arg21: memref<64x32xbf16, #tpu.memory_space<vmem>>, %arg22: memref<1x32xf32, #tpu.memory_space<vmem>>, %arg23: memref<8x32xbf16, #tpu.memory_space<vmem>>, %arg24: memref<1x32xf32, #tpu.memory_space<vmem>>, %arg25: memref<8x32xbf16, #tpu.memory_space<vmem>>, %arg26: memref<1x32xf32, #tpu.memory_space<vmem>>, %arg27: memref<8x128xbf16, #tpu.memory_space<vmem>>, %arg28: memref<32x128xbf16, #tpu.memory_space<vmem>>, %arg29: memref<1x128xf32, #tpu.memory_space<vmem>>, %arg30: memref<8x128xbf16, #tpu.memory_space<vmem>>, %arg31: memref<32x128xbf16, #tpu.memory_space<vmem>>, %arg32: memref<1x128xf32, #tpu.memory_space<vmem>>, %arg33: memref<224x32xbf16, #tpu.memory_space<vmem>>, %arg34: memref<1x32xf32, #tpu.memory_space<vmem>>, %arg35: memref<32x5xbf16, #tpu.memory_space<vmem>>, %arg36: memref<1x5xf32, #tpu.memory_space<vmem>>, %arg37: memref<229x32xbf16, #tpu.memory_space<vmem>>, %arg38: memref<1x32xf32, #tpu.memory_space<vmem>>, %arg39: memref<229x96xbf16, #tpu.memory_space<vmem>>, %arg40: memref<2x96xbf16, #tpu.memory_space<vmem>>, %arg41: memref<32x96xbf16, #tpu.memory_space<vmem>>, %arg42: memref<1x96xf32, #tpu.memory_space<vmem>>, %arg43: memref<1x96xf32, #tpu.memory_space<vmem>>, %arg44: memref<32x6xbf16, #tpu.memory_space<vmem>>, %arg45: memref<1x6xf32, #tpu.memory_space<vmem>>, %arg46: memref<8x36xf32, #tpu.memory_space<vmem>>, %arg47: memref<8x12xf32, #tpu.memory_space<vmem>>) attributes {dimension_semantics = [], scalar_prefetch = 0 : i64, scratch_operands = 0 : i64, tpu.core_type = #tpu.core_type<tc>} {
    %c0 = arith.constant 0 : index
    %c0_0 = arith.constant 0 : index
    %0 = vector.load %arg0[%c0, %c0_0] : memref<64x6xbf16, #tpu.memory_space<vmem>>, vector<64x6xbf16>
    %c0_1 = arith.constant 0 : index
    %c0_2 = arith.constant 0 : index
    %1 = vector.load %arg8[%c0_1, %c0_2] : memref<6x128xbf16, #tpu.memory_space<vmem>>, vector<6x128xbf16>
    %cst = arith.constant dense<0.000000e+00> : vector<64x128xf32>
    %2 = tpu.matmul %0, %1, %cst {dimension_numbers = #tpu.dot_dimension_numbers<[1], [0], [0], [1], [0, 0, 1, 1], [], []>} : vector<64x6xbf16>, vector<6x128xbf16>, vector<64x128xf32> -> vector<64x128xf32>
    %c0_3 = arith.constant 0 : index
    %c0_4 = arith.constant 0 : index
    %3 = vector.load %arg10[%c0_3, %c0_4] : memref<1x128xf32, #tpu.memory_space<vmem>>, vector<1x128xf32>
    %4 = vector.broadcast %3 : vector<1x128xf32> to vector<64x128xf32>
    %5 = arith.addf %2, %4 : vector<64x128xf32>
    %c0_5 = arith.constant 0 : index
    %c0_6 = arith.constant 0 : index
    %6 = vector.load %arg9[%c0_5, %c0_6] : memref<32x128xbf16, #tpu.memory_space<vmem>>, vector<32x128xbf16>
    %cst_7 = arith.constant 0.000000e+00 : f32
    %7 = vector.broadcast %cst_7 : f32 to vector<8x32xf32>
    %cst_8 = arith.constant 0.000000e+00 : f32
    %8 = vector.broadcast %cst_8 : f32 to vector<8x32xf32>
    %9 = vector.extract_strided_slice %5 {offsets = [0, 0], sizes = [8, 128], strides = [1, 1]} : vector<64x128xf32> to vector<8x128xf32>
    %10 = arith.truncf %7 : vector<8x32xf32> to vector<8x32xbf16>
    %cst_9 = arith.constant dense<0.000000e+00> : vector<8x128xf32>
    %11 = tpu.matmul %10, %6, %cst_9 {dimension_numbers = #tpu.dot_dimension_numbers<[1], [0], [0], [1], [0, 0, 1, 1], [], []>} : vector<8x32xbf16>, vector<32x128xbf16>, vector<8x128xf32> -> vector<8x128xf32>
    %12 = arith.addf %9, %11 : vector<8x128xf32>
    %13 = vector.extract_strided_slice %12 {offsets = [0, 0], sizes = [8, 32], strides = [1, 1]} : vector<8x128xf32> to vector<8x32xf32>
    %14 = arith.negf %13 : vector<8x32xf32>
    %15 = math.exp %14 : vector<8x32xf32>
    %cst_10 = arith.constant 1.000000e+00 : f32
    %16 = vector.broadcast %cst_10 : f32 to vector<8x32xf32>
    %17 = arith.addf %16, %15 : vector<8x32xf32>
    %18 = arith.divf %16, %17 : vector<8x32xf32>
    %19 = vector.extract_strided_slice %12 {offsets = [0, 32], sizes = [8, 32], strides = [1, 1]} : vector<8x128xf32> to vector<8x32xf32>
    %20 = arith.negf %19 : vector<8x32xf32>
    %21 = math.exp %20 : vector<8x32xf32>
    %cst_11 = arith.constant 1.000000e+00 : f32
    %22 = vector.broadcast %cst_11 : f32 to vector<8x32xf32>
    %23 = arith.addf %22, %21 : vector<8x32xf32>
    %24 = arith.divf %22, %23 : vector<8x32xf32>
    %25 = vector.extract_strided_slice %12 {offsets = [0, 64], sizes = [8, 32], strides = [1, 1]} : vector<8x128xf32> to vector<8x32xf32>
    %26 = math.tanh %25 : vector<8x32xf32>
    %27 = vector.extract_strided_slice %12 {offsets = [0, 96], sizes = [8, 32], strides = [1, 1]} : vector<8x128xf32> to vector<8x32xf32>
    %28 = arith.negf %27 : vector<8x32xf32>
    %29 = math.exp %28 : vector<8x32xf32>
    %cst_12 = arith.constant 1.000000e+00 : f32
    %30 = vector.broadcast %cst_12 : f32 to vector<8x32xf32>
    %31 = arith.addf %30, %29 : vector<8x32xf32>
    %32 = arith.divf %30, %31 : vector<8x32xf32>
    %33 = arith.mulf %24, %8 : vector<8x32xf32>
    %34 = arith.mulf %18, %26 : vector<8x32xf32>
    %35 = arith.addf %33, %34 : vector<8x32xf32>
    %36 = math.tanh %35 : vector<8x32xf32>
    %37 = arith.mulf %32, %36 : vector<8x32xf32>
    %38 = vector.extract_strided_slice %5 {offsets = [8, 0], sizes = [8, 128], strides = [1, 1]} : vector<64x128xf32> to vector<8x128xf32>
    %39 = arith.truncf %37 : vector<8x32xf32> to vector<8x32xbf16>
    %cst_13 = arith.constant dense<0.000000e+00> : vector<8x128xf32>
    %40 = tpu.matmul %39, %6, %cst_13 {dimension_numbers = #tpu.dot_dimension_numbers<[1], [0], [0], [1], [0, 0, 1, 1], [], []>} : vector<8x32xbf16>, vector<32x128xbf16>, vector<8x128xf32> -> vector<8x128xf32>
    %41 = arith.addf %38, %40 : vector<8x128xf32>
    %42 = vector.extract_strided_slice %41 {offsets = [0, 0], sizes = [8, 32], strides = [1, 1]} : vector<8x128xf32> to vector<8x32xf32>
    %43 = arith.negf %42 : vector<8x32xf32>
    %44 = math.exp %43 : vector<8x32xf32>
    %cst_14 = arith.constant 1.000000e+00 : f32
    %45 = vector.broadcast %cst_14 : f32 to vector<8x32xf32>
    %46 = arith.addf %45, %44 : vector<8x32xf32>
    %47 = arith.divf %45, %46 : vector<8x32xf32>
    %48 = vector.extract_strided_slice %41 {offsets = [0, 32], sizes = [8, 32], strides = [1, 1]} : vector<8x128xf32> to vector<8x32xf32>
    %49 = arith.negf %48 : vector<8x32xf32>
    %50 = math.exp %49 : vector<8x32xf32>
    %cst_15 = arith.constant 1.000000e+00 : f32
    %51 = vector.broadcast %cst_15 : f32 to vector<8x32xf32>
    %52 = arith.addf %51, %50 : vector<8x32xf32>
    %53 = arith.divf %51, %52 : vector<8x32xf32>
    %54 = vector.extract_strided_slice %41 {offsets = [0, 64], sizes = [8, 32], strides = [1, 1]} : vector<8x128xf32> to vector<8x32xf32>
    %55 = math.tanh %54 : vector<8x32xf32>
    %56 = vector.extract_strided_slice %41 {offsets = [0, 96], sizes = [8, 32], strides = [1, 1]} : vector<8x128xf32> to vector<8x32xf32>
    %57 = arith.negf %56 : vector<8x32xf32>
    %58 = math.exp %57 : vector<8x32xf32>
    %cst_16 = arith.constant 1.000000e+00 : f32
    %59 = vector.broadcast %cst_16 : f32 to vector<8x32xf32>
    %60 = arith.addf %59, %58 : vector<8x32xf32>
    %61 = arith.divf %59, %60 : vector<8x32xf32>
    %62 = arith.mulf %53, %35 : vector<8x32xf32>
    %63 = arith.mulf %47, %55 : vector<8x32xf32>
    %64 = arith.addf %62, %63 : vector<8x32xf32>
    %65 = math.tanh %64 : vector<8x32xf32>
    %66 = arith.mulf %61, %65 : vector<8x32xf32>
    %67 = vector.extract_strided_slice %5 {offsets = [16, 0], sizes = [8, 128], strides = [1, 1]} : vector<64x128xf32> to vector<8x128xf32>
    %68 = arith.truncf %66 : vector<8x32xf32> to vector<8x32xbf16>
    %cst_17 = arith.constant dense<0.000000e+00> : vector<8x128xf32>
    %69 = tpu.matmul %68, %6, %cst_17 {dimension_numbers = #tpu.dot_dimension_numbers<[1], [0], [0], [1], [0, 0, 1, 1], [], []>} : vector<8x32xbf16>, vector<32x128xbf16>, vector<8x128xf32> -> vector<8x128xf32>
    %70 = arith.addf %67, %69 : vector<8x128xf32>
    %71 = vector.extract_strided_slice %70 {offsets = [0, 0], sizes = [8, 32], strides = [1, 1]} : vector<8x128xf32> to vector<8x32xf32>
    %72 = arith.negf %71 : vector<8x32xf32>
    %73 = math.exp %72 : vector<8x32xf32>
    %cst_18 = arith.constant 1.000000e+00 : f32
    %74 = vector.broadcast %cst_18 : f32 to vector<8x32xf32>
    %75 = arith.addf %74, %73 : vector<8x32xf32>
    %76 = arith.divf %74, %75 : vector<8x32xf32>
    %77 = vector.extract_strided_slice %70 {offsets = [0, 32], sizes = [8, 32], strides = [1, 1]} : vector<8x128xf32> to vector<8x32xf32>
    %78 = arith.negf %77 : vector<8x32xf32>
    %79 = math.exp %78 : vector<8x32xf32>
    %cst_19 = arith.constant 1.000000e+00 : f32
    %80 = vector.broadcast %cst_19 : f32 to vector<8x32xf32>
    %81 = arith.addf %80, %79 : vector<8x32xf32>
    %82 = arith.divf %80, %81 : vector<8x32xf32>
    %83 = vector.extract_strided_slice %70 {offsets = [0, 64], sizes = [8, 32], strides = [1, 1]} : vector<8x128xf32> to vector<8x32xf32>
    %84 = math.tanh %83 : vector<8x32xf32>
    %85 = vector.extract_strided_slice %70 {offsets = [0, 96], sizes = [8, 32], strides = [1, 1]} : vector<8x128xf32> to vector<8x32xf32>
    %86 = arith.negf %85 : vector<8x32xf32>
    %87 = math.exp %86 : vector<8x32xf32>
    %cst_20 = arith.constant 1.000000e+00 : f32
    %88 = vector.broadcast %cst_20 : f32 to vector<8x32xf32>
    %89 = arith.addf %88, %87 : vector<8x32xf32>
    %90 = arith.divf %88, %89 : vector<8x32xf32>
    %91 = arith.mulf %82, %64 : vector<8x32xf32>
    %92 = arith.mulf %76, %84 : vector<8x32xf32>
    %93 = arith.addf %91, %92 : vector<8x32xf32>
    %94 = math.tanh %93 : vector<8x32xf32>
    %95 = arith.mulf %90, %94 : vector<8x32xf32>
    %96 = vector.extract_strided_slice %5 {offsets = [24, 0], sizes = [8, 128], strides = [1, 1]} : vector<64x128xf32> to vector<8x128xf32>
    %97 = arith.truncf %95 : vector<8x32xf32> to vector<8x32xbf16>
    %cst_21 = arith.constant dense<0.000000e+00> : vector<8x128xf32>
    %98 = tpu.matmul %97, %6, %cst_21 {dimension_numbers = #tpu.dot_dimension_numbers<[1], [0], [0], [1], [0, 0, 1, 1], [], []>} : vector<8x32xbf16>, vector<32x128xbf16>, vector<8x128xf32> -> vector<8x128xf32>
    %99 = arith.addf %96, %98 : vector<8x128xf32>
    %100 = vector.extract_strided_slice %99 {offsets = [0, 0], sizes = [8, 32], strides = [1, 1]} : vector<8x128xf32> to vector<8x32xf32>
    %101 = arith.negf %100 : vector<8x32xf32>
    %102 = math.exp %101 : vector<8x32xf32>
    %cst_22 = arith.constant 1.000000e+00 : f32
    %103 = vector.broadcast %cst_22 : f32 to vector<8x32xf32>
    %104 = arith.addf %103, %102 : vector<8x32xf32>
    %105 = arith.divf %103, %104 : vector<8x32xf32>
    %106 = vector.extract_strided_slice %99 {offsets = [0, 32], sizes = [8, 32], strides = [1, 1]} : vector<8x128xf32> to vector<8x32xf32>
    %107 = arith.negf %106 : vector<8x32xf32>
    %108 = math.exp %107 : vector<8x32xf32>
    %cst_23 = arith.constant 1.000000e+00 : f32
    %109 = vector.broadcast %cst_23 : f32 to vector<8x32xf32>
    %110 = arith.addf %109, %108 : vector<8x32xf32>
    %111 = arith.divf %109, %110 : vector<8x32xf32>
    %112 = vector.extract_strided_slice %99 {offsets = [0, 64], sizes = [8, 32], strides = [1, 1]} : vector<8x128xf32> to vector<8x32xf32>
    %113 = math.tanh %112 : vector<8x32xf32>
    %114 = vector.extract_strided_slice %99 {offsets = [0, 96], sizes = [8, 32], strides = [1, 1]} : vector<8x128xf32> to vector<8x32xf32>
    %115 = arith.negf %114 : vector<8x32xf32>
    %116 = math.exp %115 : vector<8x32xf32>
    %cst_24 = arith.constant 1.000000e+00 : f32
    %117 = vector.broadcast %cst_24 : f32 to vector<8x32xf32>
    %118 = arith.addf %117, %116 : vector<8x32xf32>
    %119 = arith.divf %117, %118 : vector<8x32xf32>
    %120 = arith.mulf %111, %93 : vector<8x32xf32>
    %121 = arith.mulf %105, %113 : vector<8x32xf32>
    %122 = arith.addf %120, %121 : vector<8x32xf32>
    %123 = math.tanh %122 : vector<8x32xf32>
    %124 = arith.mulf %119, %123 : vector<8x32xf32>
    %125 = vector.extract_strided_slice %5 {offsets = [32, 0], sizes = [8, 128], strides = [1, 1]} : vector<64x128xf32> to vector<8x128xf32>
    %126 = arith.truncf %124 : vector<8x32xf32> to vector<8x32xbf16>
    %cst_25 = arith.constant dense<0.000000e+00> : vector<8x128xf32>
    %127 = tpu.matmul %126, %6, %cst_25 {dimension_numbers = #tpu.dot_dimension_numbers<[1], [0], [0], [1], [0, 0, 1, 1], [], []>} : vector<8x32xbf16>, vector<32x128xbf16>, vector<8x128xf32> -> vector<8x128xf32>
    %128 = arith.addf %125, %127 : vector<8x128xf32>
    %129 = vector.extract_strided_slice %128 {offsets = [0, 0], sizes = [8, 32], strides = [1, 1]} : vector<8x128xf32> to vector<8x32xf32>
    %130 = arith.negf %129 : vector<8x32xf32>
    %131 = math.exp %130 : vector<8x32xf32>
    %cst_26 = arith.constant 1.000000e+00 : f32
    %132 = vector.broadcast %cst_26 : f32 to vector<8x32xf32>
    %133 = arith.addf %132, %131 : vector<8x32xf32>
    %134 = arith.divf %132, %133 : vector<8x32xf32>
    %135 = vector.extract_strided_slice %128 {offsets = [0, 32], sizes = [8, 32], strides = [1, 1]} : vector<8x128xf32> to vector<8x32xf32>
    %136 = arith.negf %135 : vector<8x32xf32>
    %137 = math.exp %136 : vector<8x32xf32>
    %cst_27 = arith.constant 1.000000e+00 : f32
    %138 = vector.broadcast %cst_27 : f32 to vector<8x32xf32>
    %139 = arith.addf %138, %137 : vector<8x32xf32>
    %140 = arith.divf %138, %139 : vector<8x32xf32>
    %141 = vector.extract_strided_slice %128 {offsets = [0, 64], sizes = [8, 32], strides = [1, 1]} : vector<8x128xf32> to vector<8x32xf32>
    %142 = math.tanh %141 : vector<8x32xf32>
    %143 = vector.extract_strided_slice %128 {offsets = [0, 96], sizes = [8, 32], strides = [1, 1]} : vector<8x128xf32> to vector<8x32xf32>
    %144 = arith.negf %143 : vector<8x32xf32>
    %145 = math.exp %144 : vector<8x32xf32>
    %cst_28 = arith.constant 1.000000e+00 : f32
    %146 = vector.broadcast %cst_28 : f32 to vector<8x32xf32>
    %147 = arith.addf %146, %145 : vector<8x32xf32>
    %148 = arith.divf %146, %147 : vector<8x32xf32>
    %149 = arith.mulf %140, %122 : vector<8x32xf32>
    %150 = arith.mulf %134, %142 : vector<8x32xf32>
    %151 = arith.addf %149, %150 : vector<8x32xf32>
    %152 = math.tanh %151 : vector<8x32xf32>
    %153 = arith.mulf %148, %152 : vector<8x32xf32>
    %154 = vector.extract_strided_slice %5 {offsets = [40, 0], sizes = [8, 128], strides = [1, 1]} : vector<64x128xf32> to vector<8x128xf32>
    %155 = arith.truncf %153 : vector<8x32xf32> to vector<8x32xbf16>
    %cst_29 = arith.constant dense<0.000000e+00> : vector<8x128xf32>
    %156 = tpu.matmul %155, %6, %cst_29 {dimension_numbers = #tpu.dot_dimension_numbers<[1], [0], [0], [1], [0, 0, 1, 1], [], []>} : vector<8x32xbf16>, vector<32x128xbf16>, vector<8x128xf32> -> vector<8x128xf32>
    %157 = arith.addf %154, %156 : vector<8x128xf32>
    %158 = vector.extract_strided_slice %157 {offsets = [0, 0], sizes = [8, 32], strides = [1, 1]} : vector<8x128xf32> to vector<8x32xf32>
    %159 = arith.negf %158 : vector<8x32xf32>
    %160 = math.exp %159 : vector<8x32xf32>
    %cst_30 = arith.constant 1.000000e+00 : f32
    %161 = vector.broadcast %cst_30 : f32 to vector<8x32xf32>
    %162 = arith.addf %161, %160 : vector<8x32xf32>
    %163 = arith.divf %161, %162 : vector<8x32xf32>
    %164 = vector.extract_strided_slice %157 {offsets = [0, 32], sizes = [8, 32], strides = [1, 1]} : vector<8x128xf32> to vector<8x32xf32>
    %165 = arith.negf %164 : vector<8x32xf32>
    %166 = math.exp %165 : vector<8x32xf32>
    %cst_31 = arith.constant 1.000000e+00 : f32
    %167 = vector.broadcast %cst_31 : f32 to vector<8x32xf32>
    %168 = arith.addf %167, %166 : vector<8x32xf32>
    %169 = arith.divf %167, %168 : vector<8x32xf32>
    %170 = vector.extract_strided_slice %157 {offsets = [0, 64], sizes = [8, 32], strides = [1, 1]} : vector<8x128xf32> to vector<8x32xf32>
    %171 = math.tanh %170 : vector<8x32xf32>
    %172 = vector.extract_strided_slice %157 {offsets = [0, 96], sizes = [8, 32], strides = [1, 1]} : vector<8x128xf32> to vector<8x32xf32>
    %173 = arith.negf %172 : vector<8x32xf32>
    %174 = math.exp %173 : vector<8x32xf32>
    %cst_32 = arith.constant 1.000000e+00 : f32
    %175 = vector.broadcast %cst_32 : f32 to vector<8x32xf32>
    %176 = arith.addf %175, %174 : vector<8x32xf32>
    %177 = arith.divf %175, %176 : vector<8x32xf32>
    %178 = arith.mulf %169, %151 : vector<8x32xf32>
    %179 = arith.mulf %163, %171 : vector<8x32xf32>
    %180 = arith.addf %178, %179 : vector<8x32xf32>
    %181 = math.tanh %180 : vector<8x32xf32>
    %182 = arith.mulf %177, %181 : vector<8x32xf32>
    %183 = vector.extract_strided_slice %5 {offsets = [48, 0], sizes = [8, 128], strides = [1, 1]} : vector<64x128xf32> to vector<8x128xf32>
    %184 = arith.truncf %182 : vector<8x32xf32> to vector<8x32xbf16>
    %cst_33 = arith.constant dense<0.000000e+00> : vector<8x128xf32>
    %185 = tpu.matmul %184, %6, %cst_33 {dimension_numbers = #tpu.dot_dimension_numbers<[1], [0], [0], [1], [0, 0, 1, 1], [], []>} : vector<8x32xbf16>, vector<32x128xbf16>, vector<8x128xf32> -> vector<8x128xf32>
    %186 = arith.addf %183, %185 : vector<8x128xf32>
    %187 = vector.extract_strided_slice %186 {offsets = [0, 0], sizes = [8, 32], strides = [1, 1]} : vector<8x128xf32> to vector<8x32xf32>
    %188 = arith.negf %187 : vector<8x32xf32>
    %189 = math.exp %188 : vector<8x32xf32>
    %cst_34 = arith.constant 1.000000e+00 : f32
    %190 = vector.broadcast %cst_34 : f32 to vector<8x32xf32>
    %191 = arith.addf %190, %189 : vector<8x32xf32>
    %192 = arith.divf %190, %191 : vector<8x32xf32>
    %193 = vector.extract_strided_slice %186 {offsets = [0, 32], sizes = [8, 32], strides = [1, 1]} : vector<8x128xf32> to vector<8x32xf32>
    %194 = arith.negf %193 : vector<8x32xf32>
    %195 = math.exp %194 : vector<8x32xf32>
    %cst_35 = arith.constant 1.000000e+00 : f32
    %196 = vector.broadcast %cst_35 : f32 to vector<8x32xf32>
    %197 = arith.addf %196, %195 : vector<8x32xf32>
    %198 = arith.divf %196, %197 : vector<8x32xf32>
    %199 = vector.extract_strided_slice %186 {offsets = [0, 64], sizes = [8, 32], strides = [1, 1]} : vector<8x128xf32> to vector<8x32xf32>
    %200 = math.tanh %199 : vector<8x32xf32>
    %201 = vector.extract_strided_slice %186 {offsets = [0, 96], sizes = [8, 32], strides = [1, 1]} : vector<8x128xf32> to vector<8x32xf32>
    %202 = arith.negf %201 : vector<8x32xf32>
    %203 = math.exp %202 : vector<8x32xf32>
    %cst_36 = arith.constant 1.000000e+00 : f32
    %204 = vector.broadcast %cst_36 : f32 to vector<8x32xf32>
    %205 = arith.addf %204, %203 : vector<8x32xf32>
    %206 = arith.divf %204, %205 : vector<8x32xf32>
    %207 = arith.mulf %198, %180 : vector<8x32xf32>
    %208 = arith.mulf %192, %200 : vector<8x32xf32>
    %209 = arith.addf %207, %208 : vector<8x32xf32>
    %210 = math.tanh %209 : vector<8x32xf32>
    %211 = arith.mulf %206, %210 : vector<8x32xf32>
    %212 = vector.extract_strided_slice %5 {offsets = [56, 0], sizes = [8, 128], strides = [1, 1]} : vector<64x128xf32> to vector<8x128xf32>
    %213 = arith.truncf %211 : vector<8x32xf32> to vector<8x32xbf16>
    %cst_37 = arith.constant dense<0.000000e+00> : vector<8x128xf32>
    %214 = tpu.matmul %213, %6, %cst_37 {dimension_numbers = #tpu.dot_dimension_numbers<[1], [0], [0], [1], [0, 0, 1, 1], [], []>} : vector<8x32xbf16>, vector<32x128xbf16>, vector<8x128xf32> -> vector<8x128xf32>
    %215 = arith.addf %212, %214 : vector<8x128xf32>
    %216 = vector.extract_strided_slice %215 {offsets = [0, 0], sizes = [8, 32], strides = [1, 1]} : vector<8x128xf32> to vector<8x32xf32>
    %217 = arith.negf %216 : vector<8x32xf32>
    %218 = math.exp %217 : vector<8x32xf32>
    %cst_38 = arith.constant 1.000000e+00 : f32
    %219 = vector.broadcast %cst_38 : f32 to vector<8x32xf32>
    %220 = arith.addf %219, %218 : vector<8x32xf32>
    %221 = arith.divf %219, %220 : vector<8x32xf32>
    %222 = vector.extract_strided_slice %215 {offsets = [0, 32], sizes = [8, 32], strides = [1, 1]} : vector<8x128xf32> to vector<8x32xf32>
    %223 = arith.negf %222 : vector<8x32xf32>
    %224 = math.exp %223 : vector<8x32xf32>
    %cst_39 = arith.constant 1.000000e+00 : f32
    %225 = vector.broadcast %cst_39 : f32 to vector<8x32xf32>
    %226 = arith.addf %225, %224 : vector<8x32xf32>
    %227 = arith.divf %225, %226 : vector<8x32xf32>
    %228 = vector.extract_strided_slice %215 {offsets = [0, 64], sizes = [8, 32], strides = [1, 1]} : vector<8x128xf32> to vector<8x32xf32>
    %229 = math.tanh %228 : vector<8x32xf32>
    %230 = vector.extract_strided_slice %215 {offsets = [0, 96], sizes = [8, 32], strides = [1, 1]} : vector<8x128xf32> to vector<8x32xf32>
    %231 = arith.negf %230 : vector<8x32xf32>
    %232 = math.exp %231 : vector<8x32xf32>
    %cst_40 = arith.constant 1.000000e+00 : f32
    %233 = vector.broadcast %cst_40 : f32 to vector<8x32xf32>
    %234 = arith.addf %233, %232 : vector<8x32xf32>
    %235 = arith.divf %233, %234 : vector<8x32xf32>
    %236 = arith.mulf %227, %209 : vector<8x32xf32>
    %237 = arith.mulf %221, %229 : vector<8x32xf32>
    %238 = arith.addf %236, %237 : vector<8x32xf32>
    %239 = math.tanh %238 : vector<8x32xf32>
    %240 = arith.mulf %235, %239 : vector<8x32xf32>
    %c0_41 = arith.constant 0 : index
    %c0_42 = arith.constant 0 : index
    %c0_43 = arith.constant 0 : index
    %241 = vector.load %arg1[%c0_41, %c0_42, %c0_43] : memref<2x64x14xbf16, #tpu.memory_space<vmem>>, vector<1x64x14xbf16>
    %242 = vector.shape_cast %241 : vector<1x64x14xbf16> to vector<64x14xbf16>
    %c0_44 = arith.constant 0 : index
    %c0_45 = arith.constant 0 : index
    %c0_46 = arith.constant 0 : index
    %243 = vector.load %arg11[%c0_44, %c0_45, %c0_46] : memref<2x14x128xbf16, #tpu.memory_space<vmem>>, vector<1x14x128xbf16>
    %244 = vector.shape_cast %243 : vector<1x14x128xbf16> to vector<14x128xbf16>
    %cst_47 = arith.constant dense<0.000000e+00> : vector<64x128xf32>
    %245 = tpu.matmul %242, %244, %cst_47 {dimension_numbers = #tpu.dot_dimension_numbers<[1], [0], [0], [1], [0, 0, 1, 1], [], []>} : vector<64x14xbf16>, vector<14x128xbf16>, vector<64x128xf32> -> vector<64x128xf32>
    %c0_48 = arith.constant 0 : index
    %c0_49 = arith.constant 0 : index
    %c0_50 = arith.constant 0 : index
    %246 = vector.load %arg13[%c0_48, %c0_49, %c0_50] : memref<2x1x128xf32, #tpu.memory_space<vmem>>, vector<1x1x128xf32>
    %247 = vector.shape_cast %246 : vector<1x1x128xf32> to vector<1x128xf32>
    %248 = vector.broadcast %247 : vector<1x128xf32> to vector<64x128xf32>
    %249 = arith.addf %245, %248 : vector<64x128xf32>
    %c0_51 = arith.constant 0 : index
    %c0_52 = arith.constant 0 : index
    %c0_53 = arith.constant 0 : index
    %250 = vector.load %arg12[%c0_51, %c0_52, %c0_53] : memref<2x32x128xbf16, #tpu.memory_space<vmem>>, vector<1x32x128xbf16>
    %251 = vector.shape_cast %250 : vector<1x32x128xbf16> to vector<32x128xbf16>
    %cst_54 = arith.constant 0.000000e+00 : f32
    %252 = vector.broadcast %cst_54 : f32 to vector<8x32xf32>
    %cst_55 = arith.constant 0.000000e+00 : f32
    %253 = vector.broadcast %cst_55 : f32 to vector<8x32xf32>
    %254 = vector.extract_strided_slice %249 {offsets = [0, 0], sizes = [8, 128], strides = [1, 1]} : vector<64x128xf32> to vector<8x128xf32>
    %255 = arith.truncf %252 : vector<8x32xf32> to vector<8x32xbf16>
    %cst_56 = arith.constant dense<0.000000e+00> : vector<8x128xf32>
    %256 = tpu.matmul %255, %251, %cst_56 {dimension_numbers = #tpu.dot_dimension_numbers<[1], [0], [0], [1], [0, 0, 1, 1], [], []>} : vector<8x32xbf16>, vector<32x128xbf16>, vector<8x128xf32> -> vector<8x128xf32>
    %257 = arith.addf %254, %256 : vector<8x128xf32>
    %258 = vector.extract_strided_slice %257 {offsets = [0, 0], sizes = [8, 32], strides = [1, 1]} : vector<8x128xf32> to vector<8x32xf32>
    %259 = arith.negf %258 : vector<8x32xf32>
    %260 = math.exp %259 : vector<8x32xf32>
    %cst_57 = arith.constant 1.000000e+00 : f32
    %261 = vector.broadcast %cst_57 : f32 to vector<8x32xf32>
    %262 = arith.addf %261, %260 : vector<8x32xf32>
    %263 = arith.divf %261, %262 : vector<8x32xf32>
    %264 = vector.extract_strided_slice %257 {offsets = [0, 32], sizes = [8, 32], strides = [1, 1]} : vector<8x128xf32> to vector<8x32xf32>
    %265 = arith.negf %264 : vector<8x32xf32>
    %266 = math.exp %265 : vector<8x32xf32>
    %cst_58 = arith.constant 1.000000e+00 : f32
    %267 = vector.broadcast %cst_58 : f32 to vector<8x32xf32>
    %268 = arith.addf %267, %266 : vector<8x32xf32>
    %269 = arith.divf %267, %268 : vector<8x32xf32>
    %270 = vector.extract_strided_slice %257 {offsets = [0, 64], sizes = [8, 32], strides = [1, 1]} : vector<8x128xf32> to vector<8x32xf32>
    %271 = math.tanh %270 : vector<8x32xf32>
    %272 = vector.extract_strided_slice %257 {offsets = [0, 96], sizes = [8, 32], strides = [1, 1]} : vector<8x128xf32> to vector<8x32xf32>
    %273 = arith.negf %272 : vector<8x32xf32>
    %274 = math.exp %273 : vector<8x32xf32>
    %cst_59 = arith.constant 1.000000e+00 : f32
    %275 = vector.broadcast %cst_59 : f32 to vector<8x32xf32>
    %276 = arith.addf %275, %274 : vector<8x32xf32>
    %277 = arith.divf %275, %276 : vector<8x32xf32>
    %278 = arith.mulf %269, %253 : vector<8x32xf32>
    %279 = arith.mulf %263, %271 : vector<8x32xf32>
    %280 = arith.addf %278, %279 : vector<8x32xf32>
    %281 = math.tanh %280 : vector<8x32xf32>
    %282 = arith.mulf %277, %281 : vector<8x32xf32>
    %283 = vector.extract_strided_slice %249 {offsets = [8, 0], sizes = [8, 128], strides = [1, 1]} : vector<64x128xf32> to vector<8x128xf32>
    %284 = arith.truncf %282 : vector<8x32xf32> to vector<8x32xbf16>
    %cst_60 = arith.constant dense<0.000000e+00> : vector<8x128xf32>
    %285 = tpu.matmul %284, %251, %cst_60 {dimension_numbers = #tpu.dot_dimension_numbers<[1], [0], [0], [1], [0, 0, 1, 1], [], []>} : vector<8x32xbf16>, vector<32x128xbf16>, vector<8x128xf32> -> vector<8x128xf32>
    %286 = arith.addf %283, %285 : vector<8x128xf32>
    %287 = vector.extract_strided_slice %286 {offsets = [0, 0], sizes = [8, 32], strides = [1, 1]} : vector<8x128xf32> to vector<8x32xf32>
    %288 = arith.negf %287 : vector<8x32xf32>
    %289 = math.exp %288 : vector<8x32xf32>
    %cst_61 = arith.constant 1.000000e+00 : f32
    %290 = vector.broadcast %cst_61 : f32 to vector<8x32xf32>
    %291 = arith.addf %290, %289 : vector<8x32xf32>
    %292 = arith.divf %290, %291 : vector<8x32xf32>
    %293 = vector.extract_strided_slice %286 {offsets = [0, 32], sizes = [8, 32], strides = [1, 1]} : vector<8x128xf32> to vector<8x32xf32>
    %294 = arith.negf %293 : vector<8x32xf32>
    %295 = math.exp %294 : vector<8x32xf32>
    %cst_62 = arith.constant 1.000000e+00 : f32
    %296 = vector.broadcast %cst_62 : f32 to vector<8x32xf32>
    %297 = arith.addf %296, %295 : vector<8x32xf32>
    %298 = arith.divf %296, %297 : vector<8x32xf32>
    %299 = vector.extract_strided_slice %286 {offsets = [0, 64], sizes = [8, 32], strides = [1, 1]} : vector<8x128xf32> to vector<8x32xf32>
    %300 = math.tanh %299 : vector<8x32xf32>
    %301 = vector.extract_strided_slice %286 {offsets = [0, 96], sizes = [8, 32], strides = [1, 1]} : vector<8x128xf32> to vector<8x32xf32>
    %302 = arith.negf %301 : vector<8x32xf32>
    %303 = math.exp %302 : vector<8x32xf32>
    %cst_63 = arith.constant 1.000000e+00 : f32
    %304 = vector.broadcast %cst_63 : f32 to vector<8x32xf32>
    %305 = arith.addf %304, %303 : vector<8x32xf32>
    %306 = arith.divf %304, %305 : vector<8x32xf32>
    %307 = arith.mulf %298, %280 : vector<8x32xf32>
    %308 = arith.mulf %292, %300 : vector<8x32xf32>
    %309 = arith.addf %307, %308 : vector<8x32xf32>
    %310 = math.tanh %309 : vector<8x32xf32>
    %311 = arith.mulf %306, %310 : vector<8x32xf32>
    %312 = vector.extract_strided_slice %249 {offsets = [16, 0], sizes = [8, 128], strides = [1, 1]} : vector<64x128xf32> to vector<8x128xf32>
    %313 = arith.truncf %311 : vector<8x32xf32> to vector<8x32xbf16>
    %cst_64 = arith.constant dense<0.000000e+00> : vector<8x128xf32>
    %314 = tpu.matmul %313, %251, %cst_64 {dimension_numbers = #tpu.dot_dimension_numbers<[1], [0], [0], [1], [0, 0, 1, 1], [], []>} : vector<8x32xbf16>, vector<32x128xbf16>, vector<8x128xf32> -> vector<8x128xf32>
    %315 = arith.addf %312, %314 : vector<8x128xf32>
    %316 = vector.extract_strided_slice %315 {offsets = [0, 0], sizes = [8, 32], strides = [1, 1]} : vector<8x128xf32> to vector<8x32xf32>
    %317 = arith.negf %316 : vector<8x32xf32>
    %318 = math.exp %317 : vector<8x32xf32>
    %cst_65 = arith.constant 1.000000e+00 : f32
    %319 = vector.broadcast %cst_65 : f32 to vector<8x32xf32>
    %320 = arith.addf %319, %318 : vector<8x32xf32>
    %321 = arith.divf %319, %320 : vector<8x32xf32>
    %322 = vector.extract_strided_slice %315 {offsets = [0, 32], sizes = [8, 32], strides = [1, 1]} : vector<8x128xf32> to vector<8x32xf32>
    %323 = arith.negf %322 : vector<8x32xf32>
    %324 = math.exp %323 : vector<8x32xf32>
    %cst_66 = arith.constant 1.000000e+00 : f32
    %325 = vector.broadcast %cst_66 : f32 to vector<8x32xf32>
    %326 = arith.addf %325, %324 : vector<8x32xf32>
    %327 = arith.divf %325, %326 : vector<8x32xf32>
    %328 = vector.extract_strided_slice %315 {offsets = [0, 64], sizes = [8, 32], strides = [1, 1]} : vector<8x128xf32> to vector<8x32xf32>
    %329 = math.tanh %328 : vector<8x32xf32>
    %330 = vector.extract_strided_slice %315 {offsets = [0, 96], sizes = [8, 32], strides = [1, 1]} : vector<8x128xf32> to vector<8x32xf32>
    %331 = arith.negf %330 : vector<8x32xf32>
    %332 = math.exp %331 : vector<8x32xf32>
    %cst_67 = arith.constant 1.000000e+00 : f32
    %333 = vector.broadcast %cst_67 : f32 to vector<8x32xf32>
    %334 = arith.addf %333, %332 : vector<8x32xf32>
    %335 = arith.divf %333, %334 : vector<8x32xf32>
    %336 = arith.mulf %327, %309 : vector<8x32xf32>
    %337 = arith.mulf %321, %329 : vector<8x32xf32>
    %338 = arith.addf %336, %337 : vector<8x32xf32>
    %339 = math.tanh %338 : vector<8x32xf32>
    %340 = arith.mulf %335, %339 : vector<8x32xf32>
    %341 = vector.extract_strided_slice %249 {offsets = [24, 0], sizes = [8, 128], strides = [1, 1]} : vector<64x128xf32> to vector<8x128xf32>
    %342 = arith.truncf %340 : vector<8x32xf32> to vector<8x32xbf16>
    %cst_68 = arith.constant dense<0.000000e+00> : vector<8x128xf32>
    %343 = tpu.matmul %342, %251, %cst_68 {dimension_numbers = #tpu.dot_dimension_numbers<[1], [0], [0], [1], [0, 0, 1, 1], [], []>} : vector<8x32xbf16>, vector<32x128xbf16>, vector<8x128xf32> -> vector<8x128xf32>
    %344 = arith.addf %341, %343 : vector<8x128xf32>
    %345 = vector.extract_strided_slice %344 {offsets = [0, 0], sizes = [8, 32], strides = [1, 1]} : vector<8x128xf32> to vector<8x32xf32>
    %346 = arith.negf %345 : vector<8x32xf32>
    %347 = math.exp %346 : vector<8x32xf32>
    %cst_69 = arith.constant 1.000000e+00 : f32
    %348 = vector.broadcast %cst_69 : f32 to vector<8x32xf32>
    %349 = arith.addf %348, %347 : vector<8x32xf32>
    %350 = arith.divf %348, %349 : vector<8x32xf32>
    %351 = vector.extract_strided_slice %344 {offsets = [0, 32], sizes = [8, 32], strides = [1, 1]} : vector<8x128xf32> to vector<8x32xf32>
    %352 = arith.negf %351 : vector<8x32xf32>
    %353 = math.exp %352 : vector<8x32xf32>
    %cst_70 = arith.constant 1.000000e+00 : f32
    %354 = vector.broadcast %cst_70 : f32 to vector<8x32xf32>
    %355 = arith.addf %354, %353 : vector<8x32xf32>
    %356 = arith.divf %354, %355 : vector<8x32xf32>
    %357 = vector.extract_strided_slice %344 {offsets = [0, 64], sizes = [8, 32], strides = [1, 1]} : vector<8x128xf32> to vector<8x32xf32>
    %358 = math.tanh %357 : vector<8x32xf32>
    %359 = vector.extract_strided_slice %344 {offsets = [0, 96], sizes = [8, 32], strides = [1, 1]} : vector<8x128xf32> to vector<8x32xf32>
    %360 = arith.negf %359 : vector<8x32xf32>
    %361 = math.exp %360 : vector<8x32xf32>
    %cst_71 = arith.constant 1.000000e+00 : f32
    %362 = vector.broadcast %cst_71 : f32 to vector<8x32xf32>
    %363 = arith.addf %362, %361 : vector<8x32xf32>
    %364 = arith.divf %362, %363 : vector<8x32xf32>
    %365 = arith.mulf %356, %338 : vector<8x32xf32>
    %366 = arith.mulf %350, %358 : vector<8x32xf32>
    %367 = arith.addf %365, %366 : vector<8x32xf32>
    %368 = math.tanh %367 : vector<8x32xf32>
    %369 = arith.mulf %364, %368 : vector<8x32xf32>
    %370 = vector.extract_strided_slice %249 {offsets = [32, 0], sizes = [8, 128], strides = [1, 1]} : vector<64x128xf32> to vector<8x128xf32>
    %371 = arith.truncf %369 : vector<8x32xf32> to vector<8x32xbf16>
    %cst_72 = arith.constant dense<0.000000e+00> : vector<8x128xf32>
    %372 = tpu.matmul %371, %251, %cst_72 {dimension_numbers = #tpu.dot_dimension_numbers<[1], [0], [0], [1], [0, 0, 1, 1], [], []>} : vector<8x32xbf16>, vector<32x128xbf16>, vector<8x128xf32> -> vector<8x128xf32>
    %373 = arith.addf %370, %372 : vector<8x128xf32>
    %374 = vector.extract_strided_slice %373 {offsets = [0, 0], sizes = [8, 32], strides = [1, 1]} : vector<8x128xf32> to vector<8x32xf32>
    %375 = arith.negf %374 : vector<8x32xf32>
    %376 = math.exp %375 : vector<8x32xf32>
    %cst_73 = arith.constant 1.000000e+00 : f32
    %377 = vector.broadcast %cst_73 : f32 to vector<8x32xf32>
    %378 = arith.addf %377, %376 : vector<8x32xf32>
    %379 = arith.divf %377, %378 : vector<8x32xf32>
    %380 = vector.extract_strided_slice %373 {offsets = [0, 32], sizes = [8, 32], strides = [1, 1]} : vector<8x128xf32> to vector<8x32xf32>
    %381 = arith.negf %380 : vector<8x32xf32>
    %382 = math.exp %381 : vector<8x32xf32>
    %cst_74 = arith.constant 1.000000e+00 : f32
    %383 = vector.broadcast %cst_74 : f32 to vector<8x32xf32>
    %384 = arith.addf %383, %382 : vector<8x32xf32>
    %385 = arith.divf %383, %384 : vector<8x32xf32>
    %386 = vector.extract_strided_slice %373 {offsets = [0, 64], sizes = [8, 32], strides = [1, 1]} : vector<8x128xf32> to vector<8x32xf32>
    %387 = math.tanh %386 : vector<8x32xf32>
    %388 = vector.extract_strided_slice %373 {offsets = [0, 96], sizes = [8, 32], strides = [1, 1]} : vector<8x128xf32> to vector<8x32xf32>
    %389 = arith.negf %388 : vector<8x32xf32>
    %390 = math.exp %389 : vector<8x32xf32>
    %cst_75 = arith.constant 1.000000e+00 : f32
    %391 = vector.broadcast %cst_75 : f32 to vector<8x32xf32>
    %392 = arith.addf %391, %390 : vector<8x32xf32>
    %393 = arith.divf %391, %392 : vector<8x32xf32>
    %394 = arith.mulf %385, %367 : vector<8x32xf32>
    %395 = arith.mulf %379, %387 : vector<8x32xf32>
    %396 = arith.addf %394, %395 : vector<8x32xf32>
    %397 = math.tanh %396 : vector<8x32xf32>
    %398 = arith.mulf %393, %397 : vector<8x32xf32>
    %399 = vector.extract_strided_slice %249 {offsets = [40, 0], sizes = [8, 128], strides = [1, 1]} : vector<64x128xf32> to vector<8x128xf32>
    %400 = arith.truncf %398 : vector<8x32xf32> to vector<8x32xbf16>
    %cst_76 = arith.constant dense<0.000000e+00> : vector<8x128xf32>
    %401 = tpu.matmul %400, %251, %cst_76 {dimension_numbers = #tpu.dot_dimension_numbers<[1], [0], [0], [1], [0, 0, 1, 1], [], []>} : vector<8x32xbf16>, vector<32x128xbf16>, vector<8x128xf32> -> vector<8x128xf32>
    %402 = arith.addf %399, %401 : vector<8x128xf32>
    %403 = vector.extract_strided_slice %402 {offsets = [0, 0], sizes = [8, 32], strides = [1, 1]} : vector<8x128xf32> to vector<8x32xf32>
    %404 = arith.negf %403 : vector<8x32xf32>
    %405 = math.exp %404 : vector<8x32xf32>
    %cst_77 = arith.constant 1.000000e+00 : f32
    %406 = vector.broadcast %cst_77 : f32 to vector<8x32xf32>
    %407 = arith.addf %406, %405 : vector<8x32xf32>
    %408 = arith.divf %406, %407 : vector<8x32xf32>
    %409 = vector.extract_strided_slice %402 {offsets = [0, 32], sizes = [8, 32], strides = [1, 1]} : vector<8x128xf32> to vector<8x32xf32>
    %410 = arith.negf %409 : vector<8x32xf32>
    %411 = math.exp %410 : vector<8x32xf32>
    %cst_78 = arith.constant 1.000000e+00 : f32
    %412 = vector.broadcast %cst_78 : f32 to vector<8x32xf32>
    %413 = arith.addf %412, %411 : vector<8x32xf32>
    %414 = arith.divf %412, %413 : vector<8x32xf32>
    %415 = vector.extract_strided_slice %402 {offsets = [0, 64], sizes = [8, 32], strides = [1, 1]} : vector<8x128xf32> to vector<8x32xf32>
    %416 = math.tanh %415 : vector<8x32xf32>
    %417 = vector.extract_strided_slice %402 {offsets = [0, 96], sizes = [8, 32], strides = [1, 1]} : vector<8x128xf32> to vector<8x32xf32>
    %418 = arith.negf %417 : vector<8x32xf32>
    %419 = math.exp %418 : vector<8x32xf32>
    %cst_79 = arith.constant 1.000000e+00 : f32
    %420 = vector.broadcast %cst_79 : f32 to vector<8x32xf32>
    %421 = arith.addf %420, %419 : vector<8x32xf32>
    %422 = arith.divf %420, %421 : vector<8x32xf32>
    %423 = arith.mulf %414, %396 : vector<8x32xf32>
    %424 = arith.mulf %408, %416 : vector<8x32xf32>
    %425 = arith.addf %423, %424 : vector<8x32xf32>
    %426 = math.tanh %425 : vector<8x32xf32>
    %427 = arith.mulf %422, %426 : vector<8x32xf32>
    %428 = vector.extract_strided_slice %249 {offsets = [48, 0], sizes = [8, 128], strides = [1, 1]} : vector<64x128xf32> to vector<8x128xf32>
    %429 = arith.truncf %427 : vector<8x32xf32> to vector<8x32xbf16>
    %cst_80 = arith.constant dense<0.000000e+00> : vector<8x128xf32>
    %430 = tpu.matmul %429, %251, %cst_80 {dimension_numbers = #tpu.dot_dimension_numbers<[1], [0], [0], [1], [0, 0, 1, 1], [], []>} : vector<8x32xbf16>, vector<32x128xbf16>, vector<8x128xf32> -> vector<8x128xf32>
    %431 = arith.addf %428, %430 : vector<8x128xf32>
    %432 = vector.extract_strided_slice %431 {offsets = [0, 0], sizes = [8, 32], strides = [1, 1]} : vector<8x128xf32> to vector<8x32xf32>
    %433 = arith.negf %432 : vector<8x32xf32>
    %434 = math.exp %433 : vector<8x32xf32>
    %cst_81 = arith.constant 1.000000e+00 : f32
    %435 = vector.broadcast %cst_81 : f32 to vector<8x32xf32>
    %436 = arith.addf %435, %434 : vector<8x32xf32>
    %437 = arith.divf %435, %436 : vector<8x32xf32>
    %438 = vector.extract_strided_slice %431 {offsets = [0, 32], sizes = [8, 32], strides = [1, 1]} : vector<8x128xf32> to vector<8x32xf32>
    %439 = arith.negf %438 : vector<8x32xf32>
    %440 = math.exp %439 : vector<8x32xf32>
    %cst_82 = arith.constant 1.000000e+00 : f32
    %441 = vector.broadcast %cst_82 : f32 to vector<8x32xf32>
    %442 = arith.addf %441, %440 : vector<8x32xf32>
    %443 = arith.divf %441, %442 : vector<8x32xf32>
    %444 = vector.extract_strided_slice %431 {offsets = [0, 64], sizes = [8, 32], strides = [1, 1]} : vector<8x128xf32> to vector<8x32xf32>
    %445 = math.tanh %444 : vector<8x32xf32>
    %446 = vector.extract_strided_slice %431 {offsets = [0, 96], sizes = [8, 32], strides = [1, 1]} : vector<8x128xf32> to vector<8x32xf32>
    %447 = arith.negf %446 : vector<8x32xf32>
    %448 = math.exp %447 : vector<8x32xf32>
    %cst_83 = arith.constant 1.000000e+00 : f32
    %449 = vector.broadcast %cst_83 : f32 to vector<8x32xf32>
    %450 = arith.addf %449, %448 : vector<8x32xf32>
    %451 = arith.divf %449, %450 : vector<8x32xf32>
    %452 = arith.mulf %443, %425 : vector<8x32xf32>
    %453 = arith.mulf %437, %445 : vector<8x32xf32>
    %454 = arith.addf %452, %453 : vector<8x32xf32>
    %455 = math.tanh %454 : vector<8x32xf32>
    %456 = arith.mulf %451, %455 : vector<8x32xf32>
    %457 = vector.extract_strided_slice %249 {offsets = [56, 0], sizes = [8, 128], strides = [1, 1]} : vector<64x128xf32> to vector<8x128xf32>
    %458 = arith.truncf %456 : vector<8x32xf32> to vector<8x32xbf16>
    %cst_84 = arith.constant dense<0.000000e+00> : vector<8x128xf32>
    %459 = tpu.matmul %458, %251, %cst_84 {dimension_numbers = #tpu.dot_dimension_numbers<[1], [0], [0], [1], [0, 0, 1, 1], [], []>} : vector<8x32xbf16>, vector<32x128xbf16>, vector<8x128xf32> -> vector<8x128xf32>
    %460 = arith.addf %457, %459 : vector<8x128xf32>
    %461 = vector.extract_strided_slice %460 {offsets = [0, 0], sizes = [8, 32], strides = [1, 1]} : vector<8x128xf32> to vector<8x32xf32>
    %462 = arith.negf %461 : vector<8x32xf32>
    %463 = math.exp %462 : vector<8x32xf32>
    %cst_85 = arith.constant 1.000000e+00 : f32
    %464 = vector.broadcast %cst_85 : f32 to vector<8x32xf32>
    %465 = arith.addf %464, %463 : vector<8x32xf32>
    %466 = arith.divf %464, %465 : vector<8x32xf32>
    %467 = vector.extract_strided_slice %460 {offsets = [0, 32], sizes = [8, 32], strides = [1, 1]} : vector<8x128xf32> to vector<8x32xf32>
    %468 = arith.negf %467 : vector<8x32xf32>
    %469 = math.exp %468 : vector<8x32xf32>
    %cst_86 = arith.constant 1.000000e+00 : f32
    %470 = vector.broadcast %cst_86 : f32 to vector<8x32xf32>
    %471 = arith.addf %470, %469 : vector<8x32xf32>
    %472 = arith.divf %470, %471 : vector<8x32xf32>
    %473 = vector.extract_strided_slice %460 {offsets = [0, 64], sizes = [8, 32], strides = [1, 1]} : vector<8x128xf32> to vector<8x32xf32>
    %474 = math.tanh %473 : vector<8x32xf32>
    %475 = vector.extract_strided_slice %460 {offsets = [0, 96], sizes = [8, 32], strides = [1, 1]} : vector<8x128xf32> to vector<8x32xf32>
    %476 = arith.negf %475 : vector<8x32xf32>
    %477 = math.exp %476 : vector<8x32xf32>
    %cst_87 = arith.constant 1.000000e+00 : f32
    %478 = vector.broadcast %cst_87 : f32 to vector<8x32xf32>
    %479 = arith.addf %478, %477 : vector<8x32xf32>
    %480 = arith.divf %478, %479 : vector<8x32xf32>
    %481 = arith.mulf %472, %454 : vector<8x32xf32>
    %482 = arith.mulf %466, %474 : vector<8x32xf32>
    %483 = arith.addf %481, %482 : vector<8x32xf32>
    %484 = math.tanh %483 : vector<8x32xf32>
    %485 = arith.mulf %480, %484 : vector<8x32xf32>
    %c0_88 = arith.constant 0 : index
    %c0_89 = arith.constant 0 : index
    %c0_90 = arith.constant 0 : index
    %486 = vector.load %arg2[%c0_88, %c0_89, %c0_90] : memref<2x8x1xf32, #tpu.memory_space<vmem>>, vector<1x8x1xf32>
    %487 = vector.shape_cast %486 : vector<1x8x1xf32> to vector<8x1xf32>
    %488 = vector.broadcast %487 : vector<8x1xf32> to vector<8x32xf32>
    %489 = arith.mulf %485, %488 : vector<8x32xf32>
    %c1 = arith.constant 1 : index
    %c0_91 = arith.constant 0 : index
    %c0_92 = arith.constant 0 : index
    %490 = vector.load %arg1[%c1, %c0_91, %c0_92] : memref<2x64x14xbf16, #tpu.memory_space<vmem>>, vector<1x64x14xbf16>
    %491 = vector.shape_cast %490 : vector<1x64x14xbf16> to vector<64x14xbf16>
    %c1_93 = arith.constant 1 : index
    %c0_94 = arith.constant 0 : index
    %c0_95 = arith.constant 0 : index
    %492 = vector.load %arg11[%c1_93, %c0_94, %c0_95] : memref<2x14x128xbf16, #tpu.memory_space<vmem>>, vector<1x14x128xbf16>
    %493 = vector.shape_cast %492 : vector<1x14x128xbf16> to vector<14x128xbf16>
    %cst_96 = arith.constant dense<0.000000e+00> : vector<64x128xf32>
    %494 = tpu.matmul %491, %493, %cst_96 {dimension_numbers = #tpu.dot_dimension_numbers<[1], [0], [0], [1], [0, 0, 1, 1], [], []>} : vector<64x14xbf16>, vector<14x128xbf16>, vector<64x128xf32> -> vector<64x128xf32>
    %c1_97 = arith.constant 1 : index
    %c0_98 = arith.constant 0 : index
    %c0_99 = arith.constant 0 : index
    %495 = vector.load %arg13[%c1_97, %c0_98, %c0_99] : memref<2x1x128xf32, #tpu.memory_space<vmem>>, vector<1x1x128xf32>
    %496 = vector.shape_cast %495 : vector<1x1x128xf32> to vector<1x128xf32>
    %497 = vector.broadcast %496 : vector<1x128xf32> to vector<64x128xf32>
    %498 = arith.addf %494, %497 : vector<64x128xf32>
    %c1_100 = arith.constant 1 : index
    %c0_101 = arith.constant 0 : index
    %c0_102 = arith.constant 0 : index
    %499 = vector.load %arg12[%c1_100, %c0_101, %c0_102] : memref<2x32x128xbf16, #tpu.memory_space<vmem>>, vector<1x32x128xbf16>
    %500 = vector.shape_cast %499 : vector<1x32x128xbf16> to vector<32x128xbf16>
    %cst_103 = arith.constant 0.000000e+00 : f32
    %501 = vector.broadcast %cst_103 : f32 to vector<8x32xf32>
    %cst_104 = arith.constant 0.000000e+00 : f32
    %502 = vector.broadcast %cst_104 : f32 to vector<8x32xf32>
    %503 = vector.extract_strided_slice %498 {offsets = [0, 0], sizes = [8, 128], strides = [1, 1]} : vector<64x128xf32> to vector<8x128xf32>
    %504 = arith.truncf %501 : vector<8x32xf32> to vector<8x32xbf16>
    %cst_105 = arith.constant dense<0.000000e+00> : vector<8x128xf32>
    %505 = tpu.matmul %504, %500, %cst_105 {dimension_numbers = #tpu.dot_dimension_numbers<[1], [0], [0], [1], [0, 0, 1, 1], [], []>} : vector<8x32xbf16>, vector<32x128xbf16>, vector<8x128xf32> -> vector<8x128xf32>
    %506 = arith.addf %503, %505 : vector<8x128xf32>
    %507 = vector.extract_strided_slice %506 {offsets = [0, 0], sizes = [8, 32], strides = [1, 1]} : vector<8x128xf32> to vector<8x32xf32>
    %508 = arith.negf %507 : vector<8x32xf32>
    %509 = math.exp %508 : vector<8x32xf32>
    %cst_106 = arith.constant 1.000000e+00 : f32
    %510 = vector.broadcast %cst_106 : f32 to vector<8x32xf32>
    %511 = arith.addf %510, %509 : vector<8x32xf32>
    %512 = arith.divf %510, %511 : vector<8x32xf32>
    %513 = vector.extract_strided_slice %506 {offsets = [0, 32], sizes = [8, 32], strides = [1, 1]} : vector<8x128xf32> to vector<8x32xf32>
    %514 = arith.negf %513 : vector<8x32xf32>
    %515 = math.exp %514 : vector<8x32xf32>
    %cst_107 = arith.constant 1.000000e+00 : f32
    %516 = vector.broadcast %cst_107 : f32 to vector<8x32xf32>
    %517 = arith.addf %516, %515 : vector<8x32xf32>
    %518 = arith.divf %516, %517 : vector<8x32xf32>
    %519 = vector.extract_strided_slice %506 {offsets = [0, 64], sizes = [8, 32], strides = [1, 1]} : vector<8x128xf32> to vector<8x32xf32>
    %520 = math.tanh %519 : vector<8x32xf32>
    %521 = vector.extract_strided_slice %506 {offsets = [0, 96], sizes = [8, 32], strides = [1, 1]} : vector<8x128xf32> to vector<8x32xf32>
    %522 = arith.negf %521 : vector<8x32xf32>
    %523 = math.exp %522 : vector<8x32xf32>
    %cst_108 = arith.constant 1.000000e+00 : f32
    %524 = vector.broadcast %cst_108 : f32 to vector<8x32xf32>
    %525 = arith.addf %524, %523 : vector<8x32xf32>
    %526 = arith.divf %524, %525 : vector<8x32xf32>
    %527 = arith.mulf %518, %502 : vector<8x32xf32>
    %528 = arith.mulf %512, %520 : vector<8x32xf32>
    %529 = arith.addf %527, %528 : vector<8x32xf32>
    %530 = math.tanh %529 : vector<8x32xf32>
    %531 = arith.mulf %526, %530 : vector<8x32xf32>
    %532 = vector.extract_strided_slice %498 {offsets = [8, 0], sizes = [8, 128], strides = [1, 1]} : vector<64x128xf32> to vector<8x128xf32>
    %533 = arith.truncf %531 : vector<8x32xf32> to vector<8x32xbf16>
    %cst_109 = arith.constant dense<0.000000e+00> : vector<8x128xf32>
    %534 = tpu.matmul %533, %500, %cst_109 {dimension_numbers = #tpu.dot_dimension_numbers<[1], [0], [0], [1], [0, 0, 1, 1], [], []>} : vector<8x32xbf16>, vector<32x128xbf16>, vector<8x128xf32> -> vector<8x128xf32>
    %535 = arith.addf %532, %534 : vector<8x128xf32>
    %536 = vector.extract_strided_slice %535 {offsets = [0, 0], sizes = [8, 32], strides = [1, 1]} : vector<8x128xf32> to vector<8x32xf32>
    %537 = arith.negf %536 : vector<8x32xf32>
    %538 = math.exp %537 : vector<8x32xf32>
    %cst_110 = arith.constant 1.000000e+00 : f32
    %539 = vector.broadcast %cst_110 : f32 to vector<8x32xf32>
    %540 = arith.addf %539, %538 : vector<8x32xf32>
    %541 = arith.divf %539, %540 : vector<8x32xf32>
    %542 = vector.extract_strided_slice %535 {offsets = [0, 32], sizes = [8, 32], strides = [1, 1]} : vector<8x128xf32> to vector<8x32xf32>
    %543 = arith.negf %542 : vector<8x32xf32>
    %544 = math.exp %543 : vector<8x32xf32>
    %cst_111 = arith.constant 1.000000e+00 : f32
    %545 = vector.broadcast %cst_111 : f32 to vector<8x32xf32>
    %546 = arith.addf %545, %544 : vector<8x32xf32>
    %547 = arith.divf %545, %546 : vector<8x32xf32>
    %548 = vector.extract_strided_slice %535 {offsets = [0, 64], sizes = [8, 32], strides = [1, 1]} : vector<8x128xf32> to vector<8x32xf32>
    %549 = math.tanh %548 : vector<8x32xf32>
    %550 = vector.extract_strided_slice %535 {offsets = [0, 96], sizes = [8, 32], strides = [1, 1]} : vector<8x128xf32> to vector<8x32xf32>
    %551 = arith.negf %550 : vector<8x32xf32>
    %552 = math.exp %551 : vector<8x32xf32>
    %cst_112 = arith.constant 1.000000e+00 : f32
    %553 = vector.broadcast %cst_112 : f32 to vector<8x32xf32>
    %554 = arith.addf %553, %552 : vector<8x32xf32>
    %555 = arith.divf %553, %554 : vector<8x32xf32>
    %556 = arith.mulf %547, %529 : vector<8x32xf32>
    %557 = arith.mulf %541, %549 : vector<8x32xf32>
    %558 = arith.addf %556, %557 : vector<8x32xf32>
    %559 = math.tanh %558 : vector<8x32xf32>
    %560 = arith.mulf %555, %559 : vector<8x32xf32>
    %561 = vector.extract_strided_slice %498 {offsets = [16, 0], sizes = [8, 128], strides = [1, 1]} : vector<64x128xf32> to vector<8x128xf32>
    %562 = arith.truncf %560 : vector<8x32xf32> to vector<8x32xbf16>
    %cst_113 = arith.constant dense<0.000000e+00> : vector<8x128xf32>
    %563 = tpu.matmul %562, %500, %cst_113 {dimension_numbers = #tpu.dot_dimension_numbers<[1], [0], [0], [1], [0, 0, 1, 1], [], []>} : vector<8x32xbf16>, vector<32x128xbf16>, vector<8x128xf32> -> vector<8x128xf32>
    %564 = arith.addf %561, %563 : vector<8x128xf32>
    %565 = vector.extract_strided_slice %564 {offsets = [0, 0], sizes = [8, 32], strides = [1, 1]} : vector<8x128xf32> to vector<8x32xf32>
    %566 = arith.negf %565 : vector<8x32xf32>
    %567 = math.exp %566 : vector<8x32xf32>
    %cst_114 = arith.constant 1.000000e+00 : f32
    %568 = vector.broadcast %cst_114 : f32 to vector<8x32xf32>
    %569 = arith.addf %568, %567 : vector<8x32xf32>
    %570 = arith.divf %568, %569 : vector<8x32xf32>
    %571 = vector.extract_strided_slice %564 {offsets = [0, 32], sizes = [8, 32], strides = [1, 1]} : vector<8x128xf32> to vector<8x32xf32>
    %572 = arith.negf %571 : vector<8x32xf32>
    %573 = math.exp %572 : vector<8x32xf32>
    %cst_115 = arith.constant 1.000000e+00 : f32
    %574 = vector.broadcast %cst_115 : f32 to vector<8x32xf32>
    %575 = arith.addf %574, %573 : vector<8x32xf32>
    %576 = arith.divf %574, %575 : vector<8x32xf32>
    %577 = vector.extract_strided_slice %564 {offsets = [0, 64], sizes = [8, 32], strides = [1, 1]} : vector<8x128xf32> to vector<8x32xf32>
    %578 = math.tanh %577 : vector<8x32xf32>
    %579 = vector.extract_strided_slice %564 {offsets = [0, 96], sizes = [8, 32], strides = [1, 1]} : vector<8x128xf32> to vector<8x32xf32>
    %580 = arith.negf %579 : vector<8x32xf32>
    %581 = math.exp %580 : vector<8x32xf32>
    %cst_116 = arith.constant 1.000000e+00 : f32
    %582 = vector.broadcast %cst_116 : f32 to vector<8x32xf32>
    %583 = arith.addf %582, %581 : vector<8x32xf32>
    %584 = arith.divf %582, %583 : vector<8x32xf32>
    %585 = arith.mulf %576, %558 : vector<8x32xf32>
    %586 = arith.mulf %570, %578 : vector<8x32xf32>
    %587 = arith.addf %585, %586 : vector<8x32xf32>
    %588 = math.tanh %587 : vector<8x32xf32>
    %589 = arith.mulf %584, %588 : vector<8x32xf32>
    %590 = vector.extract_strided_slice %498 {offsets = [24, 0], sizes = [8, 128], strides = [1, 1]} : vector<64x128xf32> to vector<8x128xf32>
    %591 = arith.truncf %589 : vector<8x32xf32> to vector<8x32xbf16>
    %cst_117 = arith.constant dense<0.000000e+00> : vector<8x128xf32>
    %592 = tpu.matmul %591, %500, %cst_117 {dimension_numbers = #tpu.dot_dimension_numbers<[1], [0], [0], [1], [0, 0, 1, 1], [], []>} : vector<8x32xbf16>, vector<32x128xbf16>, vector<8x128xf32> -> vector<8x128xf32>
    %593 = arith.addf %590, %592 : vector<8x128xf32>
    %594 = vector.extract_strided_slice %593 {offsets = [0, 0], sizes = [8, 32], strides = [1, 1]} : vector<8x128xf32> to vector<8x32xf32>
    %595 = arith.negf %594 : vector<8x32xf32>
    %596 = math.exp %595 : vector<8x32xf32>
    %cst_118 = arith.constant 1.000000e+00 : f32
    %597 = vector.broadcast %cst_118 : f32 to vector<8x32xf32>
    %598 = arith.addf %597, %596 : vector<8x32xf32>
    %599 = arith.divf %597, %598 : vector<8x32xf32>
    %600 = vector.extract_strided_slice %593 {offsets = [0, 32], sizes = [8, 32], strides = [1, 1]} : vector<8x128xf32> to vector<8x32xf32>
    %601 = arith.negf %600 : vector<8x32xf32>
    %602 = math.exp %601 : vector<8x32xf32>
    %cst_119 = arith.constant 1.000000e+00 : f32
    %603 = vector.broadcast %cst_119 : f32 to vector<8x32xf32>
    %604 = arith.addf %603, %602 : vector<8x32xf32>
    %605 = arith.divf %603, %604 : vector<8x32xf32>
    %606 = vector.extract_strided_slice %593 {offsets = [0, 64], sizes = [8, 32], strides = [1, 1]} : vector<8x128xf32> to vector<8x32xf32>
    %607 = math.tanh %606 : vector<8x32xf32>
    %608 = vector.extract_strided_slice %593 {offsets = [0, 96], sizes = [8, 32], strides = [1, 1]} : vector<8x128xf32> to vector<8x32xf32>
    %609 = arith.negf %608 : vector<8x32xf32>
    %610 = math.exp %609 : vector<8x32xf32>
    %cst_120 = arith.constant 1.000000e+00 : f32
    %611 = vector.broadcast %cst_120 : f32 to vector<8x32xf32>
    %612 = arith.addf %611, %610 : vector<8x32xf32>
    %613 = arith.divf %611, %612 : vector<8x32xf32>
    %614 = arith.mulf %605, %587 : vector<8x32xf32>
    %615 = arith.mulf %599, %607 : vector<8x32xf32>
    %616 = arith.addf %614, %615 : vector<8x32xf32>
    %617 = math.tanh %616 : vector<8x32xf32>
    %618 = arith.mulf %613, %617 : vector<8x32xf32>
    %619 = vector.extract_strided_slice %498 {offsets = [32, 0], sizes = [8, 128], strides = [1, 1]} : vector<64x128xf32> to vector<8x128xf32>
    %620 = arith.truncf %618 : vector<8x32xf32> to vector<8x32xbf16>
    %cst_121 = arith.constant dense<0.000000e+00> : vector<8x128xf32>
    %621 = tpu.matmul %620, %500, %cst_121 {dimension_numbers = #tpu.dot_dimension_numbers<[1], [0], [0], [1], [0, 0, 1, 1], [], []>} : vector<8x32xbf16>, vector<32x128xbf16>, vector<8x128xf32> -> vector<8x128xf32>
    %622 = arith.addf %619, %621 : vector<8x128xf32>
    %623 = vector.extract_strided_slice %622 {offsets = [0, 0], sizes = [8, 32], strides = [1, 1]} : vector<8x128xf32> to vector<8x32xf32>
    %624 = arith.negf %623 : vector<8x32xf32>
    %625 = math.exp %624 : vector<8x32xf32>
    %cst_122 = arith.constant 1.000000e+00 : f32
    %626 = vector.broadcast %cst_122 : f32 to vector<8x32xf32>
    %627 = arith.addf %626, %625 : vector<8x32xf32>
    %628 = arith.divf %626, %627 : vector<8x32xf32>
    %629 = vector.extract_strided_slice %622 {offsets = [0, 32], sizes = [8, 32], strides = [1, 1]} : vector<8x128xf32> to vector<8x32xf32>
    %630 = arith.negf %629 : vector<8x32xf32>
    %631 = math.exp %630 : vector<8x32xf32>
    %cst_123 = arith.constant 1.000000e+00 : f32
    %632 = vector.broadcast %cst_123 : f32 to vector<8x32xf32>
    %633 = arith.addf %632, %631 : vector<8x32xf32>
    %634 = arith.divf %632, %633 : vector<8x32xf32>
    %635 = vector.extract_strided_slice %622 {offsets = [0, 64], sizes = [8, 32], strides = [1, 1]} : vector<8x128xf32> to vector<8x32xf32>
    %636 = math.tanh %635 : vector<8x32xf32>
    %637 = vector.extract_strided_slice %622 {offsets = [0, 96], sizes = [8, 32], strides = [1, 1]} : vector<8x128xf32> to vector<8x32xf32>
    %638 = arith.negf %637 : vector<8x32xf32>
    %639 = math.exp %638 : vector<8x32xf32>
    %cst_124 = arith.constant 1.000000e+00 : f32
    %640 = vector.broadcast %cst_124 : f32 to vector<8x32xf32>
    %641 = arith.addf %640, %639 : vector<8x32xf32>
    %642 = arith.divf %640, %641 : vector<8x32xf32>
    %643 = arith.mulf %634, %616 : vector<8x32xf32>
    %644 = arith.mulf %628, %636 : vector<8x32xf32>
    %645 = arith.addf %643, %644 : vector<8x32xf32>
    %646 = math.tanh %645 : vector<8x32xf32>
    %647 = arith.mulf %642, %646 : vector<8x32xf32>
    %648 = vector.extract_strided_slice %498 {offsets = [40, 0], sizes = [8, 128], strides = [1, 1]} : vector<64x128xf32> to vector<8x128xf32>
    %649 = arith.truncf %647 : vector<8x32xf32> to vector<8x32xbf16>
    %cst_125 = arith.constant dense<0.000000e+00> : vector<8x128xf32>
    %650 = tpu.matmul %649, %500, %cst_125 {dimension_numbers = #tpu.dot_dimension_numbers<[1], [0], [0], [1], [0, 0, 1, 1], [], []>} : vector<8x32xbf16>, vector<32x128xbf16>, vector<8x128xf32> -> vector<8x128xf32>
    %651 = arith.addf %648, %650 : vector<8x128xf32>
    %652 = vector.extract_strided_slice %651 {offsets = [0, 0], sizes = [8, 32], strides = [1, 1]} : vector<8x128xf32> to vector<8x32xf32>
    %653 = arith.negf %652 : vector<8x32xf32>
    %654 = math.exp %653 : vector<8x32xf32>
    %cst_126 = arith.constant 1.000000e+00 : f32
    %655 = vector.broadcast %cst_126 : f32 to vector<8x32xf32>
    %656 = arith.addf %655, %654 : vector<8x32xf32>
    %657 = arith.divf %655, %656 : vector<8x32xf32>
    %658 = vector.extract_strided_slice %651 {offsets = [0, 32], sizes = [8, 32], strides = [1, 1]} : vector<8x128xf32> to vector<8x32xf32>
    %659 = arith.negf %658 : vector<8x32xf32>
    %660 = math.exp %659 : vector<8x32xf32>
    %cst_127 = arith.constant 1.000000e+00 : f32
    %661 = vector.broadcast %cst_127 : f32 to vector<8x32xf32>
    %662 = arith.addf %661, %660 : vector<8x32xf32>
    %663 = arith.divf %661, %662 : vector<8x32xf32>
    %664 = vector.extract_strided_slice %651 {offsets = [0, 64], sizes = [8, 32], strides = [1, 1]} : vector<8x128xf32> to vector<8x32xf32>
    %665 = math.tanh %664 : vector<8x32xf32>
    %666 = vector.extract_strided_slice %651 {offsets = [0, 96], sizes = [8, 32], strides = [1, 1]} : vector<8x128xf32> to vector<8x32xf32>
    %667 = arith.negf %666 : vector<8x32xf32>
    %668 = math.exp %667 : vector<8x32xf32>
    %cst_128 = arith.constant 1.000000e+00 : f32
    %669 = vector.broadcast %cst_128 : f32 to vector<8x32xf32>
    %670 = arith.addf %669, %668 : vector<8x32xf32>
    %671 = arith.divf %669, %670 : vector<8x32xf32>
    %672 = arith.mulf %663, %645 : vector<8x32xf32>
    %673 = arith.mulf %657, %665 : vector<8x32xf32>
    %674 = arith.addf %672, %673 : vector<8x32xf32>
    %675 = math.tanh %674 : vector<8x32xf32>
    %676 = arith.mulf %671, %675 : vector<8x32xf32>
    %677 = vector.extract_strided_slice %498 {offsets = [48, 0], sizes = [8, 128], strides = [1, 1]} : vector<64x128xf32> to vector<8x128xf32>
    %678 = arith.truncf %676 : vector<8x32xf32> to vector<8x32xbf16>
    %cst_129 = arith.constant dense<0.000000e+00> : vector<8x128xf32>
    %679 = tpu.matmul %678, %500, %cst_129 {dimension_numbers = #tpu.dot_dimension_numbers<[1], [0], [0], [1], [0, 0, 1, 1], [], []>} : vector<8x32xbf16>, vector<32x128xbf16>, vector<8x128xf32> -> vector<8x128xf32>
    %680 = arith.addf %677, %679 : vector<8x128xf32>
    %681 = vector.extract_strided_slice %680 {offsets = [0, 0], sizes = [8, 32], strides = [1, 1]} : vector<8x128xf32> to vector<8x32xf32>
    %682 = arith.negf %681 : vector<8x32xf32>
    %683 = math.exp %682 : vector<8x32xf32>
    %cst_130 = arith.constant 1.000000e+00 : f32
    %684 = vector.broadcast %cst_130 : f32 to vector<8x32xf32>
    %685 = arith.addf %684, %683 : vector<8x32xf32>
    %686 = arith.divf %684, %685 : vector<8x32xf32>
    %687 = vector.extract_strided_slice %680 {offsets = [0, 32], sizes = [8, 32], strides = [1, 1]} : vector<8x128xf32> to vector<8x32xf32>
    %688 = arith.negf %687 : vector<8x32xf32>
    %689 = math.exp %688 : vector<8x32xf32>
    %cst_131 = arith.constant 1.000000e+00 : f32
    %690 = vector.broadcast %cst_131 : f32 to vector<8x32xf32>
    %691 = arith.addf %690, %689 : vector<8x32xf32>
    %692 = arith.divf %690, %691 : vector<8x32xf32>
    %693 = vector.extract_strided_slice %680 {offsets = [0, 64], sizes = [8, 32], strides = [1, 1]} : vector<8x128xf32> to vector<8x32xf32>
    %694 = math.tanh %693 : vector<8x32xf32>
    %695 = vector.extract_strided_slice %680 {offsets = [0, 96], sizes = [8, 32], strides = [1, 1]} : vector<8x128xf32> to vector<8x32xf32>
    %696 = arith.negf %695 : vector<8x32xf32>
    %697 = math.exp %696 : vector<8x32xf32>
    %cst_132 = arith.constant 1.000000e+00 : f32
    %698 = vector.broadcast %cst_132 : f32 to vector<8x32xf32>
    %699 = arith.addf %698, %697 : vector<8x32xf32>
    %700 = arith.divf %698, %699 : vector<8x32xf32>
    %701 = arith.mulf %692, %674 : vector<8x32xf32>
    %702 = arith.mulf %686, %694 : vector<8x32xf32>
    %703 = arith.addf %701, %702 : vector<8x32xf32>
    %704 = math.tanh %703 : vector<8x32xf32>
    %705 = arith.mulf %700, %704 : vector<8x32xf32>
    %706 = vector.extract_strided_slice %498 {offsets = [56, 0], sizes = [8, 128], strides = [1, 1]} : vector<64x128xf32> to vector<8x128xf32>
    %707 = arith.truncf %705 : vector<8x32xf32> to vector<8x32xbf16>
    %cst_133 = arith.constant dense<0.000000e+00> : vector<8x128xf32>
    %708 = tpu.matmul %707, %500, %cst_133 {dimension_numbers = #tpu.dot_dimension_numbers<[1], [0], [0], [1], [0, 0, 1, 1], [], []>} : vector<8x32xbf16>, vector<32x128xbf16>, vector<8x128xf32> -> vector<8x128xf32>
    %709 = arith.addf %706, %708 : vector<8x128xf32>
    %710 = vector.extract_strided_slice %709 {offsets = [0, 0], sizes = [8, 32], strides = [1, 1]} : vector<8x128xf32> to vector<8x32xf32>
    %711 = arith.negf %710 : vector<8x32xf32>
    %712 = math.exp %711 : vector<8x32xf32>
    %cst_134 = arith.constant 1.000000e+00 : f32
    %713 = vector.broadcast %cst_134 : f32 to vector<8x32xf32>
    %714 = arith.addf %713, %712 : vector<8x32xf32>
    %715 = arith.divf %713, %714 : vector<8x32xf32>
    %716 = vector.extract_strided_slice %709 {offsets = [0, 32], sizes = [8, 32], strides = [1, 1]} : vector<8x128xf32> to vector<8x32xf32>
    %717 = arith.negf %716 : vector<8x32xf32>
    %718 = math.exp %717 : vector<8x32xf32>
    %cst_135 = arith.constant 1.000000e+00 : f32
    %719 = vector.broadcast %cst_135 : f32 to vector<8x32xf32>
    %720 = arith.addf %719, %718 : vector<8x32xf32>
    %721 = arith.divf %719, %720 : vector<8x32xf32>
    %722 = vector.extract_strided_slice %709 {offsets = [0, 64], sizes = [8, 32], strides = [1, 1]} : vector<8x128xf32> to vector<8x32xf32>
    %723 = math.tanh %722 : vector<8x32xf32>
    %724 = vector.extract_strided_slice %709 {offsets = [0, 96], sizes = [8, 32], strides = [1, 1]} : vector<8x128xf32> to vector<8x32xf32>
    %725 = arith.negf %724 : vector<8x32xf32>
    %726 = math.exp %725 : vector<8x32xf32>
    %cst_136 = arith.constant 1.000000e+00 : f32
    %727 = vector.broadcast %cst_136 : f32 to vector<8x32xf32>
    %728 = arith.addf %727, %726 : vector<8x32xf32>
    %729 = arith.divf %727, %728 : vector<8x32xf32>
    %730 = arith.mulf %721, %703 : vector<8x32xf32>
    %731 = arith.mulf %715, %723 : vector<8x32xf32>
    %732 = arith.addf %730, %731 : vector<8x32xf32>
    %733 = math.tanh %732 : vector<8x32xf32>
    %734 = arith.mulf %729, %733 : vector<8x32xf32>
    %c1_137 = arith.constant 1 : index
    %c0_138 = arith.constant 0 : index
    %c0_139 = arith.constant 0 : index
    %735 = vector.load %arg2[%c1_137, %c0_138, %c0_139] : memref<2x8x1xf32, #tpu.memory_space<vmem>>, vector<1x8x1xf32>
    %736 = vector.shape_cast %735 : vector<1x8x1xf32> to vector<8x1xf32>
    %737 = vector.broadcast %736 : vector<8x1xf32> to vector<8x32xf32>
    %738 = arith.mulf %734, %737 : vector<8x32xf32>
    %739 = arith.truncf %240 : vector<8x32xf32> to vector<8x32xbf16>
    %c0_140 = arith.constant 0 : index
    %c0_141 = arith.constant 0 : index
    %740 = vector.load %arg14[%c0_140, %c0_141] : memref<32x32xbf16, #tpu.memory_space<vmem>>, vector<32x32xbf16>
    %cst_142 = arith.constant dense<0.000000e+00> : vector<8x32xf32>
    %741 = tpu.matmul %739, %740, %cst_142 {dimension_numbers = #tpu.dot_dimension_numbers<[1], [0], [0], [1], [0, 0, 1, 1], [], []>} : vector<8x32xbf16>, vector<32x32xbf16>, vector<8x32xf32> -> vector<8x32xf32>
    %742 = tpu.concatenate %489, %738 in 0 : vector<8x32xf32>, vector<8x32xf32> -> vector<16x32xf32>
    %743 = arith.truncf %742 : vector<16x32xf32> to vector<16x32xbf16>
    %c0_143 = arith.constant 0 : index
    %c0_144 = arith.constant 0 : index
    %744 = vector.load %arg15[%c0_143, %c0_144] : memref<32x32xbf16, #tpu.memory_space<vmem>>, vector<32x32xbf16>
    %cst_145 = arith.constant dense<0.000000e+00> : vector<16x32xf32>
    %745 = tpu.matmul %743, %744, %cst_145 {dimension_numbers = #tpu.dot_dimension_numbers<[1], [0], [0], [1], [0, 0, 1, 1], [], []>} : vector<16x32xbf16>, vector<32x32xbf16>, vector<16x32xf32> -> vector<16x32xf32>
    %c0_146 = arith.constant 0 : index
    %c0_147 = arith.constant 0 : index
    %746 = vector.load %arg16[%c0_146, %c0_147] : memref<1x32xf32, #tpu.memory_space<vmem>>, vector<1x32xf32>
    %747 = vector.extract_strided_slice %745 {offsets = [0, 0], sizes = [8, 32], strides = [1, 1]} : vector<16x32xf32> to vector<8x32xf32>
    %748 = arith.addf %741, %747 : vector<8x32xf32>
    %749 = math.tanh %748 : vector<8x32xf32>
    %750 = vector.broadcast %746 : vector<1x32xf32> to vector<8x32xf32>
    %751 = arith.mulf %749, %750 : vector<8x32xf32>
    %cst_148 = arith.constant dense<0.000000e+00> : vector<8xf32>
    %752 = vector.multi_reduction <add>, %751, %cst_148 [1] : vector<8x32xf32> to vector<8xf32>
    %753 = vector.shape_cast %752 : vector<8xf32> to vector<8x1xf32>
    %754 = vector.extract_strided_slice %745 {offsets = [8, 0], sizes = [8, 32], strides = [1, 1]} : vector<16x32xf32> to vector<8x32xf32>
    %755 = arith.addf %741, %754 : vector<8x32xf32>
    %756 = math.tanh %755 : vector<8x32xf32>
    %757 = vector.broadcast %746 : vector<1x32xf32> to vector<8x32xf32>
    %758 = arith.mulf %756, %757 : vector<8x32xf32>
    %cst_149 = arith.constant dense<0.000000e+00> : vector<8xf32>
    %759 = vector.multi_reduction <add>, %758, %cst_149 [1] : vector<8x32xf32> to vector<8xf32>
    %760 = vector.shape_cast %759 : vector<8xf32> to vector<8x1xf32>
    %761 = arith.maximumf %753, %760 : vector<8x1xf32>
    %762 = arith.subf %753, %761 : vector<8x1xf32>
    %763 = math.exp %762 : vector<8x1xf32>
    %764 = arith.subf %760, %761 : vector<8x1xf32>
    %765 = math.exp %764 : vector<8x1xf32>
    %766 = arith.addf %763, %765 : vector<8x1xf32>
    %767 = vector.broadcast %763 : vector<8x1xf32> to vector<8x32xf32>
    %768 = arith.mulf %767, %489 : vector<8x32xf32>
    %769 = vector.broadcast %765 : vector<8x1xf32> to vector<8x32xf32>
    %770 = arith.mulf %769, %738 : vector<8x32xf32>
    %771 = arith.addf %768, %770 : vector<8x32xf32>
    %772 = tpu.reciprocal %766 {approx = true} : vector<8x1xf32> -> vector<8x1xf32>
    %773 = vector.broadcast %772 : vector<8x1xf32> to vector<8x32xf32>
    %774 = arith.mulf %771, %773 : vector<8x32xf32>
    %c0_150 = arith.constant 0 : index
    %c0_151 = arith.constant 0 : index
    %775 = vector.load %arg3[%c0_150, %c0_151] : memref<288x75xbf16, #tpu.memory_space<vmem>>, vector<288x75xbf16>
    %c0_152 = arith.constant 0 : index
    %c0_153 = arith.constant 0 : index
    %776 = vector.load %arg17[%c0_152, %c0_153] : memref<75x8xbf16, #tpu.memory_space<vmem>>, vector<75x8xbf16>
    %cst_154 = arith.constant dense<0.000000e+00> : vector<288x8xf32>
    %777 = tpu.matmul %775, %776, %cst_154 {dimension_numbers = #tpu.dot_dimension_numbers<[1], [0], [0], [1], [0, 0, 1, 1], [], []>} : vector<288x75xbf16>, vector<75x8xbf16>, vector<288x8xf32> -> vector<288x8xf32>
    %c0_155 = arith.constant 0 : index
    %c0_156 = arith.constant 0 : index
    %778 = vector.load %arg18[%c0_155, %c0_156] : memref<1x8xf32, #tpu.memory_space<vmem>>, vector<1x8xf32>
    %779 = vector.broadcast %778 : vector<1x8xf32> to vector<288x8xf32>
    %780 = arith.addf %777, %779 : vector<288x8xf32>
    %cst_157 = arith.constant 0.000000e+00 : f32
    %781 = vector.broadcast %cst_157 : f32 to vector<288x8xf32>
    %782 = arith.maximumf %780, %781 : vector<288x8xf32>
    %783 = vector.extract_strided_slice %782 {offsets = [0, 0], sizes = [8, 8], strides = [1, 1]} : vector<288x8xf32> to vector<8x8xf32>
    %784 = vector.extract_strided_slice %782 {offsets = [8, 0], sizes = [8, 8], strides = [1, 1]} : vector<288x8xf32> to vector<8x8xf32>
    %785 = vector.extract_strided_slice %782 {offsets = [16, 0], sizes = [8, 8], strides = [1, 1]} : vector<288x8xf32> to vector<8x8xf32>
    %786 = vector.extract_strided_slice %782 {offsets = [48, 0], sizes = [8, 8], strides = [1, 1]} : vector<288x8xf32> to vector<8x8xf32>
    %787 = vector.extract_strided_slice %782 {offsets = [56, 0], sizes = [8, 8], strides = [1, 1]} : vector<288x8xf32> to vector<8x8xf32>
    %788 = vector.extract_strided_slice %782 {offsets = [64, 0], sizes = [8, 8], strides = [1, 1]} : vector<288x8xf32> to vector<8x8xf32>
    %789 = vector.extract_strided_slice %782 {offsets = [96, 0], sizes = [8, 8], strides = [1, 1]} : vector<288x8xf32> to vector<8x8xf32>
    %790 = vector.extract_strided_slice %782 {offsets = [104, 0], sizes = [8, 8], strides = [1, 1]} : vector<288x8xf32> to vector<8x8xf32>
    %791 = vector.extract_strided_slice %782 {offsets = [112, 0], sizes = [8, 8], strides = [1, 1]} : vector<288x8xf32> to vector<8x8xf32>
    %792 = tpu.concatenate %783, %784, %785, %786, %787, %788, %789, %790, %791 in 1 : vector<8x8xf32>, vector<8x8xf32>, vector<8x8xf32>, vector<8x8xf32>, vector<8x8xf32>, vector<8x8xf32>, vector<8x8xf32>, vector<8x8xf32>, vector<8x8xf32> -> vector<8x72xf32>
    %793 = vector.extract_strided_slice %782 {offsets = [16, 0], sizes = [8, 8], strides = [1, 1]} : vector<288x8xf32> to vector<8x8xf32>
    %794 = vector.extract_strided_slice %782 {offsets = [24, 0], sizes = [8, 8], strides = [1, 1]} : vector<288x8xf32> to vector<8x8xf32>
    %795 = vector.extract_strided_slice %782 {offsets = [32, 0], sizes = [8, 8], strides = [1, 1]} : vector<288x8xf32> to vector<8x8xf32>
    %796 = vector.extract_strided_slice %782 {offsets = [64, 0], sizes = [8, 8], strides = [1, 1]} : vector<288x8xf32> to vector<8x8xf32>
    %797 = vector.extract_strided_slice %782 {offsets = [72, 0], sizes = [8, 8], strides = [1, 1]} : vector<288x8xf32> to vector<8x8xf32>
    %798 = vector.extract_strided_slice %782 {offsets = [80, 0], sizes = [8, 8], strides = [1, 1]} : vector<288x8xf32> to vector<8x8xf32>
    %799 = vector.extract_strided_slice %782 {offsets = [112, 0], sizes = [8, 8], strides = [1, 1]} : vector<288x8xf32> to vector<8x8xf32>
    %800 = vector.extract_strided_slice %782 {offsets = [120, 0], sizes = [8, 8], strides = [1, 1]} : vector<288x8xf32> to vector<8x8xf32>
    %801 = vector.extract_strided_slice %782 {offsets = [128, 0], sizes = [8, 8], strides = [1, 1]} : vector<288x8xf32> to vector<8x8xf32>
    %802 = tpu.concatenate %793, %794, %795, %796, %797, %798, %799, %800, %801 in 1 : vector<8x8xf32>, vector<8x8xf32>, vector<8x8xf32>, vector<8x8xf32>, vector<8x8xf32>, vector<8x8xf32>, vector<8x8xf32>, vector<8x8xf32>, vector<8x8xf32> -> vector<8x72xf32>
    %803 = vector.extract_strided_slice %782 {offsets = [96, 0], sizes = [8, 8], strides = [1, 1]} : vector<288x8xf32> to vector<8x8xf32>
    %804 = vector.extract_strided_slice %782 {offsets = [104, 0], sizes = [8, 8], strides = [1, 1]} : vector<288x8xf32> to vector<8x8xf32>
    %805 = vector.extract_strided_slice %782 {offsets = [112, 0], sizes = [8, 8], strides = [1, 1]} : vector<288x8xf32> to vector<8x8xf32>
    %806 = vector.extract_strided_slice %782 {offsets = [144, 0], sizes = [8, 8], strides = [1, 1]} : vector<288x8xf32> to vector<8x8xf32>
    %807 = vector.extract_strided_slice %782 {offsets = [152, 0], sizes = [8, 8], strides = [1, 1]} : vector<288x8xf32> to vector<8x8xf32>
    %808 = vector.extract_strided_slice %782 {offsets = [160, 0], sizes = [8, 8], strides = [1, 1]} : vector<288x8xf32> to vector<8x8xf32>
    %809 = vector.extract_strided_slice %782 {offsets = [192, 0], sizes = [8, 8], strides = [1, 1]} : vector<288x8xf32> to vector<8x8xf32>
    %810 = vector.extract_strided_slice %782 {offsets = [200, 0], sizes = [8, 8], strides = [1, 1]} : vector<288x8xf32> to vector<8x8xf32>
    %811 = vector.extract_strided_slice %782 {offsets = [208, 0], sizes = [8, 8], strides = [1, 1]} : vector<288x8xf32> to vector<8x8xf32>
    %812 = tpu.concatenate %803, %804, %805, %806, %807, %808, %809, %810, %811 in 1 : vector<8x8xf32>, vector<8x8xf32>, vector<8x8xf32>, vector<8x8xf32>, vector<8x8xf32>, vector<8x8xf32>, vector<8x8xf32>, vector<8x8xf32>, vector<8x8xf32> -> vector<8x72xf32>
    %813 = vector.extract_strided_slice %782 {offsets = [112, 0], sizes = [8, 8], strides = [1, 1]} : vector<288x8xf32> to vector<8x8xf32>
    %814 = vector.extract_strided_slice %782 {offsets = [120, 0], sizes = [8, 8], strides = [1, 1]} : vector<288x8xf32> to vector<8x8xf32>
    %815 = vector.extract_strided_slice %782 {offsets = [128, 0], sizes = [8, 8], strides = [1, 1]} : vector<288x8xf32> to vector<8x8xf32>
    %816 = vector.extract_strided_slice %782 {offsets = [160, 0], sizes = [8, 8], strides = [1, 1]} : vector<288x8xf32> to vector<8x8xf32>
    %817 = vector.extract_strided_slice %782 {offsets = [168, 0], sizes = [8, 8], strides = [1, 1]} : vector<288x8xf32> to vector<8x8xf32>
    %818 = vector.extract_strided_slice %782 {offsets = [176, 0], sizes = [8, 8], strides = [1, 1]} : vector<288x8xf32> to vector<8x8xf32>
    %819 = vector.extract_strided_slice %782 {offsets = [208, 0], sizes = [8, 8], strides = [1, 1]} : vector<288x8xf32> to vector<8x8xf32>
    %820 = vector.extract_strided_slice %782 {offsets = [216, 0], sizes = [8, 8], strides = [1, 1]} : vector<288x8xf32> to vector<8x8xf32>
    %821 = vector.extract_strided_slice %782 {offsets = [224, 0], sizes = [8, 8], strides = [1, 1]} : vector<288x8xf32> to vector<8x8xf32>
    %822 = tpu.concatenate %813, %814, %815, %816, %817, %818, %819, %820, %821 in 1 : vector<8x8xf32>, vector<8x8xf32>, vector<8x8xf32>, vector<8x8xf32>, vector<8x8xf32>, vector<8x8xf32>, vector<8x8xf32>, vector<8x8xf32>, vector<8x8xf32> -> vector<8x72xf32>
    %823 = tpu.concatenate %792, %802, %812, %822 in 0 : vector<8x72xf32>, vector<8x72xf32>, vector<8x72xf32>, vector<8x72xf32> -> vector<32x72xf32>
    %824 = arith.truncf %823 : vector<32x72xf32> to vector<32x72xbf16>
    %c0_158 = arith.constant 0 : index
    %c0_159 = arith.constant 0 : index
    %825 = vector.load %arg19[%c0_158, %c0_159] : memref<72x16xbf16, #tpu.memory_space<vmem>>, vector<72x16xbf16>
    %cst_160 = arith.constant dense<0.000000e+00> : vector<32x16xf32>
    %826 = tpu.matmul %824, %825, %cst_160 {dimension_numbers = #tpu.dot_dimension_numbers<[1], [0], [0], [1], [0, 0, 1, 1], [], []>} : vector<32x72xbf16>, vector<72x16xbf16>, vector<32x16xf32> -> vector<32x16xf32>
    %c0_161 = arith.constant 0 : index
    %c0_162 = arith.constant 0 : index
    %827 = vector.load %arg20[%c0_161, %c0_162] : memref<1x16xf32, #tpu.memory_space<vmem>>, vector<1x16xf32>
    %828 = vector.broadcast %827 : vector<1x16xf32> to vector<32x16xf32>
    %829 = arith.addf %826, %828 : vector<32x16xf32>
    %cst_163 = arith.constant 0.000000e+00 : f32
    %830 = vector.broadcast %cst_163 : f32 to vector<32x16xf32>
    %831 = arith.maximumf %829, %830 : vector<32x16xf32>
    %832 = vector.extract_strided_slice %831 {offsets = [0, 0], sizes = [8, 16], strides = [1, 1]} : vector<32x16xf32> to vector<8x16xf32>
    %833 = vector.extract_strided_slice %831 {offsets = [8, 0], sizes = [8, 16], strides = [1, 1]} : vector<32x16xf32> to vector<8x16xf32>
    %834 = vector.extract_strided_slice %831 {offsets = [16, 0], sizes = [8, 16], strides = [1, 1]} : vector<32x16xf32> to vector<8x16xf32>
    %835 = vector.extract_strided_slice %831 {offsets = [24, 0], sizes = [8, 16], strides = [1, 1]} : vector<32x16xf32> to vector<8x16xf32>
    %836 = tpu.concatenate %832, %833, %834, %835 in 1 : vector<8x16xf32>, vector<8x16xf32>, vector<8x16xf32>, vector<8x16xf32> -> vector<8x64xf32>
    %837 = arith.truncf %836 : vector<8x64xf32> to vector<8x64xbf16>
    %c0_164 = arith.constant 0 : index
    %c0_165 = arith.constant 0 : index
    %838 = vector.load %arg21[%c0_164, %c0_165] : memref<64x32xbf16, #tpu.memory_space<vmem>>, vector<64x32xbf16>
    %cst_166 = arith.constant dense<0.000000e+00> : vector<8x32xf32>
    %839 = tpu.matmul %837, %838, %cst_166 {dimension_numbers = #tpu.dot_dimension_numbers<[1], [0], [0], [1], [0, 0, 1, 1], [], []>} : vector<8x64xbf16>, vector<64x32xbf16>, vector<8x32xf32> -> vector<8x32xf32>
    %c0_167 = arith.constant 0 : index
    %c0_168 = arith.constant 0 : index
    %840 = vector.load %arg22[%c0_167, %c0_168] : memref<1x32xf32, #tpu.memory_space<vmem>>, vector<1x32xf32>
    %841 = vector.broadcast %840 : vector<1x32xf32> to vector<8x32xf32>
    %842 = arith.addf %839, %841 : vector<8x32xf32>
    %cst_169 = arith.constant 0.000000e+00 : f32
    %843 = vector.broadcast %cst_169 : f32 to vector<8x32xf32>
    %844 = arith.maximumf %842, %843 : vector<8x32xf32>
    %c0_170 = arith.constant 0 : index
    %c0_171 = arith.constant 0 : index
    %845 = vector.load %arg4[%c0_170, %c0_171] : memref<8x8xbf16, #tpu.memory_space<vmem>>, vector<8x8xbf16>
    %c0_172 = arith.constant 0 : index
    %c0_173 = arith.constant 0 : index
    %846 = vector.load %arg23[%c0_172, %c0_173] : memref<8x32xbf16, #tpu.memory_space<vmem>>, vector<8x32xbf16>
    %cst_174 = arith.constant dense<0.000000e+00> : vector<8x32xf32>
    %847 = tpu.matmul %845, %846, %cst_174 {dimension_numbers = #tpu.dot_dimension_numbers<[1], [0], [0], [1], [0, 0, 1, 1], [], []>} : vector<8x8xbf16>, vector<8x32xbf16>, vector<8x32xf32> -> vector<8x32xf32>
    %c0_175 = arith.constant 0 : index
    %c0_176 = arith.constant 0 : index
    %848 = vector.load %arg24[%c0_175, %c0_176] : memref<1x32xf32, #tpu.memory_space<vmem>>, vector<1x32xf32>
    %849 = vector.broadcast %848 : vector<1x32xf32> to vector<8x32xf32>
    %850 = arith.addf %847, %849 : vector<8x32xf32>
    %c0_177 = arith.constant 0 : index
    %c0_178 = arith.constant 0 : index
    %851 = vector.load %arg25[%c0_177, %c0_178] : memref<8x32xbf16, #tpu.memory_space<vmem>>, vector<8x32xbf16>
    %cst_179 = arith.constant dense<0.000000e+00> : vector<8x32xf32>
    %852 = tpu.matmul %845, %851, %cst_179 {dimension_numbers = #tpu.dot_dimension_numbers<[1], [0], [0], [1], [0, 0, 1, 1], [], []>} : vector<8x8xbf16>, vector<8x32xbf16>, vector<8x32xf32> -> vector<8x32xf32>
    %c0_180 = arith.constant 0 : index
    %c0_181 = arith.constant 0 : index
    %853 = vector.load %arg26[%c0_180, %c0_181] : memref<1x32xf32, #tpu.memory_space<vmem>>, vector<1x32xf32>
    %854 = vector.broadcast %853 : vector<1x32xf32> to vector<8x32xf32>
    %855 = arith.addf %852, %854 : vector<8x32xf32>
    %c0_182 = arith.constant 0 : index
    %c0_183 = arith.constant 0 : index
    %856 = vector.load %arg5[%c0_182, %c0_183] : memref<48x8xbf16, #tpu.memory_space<vmem>>, vector<48x8xbf16>
    %c0_184 = arith.constant 0 : index
    %c0_185 = arith.constant 0 : index
    %857 = vector.load %arg27[%c0_184, %c0_185] : memref<8x128xbf16, #tpu.memory_space<vmem>>, vector<8x128xbf16>
    %cst_186 = arith.constant dense<0.000000e+00> : vector<48x128xf32>
    %858 = tpu.matmul %856, %857, %cst_186 {dimension_numbers = #tpu.dot_dimension_numbers<[1], [0], [0], [1], [0, 0, 1, 1], [], []>} : vector<48x8xbf16>, vector<8x128xbf16>, vector<48x128xf32> -> vector<48x128xf32>
    %c0_187 = arith.constant 0 : index
    %c0_188 = arith.constant 0 : index
    %859 = vector.load %arg29[%c0_187, %c0_188] : memref<1x128xf32, #tpu.memory_space<vmem>>, vector<1x128xf32>
    %860 = vector.broadcast %859 : vector<1x128xf32> to vector<48x128xf32>
    %861 = arith.addf %858, %860 : vector<48x128xf32>
    %c0_189 = arith.constant 0 : index
    %c0_190 = arith.constant 0 : index
    %862 = vector.load %arg30[%c0_189, %c0_190] : memref<8x128xbf16, #tpu.memory_space<vmem>>, vector<8x128xbf16>
    %cst_191 = arith.constant dense<0.000000e+00> : vector<48x128xf32>
    %863 = tpu.matmul %856, %862, %cst_191 {dimension_numbers = #tpu.dot_dimension_numbers<[1], [0], [0], [1], [0, 0, 1, 1], [], []>} : vector<48x8xbf16>, vector<8x128xbf16>, vector<48x128xf32> -> vector<48x128xf32>
    %c0_192 = arith.constant 0 : index
    %c0_193 = arith.constant 0 : index
    %864 = vector.load %arg32[%c0_192, %c0_193] : memref<1x128xf32, #tpu.memory_space<vmem>>, vector<1x128xf32>
    %865 = vector.broadcast %864 : vector<1x128xf32> to vector<48x128xf32>
    %866 = arith.addf %863, %865 : vector<48x128xf32>
    %c0_194 = arith.constant 0 : index
    %c0_195 = arith.constant 0 : index
    %867 = vector.load %arg28[%c0_194, %c0_195] : memref<32x128xbf16, #tpu.memory_space<vmem>>, vector<32x128xbf16>
    %868 = vector.extract_strided_slice %861 {offsets = [0, 0], sizes = [8, 128], strides = [1, 1]} : vector<48x128xf32> to vector<8x128xf32>
    %869 = arith.truncf %850 : vector<8x32xf32> to vector<8x32xbf16>
    %cst_196 = arith.constant dense<0.000000e+00> : vector<8x128xf32>
    %870 = tpu.matmul %869, %867, %cst_196 {dimension_numbers = #tpu.dot_dimension_numbers<[1], [0], [0], [1], [0, 0, 1, 1], [], []>} : vector<8x32xbf16>, vector<32x128xbf16>, vector<8x128xf32> -> vector<8x128xf32>
    %871 = arith.addf %868, %870 : vector<8x128xf32>
    %872 = vector.extract_strided_slice %871 {offsets = [0, 0], sizes = [8, 32], strides = [1, 1]} : vector<8x128xf32> to vector<8x32xf32>
    %873 = arith.negf %872 : vector<8x32xf32>
    %874 = math.exp %873 : vector<8x32xf32>
    %cst_197 = arith.constant 1.000000e+00 : f32
    %875 = vector.broadcast %cst_197 : f32 to vector<8x32xf32>
    %876 = arith.addf %875, %874 : vector<8x32xf32>
    %877 = arith.divf %875, %876 : vector<8x32xf32>
    %878 = vector.extract_strided_slice %871 {offsets = [0, 32], sizes = [8, 32], strides = [1, 1]} : vector<8x128xf32> to vector<8x32xf32>
    %879 = arith.negf %878 : vector<8x32xf32>
    %880 = math.exp %879 : vector<8x32xf32>
    %cst_198 = arith.constant 1.000000e+00 : f32
    %881 = vector.broadcast %cst_198 : f32 to vector<8x32xf32>
    %882 = arith.addf %881, %880 : vector<8x32xf32>
    %883 = arith.divf %881, %882 : vector<8x32xf32>
    %884 = vector.extract_strided_slice %871 {offsets = [0, 64], sizes = [8, 32], strides = [1, 1]} : vector<8x128xf32> to vector<8x32xf32>
    %885 = math.tanh %884 : vector<8x32xf32>
    %886 = vector.extract_strided_slice %871 {offsets = [0, 96], sizes = [8, 32], strides = [1, 1]} : vector<8x128xf32> to vector<8x32xf32>
    %887 = arith.negf %886 : vector<8x32xf32>
    %888 = math.exp %887 : vector<8x32xf32>
    %cst_199 = arith.constant 1.000000e+00 : f32
    %889 = vector.broadcast %cst_199 : f32 to vector<8x32xf32>
    %890 = arith.addf %889, %888 : vector<8x32xf32>
    %891 = arith.divf %889, %890 : vector<8x32xf32>
    %892 = arith.mulf %883, %855 : vector<8x32xf32>
    %893 = arith.mulf %877, %885 : vector<8x32xf32>
    %894 = arith.addf %892, %893 : vector<8x32xf32>
    %895 = math.tanh %894 : vector<8x32xf32>
    %896 = arith.mulf %891, %895 : vector<8x32xf32>
    %897 = vector.extract_strided_slice %861 {offsets = [8, 0], sizes = [8, 128], strides = [1, 1]} : vector<48x128xf32> to vector<8x128xf32>
    %898 = arith.truncf %896 : vector<8x32xf32> to vector<8x32xbf16>
    %cst_200 = arith.constant dense<0.000000e+00> : vector<8x128xf32>
    %899 = tpu.matmul %898, %867, %cst_200 {dimension_numbers = #tpu.dot_dimension_numbers<[1], [0], [0], [1], [0, 0, 1, 1], [], []>} : vector<8x32xbf16>, vector<32x128xbf16>, vector<8x128xf32> -> vector<8x128xf32>
    %900 = arith.addf %897, %899 : vector<8x128xf32>
    %901 = vector.extract_strided_slice %900 {offsets = [0, 0], sizes = [8, 32], strides = [1, 1]} : vector<8x128xf32> to vector<8x32xf32>
    %902 = arith.negf %901 : vector<8x32xf32>
    %903 = math.exp %902 : vector<8x32xf32>
    %cst_201 = arith.constant 1.000000e+00 : f32
    %904 = vector.broadcast %cst_201 : f32 to vector<8x32xf32>
    %905 = arith.addf %904, %903 : vector<8x32xf32>
    %906 = arith.divf %904, %905 : vector<8x32xf32>
    %907 = vector.extract_strided_slice %900 {offsets = [0, 32], sizes = [8, 32], strides = [1, 1]} : vector<8x128xf32> to vector<8x32xf32>
    %908 = arith.negf %907 : vector<8x32xf32>
    %909 = math.exp %908 : vector<8x32xf32>
    %cst_202 = arith.constant 1.000000e+00 : f32
    %910 = vector.broadcast %cst_202 : f32 to vector<8x32xf32>
    %911 = arith.addf %910, %909 : vector<8x32xf32>
    %912 = arith.divf %910, %911 : vector<8x32xf32>
    %913 = vector.extract_strided_slice %900 {offsets = [0, 64], sizes = [8, 32], strides = [1, 1]} : vector<8x128xf32> to vector<8x32xf32>
    %914 = math.tanh %913 : vector<8x32xf32>
    %915 = vector.extract_strided_slice %900 {offsets = [0, 96], sizes = [8, 32], strides = [1, 1]} : vector<8x128xf32> to vector<8x32xf32>
    %916 = arith.negf %915 : vector<8x32xf32>
    %917 = math.exp %916 : vector<8x32xf32>
    %cst_203 = arith.constant 1.000000e+00 : f32
    %918 = vector.broadcast %cst_203 : f32 to vector<8x32xf32>
    %919 = arith.addf %918, %917 : vector<8x32xf32>
    %920 = arith.divf %918, %919 : vector<8x32xf32>
    %921 = arith.mulf %912, %894 : vector<8x32xf32>
    %922 = arith.mulf %906, %914 : vector<8x32xf32>
    %923 = arith.addf %921, %922 : vector<8x32xf32>
    %924 = math.tanh %923 : vector<8x32xf32>
    %925 = arith.mulf %920, %924 : vector<8x32xf32>
    %926 = vector.extract_strided_slice %861 {offsets = [16, 0], sizes = [8, 128], strides = [1, 1]} : vector<48x128xf32> to vector<8x128xf32>
    %927 = arith.truncf %925 : vector<8x32xf32> to vector<8x32xbf16>
    %cst_204 = arith.constant dense<0.000000e+00> : vector<8x128xf32>
    %928 = tpu.matmul %927, %867, %cst_204 {dimension_numbers = #tpu.dot_dimension_numbers<[1], [0], [0], [1], [0, 0, 1, 1], [], []>} : vector<8x32xbf16>, vector<32x128xbf16>, vector<8x128xf32> -> vector<8x128xf32>
    %929 = arith.addf %926, %928 : vector<8x128xf32>
    %930 = vector.extract_strided_slice %929 {offsets = [0, 0], sizes = [8, 32], strides = [1, 1]} : vector<8x128xf32> to vector<8x32xf32>
    %931 = arith.negf %930 : vector<8x32xf32>
    %932 = math.exp %931 : vector<8x32xf32>
    %cst_205 = arith.constant 1.000000e+00 : f32
    %933 = vector.broadcast %cst_205 : f32 to vector<8x32xf32>
    %934 = arith.addf %933, %932 : vector<8x32xf32>
    %935 = arith.divf %933, %934 : vector<8x32xf32>
    %936 = vector.extract_strided_slice %929 {offsets = [0, 32], sizes = [8, 32], strides = [1, 1]} : vector<8x128xf32> to vector<8x32xf32>
    %937 = arith.negf %936 : vector<8x32xf32>
    %938 = math.exp %937 : vector<8x32xf32>
    %cst_206 = arith.constant 1.000000e+00 : f32
    %939 = vector.broadcast %cst_206 : f32 to vector<8x32xf32>
    %940 = arith.addf %939, %938 : vector<8x32xf32>
    %941 = arith.divf %939, %940 : vector<8x32xf32>
    %942 = vector.extract_strided_slice %929 {offsets = [0, 64], sizes = [8, 32], strides = [1, 1]} : vector<8x128xf32> to vector<8x32xf32>
    %943 = math.tanh %942 : vector<8x32xf32>
    %944 = vector.extract_strided_slice %929 {offsets = [0, 96], sizes = [8, 32], strides = [1, 1]} : vector<8x128xf32> to vector<8x32xf32>
    %945 = arith.negf %944 : vector<8x32xf32>
    %946 = math.exp %945 : vector<8x32xf32>
    %cst_207 = arith.constant 1.000000e+00 : f32
    %947 = vector.broadcast %cst_207 : f32 to vector<8x32xf32>
    %948 = arith.addf %947, %946 : vector<8x32xf32>
    %949 = arith.divf %947, %948 : vector<8x32xf32>
    %950 = arith.mulf %941, %923 : vector<8x32xf32>
    %951 = arith.mulf %935, %943 : vector<8x32xf32>
    %952 = arith.addf %950, %951 : vector<8x32xf32>
    %953 = math.tanh %952 : vector<8x32xf32>
    %954 = arith.mulf %949, %953 : vector<8x32xf32>
    %955 = vector.extract_strided_slice %861 {offsets = [24, 0], sizes = [8, 128], strides = [1, 1]} : vector<48x128xf32> to vector<8x128xf32>
    %956 = arith.truncf %954 : vector<8x32xf32> to vector<8x32xbf16>
    %cst_208 = arith.constant dense<0.000000e+00> : vector<8x128xf32>
    %957 = tpu.matmul %956, %867, %cst_208 {dimension_numbers = #tpu.dot_dimension_numbers<[1], [0], [0], [1], [0, 0, 1, 1], [], []>} : vector<8x32xbf16>, vector<32x128xbf16>, vector<8x128xf32> -> vector<8x128xf32>
    %958 = arith.addf %955, %957 : vector<8x128xf32>
    %959 = vector.extract_strided_slice %958 {offsets = [0, 0], sizes = [8, 32], strides = [1, 1]} : vector<8x128xf32> to vector<8x32xf32>
    %960 = arith.negf %959 : vector<8x32xf32>
    %961 = math.exp %960 : vector<8x32xf32>
    %cst_209 = arith.constant 1.000000e+00 : f32
    %962 = vector.broadcast %cst_209 : f32 to vector<8x32xf32>
    %963 = arith.addf %962, %961 : vector<8x32xf32>
    %964 = arith.divf %962, %963 : vector<8x32xf32>
    %965 = vector.extract_strided_slice %958 {offsets = [0, 32], sizes = [8, 32], strides = [1, 1]} : vector<8x128xf32> to vector<8x32xf32>
    %966 = arith.negf %965 : vector<8x32xf32>
    %967 = math.exp %966 : vector<8x32xf32>
    %cst_210 = arith.constant 1.000000e+00 : f32
    %968 = vector.broadcast %cst_210 : f32 to vector<8x32xf32>
    %969 = arith.addf %968, %967 : vector<8x32xf32>
    %970 = arith.divf %968, %969 : vector<8x32xf32>
    %971 = vector.extract_strided_slice %958 {offsets = [0, 64], sizes = [8, 32], strides = [1, 1]} : vector<8x128xf32> to vector<8x32xf32>
    %972 = math.tanh %971 : vector<8x32xf32>
    %973 = vector.extract_strided_slice %958 {offsets = [0, 96], sizes = [8, 32], strides = [1, 1]} : vector<8x128xf32> to vector<8x32xf32>
    %974 = arith.negf %973 : vector<8x32xf32>
    %975 = math.exp %974 : vector<8x32xf32>
    %cst_211 = arith.constant 1.000000e+00 : f32
    %976 = vector.broadcast %cst_211 : f32 to vector<8x32xf32>
    %977 = arith.addf %976, %975 : vector<8x32xf32>
    %978 = arith.divf %976, %977 : vector<8x32xf32>
    %979 = arith.mulf %970, %952 : vector<8x32xf32>
    %980 = arith.mulf %964, %972 : vector<8x32xf32>
    %981 = arith.addf %979, %980 : vector<8x32xf32>
    %982 = math.tanh %981 : vector<8x32xf32>
    %983 = arith.mulf %978, %982 : vector<8x32xf32>
    %984 = vector.extract_strided_slice %861 {offsets = [32, 0], sizes = [8, 128], strides = [1, 1]} : vector<48x128xf32> to vector<8x128xf32>
    %985 = arith.truncf %983 : vector<8x32xf32> to vector<8x32xbf16>
    %cst_212 = arith.constant dense<0.000000e+00> : vector<8x128xf32>
    %986 = tpu.matmul %985, %867, %cst_212 {dimension_numbers = #tpu.dot_dimension_numbers<[1], [0], [0], [1], [0, 0, 1, 1], [], []>} : vector<8x32xbf16>, vector<32x128xbf16>, vector<8x128xf32> -> vector<8x128xf32>
    %987 = arith.addf %984, %986 : vector<8x128xf32>
    %988 = vector.extract_strided_slice %987 {offsets = [0, 0], sizes = [8, 32], strides = [1, 1]} : vector<8x128xf32> to vector<8x32xf32>
    %989 = arith.negf %988 : vector<8x32xf32>
    %990 = math.exp %989 : vector<8x32xf32>
    %cst_213 = arith.constant 1.000000e+00 : f32
    %991 = vector.broadcast %cst_213 : f32 to vector<8x32xf32>
    %992 = arith.addf %991, %990 : vector<8x32xf32>
    %993 = arith.divf %991, %992 : vector<8x32xf32>
    %994 = vector.extract_strided_slice %987 {offsets = [0, 32], sizes = [8, 32], strides = [1, 1]} : vector<8x128xf32> to vector<8x32xf32>
    %995 = arith.negf %994 : vector<8x32xf32>
    %996 = math.exp %995 : vector<8x32xf32>
    %cst_214 = arith.constant 1.000000e+00 : f32
    %997 = vector.broadcast %cst_214 : f32 to vector<8x32xf32>
    %998 = arith.addf %997, %996 : vector<8x32xf32>
    %999 = arith.divf %997, %998 : vector<8x32xf32>
    %1000 = vector.extract_strided_slice %987 {offsets = [0, 64], sizes = [8, 32], strides = [1, 1]} : vector<8x128xf32> to vector<8x32xf32>
    %1001 = math.tanh %1000 : vector<8x32xf32>
    %1002 = vector.extract_strided_slice %987 {offsets = [0, 96], sizes = [8, 32], strides = [1, 1]} : vector<8x128xf32> to vector<8x32xf32>
    %1003 = arith.negf %1002 : vector<8x32xf32>
    %1004 = math.exp %1003 : vector<8x32xf32>
    %cst_215 = arith.constant 1.000000e+00 : f32
    %1005 = vector.broadcast %cst_215 : f32 to vector<8x32xf32>
    %1006 = arith.addf %1005, %1004 : vector<8x32xf32>
    %1007 = arith.divf %1005, %1006 : vector<8x32xf32>
    %1008 = arith.mulf %999, %981 : vector<8x32xf32>
    %1009 = arith.mulf %993, %1001 : vector<8x32xf32>
    %1010 = arith.addf %1008, %1009 : vector<8x32xf32>
    %1011 = math.tanh %1010 : vector<8x32xf32>
    %1012 = arith.mulf %1007, %1011 : vector<8x32xf32>
    %1013 = vector.extract_strided_slice %861 {offsets = [40, 0], sizes = [8, 128], strides = [1, 1]} : vector<48x128xf32> to vector<8x128xf32>
    %1014 = arith.truncf %1012 : vector<8x32xf32> to vector<8x32xbf16>
    %cst_216 = arith.constant dense<0.000000e+00> : vector<8x128xf32>
    %1015 = tpu.matmul %1014, %867, %cst_216 {dimension_numbers = #tpu.dot_dimension_numbers<[1], [0], [0], [1], [0, 0, 1, 1], [], []>} : vector<8x32xbf16>, vector<32x128xbf16>, vector<8x128xf32> -> vector<8x128xf32>
    %1016 = arith.addf %1013, %1015 : vector<8x128xf32>
    %1017 = vector.extract_strided_slice %1016 {offsets = [0, 0], sizes = [8, 32], strides = [1, 1]} : vector<8x128xf32> to vector<8x32xf32>
    %1018 = arith.negf %1017 : vector<8x32xf32>
    %1019 = math.exp %1018 : vector<8x32xf32>
    %cst_217 = arith.constant 1.000000e+00 : f32
    %1020 = vector.broadcast %cst_217 : f32 to vector<8x32xf32>
    %1021 = arith.addf %1020, %1019 : vector<8x32xf32>
    %1022 = arith.divf %1020, %1021 : vector<8x32xf32>
    %1023 = vector.extract_strided_slice %1016 {offsets = [0, 32], sizes = [8, 32], strides = [1, 1]} : vector<8x128xf32> to vector<8x32xf32>
    %1024 = arith.negf %1023 : vector<8x32xf32>
    %1025 = math.exp %1024 : vector<8x32xf32>
    %cst_218 = arith.constant 1.000000e+00 : f32
    %1026 = vector.broadcast %cst_218 : f32 to vector<8x32xf32>
    %1027 = arith.addf %1026, %1025 : vector<8x32xf32>
    %1028 = arith.divf %1026, %1027 : vector<8x32xf32>
    %1029 = vector.extract_strided_slice %1016 {offsets = [0, 64], sizes = [8, 32], strides = [1, 1]} : vector<8x128xf32> to vector<8x32xf32>
    %1030 = math.tanh %1029 : vector<8x32xf32>
    %1031 = vector.extract_strided_slice %1016 {offsets = [0, 96], sizes = [8, 32], strides = [1, 1]} : vector<8x128xf32> to vector<8x32xf32>
    %1032 = arith.negf %1031 : vector<8x32xf32>
    %1033 = math.exp %1032 : vector<8x32xf32>
    %cst_219 = arith.constant 1.000000e+00 : f32
    %1034 = vector.broadcast %cst_219 : f32 to vector<8x32xf32>
    %1035 = arith.addf %1034, %1033 : vector<8x32xf32>
    %1036 = arith.divf %1034, %1035 : vector<8x32xf32>
    %1037 = arith.mulf %1028, %1010 : vector<8x32xf32>
    %1038 = arith.mulf %1022, %1030 : vector<8x32xf32>
    %1039 = arith.addf %1037, %1038 : vector<8x32xf32>
    %1040 = math.tanh %1039 : vector<8x32xf32>
    %1041 = arith.mulf %1036, %1040 : vector<8x32xf32>
    %c0_220 = arith.constant 0 : index
    %c0_221 = arith.constant 0 : index
    %1042 = vector.load %arg31[%c0_220, %c0_221] : memref<32x128xbf16, #tpu.memory_space<vmem>>, vector<32x128xbf16>
    %1043 = vector.extract_strided_slice %866 {offsets = [40, 0], sizes = [8, 128], strides = [1, 1]} : vector<48x128xf32> to vector<8x128xf32>
    %1044 = arith.truncf %850 : vector<8x32xf32> to vector<8x32xbf16>
    %cst_222 = arith.constant dense<0.000000e+00> : vector<8x128xf32>
    %1045 = tpu.matmul %1044, %1042, %cst_222 {dimension_numbers = #tpu.dot_dimension_numbers<[1], [0], [0], [1], [0, 0, 1, 1], [], []>} : vector<8x32xbf16>, vector<32x128xbf16>, vector<8x128xf32> -> vector<8x128xf32>
    %1046 = arith.addf %1043, %1045 : vector<8x128xf32>
    %1047 = vector.extract_strided_slice %1046 {offsets = [0, 0], sizes = [8, 32], strides = [1, 1]} : vector<8x128xf32> to vector<8x32xf32>
    %1048 = arith.negf %1047 : vector<8x32xf32>
    %1049 = math.exp %1048 : vector<8x32xf32>
    %cst_223 = arith.constant 1.000000e+00 : f32
    %1050 = vector.broadcast %cst_223 : f32 to vector<8x32xf32>
    %1051 = arith.addf %1050, %1049 : vector<8x32xf32>
    %1052 = arith.divf %1050, %1051 : vector<8x32xf32>
    %1053 = vector.extract_strided_slice %1046 {offsets = [0, 32], sizes = [8, 32], strides = [1, 1]} : vector<8x128xf32> to vector<8x32xf32>
    %1054 = arith.negf %1053 : vector<8x32xf32>
    %1055 = math.exp %1054 : vector<8x32xf32>
    %cst_224 = arith.constant 1.000000e+00 : f32
    %1056 = vector.broadcast %cst_224 : f32 to vector<8x32xf32>
    %1057 = arith.addf %1056, %1055 : vector<8x32xf32>
    %1058 = arith.divf %1056, %1057 : vector<8x32xf32>
    %1059 = vector.extract_strided_slice %1046 {offsets = [0, 64], sizes = [8, 32], strides = [1, 1]} : vector<8x128xf32> to vector<8x32xf32>
    %1060 = math.tanh %1059 : vector<8x32xf32>
    %1061 = vector.extract_strided_slice %1046 {offsets = [0, 96], sizes = [8, 32], strides = [1, 1]} : vector<8x128xf32> to vector<8x32xf32>
    %1062 = arith.negf %1061 : vector<8x32xf32>
    %1063 = math.exp %1062 : vector<8x32xf32>
    %cst_225 = arith.constant 1.000000e+00 : f32
    %1064 = vector.broadcast %cst_225 : f32 to vector<8x32xf32>
    %1065 = arith.addf %1064, %1063 : vector<8x32xf32>
    %1066 = arith.divf %1064, %1065 : vector<8x32xf32>
    %1067 = arith.mulf %1058, %855 : vector<8x32xf32>
    %1068 = arith.mulf %1052, %1060 : vector<8x32xf32>
    %1069 = arith.addf %1067, %1068 : vector<8x32xf32>
    %1070 = math.tanh %1069 : vector<8x32xf32>
    %1071 = arith.mulf %1066, %1070 : vector<8x32xf32>
    %1072 = vector.extract_strided_slice %866 {offsets = [32, 0], sizes = [8, 128], strides = [1, 1]} : vector<48x128xf32> to vector<8x128xf32>
    %1073 = arith.truncf %1071 : vector<8x32xf32> to vector<8x32xbf16>
    %cst_226 = arith.constant dense<0.000000e+00> : vector<8x128xf32>
    %1074 = tpu.matmul %1073, %1042, %cst_226 {dimension_numbers = #tpu.dot_dimension_numbers<[1], [0], [0], [1], [0, 0, 1, 1], [], []>} : vector<8x32xbf16>, vector<32x128xbf16>, vector<8x128xf32> -> vector<8x128xf32>
    %1075 = arith.addf %1072, %1074 : vector<8x128xf32>
    %1076 = vector.extract_strided_slice %1075 {offsets = [0, 0], sizes = [8, 32], strides = [1, 1]} : vector<8x128xf32> to vector<8x32xf32>
    %1077 = arith.negf %1076 : vector<8x32xf32>
    %1078 = math.exp %1077 : vector<8x32xf32>
    %cst_227 = arith.constant 1.000000e+00 : f32
    %1079 = vector.broadcast %cst_227 : f32 to vector<8x32xf32>
    %1080 = arith.addf %1079, %1078 : vector<8x32xf32>
    %1081 = arith.divf %1079, %1080 : vector<8x32xf32>
    %1082 = vector.extract_strided_slice %1075 {offsets = [0, 32], sizes = [8, 32], strides = [1, 1]} : vector<8x128xf32> to vector<8x32xf32>
    %1083 = arith.negf %1082 : vector<8x32xf32>
    %1084 = math.exp %1083 : vector<8x32xf32>
    %cst_228 = arith.constant 1.000000e+00 : f32
    %1085 = vector.broadcast %cst_228 : f32 to vector<8x32xf32>
    %1086 = arith.addf %1085, %1084 : vector<8x32xf32>
    %1087 = arith.divf %1085, %1086 : vector<8x32xf32>
    %1088 = vector.extract_strided_slice %1075 {offsets = [0, 64], sizes = [8, 32], strides = [1, 1]} : vector<8x128xf32> to vector<8x32xf32>
    %1089 = math.tanh %1088 : vector<8x32xf32>
    %1090 = vector.extract_strided_slice %1075 {offsets = [0, 96], sizes = [8, 32], strides = [1, 1]} : vector<8x128xf32> to vector<8x32xf32>
    %1091 = arith.negf %1090 : vector<8x32xf32>
    %1092 = math.exp %1091 : vector<8x32xf32>
    %cst_229 = arith.constant 1.000000e+00 : f32
    %1093 = vector.broadcast %cst_229 : f32 to vector<8x32xf32>
    %1094 = arith.addf %1093, %1092 : vector<8x32xf32>
    %1095 = arith.divf %1093, %1094 : vector<8x32xf32>
    %1096 = arith.mulf %1087, %1069 : vector<8x32xf32>
    %1097 = arith.mulf %1081, %1089 : vector<8x32xf32>
    %1098 = arith.addf %1096, %1097 : vector<8x32xf32>
    %1099 = math.tanh %1098 : vector<8x32xf32>
    %1100 = arith.mulf %1095, %1099 : vector<8x32xf32>
    %1101 = vector.extract_strided_slice %866 {offsets = [24, 0], sizes = [8, 128], strides = [1, 1]} : vector<48x128xf32> to vector<8x128xf32>
    %1102 = arith.truncf %1100 : vector<8x32xf32> to vector<8x32xbf16>
    %cst_230 = arith.constant dense<0.000000e+00> : vector<8x128xf32>
    %1103 = tpu.matmul %1102, %1042, %cst_230 {dimension_numbers = #tpu.dot_dimension_numbers<[1], [0], [0], [1], [0, 0, 1, 1], [], []>} : vector<8x32xbf16>, vector<32x128xbf16>, vector<8x128xf32> -> vector<8x128xf32>
    %1104 = arith.addf %1101, %1103 : vector<8x128xf32>
    %1105 = vector.extract_strided_slice %1104 {offsets = [0, 0], sizes = [8, 32], strides = [1, 1]} : vector<8x128xf32> to vector<8x32xf32>
    %1106 = arith.negf %1105 : vector<8x32xf32>
    %1107 = math.exp %1106 : vector<8x32xf32>
    %cst_231 = arith.constant 1.000000e+00 : f32
    %1108 = vector.broadcast %cst_231 : f32 to vector<8x32xf32>
    %1109 = arith.addf %1108, %1107 : vector<8x32xf32>
    %1110 = arith.divf %1108, %1109 : vector<8x32xf32>
    %1111 = vector.extract_strided_slice %1104 {offsets = [0, 32], sizes = [8, 32], strides = [1, 1]} : vector<8x128xf32> to vector<8x32xf32>
    %1112 = arith.negf %1111 : vector<8x32xf32>
    %1113 = math.exp %1112 : vector<8x32xf32>
    %cst_232 = arith.constant 1.000000e+00 : f32
    %1114 = vector.broadcast %cst_232 : f32 to vector<8x32xf32>
    %1115 = arith.addf %1114, %1113 : vector<8x32xf32>
    %1116 = arith.divf %1114, %1115 : vector<8x32xf32>
    %1117 = vector.extract_strided_slice %1104 {offsets = [0, 64], sizes = [8, 32], strides = [1, 1]} : vector<8x128xf32> to vector<8x32xf32>
    %1118 = math.tanh %1117 : vector<8x32xf32>
    %1119 = vector.extract_strided_slice %1104 {offsets = [0, 96], sizes = [8, 32], strides = [1, 1]} : vector<8x128xf32> to vector<8x32xf32>
    %1120 = arith.negf %1119 : vector<8x32xf32>
    %1121 = math.exp %1120 : vector<8x32xf32>
    %cst_233 = arith.constant 1.000000e+00 : f32
    %1122 = vector.broadcast %cst_233 : f32 to vector<8x32xf32>
    %1123 = arith.addf %1122, %1121 : vector<8x32xf32>
    %1124 = arith.divf %1122, %1123 : vector<8x32xf32>
    %1125 = arith.mulf %1116, %1098 : vector<8x32xf32>
    %1126 = arith.mulf %1110, %1118 : vector<8x32xf32>
    %1127 = arith.addf %1125, %1126 : vector<8x32xf32>
    %1128 = math.tanh %1127 : vector<8x32xf32>
    %1129 = arith.mulf %1124, %1128 : vector<8x32xf32>
    %1130 = vector.extract_strided_slice %866 {offsets = [16, 0], sizes = [8, 128], strides = [1, 1]} : vector<48x128xf32> to vector<8x128xf32>
    %1131 = arith.truncf %1129 : vector<8x32xf32> to vector<8x32xbf16>
    %cst_234 = arith.constant dense<0.000000e+00> : vector<8x128xf32>
    %1132 = tpu.matmul %1131, %1042, %cst_234 {dimension_numbers = #tpu.dot_dimension_numbers<[1], [0], [0], [1], [0, 0, 1, 1], [], []>} : vector<8x32xbf16>, vector<32x128xbf16>, vector<8x128xf32> -> vector<8x128xf32>
    %1133 = arith.addf %1130, %1132 : vector<8x128xf32>
    %1134 = vector.extract_strided_slice %1133 {offsets = [0, 0], sizes = [8, 32], strides = [1, 1]} : vector<8x128xf32> to vector<8x32xf32>
    %1135 = arith.negf %1134 : vector<8x32xf32>
    %1136 = math.exp %1135 : vector<8x32xf32>
    %cst_235 = arith.constant 1.000000e+00 : f32
    %1137 = vector.broadcast %cst_235 : f32 to vector<8x32xf32>
    %1138 = arith.addf %1137, %1136 : vector<8x32xf32>
    %1139 = arith.divf %1137, %1138 : vector<8x32xf32>
    %1140 = vector.extract_strided_slice %1133 {offsets = [0, 32], sizes = [8, 32], strides = [1, 1]} : vector<8x128xf32> to vector<8x32xf32>
    %1141 = arith.negf %1140 : vector<8x32xf32>
    %1142 = math.exp %1141 : vector<8x32xf32>
    %cst_236 = arith.constant 1.000000e+00 : f32
    %1143 = vector.broadcast %cst_236 : f32 to vector<8x32xf32>
    %1144 = arith.addf %1143, %1142 : vector<8x32xf32>
    %1145 = arith.divf %1143, %1144 : vector<8x32xf32>
    %1146 = vector.extract_strided_slice %1133 {offsets = [0, 64], sizes = [8, 32], strides = [1, 1]} : vector<8x128xf32> to vector<8x32xf32>
    %1147 = math.tanh %1146 : vector<8x32xf32>
    %1148 = vector.extract_strided_slice %1133 {offsets = [0, 96], sizes = [8, 32], strides = [1, 1]} : vector<8x128xf32> to vector<8x32xf32>
    %1149 = arith.negf %1148 : vector<8x32xf32>
    %1150 = math.exp %1149 : vector<8x32xf32>
    %cst_237 = arith.constant 1.000000e+00 : f32
    %1151 = vector.broadcast %cst_237 : f32 to vector<8x32xf32>
    %1152 = arith.addf %1151, %1150 : vector<8x32xf32>
    %1153 = arith.divf %1151, %1152 : vector<8x32xf32>
    %1154 = arith.mulf %1145, %1127 : vector<8x32xf32>
    %1155 = arith.mulf %1139, %1147 : vector<8x32xf32>
    %1156 = arith.addf %1154, %1155 : vector<8x32xf32>
    %1157 = math.tanh %1156 : vector<8x32xf32>
    %1158 = arith.mulf %1153, %1157 : vector<8x32xf32>
    %1159 = vector.extract_strided_slice %866 {offsets = [8, 0], sizes = [8, 128], strides = [1, 1]} : vector<48x128xf32> to vector<8x128xf32>
    %1160 = arith.truncf %1158 : vector<8x32xf32> to vector<8x32xbf16>
    %cst_238 = arith.constant dense<0.000000e+00> : vector<8x128xf32>
    %1161 = tpu.matmul %1160, %1042, %cst_238 {dimension_numbers = #tpu.dot_dimension_numbers<[1], [0], [0], [1], [0, 0, 1, 1], [], []>} : vector<8x32xbf16>, vector<32x128xbf16>, vector<8x128xf32> -> vector<8x128xf32>
    %1162 = arith.addf %1159, %1161 : vector<8x128xf32>
    %1163 = vector.extract_strided_slice %1162 {offsets = [0, 0], sizes = [8, 32], strides = [1, 1]} : vector<8x128xf32> to vector<8x32xf32>
    %1164 = arith.negf %1163 : vector<8x32xf32>
    %1165 = math.exp %1164 : vector<8x32xf32>
    %cst_239 = arith.constant 1.000000e+00 : f32
    %1166 = vector.broadcast %cst_239 : f32 to vector<8x32xf32>
    %1167 = arith.addf %1166, %1165 : vector<8x32xf32>
    %1168 = arith.divf %1166, %1167 : vector<8x32xf32>
    %1169 = vector.extract_strided_slice %1162 {offsets = [0, 32], sizes = [8, 32], strides = [1, 1]} : vector<8x128xf32> to vector<8x32xf32>
    %1170 = arith.negf %1169 : vector<8x32xf32>
    %1171 = math.exp %1170 : vector<8x32xf32>
    %cst_240 = arith.constant 1.000000e+00 : f32
    %1172 = vector.broadcast %cst_240 : f32 to vector<8x32xf32>
    %1173 = arith.addf %1172, %1171 : vector<8x32xf32>
    %1174 = arith.divf %1172, %1173 : vector<8x32xf32>
    %1175 = vector.extract_strided_slice %1162 {offsets = [0, 64], sizes = [8, 32], strides = [1, 1]} : vector<8x128xf32> to vector<8x32xf32>
    %1176 = math.tanh %1175 : vector<8x32xf32>
    %1177 = vector.extract_strided_slice %1162 {offsets = [0, 96], sizes = [8, 32], strides = [1, 1]} : vector<8x128xf32> to vector<8x32xf32>
    %1178 = arith.negf %1177 : vector<8x32xf32>
    %1179 = math.exp %1178 : vector<8x32xf32>
    %cst_241 = arith.constant 1.000000e+00 : f32
    %1180 = vector.broadcast %cst_241 : f32 to vector<8x32xf32>
    %1181 = arith.addf %1180, %1179 : vector<8x32xf32>
    %1182 = arith.divf %1180, %1181 : vector<8x32xf32>
    %1183 = arith.mulf %1174, %1156 : vector<8x32xf32>
    %1184 = arith.mulf %1168, %1176 : vector<8x32xf32>
    %1185 = arith.addf %1183, %1184 : vector<8x32xf32>
    %1186 = math.tanh %1185 : vector<8x32xf32>
    %1187 = arith.mulf %1182, %1186 : vector<8x32xf32>
    %1188 = vector.extract_strided_slice %866 {offsets = [0, 0], sizes = [8, 128], strides = [1, 1]} : vector<48x128xf32> to vector<8x128xf32>
    %1189 = arith.truncf %1187 : vector<8x32xf32> to vector<8x32xbf16>
    %cst_242 = arith.constant dense<0.000000e+00> : vector<8x128xf32>
    %1190 = tpu.matmul %1189, %1042, %cst_242 {dimension_numbers = #tpu.dot_dimension_numbers<[1], [0], [0], [1], [0, 0, 1, 1], [], []>} : vector<8x32xbf16>, vector<32x128xbf16>, vector<8x128xf32> -> vector<8x128xf32>
    %1191 = arith.addf %1188, %1190 : vector<8x128xf32>
    %1192 = vector.extract_strided_slice %1191 {offsets = [0, 0], sizes = [8, 32], strides = [1, 1]} : vector<8x128xf32> to vector<8x32xf32>
    %1193 = arith.negf %1192 : vector<8x32xf32>
    %1194 = math.exp %1193 : vector<8x32xf32>
    %cst_243 = arith.constant 1.000000e+00 : f32
    %1195 = vector.broadcast %cst_243 : f32 to vector<8x32xf32>
    %1196 = arith.addf %1195, %1194 : vector<8x32xf32>
    %1197 = arith.divf %1195, %1196 : vector<8x32xf32>
    %1198 = vector.extract_strided_slice %1191 {offsets = [0, 32], sizes = [8, 32], strides = [1, 1]} : vector<8x128xf32> to vector<8x32xf32>
    %1199 = arith.negf %1198 : vector<8x32xf32>
    %1200 = math.exp %1199 : vector<8x32xf32>
    %cst_244 = arith.constant 1.000000e+00 : f32
    %1201 = vector.broadcast %cst_244 : f32 to vector<8x32xf32>
    %1202 = arith.addf %1201, %1200 : vector<8x32xf32>
    %1203 = arith.divf %1201, %1202 : vector<8x32xf32>
    %1204 = vector.extract_strided_slice %1191 {offsets = [0, 64], sizes = [8, 32], strides = [1, 1]} : vector<8x128xf32> to vector<8x32xf32>
    %1205 = math.tanh %1204 : vector<8x32xf32>
    %1206 = vector.extract_strided_slice %1191 {offsets = [0, 96], sizes = [8, 32], strides = [1, 1]} : vector<8x128xf32> to vector<8x32xf32>
    %1207 = arith.negf %1206 : vector<8x32xf32>
    %1208 = math.exp %1207 : vector<8x32xf32>
    %cst_245 = arith.constant 1.000000e+00 : f32
    %1209 = vector.broadcast %cst_245 : f32 to vector<8x32xf32>
    %1210 = arith.addf %1209, %1208 : vector<8x32xf32>
    %1211 = arith.divf %1209, %1210 : vector<8x32xf32>
    %1212 = arith.mulf %1203, %1185 : vector<8x32xf32>
    %1213 = arith.mulf %1197, %1205 : vector<8x32xf32>
    %1214 = arith.addf %1212, %1213 : vector<8x32xf32>
    %1215 = math.tanh %1214 : vector<8x32xf32>
    %1216 = arith.mulf %1211, %1215 : vector<8x32xf32>
    %1217 = tpu.concatenate %1041, %1216, %1039, %1214 in 1 : vector<8x32xf32>, vector<8x32xf32>, vector<8x32xf32>, vector<8x32xf32> -> vector<8x128xf32>
    %1218 = tpu.concatenate %240, %774, %844, %1217 in 1 : vector<8x32xf32>, vector<8x32xf32>, vector<8x32xf32>, vector<8x128xf32> -> vector<8x224xf32>
    %1219 = arith.truncf %1218 : vector<8x224xf32> to vector<8x224xbf16>
    %c0_246 = arith.constant 0 : index
    %c0_247 = arith.constant 0 : index
    %1220 = vector.load %arg33[%c0_246, %c0_247] : memref<224x32xbf16, #tpu.memory_space<vmem>>, vector<224x32xbf16>
    %cst_248 = arith.constant dense<0.000000e+00> : vector<8x32xf32>
    %1221 = tpu.matmul %1219, %1220, %cst_248 {dimension_numbers = #tpu.dot_dimension_numbers<[1], [0], [0], [1], [0, 0, 1, 1], [], []>} : vector<8x224xbf16>, vector<224x32xbf16>, vector<8x32xf32> -> vector<8x32xf32>
    %c0_249 = arith.constant 0 : index
    %c0_250 = arith.constant 0 : index
    %1222 = vector.load %arg34[%c0_249, %c0_250] : memref<1x32xf32, #tpu.memory_space<vmem>>, vector<1x32xf32>
    %1223 = vector.broadcast %1222 : vector<1x32xf32> to vector<8x32xf32>
    %1224 = arith.addf %1221, %1223 : vector<8x32xf32>
    %cst_251 = arith.constant 0.000000e+00 : f32
    %1225 = vector.broadcast %cst_251 : f32 to vector<8x32xf32>
    %1226 = arith.maximumf %1224, %1225 : vector<8x32xf32>
    %1227 = arith.truncf %1226 : vector<8x32xf32> to vector<8x32xbf16>
    %c0_252 = arith.constant 0 : index
    %c0_253 = arith.constant 0 : index
    %1228 = vector.load %arg35[%c0_252, %c0_253] : memref<32x5xbf16, #tpu.memory_space<vmem>>, vector<32x5xbf16>
    %cst_254 = arith.constant dense<0.000000e+00> : vector<8x5xf32>
    %1229 = tpu.matmul %1227, %1228, %cst_254 {dimension_numbers = #tpu.dot_dimension_numbers<[1], [0], [0], [1], [0, 0, 1, 1], [], []>} : vector<8x32xbf16>, vector<32x5xbf16>, vector<8x5xf32> -> vector<8x5xf32>
    %c0_255 = arith.constant 0 : index
    %c0_256 = arith.constant 0 : index
    %1230 = vector.load %arg36[%c0_255, %c0_256] : memref<1x5xf32, #tpu.memory_space<vmem>>, vector<1x5xf32>
    %1231 = vector.broadcast %1230 : vector<1x5xf32> to vector<8x5xf32>
    %1232 = arith.addf %1229, %1231 : vector<8x5xf32>
    %cst_257 = arith.constant dense<0xFF800000> : vector<8xf32>
    %1233 = vector.multi_reduction <maximumf>, %1232, %cst_257 [1] : vector<8x5xf32> to vector<8xf32>
    %1234 = vector.shape_cast %1233 : vector<8xf32> to vector<8x1xf32>
    %1235 = tpu.iota {dimensions = array<i32: 1>} : vector<8x5xi32>
    %1236 = vector.broadcast %1234 : vector<8x1xf32> to vector<8x5xf32>
    %1237 = arith.cmpf oge, %1232, %1236 : vector<8x5xf32>
    %c5_i32 = arith.constant 5 : i32
    %1238 = vector.broadcast %c5_i32 : i32 to vector<8x5xi32>
    %1239 = arith.select %1237, %1235, %1238 : vector<8x5xi1>, vector<8x5xi32>
    %cst_258 = arith.constant dense<2147483647> : vector<8xi32>
    %1240 = vector.multi_reduction <minsi>, %1239, %cst_258 [1] : vector<8x5xi32> to vector<8xi32>
    %1241 = vector.shape_cast %1240 : vector<8xi32> to vector<8x1xi32>
    %1242 = vector.broadcast %1241 : vector<8x1xi32> to vector<8x5xi32>
    %1243 = arith.cmpi eq, %1235, %1242 : vector<8x5xi32>
    %1244 = arith.extui %1243 : vector<8x5xi1> to vector<8x5xi32>
    %1245 = arith.sitofp %1244 : vector<8x5xi32> to vector<8x5xf32>
    %1246 = tpu.concatenate %1218, %1245 in 1 : vector<8x224xf32>, vector<8x5xf32> -> vector<8x229xf32>
    %1247 = arith.truncf %1246 : vector<8x229xf32> to vector<8x229xbf16>
    %c0_259 = arith.constant 0 : index
    %c0_260 = arith.constant 0 : index
    %1248 = vector.load %arg37[%c0_259, %c0_260] : memref<229x32xbf16, #tpu.memory_space<vmem>>, vector<229x32xbf16>
    %cst_261 = arith.constant dense<0.000000e+00> : vector<8x32xf32>
    %1249 = tpu.matmul %1247, %1248, %cst_261 {dimension_numbers = #tpu.dot_dimension_numbers<[1], [0], [0], [1], [0, 0, 1, 1], [], []>} : vector<8x229xbf16>, vector<229x32xbf16>, vector<8x32xf32> -> vector<8x32xf32>
    %c0_262 = arith.constant 0 : index
    %c0_263 = arith.constant 0 : index
    %1250 = vector.load %arg38[%c0_262, %c0_263] : memref<1x32xf32, #tpu.memory_space<vmem>>, vector<1x32xf32>
    %1251 = vector.broadcast %1250 : vector<1x32xf32> to vector<8x32xf32>
    %1252 = arith.addf %1249, %1251 : vector<8x32xf32>
    %1253 = math.tanh %1252 : vector<8x32xf32>
    %c0_264 = arith.constant 0 : index
    %c0_265 = arith.constant 0 : index
    %1254 = vector.load %arg41[%c0_264, %c0_265] : memref<32x96xbf16, #tpu.memory_space<vmem>>, vector<32x96xbf16>
    %c0_266 = arith.constant 0 : index
    %c0_267 = arith.constant 0 : index
    %1255 = vector.load %arg44[%c0_266, %c0_267] : memref<32x6xbf16, #tpu.memory_space<vmem>>, vector<32x6xbf16>
    %c0_268 = arith.constant 0 : index
    %c0_269 = arith.constant 0 : index
    %1256 = vector.load %arg39[%c0_268, %c0_269] : memref<229x96xbf16, #tpu.memory_space<vmem>>, vector<229x96xbf16>
    %cst_270 = arith.constant dense<0.000000e+00> : vector<8x96xf32>
    %1257 = tpu.matmul %1247, %1256, %cst_270 {dimension_numbers = #tpu.dot_dimension_numbers<[1], [0], [0], [1], [0, 0, 1, 1], [], []>} : vector<8x229xbf16>, vector<229x96xbf16>, vector<8x96xf32> -> vector<8x96xf32>
    %c0_271 = arith.constant 0 : index
    %c0_272 = arith.constant 0 : index
    %1258 = vector.load %arg42[%c0_271, %c0_272] : memref<1x96xf32, #tpu.memory_space<vmem>>, vector<1x96xf32>
    %1259 = vector.broadcast %1258 : vector<1x96xf32> to vector<8x96xf32>
    %1260 = arith.addf %1257, %1259 : vector<8x96xf32>
    %c0_273 = arith.constant 0 : index
    %c0_274 = arith.constant 0 : index
    %1261 = vector.load %arg43[%c0_273, %c0_274] : memref<1x96xf32, #tpu.memory_space<vmem>>, vector<1x96xf32>
    %1262 = vector.shape_cast %1261 : vector<1x96xf32> to vector<1x96xf32>
    %1263 = vector.broadcast %1262 : vector<1x96xf32> to vector<8x96xf32>
    %c0_275 = arith.constant 0 : index
    %c0_276 = arith.constant 0 : index
    %1264 = vector.load %arg45[%c0_275, %c0_276] : memref<1x6xf32, #tpu.memory_space<vmem>>, vector<1x6xf32>
    %1265 = vector.shape_cast %1264 : vector<1x6xf32> to vector<1x6xf32>
    %1266 = vector.broadcast %1265 : vector<1x6xf32> to vector<8x6xf32>
    %c0_277 = arith.constant 0 : index
    %c0_278 = arith.constant 0 : index
    %1267 = vector.load %arg40[%c0_277, %c0_278] : memref<2x96xbf16, #tpu.memory_space<vmem>>, vector<2x96xbf16>
    %1268 = arith.extf %1267 : vector<2x96xbf16> to vector<2x96xf32>
    %1269 = vector.extract_strided_slice %1268 {offsets = [0, 0], sizes = [1, 96], strides = [1, 1]} : vector<2x96xf32> to vector<1x96xf32>
    %1270 = vector.shape_cast %1269 : vector<1x96xf32> to vector<1x96xf32>
    %1271 = vector.broadcast %1270 : vector<1x96xf32> to vector<8x96xf32>
    %1272 = vector.extract_strided_slice %1268 {offsets = [1, 0], sizes = [1, 96], strides = [1, 1]} : vector<2x96xf32> to vector<1x96xf32>
    %1273 = vector.shape_cast %1272 : vector<1x96xf32> to vector<1x96xf32>
    %1274 = vector.broadcast %1273 : vector<1x96xf32> to vector<8x96xf32>
    %c0_279 = arith.constant 0 : index
    %c0_280 = arith.constant 0 : index
    %1275 = vector.load %arg6[%c0_279, %c0_280] : memref<8x2xf32, #tpu.memory_space<vmem>>, vector<8x2xf32>
    %c0_281 = arith.constant 0 : index
    %c0_282 = arith.constant 0 : index
    %1276 = vector.load %arg7[%c0_281, %c0_282] : memref<8x2xf32, #tpu.memory_space<vmem>>, vector<8x2xf32>
    %1277 = vector.extract_strided_slice %1275 {offsets = [0, 0], sizes = [8, 1], strides = [1, 1]} : vector<8x2xf32> to vector<8x1xf32>
    %1278 = vector.broadcast %1277 : vector<8x1xf32> to vector<8x96xf32>
    %1279 = arith.mulf %1278, %1271 : vector<8x96xf32>
    %1280 = arith.addf %1260, %1279 : vector<8x96xf32>
    %1281 = vector.extract_strided_slice %1275 {offsets = [0, 1], sizes = [8, 1], strides = [1, 1]} : vector<8x2xf32> to vector<8x1xf32>
    %1282 = vector.broadcast %1281 : vector<8x1xf32> to vector<8x96xf32>
    %1283 = arith.mulf %1282, %1274 : vector<8x96xf32>
    %1284 = arith.addf %1280, %1283 : vector<8x96xf32>
    %1285 = arith.truncf %1253 : vector<8x32xf32> to vector<8x32xbf16>
    %cst_283 = arith.constant dense<0.000000e+00> : vector<8x96xf32>
    %1286 = tpu.matmul %1285, %1254, %cst_283 {dimension_numbers = #tpu.dot_dimension_numbers<[1], [0], [0], [1], [0, 0, 1, 1], [], []>} : vector<8x32xbf16>, vector<32x96xbf16>, vector<8x96xf32> -> vector<8x96xf32>
    %1287 = arith.addf %1286, %1263 : vector<8x96xf32>
    %1288 = vector.extract_strided_slice %1284 {offsets = [0, 0], sizes = [8, 32], strides = [1, 1]} : vector<8x96xf32> to vector<8x32xf32>
    %1289 = vector.extract_strided_slice %1287 {offsets = [0, 0], sizes = [8, 32], strides = [1, 1]} : vector<8x96xf32> to vector<8x32xf32>
    %1290 = arith.addf %1288, %1289 : vector<8x32xf32>
    %1291 = arith.negf %1290 : vector<8x32xf32>
    %1292 = math.exp %1291 : vector<8x32xf32>
    %cst_284 = arith.constant 1.000000e+00 : f32
    %1293 = vector.broadcast %cst_284 : f32 to vector<8x32xf32>
    %1294 = arith.addf %1293, %1292 : vector<8x32xf32>
    %1295 = arith.divf %1293, %1294 : vector<8x32xf32>
    %1296 = vector.extract_strided_slice %1284 {offsets = [0, 32], sizes = [8, 32], strides = [1, 1]} : vector<8x96xf32> to vector<8x32xf32>
    %1297 = vector.extract_strided_slice %1287 {offsets = [0, 32], sizes = [8, 32], strides = [1, 1]} : vector<8x96xf32> to vector<8x32xf32>
    %1298 = arith.addf %1296, %1297 : vector<8x32xf32>
    %1299 = arith.negf %1298 : vector<8x32xf32>
    %1300 = math.exp %1299 : vector<8x32xf32>
    %cst_285 = arith.constant 1.000000e+00 : f32
    %1301 = vector.broadcast %cst_285 : f32 to vector<8x32xf32>
    %1302 = arith.addf %1301, %1300 : vector<8x32xf32>
    %1303 = arith.divf %1301, %1302 : vector<8x32xf32>
    %1304 = vector.extract_strided_slice %1284 {offsets = [0, 64], sizes = [8, 32], strides = [1, 1]} : vector<8x96xf32> to vector<8x32xf32>
    %1305 = vector.extract_strided_slice %1287 {offsets = [0, 64], sizes = [8, 32], strides = [1, 1]} : vector<8x96xf32> to vector<8x32xf32>
    %1306 = arith.mulf %1295, %1305 : vector<8x32xf32>
    %1307 = arith.addf %1304, %1306 : vector<8x32xf32>
    %1308 = math.tanh %1307 : vector<8x32xf32>
    %cst_286 = arith.constant 1.000000e+00 : f32
    %1309 = vector.broadcast %cst_286 : f32 to vector<8x32xf32>
    %1310 = arith.subf %1309, %1303 : vector<8x32xf32>
    %1311 = arith.mulf %1310, %1308 : vector<8x32xf32>
    %1312 = arith.mulf %1303, %1253 : vector<8x32xf32>
    %1313 = arith.addf %1311, %1312 : vector<8x32xf32>
    %1314 = arith.truncf %1313 : vector<8x32xf32> to vector<8x32xbf16>
    %cst_287 = arith.constant dense<0.000000e+00> : vector<8x6xf32>
    %1315 = tpu.matmul %1314, %1255, %cst_287 {dimension_numbers = #tpu.dot_dimension_numbers<[1], [0], [0], [1], [0, 0, 1, 1], [], []>} : vector<8x32xbf16>, vector<32x6xbf16>, vector<8x6xf32> -> vector<8x6xf32>
    %1316 = arith.addf %1315, %1266 : vector<8x6xf32>
    %1317 = vector.extract_strided_slice %1316 {offsets = [0, 1], sizes = [8, 2], strides = [1, 1]} : vector<8x6xf32> to vector<8x2xf32>
    %cst_288 = arith.constant 4.000000e-01 : f32
    %1318 = vector.broadcast %cst_288 : f32 to vector<8x2xf32>
    %1319 = arith.mulf %1317, %1318 : vector<8x2xf32>
    %1320 = arith.addf %1276, %1319 : vector<8x2xf32>
    %1321 = vector.extract_strided_slice %1317 {offsets = [0, 0], sizes = [8, 1], strides = [1, 1]} : vector<8x2xf32> to vector<8x1xf32>
    %1322 = vector.broadcast %1321 : vector<8x1xf32> to vector<8x96xf32>
    %1323 = arith.mulf %1322, %1271 : vector<8x96xf32>
    %1324 = arith.addf %1260, %1323 : vector<8x96xf32>
    %1325 = vector.extract_strided_slice %1317 {offsets = [0, 1], sizes = [8, 1], strides = [1, 1]} : vector<8x2xf32> to vector<8x1xf32>
    %1326 = vector.broadcast %1325 : vector<8x1xf32> to vector<8x96xf32>
    %1327 = arith.mulf %1326, %1274 : vector<8x96xf32>
    %1328 = arith.addf %1324, %1327 : vector<8x96xf32>
    %1329 = arith.truncf %1313 : vector<8x32xf32> to vector<8x32xbf16>
    %cst_289 = arith.constant dense<0.000000e+00> : vector<8x96xf32>
    %1330 = tpu.matmul %1329, %1254, %cst_289 {dimension_numbers = #tpu.dot_dimension_numbers<[1], [0], [0], [1], [0, 0, 1, 1], [], []>} : vector<8x32xbf16>, vector<32x96xbf16>, vector<8x96xf32> -> vector<8x96xf32>
    %1331 = arith.addf %1330, %1263 : vector<8x96xf32>
    %1332 = vector.extract_strided_slice %1328 {offsets = [0, 0], sizes = [8, 32], strides = [1, 1]} : vector<8x96xf32> to vector<8x32xf32>
    %1333 = vector.extract_strided_slice %1331 {offsets = [0, 0], sizes = [8, 32], strides = [1, 1]} : vector<8x96xf32> to vector<8x32xf32>
    %1334 = arith.addf %1332, %1333 : vector<8x32xf32>
    %1335 = arith.negf %1334 : vector<8x32xf32>
    %1336 = math.exp %1335 : vector<8x32xf32>
    %cst_290 = arith.constant 1.000000e+00 : f32
    %1337 = vector.broadcast %cst_290 : f32 to vector<8x32xf32>
    %1338 = arith.addf %1337, %1336 : vector<8x32xf32>
    %1339 = arith.divf %1337, %1338 : vector<8x32xf32>
    %1340 = vector.extract_strided_slice %1328 {offsets = [0, 32], sizes = [8, 32], strides = [1, 1]} : vector<8x96xf32> to vector<8x32xf32>
    %1341 = vector.extract_strided_slice %1331 {offsets = [0, 32], sizes = [8, 32], strides = [1, 1]} : vector<8x96xf32> to vector<8x32xf32>
    %1342 = arith.addf %1340, %1341 : vector<8x32xf32>
    %1343 = arith.negf %1342 : vector<8x32xf32>
    %1344 = math.exp %1343 : vector<8x32xf32>
    %cst_291 = arith.constant 1.000000e+00 : f32
    %1345 = vector.broadcast %cst_291 : f32 to vector<8x32xf32>
    %1346 = arith.addf %1345, %1344 : vector<8x32xf32>
    %1347 = arith.divf %1345, %1346 : vector<8x32xf32>
    %1348 = vector.extract_strided_slice %1328 {offsets = [0, 64], sizes = [8, 32], strides = [1, 1]} : vector<8x96xf32> to vector<8x32xf32>
    %1349 = vector.extract_strided_slice %1331 {offsets = [0, 64], sizes = [8, 32], strides = [1, 1]} : vector<8x96xf32> to vector<8x32xf32>
    %1350 = arith.mulf %1339, %1349 : vector<8x32xf32>
    %1351 = arith.addf %1348, %1350 : vector<8x32xf32>
    %1352 = math.tanh %1351 : vector<8x32xf32>
    %cst_292 = arith.constant 1.000000e+00 : f32
    %1353 = vector.broadcast %cst_292 : f32 to vector<8x32xf32>
    %1354 = arith.subf %1353, %1347 : vector<8x32xf32>
    %1355 = arith.mulf %1354, %1352 : vector<8x32xf32>
    %1356 = arith.mulf %1347, %1313 : vector<8x32xf32>
    %1357 = arith.addf %1355, %1356 : vector<8x32xf32>
    %1358 = arith.truncf %1357 : vector<8x32xf32> to vector<8x32xbf16>
    %cst_293 = arith.constant dense<0.000000e+00> : vector<8x6xf32>
    %1359 = tpu.matmul %1358, %1255, %cst_293 {dimension_numbers = #tpu.dot_dimension_numbers<[1], [0], [0], [1], [0, 0, 1, 1], [], []>} : vector<8x32xbf16>, vector<32x6xbf16>, vector<8x6xf32> -> vector<8x6xf32>
    %1360 = arith.addf %1359, %1266 : vector<8x6xf32>
    %1361 = vector.extract_strided_slice %1360 {offsets = [0, 1], sizes = [8, 2], strides = [1, 1]} : vector<8x6xf32> to vector<8x2xf32>
    %cst_294 = arith.constant 4.000000e-01 : f32
    %1362 = vector.broadcast %cst_294 : f32 to vector<8x2xf32>
    %1363 = arith.mulf %1361, %1362 : vector<8x2xf32>
    %1364 = arith.addf %1320, %1363 : vector<8x2xf32>
    %1365 = vector.extract_strided_slice %1361 {offsets = [0, 0], sizes = [8, 1], strides = [1, 1]} : vector<8x2xf32> to vector<8x1xf32>
    %1366 = vector.broadcast %1365 : vector<8x1xf32> to vector<8x96xf32>
    %1367 = arith.mulf %1366, %1271 : vector<8x96xf32>
    %1368 = arith.addf %1260, %1367 : vector<8x96xf32>
    %1369 = vector.extract_strided_slice %1361 {offsets = [0, 1], sizes = [8, 1], strides = [1, 1]} : vector<8x2xf32> to vector<8x1xf32>
    %1370 = vector.broadcast %1369 : vector<8x1xf32> to vector<8x96xf32>
    %1371 = arith.mulf %1370, %1274 : vector<8x96xf32>
    %1372 = arith.addf %1368, %1371 : vector<8x96xf32>
    %1373 = arith.truncf %1357 : vector<8x32xf32> to vector<8x32xbf16>
    %cst_295 = arith.constant dense<0.000000e+00> : vector<8x96xf32>
    %1374 = tpu.matmul %1373, %1254, %cst_295 {dimension_numbers = #tpu.dot_dimension_numbers<[1], [0], [0], [1], [0, 0, 1, 1], [], []>} : vector<8x32xbf16>, vector<32x96xbf16>, vector<8x96xf32> -> vector<8x96xf32>
    %1375 = arith.addf %1374, %1263 : vector<8x96xf32>
    %1376 = vector.extract_strided_slice %1372 {offsets = [0, 0], sizes = [8, 32], strides = [1, 1]} : vector<8x96xf32> to vector<8x32xf32>
    %1377 = vector.extract_strided_slice %1375 {offsets = [0, 0], sizes = [8, 32], strides = [1, 1]} : vector<8x96xf32> to vector<8x32xf32>
    %1378 = arith.addf %1376, %1377 : vector<8x32xf32>
    %1379 = arith.negf %1378 : vector<8x32xf32>
    %1380 = math.exp %1379 : vector<8x32xf32>
    %cst_296 = arith.constant 1.000000e+00 : f32
    %1381 = vector.broadcast %cst_296 : f32 to vector<8x32xf32>
    %1382 = arith.addf %1381, %1380 : vector<8x32xf32>
    %1383 = arith.divf %1381, %1382 : vector<8x32xf32>
    %1384 = vector.extract_strided_slice %1372 {offsets = [0, 32], sizes = [8, 32], strides = [1, 1]} : vector<8x96xf32> to vector<8x32xf32>
    %1385 = vector.extract_strided_slice %1375 {offsets = [0, 32], sizes = [8, 32], strides = [1, 1]} : vector<8x96xf32> to vector<8x32xf32>
    %1386 = arith.addf %1384, %1385 : vector<8x32xf32>
    %1387 = arith.negf %1386 : vector<8x32xf32>
    %1388 = math.exp %1387 : vector<8x32xf32>
    %cst_297 = arith.constant 1.000000e+00 : f32
    %1389 = vector.broadcast %cst_297 : f32 to vector<8x32xf32>
    %1390 = arith.addf %1389, %1388 : vector<8x32xf32>
    %1391 = arith.divf %1389, %1390 : vector<8x32xf32>
    %1392 = vector.extract_strided_slice %1372 {offsets = [0, 64], sizes = [8, 32], strides = [1, 1]} : vector<8x96xf32> to vector<8x32xf32>
    %1393 = vector.extract_strided_slice %1375 {offsets = [0, 64], sizes = [8, 32], strides = [1, 1]} : vector<8x96xf32> to vector<8x32xf32>
    %1394 = arith.mulf %1383, %1393 : vector<8x32xf32>
    %1395 = arith.addf %1392, %1394 : vector<8x32xf32>
    %1396 = math.tanh %1395 : vector<8x32xf32>
    %cst_298 = arith.constant 1.000000e+00 : f32
    %1397 = vector.broadcast %cst_298 : f32 to vector<8x32xf32>
    %1398 = arith.subf %1397, %1391 : vector<8x32xf32>
    %1399 = arith.mulf %1398, %1396 : vector<8x32xf32>
    %1400 = arith.mulf %1391, %1357 : vector<8x32xf32>
    %1401 = arith.addf %1399, %1400 : vector<8x32xf32>
    %1402 = arith.truncf %1401 : vector<8x32xf32> to vector<8x32xbf16>
    %cst_299 = arith.constant dense<0.000000e+00> : vector<8x6xf32>
    %1403 = tpu.matmul %1402, %1255, %cst_299 {dimension_numbers = #tpu.dot_dimension_numbers<[1], [0], [0], [1], [0, 0, 1, 1], [], []>} : vector<8x32xbf16>, vector<32x6xbf16>, vector<8x6xf32> -> vector<8x6xf32>
    %1404 = arith.addf %1403, %1266 : vector<8x6xf32>
    %1405 = vector.extract_strided_slice %1404 {offsets = [0, 1], sizes = [8, 2], strides = [1, 1]} : vector<8x6xf32> to vector<8x2xf32>
    %cst_300 = arith.constant 4.000000e-01 : f32
    %1406 = vector.broadcast %cst_300 : f32 to vector<8x2xf32>
    %1407 = arith.mulf %1405, %1406 : vector<8x2xf32>
    %1408 = arith.addf %1364, %1407 : vector<8x2xf32>
    %1409 = vector.extract_strided_slice %1405 {offsets = [0, 0], sizes = [8, 1], strides = [1, 1]} : vector<8x2xf32> to vector<8x1xf32>
    %1410 = vector.broadcast %1409 : vector<8x1xf32> to vector<8x96xf32>
    %1411 = arith.mulf %1410, %1271 : vector<8x96xf32>
    %1412 = arith.addf %1260, %1411 : vector<8x96xf32>
    %1413 = vector.extract_strided_slice %1405 {offsets = [0, 1], sizes = [8, 1], strides = [1, 1]} : vector<8x2xf32> to vector<8x1xf32>
    %1414 = vector.broadcast %1413 : vector<8x1xf32> to vector<8x96xf32>
    %1415 = arith.mulf %1414, %1274 : vector<8x96xf32>
    %1416 = arith.addf %1412, %1415 : vector<8x96xf32>
    %1417 = arith.truncf %1401 : vector<8x32xf32> to vector<8x32xbf16>
    %cst_301 = arith.constant dense<0.000000e+00> : vector<8x96xf32>
    %1418 = tpu.matmul %1417, %1254, %cst_301 {dimension_numbers = #tpu.dot_dimension_numbers<[1], [0], [0], [1], [0, 0, 1, 1], [], []>} : vector<8x32xbf16>, vector<32x96xbf16>, vector<8x96xf32> -> vector<8x96xf32>
    %1419 = arith.addf %1418, %1263 : vector<8x96xf32>
    %1420 = vector.extract_strided_slice %1416 {offsets = [0, 0], sizes = [8, 32], strides = [1, 1]} : vector<8x96xf32> to vector<8x32xf32>
    %1421 = vector.extract_strided_slice %1419 {offsets = [0, 0], sizes = [8, 32], strides = [1, 1]} : vector<8x96xf32> to vector<8x32xf32>
    %1422 = arith.addf %1420, %1421 : vector<8x32xf32>
    %1423 = arith.negf %1422 : vector<8x32xf32>
    %1424 = math.exp %1423 : vector<8x32xf32>
    %cst_302 = arith.constant 1.000000e+00 : f32
    %1425 = vector.broadcast %cst_302 : f32 to vector<8x32xf32>
    %1426 = arith.addf %1425, %1424 : vector<8x32xf32>
    %1427 = arith.divf %1425, %1426 : vector<8x32xf32>
    %1428 = vector.extract_strided_slice %1416 {offsets = [0, 32], sizes = [8, 32], strides = [1, 1]} : vector<8x96xf32> to vector<8x32xf32>
    %1429 = vector.extract_strided_slice %1419 {offsets = [0, 32], sizes = [8, 32], strides = [1, 1]} : vector<8x96xf32> to vector<8x32xf32>
    %1430 = arith.addf %1428, %1429 : vector<8x32xf32>
    %1431 = arith.negf %1430 : vector<8x32xf32>
    %1432 = math.exp %1431 : vector<8x32xf32>
    %cst_303 = arith.constant 1.000000e+00 : f32
    %1433 = vector.broadcast %cst_303 : f32 to vector<8x32xf32>
    %1434 = arith.addf %1433, %1432 : vector<8x32xf32>
    %1435 = arith.divf %1433, %1434 : vector<8x32xf32>
    %1436 = vector.extract_strided_slice %1416 {offsets = [0, 64], sizes = [8, 32], strides = [1, 1]} : vector<8x96xf32> to vector<8x32xf32>
    %1437 = vector.extract_strided_slice %1419 {offsets = [0, 64], sizes = [8, 32], strides = [1, 1]} : vector<8x96xf32> to vector<8x32xf32>
    %1438 = arith.mulf %1427, %1437 : vector<8x32xf32>
    %1439 = arith.addf %1436, %1438 : vector<8x32xf32>
    %1440 = math.tanh %1439 : vector<8x32xf32>
    %cst_304 = arith.constant 1.000000e+00 : f32
    %1441 = vector.broadcast %cst_304 : f32 to vector<8x32xf32>
    %1442 = arith.subf %1441, %1435 : vector<8x32xf32>
    %1443 = arith.mulf %1442, %1440 : vector<8x32xf32>
    %1444 = arith.mulf %1435, %1401 : vector<8x32xf32>
    %1445 = arith.addf %1443, %1444 : vector<8x32xf32>
    %1446 = arith.truncf %1445 : vector<8x32xf32> to vector<8x32xbf16>
    %cst_305 = arith.constant dense<0.000000e+00> : vector<8x6xf32>
    %1447 = tpu.matmul %1446, %1255, %cst_305 {dimension_numbers = #tpu.dot_dimension_numbers<[1], [0], [0], [1], [0, 0, 1, 1], [], []>} : vector<8x32xbf16>, vector<32x6xbf16>, vector<8x6xf32> -> vector<8x6xf32>
    %1448 = arith.addf %1447, %1266 : vector<8x6xf32>
    %1449 = vector.extract_strided_slice %1448 {offsets = [0, 1], sizes = [8, 2], strides = [1, 1]} : vector<8x6xf32> to vector<8x2xf32>
    %cst_306 = arith.constant 4.000000e-01 : f32
    %1450 = vector.broadcast %cst_306 : f32 to vector<8x2xf32>
    %1451 = arith.mulf %1449, %1450 : vector<8x2xf32>
    %1452 = arith.addf %1408, %1451 : vector<8x2xf32>
    %1453 = vector.extract_strided_slice %1449 {offsets = [0, 0], sizes = [8, 1], strides = [1, 1]} : vector<8x2xf32> to vector<8x1xf32>
    %1454 = vector.broadcast %1453 : vector<8x1xf32> to vector<8x96xf32>
    %1455 = arith.mulf %1454, %1271 : vector<8x96xf32>
    %1456 = arith.addf %1260, %1455 : vector<8x96xf32>
    %1457 = vector.extract_strided_slice %1449 {offsets = [0, 1], sizes = [8, 1], strides = [1, 1]} : vector<8x2xf32> to vector<8x1xf32>
    %1458 = vector.broadcast %1457 : vector<8x1xf32> to vector<8x96xf32>
    %1459 = arith.mulf %1458, %1274 : vector<8x96xf32>
    %1460 = arith.addf %1456, %1459 : vector<8x96xf32>
    %1461 = arith.truncf %1445 : vector<8x32xf32> to vector<8x32xbf16>
    %cst_307 = arith.constant dense<0.000000e+00> : vector<8x96xf32>
    %1462 = tpu.matmul %1461, %1254, %cst_307 {dimension_numbers = #tpu.dot_dimension_numbers<[1], [0], [0], [1], [0, 0, 1, 1], [], []>} : vector<8x32xbf16>, vector<32x96xbf16>, vector<8x96xf32> -> vector<8x96xf32>
    %1463 = arith.addf %1462, %1263 : vector<8x96xf32>
    %1464 = vector.extract_strided_slice %1460 {offsets = [0, 0], sizes = [8, 32], strides = [1, 1]} : vector<8x96xf32> to vector<8x32xf32>
    %1465 = vector.extract_strided_slice %1463 {offsets = [0, 0], sizes = [8, 32], strides = [1, 1]} : vector<8x96xf32> to vector<8x32xf32>
    %1466 = arith.addf %1464, %1465 : vector<8x32xf32>
    %1467 = arith.negf %1466 : vector<8x32xf32>
    %1468 = math.exp %1467 : vector<8x32xf32>
    %cst_308 = arith.constant 1.000000e+00 : f32
    %1469 = vector.broadcast %cst_308 : f32 to vector<8x32xf32>
    %1470 = arith.addf %1469, %1468 : vector<8x32xf32>
    %1471 = arith.divf %1469, %1470 : vector<8x32xf32>
    %1472 = vector.extract_strided_slice %1460 {offsets = [0, 32], sizes = [8, 32], strides = [1, 1]} : vector<8x96xf32> to vector<8x32xf32>
    %1473 = vector.extract_strided_slice %1463 {offsets = [0, 32], sizes = [8, 32], strides = [1, 1]} : vector<8x96xf32> to vector<8x32xf32>
    %1474 = arith.addf %1472, %1473 : vector<8x32xf32>
    %1475 = arith.negf %1474 : vector<8x32xf32>
    %1476 = math.exp %1475 : vector<8x32xf32>
    %cst_309 = arith.constant 1.000000e+00 : f32
    %1477 = vector.broadcast %cst_309 : f32 to vector<8x32xf32>
    %1478 = arith.addf %1477, %1476 : vector<8x32xf32>
    %1479 = arith.divf %1477, %1478 : vector<8x32xf32>
    %1480 = vector.extract_strided_slice %1460 {offsets = [0, 64], sizes = [8, 32], strides = [1, 1]} : vector<8x96xf32> to vector<8x32xf32>
    %1481 = vector.extract_strided_slice %1463 {offsets = [0, 64], sizes = [8, 32], strides = [1, 1]} : vector<8x96xf32> to vector<8x32xf32>
    %1482 = arith.mulf %1471, %1481 : vector<8x32xf32>
    %1483 = arith.addf %1480, %1482 : vector<8x32xf32>
    %1484 = math.tanh %1483 : vector<8x32xf32>
    %cst_310 = arith.constant 1.000000e+00 : f32
    %1485 = vector.broadcast %cst_310 : f32 to vector<8x32xf32>
    %1486 = arith.subf %1485, %1479 : vector<8x32xf32>
    %1487 = arith.mulf %1486, %1484 : vector<8x32xf32>
    %1488 = arith.mulf %1479, %1445 : vector<8x32xf32>
    %1489 = arith.addf %1487, %1488 : vector<8x32xf32>
    %1490 = arith.truncf %1489 : vector<8x32xf32> to vector<8x32xbf16>
    %cst_311 = arith.constant dense<0.000000e+00> : vector<8x6xf32>
    %1491 = tpu.matmul %1490, %1255, %cst_311 {dimension_numbers = #tpu.dot_dimension_numbers<[1], [0], [0], [1], [0, 0, 1, 1], [], []>} : vector<8x32xbf16>, vector<32x6xbf16>, vector<8x6xf32> -> vector<8x6xf32>
    %1492 = arith.addf %1491, %1266 : vector<8x6xf32>
    %1493 = vector.extract_strided_slice %1492 {offsets = [0, 1], sizes = [8, 2], strides = [1, 1]} : vector<8x6xf32> to vector<8x2xf32>
    %cst_312 = arith.constant 4.000000e-01 : f32
    %1494 = vector.broadcast %cst_312 : f32 to vector<8x2xf32>
    %1495 = arith.mulf %1493, %1494 : vector<8x2xf32>
    %1496 = arith.addf %1452, %1495 : vector<8x2xf32>
    %1497 = vector.extract_strided_slice %1493 {offsets = [0, 0], sizes = [8, 1], strides = [1, 1]} : vector<8x2xf32> to vector<8x1xf32>
    %1498 = vector.broadcast %1497 : vector<8x1xf32> to vector<8x96xf32>
    %1499 = arith.mulf %1498, %1271 : vector<8x96xf32>
    %1500 = arith.addf %1260, %1499 : vector<8x96xf32>
    %1501 = vector.extract_strided_slice %1493 {offsets = [0, 1], sizes = [8, 1], strides = [1, 1]} : vector<8x2xf32> to vector<8x1xf32>
    %1502 = vector.broadcast %1501 : vector<8x1xf32> to vector<8x96xf32>
    %1503 = arith.mulf %1502, %1274 : vector<8x96xf32>
    %1504 = arith.addf %1500, %1503 : vector<8x96xf32>
    %1505 = arith.truncf %1489 : vector<8x32xf32> to vector<8x32xbf16>
    %cst_313 = arith.constant dense<0.000000e+00> : vector<8x96xf32>
    %1506 = tpu.matmul %1505, %1254, %cst_313 {dimension_numbers = #tpu.dot_dimension_numbers<[1], [0], [0], [1], [0, 0, 1, 1], [], []>} : vector<8x32xbf16>, vector<32x96xbf16>, vector<8x96xf32> -> vector<8x96xf32>
    %1507 = arith.addf %1506, %1263 : vector<8x96xf32>
    %1508 = vector.extract_strided_slice %1504 {offsets = [0, 0], sizes = [8, 32], strides = [1, 1]} : vector<8x96xf32> to vector<8x32xf32>
    %1509 = vector.extract_strided_slice %1507 {offsets = [0, 0], sizes = [8, 32], strides = [1, 1]} : vector<8x96xf32> to vector<8x32xf32>
    %1510 = arith.addf %1508, %1509 : vector<8x32xf32>
    %1511 = arith.negf %1510 : vector<8x32xf32>
    %1512 = math.exp %1511 : vector<8x32xf32>
    %cst_314 = arith.constant 1.000000e+00 : f32
    %1513 = vector.broadcast %cst_314 : f32 to vector<8x32xf32>
    %1514 = arith.addf %1513, %1512 : vector<8x32xf32>
    %1515 = arith.divf %1513, %1514 : vector<8x32xf32>
    %1516 = vector.extract_strided_slice %1504 {offsets = [0, 32], sizes = [8, 32], strides = [1, 1]} : vector<8x96xf32> to vector<8x32xf32>
    %1517 = vector.extract_strided_slice %1507 {offsets = [0, 32], sizes = [8, 32], strides = [1, 1]} : vector<8x96xf32> to vector<8x32xf32>
    %1518 = arith.addf %1516, %1517 : vector<8x32xf32>
    %1519 = arith.negf %1518 : vector<8x32xf32>
    %1520 = math.exp %1519 : vector<8x32xf32>
    %cst_315 = arith.constant 1.000000e+00 : f32
    %1521 = vector.broadcast %cst_315 : f32 to vector<8x32xf32>
    %1522 = arith.addf %1521, %1520 : vector<8x32xf32>
    %1523 = arith.divf %1521, %1522 : vector<8x32xf32>
    %1524 = vector.extract_strided_slice %1504 {offsets = [0, 64], sizes = [8, 32], strides = [1, 1]} : vector<8x96xf32> to vector<8x32xf32>
    %1525 = vector.extract_strided_slice %1507 {offsets = [0, 64], sizes = [8, 32], strides = [1, 1]} : vector<8x96xf32> to vector<8x32xf32>
    %1526 = arith.mulf %1515, %1525 : vector<8x32xf32>
    %1527 = arith.addf %1524, %1526 : vector<8x32xf32>
    %1528 = math.tanh %1527 : vector<8x32xf32>
    %cst_316 = arith.constant 1.000000e+00 : f32
    %1529 = vector.broadcast %cst_316 : f32 to vector<8x32xf32>
    %1530 = arith.subf %1529, %1523 : vector<8x32xf32>
    %1531 = arith.mulf %1530, %1528 : vector<8x32xf32>
    %1532 = arith.mulf %1523, %1489 : vector<8x32xf32>
    %1533 = arith.addf %1531, %1532 : vector<8x32xf32>
    %1534 = arith.truncf %1533 : vector<8x32xf32> to vector<8x32xbf16>
    %cst_317 = arith.constant dense<0.000000e+00> : vector<8x6xf32>
    %1535 = tpu.matmul %1534, %1255, %cst_317 {dimension_numbers = #tpu.dot_dimension_numbers<[1], [0], [0], [1], [0, 0, 1, 1], [], []>} : vector<8x32xbf16>, vector<32x6xbf16>, vector<8x6xf32> -> vector<8x6xf32>
    %1536 = arith.addf %1535, %1266 : vector<8x6xf32>
    %1537 = vector.extract_strided_slice %1536 {offsets = [0, 1], sizes = [8, 2], strides = [1, 1]} : vector<8x6xf32> to vector<8x2xf32>
    %cst_318 = arith.constant 4.000000e-01 : f32
    %1538 = vector.broadcast %cst_318 : f32 to vector<8x2xf32>
    %1539 = arith.mulf %1537, %1538 : vector<8x2xf32>
    %1540 = arith.addf %1496, %1539 : vector<8x2xf32>
    %1541 = tpu.concatenate %1316, %1360, %1404, %1448, %1492, %1536 in 1 : vector<8x6xf32>, vector<8x6xf32>, vector<8x6xf32>, vector<8x6xf32>, vector<8x6xf32>, vector<8x6xf32> -> vector<8x36xf32>
    %c0_319 = arith.constant 0 : index
    %c0_320 = arith.constant 0 : index
    %1542 = vector.load %arg46[%c0_319, %c0_320] : memref<8x36xf32, #tpu.memory_space<vmem>>, vector<8x36xf32>
    tpu.vector_store %arg46[%c0_319, %c0_320], %1541 {strides = array<i32>} : memref<8x36xf32, #tpu.memory_space<vmem>>, vector<8x36xf32>,
    %1543 = tpu.concatenate %1320, %1364, %1408, %1452, %1496, %1540 in 1 : vector<8x2xf32>, vector<8x2xf32>, vector<8x2xf32>, vector<8x2xf32>, vector<8x2xf32>, vector<8x2xf32> -> vector<8x12xf32>
    %c0_321 = arith.constant 0 : index
    %c0_322 = arith.constant 0 : index
    %1544 = vector.load %arg47[%c0_321, %c0_322] : memref<8x12xf32, #tpu.memory_space<vmem>>, vector<8x12xf32>
    tpu.vector_store %arg47[%c0_321, %c0_322], %1543 {strides = array<i32>} : memref<8x12xf32, #tpu.memory_space<vmem>>, vector<8x12xf32>,
    return
  }
}

</mosaic_0001>

<llo_original>
// kernel: tpu_custom_call.1
$region0: #{tpu_custom_call.1}
  #allocation0 [shape = 'u32[]', space=smem, size = 0x4, offset = 0x4, fixed_abs, tag = 'smem constant byte address 0x4 - core index']
  #allocation1 [shape = 'u32[144,128]{1,0:T(1,128)}', space=vmem, size = 0x12000, scoped, tag = 'internal scratch']
  %s0 = inlined_call_operand.smem [shape: u32[48], index: -1, kind: input, shape index: {}]
  %s1 = sld [smem:[%s0]]
  %s2 = scalar_lea.smem %s0, 1
  %s3 = sld [smem:[%s2]]
  %s4 = scalar_lea.smem %s0, 2
  %s5 = sld [smem:[%s4]]
  %s6 = scalar_lea.smem %s0, 3
  %s7 = sld [smem:[%s6]]
  %s8 = scalar_lea.smem %s0, 4
  %s9 = sld [smem:[%s8]]
  %s10 = scalar_lea.smem %s0, 5
  %s11 = sld [smem:[%s10]]
  %s12 = scalar_lea.smem %s0, 6
  %s13 = sld [smem:[%s12]]
  %s14 = scalar_lea.smem %s0, 7
  %s15 = sld [smem:[%s14]]
  %s16 = scalar_lea.smem %s0, 8
  %s17 = sld [smem:[%s16]]
  %s18 = scalar_lea.smem %s0, 9
  %s19 = sld [smem:[%s18]]
  %s20 = scalar_lea.smem %s0, 10
  %s21 = sld [smem:[%s20]]
  %s22 = scalar_lea.smem %s0, 11
  %s23 = sld [smem:[%s22]]
  %s24 = scalar_lea.smem %s0, 12
  %s25 = sld [smem:[%s24]]
  %s26 = scalar_lea.smem %s0, 13
  %s27 = sld [smem:[%s26]]
  %s28 = scalar_lea.smem %s0, 14
  %s29 = sld [smem:[%s28]]
  %s30 = scalar_lea.smem %s0, 15
  %s31 = sld [smem:[%s30]]
  %s32 = scalar_lea.smem %s0, 16
  %s33 = sld [smem:[%s32]]
  %s34 = scalar_lea.smem %s0, 17
  %s35 = sld [smem:[%s34]]
  %s36 = scalar_lea.smem %s0, 18
  %s37 = sld [smem:[%s36]]
  %s38 = scalar_lea.smem %s0, 19
  %s39 = sld [smem:[%s38]]
  %s40 = scalar_lea.smem %s0, 20
  %s41 = sld [smem:[%s40]]
  %s42 = scalar_lea.smem %s0, 21
  %s43 = sld [smem:[%s42]]
  %s44 = scalar_lea.smem %s0, 22
  %s45 = sld [smem:[%s44]]
  %s46 = scalar_lea.smem %s0, 23
  %s47 = sld [smem:[%s46]]
  %s48 = scalar_lea.smem %s0, 24
  %s49 = sld [smem:[%s48]]
  %s50 = scalar_lea.smem %s0, 25
  %s51 = sld [smem:[%s50]]
  %s52 = scalar_lea.smem %s0, 26
  %s53 = sld [smem:[%s52]]
  %s54 = scalar_lea.smem %s0, 27
  %s55 = sld [smem:[%s54]]
  %s56 = scalar_lea.smem %s0, 28
  %s57 = sld [smem:[%s56]]
  %s58 = scalar_lea.smem %s0, 29
  %s59 = sld [smem:[%s58]]
  %s60 = scalar_lea.smem %s0, 30
  %s61 = sld [smem:[%s60]]
  %s62 = scalar_lea.smem %s0, 31
  %s63 = sld [smem:[%s62]]
  %s64 = scalar_lea.smem %s0, 32
  %s65 = sld [smem:[%s64]]
  %s66 = scalar_lea.smem %s0, 33
  %s67 = sld [smem:[%s66]]
  %s68 = scalar_lea.smem %s0, 34
  %s69 = sld [smem:[%s68]]
  %s70 = scalar_lea.smem %s0, 35
  %s71 = sld [smem:[%s70]]
  %s72 = scalar_lea.smem %s0, 36
  %s73 = sld [smem:[%s72]]
  %s74 = scalar_lea.smem %s0, 37
  %s75 = sld [smem:[%s74]]
  %s76 = scalar_lea.smem %s0, 38
  %s77 = sld [smem:[%s76]]
  %s78 = scalar_lea.smem %s0, 39
  %s79 = sld [smem:[%s78]]
  %s80 = scalar_lea.smem %s0, 40
  %s81 = sld [smem:[%s80]]
  %s82 = scalar_lea.smem %s0, 41
  %s83 = sld [smem:[%s82]]
  %s84 = scalar_lea.smem %s0, 42
  %s85 = sld [smem:[%s84]]
  %s86 = scalar_lea.smem %s0, 43
  %s87 = sld [smem:[%s86]]
  %s88 = scalar_lea.smem %s0, 44
  %s89 = sld [smem:[%s88]]
  %s90 = scalar_lea.smem %s0, 45
  %s91 = sld [smem:[%s90]]
  %s92 = scalar_lea.smem %s0, 46
  %s93 = sld [smem:[%s92]]
  %s94 = scalar_lea.smem %s0, 47
  %s95 = sld [smem:[%s94]]
  %96 = xla_tuple %s93, %s95
  %s97 = sld [smem:[#allocation0]]
  $region202: #{tpu_custom_call.1} parent=0
    _
  %s99 = ssub.s32 1, %s97
  %s100 = scalar_select 0, %s99, %s97
  $region1: #{tpu_custom_call.1} parent=0
    #allocation2 [shape = 'u8[4096]{0}', space=vmem, size = 0x1000, scoped, tag = 'output window, operand 0, single buffered']
    #allocation3 [shape = 's32[1]{0}', space=sflag, size = 0x4, scoped, tag = 'scoped memory for tpu_custom_call.1']
    #allocation4 [shape = 'u8[4096]{0}', space=vmem, size = 0x1000, scoped, tag = 'output window, operand 1, single buffered']
    #allocation5 [shape = 's32[1]{0}', space=sflag, size = 0x4, scoped, tag = 'scoped memory for tpu_custom_call.1']
    %101 = vsyncpa [#allocation3], 0
    %102 = vsyncpa [#allocation5], 0
    // Predicated region
    $region2: #{tpu_custom_call.1} parent=1 // pred_check
      _
    $region3: #{tpu_custom_call.1} parent=1 // pred_check_branch
      %104 = sbr.rel (0) target = $region5
    $region4: #{tpu_custom_call.1} parent=1 // pred_region
      _
    $region5: #{tpu_custom_call.1} parent=1 // pred_fallthru
      _
    // Predicated region
    $region6: #{tpu_custom_call.1} parent=1 // pred_check
      _
    $region7: #{tpu_custom_call.1} parent=1 // pred_check_branch
      %106 = sbr.rel (0) target = $region9
    $region8: #{tpu_custom_call.1} parent=1 // pred_region
      _
    $region9: #{tpu_custom_call.1} parent=1 // pred_fallthru
      _
    // Predicated region
    $region10: #{tpu_custom_call.1} parent=1 // pred_check
      _
    $region11: #{tpu_custom_call.1} parent=1 // pred_check_branch
      %108 = sbr.rel (0) target = $region13
    $region12: #{tpu_custom_call.1} parent=1 // pred_region
      _
    $region13: #{tpu_custom_call.1} parent=1 // pred_fallthru
      _
    // Predicated region
    $region14: #{tpu_custom_call.1} parent=1 // pred_check
      _
    $region15: #{tpu_custom_call.1} parent=1 // pred_check_branch
      %110 = sbr.rel (0) target = $region17
    $region16: #{tpu_custom_call.1} parent=1 // pred_region
      _
    $region17: #{tpu_custom_call.1} parent=1 // pred_fallthru
      _
    // Predicated region
    $region18: #{tpu_custom_call.1} parent=1 // pred_check
      _
    $region19: #{tpu_custom_call.1} parent=1 // pred_check_branch
      %112 = sbr.rel (0) target = $region21
    $region20: #{tpu_custom_call.1} parent=1 // pred_region
      _
    $region21: #{tpu_custom_call.1} parent=1 // pred_fallthru
      _
    // Predicated region
    $region22: #{tpu_custom_call.1} parent=1 // pred_check
      _
    $region23: #{tpu_custom_call.1} parent=1 // pred_check_branch
      %114 = sbr.rel (0) target = $region25
    $region24: #{tpu_custom_call.1} parent=1 // pred_region
      _
    $region25: #{tpu_custom_call.1} parent=1 // pred_fallthru
      _
    // Predicated region
    $region26: #{tpu_custom_call.1} parent=1 // pred_check
      _
    $region27: #{tpu_custom_call.1} parent=1 // pred_check_branch
      %116 = sbr.rel (0) target = $region29
    $region28: #{tpu_custom_call.1} parent=1 // pred_region
      _
    $region29: #{tpu_custom_call.1} parent=1 // pred_fallthru
      _
    // Predicated region
    $region30: #{tpu_custom_call.1} parent=1 // pred_check
      _
    $region31: #{tpu_custom_call.1} parent=1 // pred_check_branch
      %118 = sbr.rel (0) target = $region33
    $region32: #{tpu_custom_call.1} parent=1 // pred_region
      _
    $region33: #{tpu_custom_call.1} parent=1 // pred_fallthru
      _
    // Predicated region
    $region34: #{tpu_custom_call.1} parent=1 // pred_check
      _
    $region35: #{tpu_custom_call.1} parent=1 // pred_check_branch
      %120 = sbr.rel (0) target = $region37
    $region36: #{tpu_custom_call.1} parent=1 // pred_region
      _
    $region37: #{tpu_custom_call.1} parent=1 // pred_fallthru
      _
    // Predicated region
    $region38: #{tpu_custom_call.1} parent=1 // pred_check
      _
    $region39: #{tpu_custom_call.1} parent=1 // pred_check_branch
      %122 = sbr.rel (0) target = $region41
    $region40: #{tpu_custom_call.1} parent=1 // pred_region
      _
    $region41: #{tpu_custom_call.1} parent=1 // pred_fallthru
      _
    // Predicated region
    $region42: #{tpu_custom_call.1} parent=1 // pred_check
      _
    $region43: #{tpu_custom_call.1} parent=1 // pred_check_branch
      %124 = sbr.rel (0) target = $region45
    $region44: #{tpu_custom_call.1} parent=1 // pred_region
      _
    $region45: #{tpu_custom_call.1} parent=1 // pred_fallthru
      _
    // Predicated region
    $region46: #{tpu_custom_call.1} parent=1 // pred_check
      _
    $region47: #{tpu_custom_call.1} parent=1 // pred_check_branch
      %126 = sbr.rel (0) target = $region49
    $region48: #{tpu_custom_call.1} parent=1 // pred_region
      _
    $region49: #{tpu_custom_call.1} parent=1 // pred_fallthru
      _
    // Predicated region
    $region50: #{tpu_custom_call.1} parent=1 // pred_check
      _
    $region51: #{tpu_custom_call.1} parent=1 // pred_check_branch
      %128 = sbr.rel (0) target = $region53
    $region52: #{tpu_custom_call.1} parent=1 // pred_region
      _
    $region53: #{tpu_custom_call.1} parent=1 // pred_fallthru
      _
    // Predicated region
    $region54: #{tpu_custom_call.1} parent=1 // pred_check
      _
    $region55: #{tpu_custom_call.1} parent=1 // pred_check_branch
      %130 = sbr.rel (0) target = $region57
    $region56: #{tpu_custom_call.1} parent=1 // pred_region
      _
    $region57: #{tpu_custom_call.1} parent=1 // pred_fallthru
      _
    // Predicated region
    $region58: #{tpu_custom_call.1} parent=1 // pred_check
      _
    $region59: #{tpu_custom_call.1} parent=1 // pred_check_branch
      %132 = sbr.rel (0) target = $region61
    $region60: #{tpu_custom_call.1} parent=1 // pred_region
      _
    $region61: #{tpu_custom_call.1} parent=1 // pred_fallthru
      _
    // Predicated region
    $region62: #{tpu_custom_call.1} parent=1 // pred_check
      _
    $region63: #{tpu_custom_call.1} parent=1 // pred_check_branch
      %134 = sbr.rel (0) target = $region65
    $region64: #{tpu_custom_call.1} parent=1 // pred_region
      _
    $region65: #{tpu_custom_call.1} parent=1 // pred_fallthru
      _
    // Predicated region
    $region66: #{tpu_custom_call.1} parent=1 // pred_check
      _
    $region67: #{tpu_custom_call.1} parent=1 // pred_check_branch
      %136 = sbr.rel (0) target = $region69
    $region68: #{tpu_custom_call.1} parent=1 // pred_region
      _
    $region69: #{tpu_custom_call.1} parent=1 // pred_fallthru
      _
    // Predicated region
    $region70: #{tpu_custom_call.1} parent=1 // pred_check
      _
    $region71: #{tpu_custom_call.1} parent=1 // pred_check_branch
      %138 = sbr.rel (0) target = $region73
    $region72: #{tpu_custom_call.1} parent=1 // pred_region
      _
    $region73: #{tpu_custom_call.1} parent=1 // pred_fallthru
      _
    // Predicated region
    $region74: #{tpu_custom_call.1} parent=1 // pred_check
      _
    $region75: #{tpu_custom_call.1} parent=1 // pred_check_branch
      %140 = sbr.rel (0) target = $region77
    $region76: #{tpu_custom_call.1} parent=1 // pred_region
      _
    $region77: #{tpu_custom_call.1} parent=1 // pred_fallthru
      _
    // Predicated region
    $region78: #{tpu_custom_call.1} parent=1 // pred_check
      _
    $region79: #{tpu_custom_call.1} parent=1 // pred_check_branch
      %142 = sbr.rel (0) target = $region81
    $region80: #{tpu_custom_call.1} parent=1 // pred_region
      _
    $region81: #{tpu_custom_call.1} parent=1 // pred_fallthru
      _
    // Predicated region
    $region82: #{tpu_custom_call.1} parent=1 // pred_check
      _
    $region83: #{tpu_custom_call.1} parent=1 // pred_check_branch
      %144 = sbr.rel (0) target = $region85
    $region84: #{tpu_custom_call.1} parent=1 // pred_region
      _
    $region85: #{tpu_custom_call.1} parent=1 // pred_fallthru
      _
    // Predicated region
    $region86: #{tpu_custom_call.1} parent=1 // pred_check
      _
    $region87: #{tpu_custom_call.1} parent=1 // pred_check_branch
      %146 = sbr.rel (0) target = $region89
    $region88: #{tpu_custom_call.1} parent=1 // pred_region
      _
    $region89: #{tpu_custom_call.1} parent=1 // pred_fallthru
      _
    // Predicated region
    $region90: #{tpu_custom_call.1} parent=1 // pred_check
      _
    $region91: #{tpu_custom_call.1} parent=1 // pred_check_branch
      %148 = sbr.rel (0) target = $region93
    $region92: #{tpu_custom_call.1} parent=1 // pred_region
      _
    $region93: #{tpu_custom_call.1} parent=1 // pred_fallthru
      _
    // Predicated region
    $region94: #{tpu_custom_call.1} parent=1 // pred_check
      _
    $region95: #{tpu_custom_call.1} parent=1 // pred_check_branch
      %150 = sbr.rel (0) target = $region97
    $region96: #{tpu_custom_call.1} parent=1 // pred_region
      _
    $region97: #{tpu_custom_call.1} parent=1 // pred_fallthru
      _
    // Predicated region
    $region98: #{tpu_custom_call.1} parent=1 // pred_check
      _
    $region99: #{tpu_custom_call.1} parent=1 // pred_check_branch
      %152 = sbr.rel (0) target = $region101
    $region100: #{tpu_custom_call.1} parent=1 // pred_region
      _
    $region101: #{tpu_custom_call.1} parent=1 // pred_fallthru
      _
    // Predicated region
    $region102: #{tpu_custom_call.1} parent=1 // pred_check
      _
    $region103: #{tpu_custom_call.1} parent=1 // pred_check_branch
      %154 = sbr.rel (0) target = $region105
    $region104: #{tpu_custom_call.1} parent=1 // pred_region
      _
    $region105: #{tpu_custom_call.1} parent=1 // pred_fallthru
      _
    // Predicated region
    $region106: #{tpu_custom_call.1} parent=1 // pred_check
      _
    $region107: #{tpu_custom_call.1} parent=1 // pred_check_branch
      %156 = sbr.rel (0) target = $region109
    $region108: #{tpu_custom_call.1} parent=1 // pred_region
      _
    $region109: #{tpu_custom_call.1} parent=1 // pred_fallthru
      _
    // Predicated region
    $region110: #{tpu_custom_call.1} parent=1 // pred_check
      _
    $region111: #{tpu_custom_call.1} parent=1 // pred_check_branch
      %158 = sbr.rel (0) target = $region113
    $region112: #{tpu_custom_call.1} parent=1 // pred_region
      _
    $region113: #{tpu_custom_call.1} parent=1 // pred_fallthru
      _
    // Predicated region
    $region114: #{tpu_custom_call.1} parent=1 // pred_check
      _
    $region115: #{tpu_custom_call.1} parent=1 // pred_check_branch
      %160 = sbr.rel (0) target = $region117
    $region116: #{tpu_custom_call.1} parent=1 // pred_region
      _
    $region117: #{tpu_custom_call.1} parent=1 // pred_fallthru
      _
    // Predicated region
    $region118: #{tpu_custom_call.1} parent=1 // pred_check
      _
    $region119: #{tpu_custom_call.1} parent=1 // pred_check_branch
      %162 = sbr.rel (0) target = $region121
    $region120: #{tpu_custom_call.1} parent=1 // pred_region
      _
    $region121: #{tpu_custom_call.1} parent=1 // pred_fallthru
      _
    // Predicated region
    $region122: #{tpu_custom_call.1} parent=1 // pred_check
      _
    $region123: #{tpu_custom_call.1} parent=1 // pred_check_branch
      %164 = sbr.rel (0) target = $region125
    $region124: #{tpu_custom_call.1} parent=1 // pred_region
      _
    $region125: #{tpu_custom_call.1} parent=1 // pred_fallthru
      _
    // Predicated region
    $region126: #{tpu_custom_call.1} parent=1 // pred_check
      _
    $region127: #{tpu_custom_call.1} parent=1 // pred_check_branch
      %166 = sbr.rel (0) target = $region129
    $region128: #{tpu_custom_call.1} parent=1 // pred_region
      _
    $region129: #{tpu_custom_call.1} parent=1 // pred_fallthru
      _
    // Predicated region
    $region130: #{tpu_custom_call.1} parent=1 // pred_check
      _
    $region131: #{tpu_custom_call.1} parent=1 // pred_check_branch
      %168 = sbr.rel (0) target = $region133
    $region132: #{tpu_custom_call.1} parent=1 // pred_region
      _
    $region133: #{tpu_custom_call.1} parent=1 // pred_fallthru
      _
    // Predicated region
    $region134: #{tpu_custom_call.1} parent=1 // pred_check
      _
    $region135: #{tpu_custom_call.1} parent=1 // pred_check_branch
      %170 = sbr.rel (0) target = $region137
    $region136: #{tpu_custom_call.1} parent=1 // pred_region
      _
    $region137: #{tpu_custom_call.1} parent=1 // pred_fallthru
      _
    // Predicated region
    $region138: #{tpu_custom_call.1} parent=1 // pred_check
      _
    $region139: #{tpu_custom_call.1} parent=1 // pred_check_branch
      %172 = sbr.rel (0) target = $region141
    $region140: #{tpu_custom_call.1} parent=1 // pred_region
      _
    $region141: #{tpu_custom_call.1} parent=1 // pred_fallthru
      _
    // Predicated region
    $region142: #{tpu_custom_call.1} parent=1 // pred_check
      _
    $region143: #{tpu_custom_call.1} parent=1 // pred_check_branch
      %174 = sbr.rel (0) target = $region145
    $region144: #{tpu_custom_call.1} parent=1 // pred_region
      _
    $region145: #{tpu_custom_call.1} parent=1 // pred_fallthru
      _
    // Predicated region
    $region146: #{tpu_custom_call.1} parent=1 // pred_check
      _
    $region147: #{tpu_custom_call.1} parent=1 // pred_check_branch
      %176 = sbr.rel (0) target = $region149
    $region148: #{tpu_custom_call.1} parent=1 // pred_region
      _
    $region149: #{tpu_custom_call.1} parent=1 // pred_fallthru
      _
    // Predicated region
    $region150: #{tpu_custom_call.1} parent=1 // pred_check
      _
    $region151: #{tpu_custom_call.1} parent=1 // pred_check_branch
      %178 = sbr.rel (0) target = $region153
    $region152: #{tpu_custom_call.1} parent=1 // pred_region
      _
    $region153: #{tpu_custom_call.1} parent=1 // pred_fallthru
      _
    // Predicated region
    $region154: #{tpu_custom_call.1} parent=1 // pred_check
      _
    $region155: #{tpu_custom_call.1} parent=1 // pred_check_branch
      %180 = sbr.rel (0) target = $region157
    $region156: #{tpu_custom_call.1} parent=1 // pred_region
      _
    $region157: #{tpu_custom_call.1} parent=1 // pred_fallthru
      _
    // Predicated region
    $region158: #{tpu_custom_call.1} parent=1 // pred_check
      _
    $region159: #{tpu_custom_call.1} parent=1 // pred_check_branch
      %182 = sbr.rel (0) target = $region161
    $region160: #{tpu_custom_call.1} parent=1 // pred_region
      _
    $region161: #{tpu_custom_call.1} parent=1 // pred_fallthru
      _
    // Predicated region
    $region162: #{tpu_custom_call.1} parent=1 // pred_check
      _
    $region163: #{tpu_custom_call.1} parent=1 // pred_check_branch
      %184 = sbr.rel (0) target = $region165
    $region164: #{tpu_custom_call.1} parent=1 // pred_region
      _
    $region165: #{tpu_custom_call.1} parent=1 // pred_fallthru
      _
    // Predicated region
    $region166: #{tpu_custom_call.1} parent=1 // pred_check
      _
    $region167: #{tpu_custom_call.1} parent=1 // pred_check_branch
      %186 = sbr.rel (0) target = $region169
    $region168: #{tpu_custom_call.1} parent=1 // pred_region
      _
    $region169: #{tpu_custom_call.1} parent=1 // pred_fallthru
      _
    // Predicated region
    $region170: #{tpu_custom_call.1} parent=1 // pred_check
      _
    $region171: #{tpu_custom_call.1} parent=1 // pred_check_branch
      %188 = sbr.rel (0) target = $region173
    $region172: #{tpu_custom_call.1} parent=1 // pred_region
      _
    $region173: #{tpu_custom_call.1} parent=1 // pred_fallthru
      _
    // Predicated region
    $region174: #{tpu_custom_call.1} parent=1 // pred_check
      _
    $region175: #{tpu_custom_call.1} parent=1 // pred_check_branch
      %190 = sbr.rel (0) target = $region177
    $region176: #{tpu_custom_call.1} parent=1 // pred_region
      _
    $region177: #{tpu_custom_call.1} parent=1 // pred_fallthru
      _
    // Predicated region
    $region178: #{tpu_custom_call.1} parent=1 // pred_check
      _
    $region179: #{tpu_custom_call.1} parent=1 // pred_check_branch
      %192 = sbr.rel (0) target = $region181
    $region180: #{tpu_custom_call.1} parent=1 // pred_region
      _
    $region181: #{tpu_custom_call.1} parent=1 // pred_fallthru
      _
    // Predicated region
    $region182: #{tpu_custom_call.1} parent=1 // pred_check
      _
    $region183: #{tpu_custom_call.1} parent=1 // pred_check_branch
      %194 = sbr.rel (0) target = $region185
    $region184: #{tpu_custom_call.1} parent=1 // pred_region
      _
    $region185: #{tpu_custom_call.1} parent=1 // pred_fallthru
      _
    %v196 = vld [vmem:[%s1] sm:$0xf]
    %v197 = vld [vmem:[%s1 + $0x4] sm:$0xf]
    %v198 = vld [vmem:[%s1 + $0x8] sm:$0xf]
    %v199 = vld [vmem:[%s1 + $0xc] sm:$0xf]
    %v200 = vld [vmem:[%s1 + $0x10] sm:$0xf]
    %v201 = vld [vmem:[%s1 + $0x14] sm:$0xf]
    %v202 = vld [vmem:[%s1 + $0x18] sm:$0xf]
    %v203 = vld [vmem:[%s1 + $0x1c] sm:$0xf]
    %v204 = vld [vmem:[%s17] sm:$0x7]
    %v205 = vld [vmem:[%s21] sm:$0x1]
    %v207 = vlaneseq
    %v208 = vshrl.u32 %v207, 7
    %v209 = vsub.s32 0, %v208
    %v210 = vrot.slane %v205, %v209
    %v220 = vunpack.c.l.b16 %v196
    %v221 = vunpack.c.l.b16 %v197
    %v222 = vunpack.c.l.b16 %v198
    %v223 = vunpack.c.l.b16 %v199
    %v224 = vunpack.c.l.b16 %v200
    %v225 = vunpack.c.l.b16 %v201
    %v226 = vunpack.c.l.b16 %v202
    %v227 = vunpack.c.l.b16 %v203
    %v228 = vpack.c.b16 %v221, %v220
    %v229 = vpack.c.b16 %v223, %v222
    %v230 = vpack.c.b16 %v225, %v224
    %v231 = vpack.c.b16 %v227, %v226
    %vm232 = vcmask 48128
    %v234 = vsel %vm232, %v228, 0
    %v237 = vsel %vm232, %v229, 0
    %v240 = vsel %vm232, %v230, 0
    %v243 = vsel %vm232, %v231, 0
    %vm245 = vcmask 1042432
    %v247 = vsel %vm245, %v204, 0
    %249 = vmatprep.subr.bf16.mxu0 0
    %250 = vmatpush1.bf16.msra.mxu0 %v247
    %251 = vmatprep.subr.bf16.mxu0 0
    %252 = vmatpush1.bf16.msra.mxu0 0
    %253 = vmatprep.subr.bf16.mxu0 0
    %254 = vmatpush1.bf16.msra.mxu0 0
    %255 = vmatprep.subr.bf16.mxu0 0
    %256 = vmatpush1.bf16.msra.mxu0 0
    %257 = vmatprep.subr.bf16.mxu0 0
    %258 = vmatpush1.bf16.msra.mxu0 0
    %259 = vmatprep.subr.bf16.mxu0 0
    %260 = vmatpush1.bf16.msra.mxu0 0
    %261 = vmatprep.subr.bf16.mxu0 0
    %262 = vmatpush1.bf16.msra.mxu0 0
    %263 = vmatprep.subr.bf16.mxu0 0
    %264 = vmatpush1.bf16.msra.mxu0 0
    %265 = vmatprep.subr.bf16.mxu0 0
    %266 = vmatpush1.bf16.msra.mxu0 0
    %267 = vmatprep.subr.bf16.mxu0 0
    %268 = vmatpush1.bf16.msra.mxu0 0
    %269 = vmatprep.subr.bf16.mxu0 0
    %270 = vmatpush1.bf16.msra.mxu0 0
    %271 = vmatprep.subr.bf16.mxu0 0
    %272 = vmatpush1.bf16.msra.mxu0 0
    %273 = vmatprep.subr.bf16.mxu0 0
    %274 = vmatpush1.bf16.msra.mxu0 0
    %275 = vmatprep.subr.bf16.mxu0 0
    %276 = vmatpush1.bf16.msra.mxu0 0
    %277 = vmatprep.subr.bf16.mxu0 0
    %278 = vmatpush1.bf16.msra.mxu0 0
    %279 = vmatprep.subr.bf16.mxu0 0
    %280 = vmatpush1.bf16.msra.mxu0 0
    %281 = vmatprep.mubr.bf16.mxu0 0
    %282 = vmatmul.mubr.bf16.gmra.mrb[0].mxu0 %v234
    %v283 = vpop.f32.mrb[0].mxu0
    %v284 = vadd.f32 %v210, %v283
    %v285 = vpop.f32.mrb[0].mxu0
    %v286 = vpop.f32.mrb[0].mxu0
    %v287 = vadd.f32 %v210, %v286
    %v288 = vpop.f32.mrb[0].mxu0
    %289 = vmatprep.mubr.bf16.mxu0 0
    %290 = vmatmul.mubr.bf16.gmra.mrb[0].mxu0 %v237
    %v291 = vpop.f32.mrb[0].mxu0
    %v292 = vadd.f32 %v210, %v291
    %v293 = vpop.f32.mrb[0].mxu0
    %v294 = vpop.f32.mrb[0].mxu0
    %v295 = vadd.f32 %v210, %v294
    %v296 = vpop.f32.mrb[0].mxu0
    %297 = vmatprep.mubr.bf16.mxu0 0
    %298 = vmatmul.mubr.bf16.gmra.mrb[0].mxu0 %v240
    %v299 = vpop.f32.mrb[0].mxu0
    %v300 = vadd.f32 %v210, %v299
    %v301 = vpop.f32.mrb[0].mxu0
    %v302 = vpop.f32.mrb[0].mxu0
    %v303 = vadd.f32 %v210, %v302
    %v304 = vpop.f32.mrb[0].mxu0
    %305 = vmatprep.mubr.bf16.mxu0 0
    %306 = vmatmul.mubr.bf16.gmra.mrb[0].mxu0 %v243
    %v307 = vpop.f32.mrb[0].mxu0
    %v308 = vadd.f32 %v210, %v307
    %v309 = vpop.f32.mrb[0].mxu0
    %v310 = vpop.f32.mrb[0].mxu0
    %v311 = vadd.f32 %v210, %v310
    %v312 = vpop.f32.mrb[0].mxu0
    %313 = vdwg.mxu0
    %v314 = vld [vmem:[%s19] sm:$0xf]
    %v315 = vld [vmem:[%s19 + $0x4] sm:$0xf]
    %v316 = vld [vmem:[%s19 + $0x8] sm:$0xf]
    %v317 = vld [vmem:[%s19 + $0xc] sm:$0xf]
    %v322 = vunpack.c.l.b16 %v314
    %v323 = vunpack.c.l.b16 %v315
    %v324 = vunpack.c.l.b16 %v316
    %v325 = vunpack.c.l.b16 %v317
    %v326 = vpack.c.b16 %v323, %v322
    %v327 = vpack.c.b16 %v325, %v324
    %vm330 = vcmask 261120
    %v332 = vsel %vm330, 0, 0
    %334 = vmatprep.subr.bf16.mxu0 0
    %335 = vmatpush1.bf16.msra.mxu0 %v326
    %336 = vmatprep.subr.bf16.mxu0 0
    %337 = vmatpush1.bf16.msra.mxu0 %v327
    %338 = vmatprep.subr.bf16.mxu0 0
    %339 = vmatpush1.bf16.msra.mxu0 0
    %340 = vmatprep.subr.bf16.mxu0 0
    %341 = vmatpush1.bf16.msra.mxu0 0
    %342 = vmatprep.subr.bf16.mxu0 0
    %343 = vmatpush1.bf16.msra.mxu0 0
    %344 = vmatprep.subr.bf16.mxu0 0
    %345 = vmatpush1.bf16.msra.mxu0 0
    %346 = vmatprep.subr.bf16.mxu0 0
    %347 = vmatpush1.bf16.msra.mxu0 0
    %348 = vmatprep.subr.bf16.mxu0 0
    %349 = vmatpush1.bf16.msra.mxu0 0
    %350 = vmatprep.subr.bf16.mxu0 0
    %351 = vmatpush1.bf16.msra.mxu0 0
    %352 = vmatprep.subr.bf16.mxu0 0
    %353 = vmatpush1.bf16.msra.mxu0 0
    %354 = vmatprep.subr.bf16.mxu0 0
    %355 = vmatpush1.bf16.msra.mxu0 0
    %356 = vmatprep.subr.bf16.mxu0 0
    %357 = vmatpush1.bf16.msra.mxu0 0
    %358 = vmatprep.subr.bf16.mxu0 0
    %359 = vmatpush1.bf16.msra.mxu0 0
    %360 = vmatprep.subr.bf16.mxu0 0
    %361 = vmatpush1.bf16.msra.mxu0 0
    %362 = vmatprep.subr.bf16.mxu0 0
    %363 = vmatpush1.bf16.msra.mxu0 0
    %364 = vmatprep.subr.bf16.mxu0 0
    %365 = vmatpush1.bf16.msra.mxu0 0
    %366 = vmatprep.mubr.bf16.mxu0 0
    %367 = vmatmul.mubr.bf16.gmra.mrb[0].mxu0 %v332
    %v368 = vpop.f32.mrb[0].mxu0
    %v369 = vadd.f32 0.0, %v368
    %v370 = vpop.f32.mrb[0].mxu0
    %v371 = vpop.f32.mrb[0].mxu0
    %v372 = vpop.f32.mrb[0].mxu0
    %373 = vdwg.mxu0
    %v374 = vadd.f32 %v284, %v369
    %v375 = vxor.u32 %v374, 2147483648
    %v376 = vmul.f32 %v375, 1.442695
    %v377 = vpow.pop %v376
    %v378 = vadd.f32 %v377, 1.0
    %v379 = vrcp.pop %v378
    %v380 = vmul.f32 1.0, %v379
    %v381 = vtanh.pop %v374
    %v382 = vmul.f32 %v380, 0.0
    %384 = vrot.lane.b32.xlu0 %v381, 64
    %v385 = vpop.permute.xlu0 %384
    %v387 = vmul.f32 %v380, %v385
    %389 = vrot.lane.b32.xlu0 %v387, 32
    %v390 = vpop.permute.xlu0 %389
    %v392 = vadd.f32 %v382, %v390
    %v393 = vtanh.pop %v392
    %395 = vrot.lane.b32.xlu0 %v393, 64
    %v396 = vpop.permute.xlu0 %395
    %v398 = vmul.f32 %v380, %v396
    %v399 = vpack.c.bf16 %v398, %v398
    %401 = vrot.lane.b32.xlu0 %v399, 32
    %v402 = vpop.permute.xlu0 %401
    %v404 = vsel %vm330, %v402, 0
    %406 = vmatprep.subr.bf16.mxu0 0
    %407 = vmatpush1.bf16.msra.mxu0 %v326
    %408 = vmatprep.subr.bf16.mxu0 0
    %409 = vmatpush1.bf16.msra.mxu0 %v327
    %410 = vmatprep.subr.bf16.mxu0 0
    %411 = vmatpush1.bf16.msra.mxu0 0
    %412 = vmatprep.subr.bf16.mxu0 0
    %413 = vmatpush1.bf16.msra.mxu0 0
    %414 = vmatprep.subr.bf16.mxu0 0
    %415 = vmatpush1.bf16.msra.mxu0 0
    %416 = vmatprep.subr.bf16.mxu0 0
    %417 = vmatpush1.bf16.msra.mxu0 0
    %418 = vmatprep.subr.bf16.mxu0 0
    %419 = vmatpush1.bf16.msra.mxu0 0
    %420 = vmatprep.subr.bf16.mxu0 0
    %421 = vmatpush1.bf16.msra.mxu0 0
    %422 = vmatprep.subr.bf16.mxu0 0
    %423 = vmatpush1.bf16.msra.mxu0 0
    %424 = vmatprep.subr.bf16.mxu0 0
    %425 = vmatpush1.bf16.msra.mxu0 0
    %426 = vmatprep.subr.bf16.mxu0 0
    %427 = vmatpush1.bf16.msra.mxu0 0
    %428 = vmatprep.subr.bf16.mxu0 0
    %429 = vmatpush1.bf16.msra.mxu0 0
    %430 = vmatprep.subr.bf16.mxu0 0
    %431 = vmatpush1.bf16.msra.mxu0 0
    %432 = vmatprep.subr.bf16.mxu0 0
    %433 = vmatpush1.bf16.msra.mxu0 0
    %434 = vmatprep.subr.bf16.mxu0 0
    %435 = vmatpush1.bf16.msra.mxu0 0
    %436 = vmatprep.subr.bf16.mxu0 0
    %437 = vmatpush1.bf16.msra.mxu0 0
    %438 = vmatprep.mubr.bf16.mxu0 0
    %439 = vmatmul.mubr.bf16.gmra.mrb[0].mxu0 %v404
    %v440 = vpop.f32.mrb[0].mxu0
    %v441 = vadd.f32 0.0, %v440
    %v442 = vpop.f32.mrb[0].mxu0
    %v443 = vpop.f32.mrb[0].mxu0
    %v444 = vpop.f32.mrb[0].mxu0
    %445 = vdwg.mxu0
    %v446 = vadd.f32 %v287, %v441
    %v447 = vxor.u32 %v446, 2147483648
    %v448 = vmul.f32 %v447, 1.442695
    %v449 = vpow.pop %v448
    %v450 = vadd.f32 %v449, 1.0
    %v451 = vrcp.pop %v450
    %v452 = vmul.f32 1.0, %v451
    %v453 = vtanh.pop %v446
    %v454 = vmul.f32 %v452, %v392
    %456 = vrot.lane.b32.xlu0 %v453, 64
    %v457 = vpop.permute.xlu0 %456
    %v459 = vmul.f32 %v452, %v457
    %461 = vrot.lane.b32.xlu0 %v459, 32
    %v462 = vpop.permute.xlu0 %461
    %v464 = vadd.f32 %v454, %v462
    %v465 = vtanh.pop %v464
    %467 = vrot.lane.b32.xlu0 %v465, 64
    %v468 = vpop.permute.xlu0 %467
    %v470 = vmul.f32 %v452, %v468
    %v471 = vpack.c.bf16 %v470, %v470
    %473 = vrot.lane.b32.xlu0 %v471, 32
    %v474 = vpop.permute.xlu0 %473
    %v476 = vsel %vm330, %v474, 0
    %478 = vmatprep.subr.bf16.mxu0 0
    %479 = vmatpush1.bf16.msra.mxu0 %v326
    %480 = vmatprep.subr.bf16.mxu0 0
    %481 = vmatpush1.bf16.msra.mxu0 %v327
    %482 = vmatprep.subr.bf16.mxu0 0
    %483 = vmatpush1.bf16.msra.mxu0 0
    %484 = vmatprep.subr.bf16.mxu0 0
    %485 = vmatpush1.bf16.msra.mxu0 0
    %486 = vmatprep.subr.bf16.mxu0 0
    %487 = vmatpush1.bf16.msra.mxu0 0
    %488 = vmatprep.subr.bf16.mxu0 0
    %489 = vmatpush1.bf16.msra.mxu0 0
    %490 = vmatprep.subr.bf16.mxu0 0
    %491 = vmatpush1.bf16.msra.mxu0 0
    %492 = vmatprep.subr.bf16.mxu0 0
    %493 = vmatpush1.bf16.msra.mxu0 0
    %494 = vmatprep.subr.bf16.mxu0 0
    %495 = vmatpush1.bf16.msra.mxu0 0
    %496 = vmatprep.subr.bf16.mxu0 0
    %497 = vmatpush1.bf16.msra.mxu0 0
    %498 = vmatprep.subr.bf16.mxu0 0
    %499 = vmatpush1.bf16.msra.mxu0 0
    %500 = vmatprep.subr.bf16.mxu0 0
    %501 = vmatpush1.bf16.msra.mxu0 0
    %502 = vmatprep.subr.bf16.mxu0 0
    %503 = vmatpush1.bf16.msra.mxu0 0
    %504 = vmatprep.subr.bf16.mxu0 0
    %505 = vmatpush1.bf16.msra.mxu0 0
    %506 = vmatprep.subr.bf16.mxu0 0
    %507 = vmatpush1.bf16.msra.mxu0 0
    %508 = vmatprep.subr.bf16.mxu0 0
    %509 = vmatpush1.bf16.msra.mxu0 0
    %510 = vmatprep.mubr.bf16.mxu0 0
    %511 = vmatmul.mubr.bf16.gmra.mrb[0].mxu0 %v476
    %v512 = vpop.f32.mrb[0].mxu0
    %v513 = vadd.f32 0.0, %v512
    %v514 = vpop.f32.mrb[0].mxu0
    %v515 = vpop.f32.mrb[0].mxu0
    %v516 = vpop.f32.mrb[0].mxu0
    %517 = vdwg.mxu0
    %v518 = vadd.f32 %v292, %v513
    %v519 = vxor.u32 %v518, 2147483648
    %v520 = vmul.f32 %v519, 1.442695
    %v521 = vpow.pop %v520
    %v522 = vadd.f32 %v521, 1.0
    %v523 = vrcp.pop %v522
    %v524 = vmul.f32 1.0, %v523
    %v525 = vtanh.pop %v518
    %v526 = vmul.f32 %v524, %v464
    %528 = vrot.lane.b32.xlu0 %v525, 64
    %v529 = vpop.permute.xlu0 %528
    %v531 = vmul.f32 %v524, %v529
    %533 = vrot.lane.b32.xlu0 %v531, 32
    %v534 = vpop.permute.xlu0 %533
    %v536 = vadd.f32 %v526, %v534
    %v537 = vtanh.pop %v536
    %539 = vrot.lane.b32.xlu0 %v537, 64
    %v540 = vpop.permute.xlu0 %539
    %v542 = vmul.f32 %v524, %v540
    %v543 = vpack.c.bf16 %v542, %v542
    %545 = vrot.lane.b32.xlu0 %v543, 32
    %v546 = vpop.permute.xlu0 %545
    %v548 = vsel %vm330, %v546, 0
    %550 = vmatprep.subr.bf16.mxu0 0
    %551 = vmatpush1.bf16.msra.mxu0 %v326
    %552 = vmatprep.subr.bf16.mxu0 0
    %553 = vmatpush1.bf16.msra.mxu0 %v327
    %554 = vmatprep.subr.bf16.mxu0 0
    %555 = vmatpush1.bf16.msra.mxu0 0
    %556 = vmatprep.subr.bf16.mxu0 0
    %557 = vmatpush1.bf16.msra.mxu0 0
    %558 = vmatprep.subr.bf16.mxu0 0
    %559 = vmatpush1.bf16.msra.mxu0 0
    %560 = vmatprep.subr.bf16.mxu0 0
    %561 = vmatpush1.bf16.msra.mxu0 0
    %562 = vmatprep.subr.bf16.mxu0 0
    %563 = vmatpush1.bf16.msra.mxu0 0
    %564 = vmatprep.subr.bf16.mxu0 0
    %565 = vmatpush1.bf16.msra.mxu0 0
    %566 = vmatprep.subr.bf16.mxu0 0
    %567 = vmatpush1.bf16.msra.mxu0 0
    %568 = vmatprep.subr.bf16.mxu0 0
    %569 = vmatpush1.bf16.msra.mxu0 0
    %570 = vmatprep.subr.bf16.mxu0 0
    %571 = vmatpush1.bf16.msra.mxu0 0
    %572 = vmatprep.subr.bf16.mxu0 0
    %573 = vmatpush1.bf16.msra.mxu0 0
    %574 = vmatprep.subr.bf16.mxu0 0
    %575 = vmatpush1.bf16.msra.mxu0 0
    %576 = vmatprep.subr.bf16.mxu0 0
    %577 = vmatpush1.bf16.msra.mxu0 0
    %578 = vmatprep.subr.bf16.mxu0 0
    %579 = vmatpush1.bf16.msra.mxu0 0
    %580 = vmatprep.subr.bf16.mxu0 0
    %581 = vmatpush1.bf16.msra.mxu0 0
    %582 = vmatprep.mubr.bf16.mxu0 0
    %583 = vmatmul.mubr.bf16.gmra.mrb[0].mxu0 %v548
    %v584 = vpop.f32.mrb[0].mxu0
    %v585 = vadd.f32 0.0, %v584
    %v586 = vpop.f32.mrb[0].mxu0
    %v587 = vpop.f32.mrb[0].mxu0
    %v588 = vpop.f32.mrb[0].mxu0
    %589 = vdwg.mxu0
    %v590 = vadd.f32 %v295, %v585
    %v591 = vxor.u32 %v590, 2147483648
    %v592 = vmul.f32 %v591, 1.442695
    %v593 = vpow.pop %v592
    %v594 = vadd.f32 %v593, 1.0
    %v595 = vrcp.pop %v594
    %v596 = vmul.f32 1.0, %v595
    %v597 = vtanh.pop %v590
    %v598 = vmul.f32 %v596, %v536
    %600 = vrot.lane.b32.xlu0 %v597, 64
    %v601 = vpop.permute.xlu0 %600
    %v603 = vmul.f32 %v596, %v601
    %605 = vrot.lane.b32.xlu0 %v603, 32
    %v606 = vpop.permute.xlu0 %605
    %v608 = vadd.f32 %v598, %v606
    %v609 = vtanh.pop %v608
    %611 = vrot.lane.b32.xlu0 %v609, 64
    %v612 = vpop.permute.xlu0 %611
    %v614 = vmul.f32 %v596, %v612
    %v615 = vpack.c.bf16 %v614, %v614
    %617 = vrot.lane.b32.xlu0 %v615, 32
    %v618 = vpop.permute.xlu0 %617
    %v620 = vsel %vm330, %v618, 0
    %622 = vmatprep.subr.bf16.mxu0 0
    %623 = vmatpush1.bf16.msra.mxu0 %v326
    %624 = vmatprep.subr.bf16.mxu0 0
    %625 = vmatpush1.bf16.msra.mxu0 %v327
    %626 = vmatprep.subr.bf16.mxu0 0
    %627 = vmatpush1.bf16.msra.mxu0 0
    %628 = vmatprep.subr.bf16.mxu0 0
    %629 = vmatpush1.bf16.msra.mxu0 0
    %630 = vmatprep.subr.bf16.mxu0 0
    %631 = vmatpush1.bf16.msra.mxu0 0
    %632 = vmatprep.subr.bf16.mxu0 0
    %633 = vmatpush1.bf16.msra.mxu0 0
    %634 = vmatprep.subr.bf16.mxu0 0
    %635 = vmatpush1.bf16.msra.mxu0 0
    %636 = vmatprep.subr.bf16.mxu0 0
    %637 = vmatpush1.bf16.msra.mxu0 0
    %638 = vmatprep.subr.bf16.mxu0 0
    %639 = vmatpush1.bf16.msra.mxu0 0
    %640 = vmatprep.subr.bf16.mxu0 0
    %641 = vmatpush1.bf16.msra.mxu0 0
    %642 = vmatprep.subr.bf16.mxu0 0
    %643 = vmatpush1.bf16.msra.mxu0 0
    %644 = vmatprep.subr.bf16.mxu0 0
    %645 = vmatpush1.bf16.msra.mxu0 0
    %646 = vmatprep.subr.bf16.mxu0 0
    %647 = vmatpush1.bf16.msra.mxu0 0
    %648 = vmatprep.subr.bf16.mxu0 0
    %649 = vmatpush1.bf16.msra.mxu0 0
    %650 = vmatprep.subr.bf16.mxu0 0
    %651 = vmatpush1.bf16.msra.mxu0 0
    %652 = vmatprep.subr.bf16.mxu0 0
    %653 = vmatpush1.bf16.msra.mxu0 0
    %654 = vmatprep.mubr.bf16.mxu0 0
    %655 = vmatmul.mubr.bf16.gmra.mrb[0].mxu0 %v620
    %v656 = vpop.f32.mrb[0].mxu0
    %v657 = vadd.f32 0.0, %v656
    %v658 = vpop.f32.mrb[0].mxu0
    %v659 = vpop.f32.mrb[0].mxu0
    %v660 = vpop.f32.mrb[0].mxu0
    %661 = vdwg.mxu0
    %v662 = vadd.f32 %v300, %v657
    %v663 = vxor.u32 %v662, 2147483648
    %v664 = vmul.f32 %v663, 1.442695
    %v665 = vpow.pop %v664
    %v666 = vadd.f32 %v665, 1.0
    %v667 = vrcp.pop %v666
    %v668 = vmul.f32 1.0, %v667
    %v669 = vtanh.pop %v662
    %v670 = vmul.f32 %v668, %v608
    %672 = vrot.lane.b32.xlu0 %v669, 64
    %v673 = vpop.permute.xlu0 %672
    %v675 = vmul.f32 %v668, %v673
    %677 = vrot.lane.b32.xlu0 %v675, 32
    %v678 = vpop.permute.xlu0 %677
    %v680 = vadd.f32 %v670, %v678
    %v681 = vtanh.pop %v680
    %683 = vrot.lane.b32.xlu0 %v681, 64
    %v684 = vpop.permute.xlu0 %683
    %v686 = vmul.f32 %v668, %v684
    %v687 = vpack.c.bf16 %v686, %v686
    %689 = vrot.lane.b32.xlu0 %v687, 32
    %v690 = vpop.permute.xlu0 %689
    %v692 = vsel %vm330, %v690, 0
    %694 = vmatprep.subr.bf16.mxu0 0
    %695 = vmatpush1.bf16.msra.mxu0 %v326
    %696 = vmatprep.subr.bf16.mxu0 0
    %697 = vmatpush1.bf16.msra.mxu0 %v327
    %698 = vmatprep.subr.bf16.mxu0 0
    %699 = vmatpush1.bf16.msra.mxu0 0
    %700 = vmatprep.subr.bf16.mxu0 0
    %701 = vmatpush1.bf16.msra.mxu0 0
    %702 = vmatprep.subr.bf16.mxu0 0
    %703 = vmatpush1.bf16.msra.mxu0 0
    %704 = vmatprep.subr.bf16.mxu0 0
    %705 = vmatpush1.bf16.msra.mxu0 0
    %706 = vmatprep.subr.bf16.mxu0 0
    %707 = vmatpush1.bf16.msra.mxu0 0
    %708 = vmatprep.subr.bf16.mxu0 0
    %709 = vmatpush1.bf16.msra.mxu0 0
    %710 = vmatprep.subr.bf16.mxu0 0
    %711 = vmatpush1.bf16.msra.mxu0 0
    %712 = vmatprep.subr.bf16.mxu0 0
    %713 = vmatpush1.bf16.msra.mxu0 0
    %714 = vmatprep.subr.bf16.mxu0 0
    %715 = vmatpush1.bf16.msra.mxu0 0
    %716 = vmatprep.subr.bf16.mxu0 0
    %717 = vmatpush1.bf16.msra.mxu0 0
    %718 = vmatprep.subr.bf16.mxu0 0
    %719 = vmatpush1.bf16.msra.mxu0 0
    %720 = vmatprep.subr.bf16.mxu0 0
    %721 = vmatpush1.bf16.msra.mxu0 0
    %722 = vmatprep.subr.bf16.mxu0 0
    %723 = vmatpush1.bf16.msra.mxu0 0
    %724 = vmatprep.subr.bf16.mxu0 0
    %725 = vmatpush1.bf16.msra.mxu0 0
    %726 = vmatprep.mubr.bf16.mxu0 0
    %727 = vmatmul.mubr.bf16.gmra.mrb[0].mxu0 %v692
    %v728 = vpop.f32.mrb[0].mxu0
    %v729 = vadd.f32 0.0, %v728
    %v730 = vpop.f32.mrb[0].mxu0
    %v731 = vpop.f32.mrb[0].mxu0
    %v732 = vpop.f32.mrb[0].mxu0
    %733 = vdwg.mxu0
    %v734 = vadd.f32 %v303, %v729
    %v735 = vxor.u32 %v734, 2147483648
    %v736 = vmul.f32 %v735, 1.442695
    %v737 = vpow.pop %v736
    %v738 = vadd.f32 %v737, 1.0
    %v739 = vrcp.pop %v738
    %v740 = vmul.f32 1.0, %v739
    %v741 = vtanh.pop %v734
    %v742 = vmul.f32 %v740, %v680
    %744 = vrot.lane.b32.xlu0 %v741, 64
    %v745 = vpop.permute.xlu0 %744
    %v747 = vmul.f32 %v740, %v745
    %749 = vrot.lane.b32.xlu0 %v747, 32
    %v750 = vpop.permute.xlu0 %749
    %v752 = vadd.f32 %v742, %v750
    %v753 = vtanh.pop %v752
    %755 = vrot.lane.b32.xlu0 %v753, 64
    %v756 = vpop.permute.xlu0 %755
    %v758 = vmul.f32 %v740, %v756
    %v759 = vpack.c.bf16 %v758, %v758
    %761 = vrot.lane.b32.xlu0 %v759, 32
    %v762 = vpop.permute.xlu0 %761
    %v764 = vsel %vm330, %v762, 0
    %766 = vmatprep.subr.bf16.mxu0 0
    %767 = vmatpush1.bf16.msra.mxu0 %v326
    %768 = vmatprep.subr.bf16.mxu0 0
    %769 = vmatpush1.bf16.msra.mxu0 %v327
    %770 = vmatprep.subr.bf16.mxu0 0
    %771 = vmatpush1.bf16.msra.mxu0 0
    %772 = vmatprep.subr.bf16.mxu0 0
    %773 = vmatpush1.bf16.msra.mxu0 0
    %774 = vmatprep.subr.bf16.mxu0 0
    %775 = vmatpush1.bf16.msra.mxu0 0
    %776 = vmatprep.subr.bf16.mxu0 0
    %777 = vmatpush1.bf16.msra.mxu0 0
    %778 = vmatprep.subr.bf16.mxu0 0
    %779 = vmatpush1.bf16.msra.mxu0 0
    %780 = vmatprep.subr.bf16.mxu0 0
    %781 = vmatpush1.bf16.msra.mxu0 0
    %782 = vmatprep.subr.bf16.mxu0 0
    %783 = vmatpush1.bf16.msra.mxu0 0
    %784 = vmatprep.subr.bf16.mxu0 0
    %785 = vmatpush1.bf16.msra.mxu0 0
    %786 = vmatprep.subr.bf16.mxu0 0
    %787 = vmatpush1.bf16.msra.mxu0 0
    %788 = vmatprep.subr.bf16.mxu0 0
    %789 = vmatpush1.bf16.msra.mxu0 0
    %790 = vmatprep.subr.bf16.mxu0 0
    %791 = vmatpush1.bf16.msra.mxu0 0
    %792 = vmatprep.subr.bf16.mxu0 0
    %793 = vmatpush1.bf16.msra.mxu0 0
    %794 = vmatprep.subr.bf16.mxu0 0
    %795 = vmatpush1.bf16.msra.mxu0 0
    %796 = vmatprep.subr.bf16.mxu0 0
    %797 = vmatpush1.bf16.msra.mxu0 0
    %798 = vmatprep.mubr.bf16.mxu0 0
    %799 = vmatmul.mubr.bf16.gmra.mrb[0].mxu0 %v764
    %v800 = vpop.f32.mrb[0].mxu0
    %v801 = vadd.f32 0.0, %v800
    %v802 = vpop.f32.mrb[0].mxu0
    %v803 = vpop.f32.mrb[0].mxu0
    %v804 = vpop.f32.mrb[0].mxu0
    %805 = vdwg.mxu0
    %v806 = vadd.f32 %v308, %v801
    %v807 = vxor.u32 %v806, 2147483648
    %v808 = vmul.f32 %v807, 1.442695
    %v809 = vpow.pop %v808
    %v810 = vadd.f32 %v809, 1.0
    %v811 = vrcp.pop %v810
    %v812 = vmul.f32 1.0, %v811
    %v813 = vtanh.pop %v806
    %v814 = vmul.f32 %v812, %v752
    %816 = vrot.lane.b32.xlu0 %v813, 64
    %v817 = vpop.permute.xlu0 %816
    %v819 = vmul.f32 %v812, %v817
    %821 = vrot.lane.b32.xlu0 %v819, 32
    %v822 = vpop.permute.xlu0 %821
    %v824 = vadd.f32 %v814, %v822
    %v825 = vtanh.pop %v824
    %827 = vrot.lane.b32.xlu0 %v825, 64
    %v828 = vpop.permute.xlu0 %827
    %v830 = vmul.f32 %v812, %v828
    %v831 = vpack.c.bf16 %v830, %v830
    %833 = vrot.lane.b32.xlu0 %v831, 32
    %v834 = vpop.permute.xlu0 %833
    %v836 = vsel %vm330, %v834, 0
    %838 = vmatprep.subr.bf16.mxu0 0
    %839 = vmatpush1.bf16.msra.mxu0 %v326
    %840 = vmatprep.subr.bf16.mxu0 0
    %841 = vmatpush1.bf16.msra.mxu0 %v327
    %842 = vmatprep.subr.bf16.mxu0 0
    %843 = vmatpush1.bf16.msra.mxu0 0
    %844 = vmatprep.subr.bf16.mxu0 0
    %845 = vmatpush1.bf16.msra.mxu0 0
    %846 = vmatprep.subr.bf16.mxu0 0
    %847 = vmatpush1.bf16.msra.mxu0 0
    %848 = vmatprep.subr.bf16.mxu0 0
    %849 = vmatpush1.bf16.msra.mxu0 0
    %850 = vmatprep.subr.bf16.mxu0 0
    %851 = vmatpush1.bf16.msra.mxu0 0
    %852 = vmatprep.subr.bf16.mxu0 0
    %853 = vmatpush1.bf16.msra.mxu0 0
    %854 = vmatprep.subr.bf16.mxu0 0
    %855 = vmatpush1.bf16.msra.mxu0 0
    %856 = vmatprep.subr.bf16.mxu0 0
    %857 = vmatpush1.bf16.msra.mxu0 0
    %858 = vmatprep.subr.bf16.mxu0 0
    %859 = vmatpush1.bf16.msra.mxu0 0
    %860 = vmatprep.subr.bf16.mxu0 0
    %861 = vmatpush1.bf16.msra.mxu0 0
    %862 = vmatprep.subr.bf16.mxu0 0
    %863 = vmatpush1.bf16.msra.mxu0 0
    %864 = vmatprep.subr.bf16.mxu0 0
    %865 = vmatpush1.bf16.msra.mxu0 0
    %866 = vmatprep.subr.bf16.mxu0 0
    %867 = vmatpush1.bf16.msra.mxu0 0
    %868 = vmatprep.subr.bf16.mxu0 0
    %869 = vmatpush1.bf16.msra.mxu0 0
    %870 = vmatprep.mubr.bf16.mxu0 0
    %871 = vmatmul.mubr.bf16.gmra.mrb[0].mxu0 %v836
    %v872 = vpop.f32.mrb[0].mxu0
    %v873 = vadd.f32 0.0, %v872
    %v874 = vpop.f32.mrb[0].mxu0
    %v875 = vpop.f32.mrb[0].mxu0
    %v876 = vpop.f32.mrb[0].mxu0
    %877 = vdwg.mxu0
    %v878 = vadd.f32 %v311, %v873
    %v879 = vxor.u32 %v878, 2147483648
    %v880 = vmul.f32 %v879, 1.442695
    %v881 = vpow.pop %v880
    %v882 = vadd.f32 %v881, 1.0
    %v883 = vrcp.pop %v882
    %v884 = vmul.f32 1.0, %v883
    %v885 = vtanh.pop %v878
    %v886 = vmul.f32 %v884, %v824
    %888 = vrot.lane.b32.xlu0 %v885, 64
    %v889 = vpop.permute.xlu0 %888
    %v891 = vmul.f32 %v884, %v889
    %893 = vrot.lane.b32.xlu0 %v891, 32
    %v894 = vpop.permute.xlu0 %893
    %v896 = vadd.f32 %v886, %v894
    %v897 = vtanh.pop %v896
    %899 = vrot.lane.b32.xlu0 %v897, 64
    %v900 = vpop.permute.xlu0 %899
    %v902 = vmul.f32 %v884, %v900
    %v903 = vld [vmem:[%s3] sm:$0xf]
    %v904 = vld [vmem:[%s3 + $0x4] sm:$0xf]
    %v905 = vld [vmem:[%s3 + $0x8] sm:$0xf]
    %v906 = vld [vmem:[%s3 + $0xc] sm:$0xf]
    %v907 = vld [vmem:[%s3 + $0x10] sm:$0xf]
    %v908 = vld [vmem:[%s3 + $0x14] sm:$0xf]
    %v909 = vld [vmem:[%s3 + $0x18] sm:$0xf]
    %v910 = vld [vmem:[%s3 + $0x1c] sm:$0xf]
    %v911 = vld [vmem:[%s23] sm:$0xf]
    %v912 = vld [vmem:[%s23 + $0x4] sm:$0x7]
    %v913 = vld [vmem:[%s27] sm:$0x1]
    %v915 = vlaneseq
    %v916 = vshrl.u32 %v915, 7
    %v917 = vsub.s32 0, %v916
    %v918 = vrot.slane %v913, %v917
    %v928 = vunpack.c.l.b16 %v903
    %v929 = vunpack.c.l.b16 %v904
    %v930 = vunpack.c.l.b16 %v905
    %v931 = vunpack.c.l.b16 %v906
    %v932 = vunpack.c.l.b16 %v907
    %v933 = vunpack.c.l.b16 %v908
    %v934 = vunpack.c.l.b16 %v909
    %v935 = vunpack.c.l.b16 %v910
    %v936 = vpack.c.b16 %v929, %v928
    %v937 = vpack.c.b16 %v931, %v930
    %v938 = vpack.c.b16 %v933, %v932
    %v939 = vpack.c.b16 %v935, %v934
    %v942 = vunpack.c.l.b16 %v911
    %v943 = vunpack.c.l.b16 %v912
    %v944 = vpack.c.b16 %v943, %v942
    %vm945 = vcmask 113664
    %v947 = vsel %vm945, %v936, 0
    %v950 = vsel %vm945, %v937, 0
    %v953 = vsel %vm945, %v938, 0
    %v956 = vsel %vm945, %v939, 0
    %vm958 = vcmask 1046528
    %v960 = vsel %vm958, %v944, 0
    %962 = vmatprep.subr.bf16.mxu0 0
    %963 = vmatpush1.bf16.msra.mxu0 %v960
    %964 = vmatprep.subr.bf16.mxu0 0
    %965 = vmatpush1.bf16.msra.mxu0 0
    %966 = vmatprep.subr.bf16.mxu0 0
    %967 = vmatpush1.bf16.msra.mxu0 0
    %968 = vmatprep.subr.bf16.mxu0 0
    %969 = vmatpush1.bf16.msra.mxu0 0
    %970 = vmatprep.subr.bf16.mxu0 0
    %971 = vmatpush1.bf16.msra.mxu0 0
    %972 = vmatprep.subr.bf16.mxu0 0
    %973 = vmatpush1.bf16.msra.mxu0 0
    %974 = vmatprep.subr.bf16.mxu0 0
    %975 = vmatpush1.bf16.msra.mxu0 0
    %976 = vmatprep.subr.bf16.mxu0 0
    %977 = vmatpush1.bf16.msra.mxu0 0
    %978 = vmatprep.subr.bf16.mxu0 0
    %979 = vmatpush1.bf16.msra.mxu0 0
    %980 = vmatprep.subr.bf16.mxu0 0
    %981 = vmatpush1.bf16.msra.mxu0 0
    %982 = vmatprep.subr.bf16.mxu0 0
    %983 = vmatpush1.bf16.msra.mxu0 0
    %984 = vmatprep.subr.bf16.mxu0 0
    %985 = vmatpush1.bf16.msra.mxu0 0
    %986 = vmatprep.subr.bf16.mxu0 0
    %987 = vmatpush1.bf16.msra.mxu0 0
    %988 = vmatprep.subr.bf16.mxu0 0
    %989 = vmatpush1.bf16.msra.mxu0 0
    %990 = vmatprep.subr.bf16.mxu0 0
    %991 = vmatpush1.bf16.msra.mxu0 0
    %992 = vmatprep.subr.bf16.mxu0 0
    %993 = vmatpush1.bf16.msra.mxu0 0
    %994 = vmatprep.mubr.bf16.mxu0 0
    %995 = vmatmul.mubr.bf16.gmra.mrb[0].mxu0 %v947
    %v996 = vpop.f32.mrb[0].mxu0
    %v997 = vadd.f32 %v918, %v996
    %v998 = vpop.f32.mrb[0].mxu0
    %v999 = vpop.f32.mrb[0].mxu0
    %v1000 = vadd.f32 %v918, %v999
    %v1001 = vpop.f32.mrb[0].mxu0
    %1002 = vmatprep.mubr.bf16.mxu0 0
    %1003 = vmatmul.mubr.bf16.gmra.mrb[0].mxu0 %v950
    %v1004 = vpop.f32.mrb[0].mxu0
    %v1005 = vadd.f32 %v918, %v1004
    %v1006 = vpop.f32.mrb[0].mxu0
    %v1007 = vpop.f32.mrb[0].mxu0
    %v1008 = vadd.f32 %v918, %v1007
    %v1009 = vpop.f32.mrb[0].mxu0
    %1010 = vmatprep.mubr.bf16.mxu0 0
    %1011 = vmatmul.mubr.bf16.gmra.mrb[0].mxu0 %v953
    %v1012 = vpop.f32.mrb[0].mxu0
    %v1013 = vadd.f32 %v918, %v1012
    %v1014 = vpop.f32.mrb[0].mxu0
    %v1015 = vpop.f32.mrb[0].mxu0
    %v1016 = vadd.f32 %v918, %v1015
    %v1017 = vpop.f32.mrb[0].mxu0
    %1018 = vmatprep.mubr.bf16.mxu0 0
    %1019 = vmatmul.mubr.bf16.gmra.mrb[0].mxu0 %v956
    %v1020 = vpop.f32.mrb[0].mxu0
    %v1021 = vadd.f32 %v918, %v1020
    %v1022 = vpop.f32.mrb[0].mxu0
    %v1023 = vpop.f32.mrb[0].mxu0
    %v1024 = vadd.f32 %v918, %v1023
    %v1025 = vpop.f32.mrb[0].mxu0
    %1026 = vdwg.mxu0
    %v1027 = vld [vmem:[%s25] sm:$0xf]
    %v1028 = vld [vmem:[%s25 + $0x4] sm:$0xf]
    %v1029 = vld [vmem:[%s25 + $0x8] sm:$0xf]
    %v1030 = vld [vmem:[%s25 + $0xc] sm:$0xf]
    %v1035 = vunpack.c.l.b16 %v1027
    %v1036 = vunpack.c.l.b16 %v1028
    %v1037 = vunpack.c.l.b16 %v1029
    %v1038 = vunpack.c.l.b16 %v1030
    %v1039 = vpack.c.b16 %v1036, %v1035
    %v1040 = vpack.c.b16 %v1038, %v1037
    %1043 = vmatprep.subr.bf16.mxu0 0
    %1044 = vmatpush1.bf16.msra.mxu0 %v1039
    %1045 = vmatprep.subr.bf16.mxu0 0
    %1046 = vmatpush1.bf16.msra.mxu0 %v1040
    %1047 = vmatprep.subr.bf16.mxu0 0
    %1048 = vmatpush1.bf16.msra.mxu0 0
    %1049 = vmatprep.subr.bf16.mxu0 0
    %1050 = vmatpush1.bf16.msra.mxu0 0
    %1051 = vmatprep.subr.bf16.mxu0 0
    %1052 = vmatpush1.bf16.msra.mxu0 0
    %1053 = vmatprep.subr.bf16.mxu0 0
    %1054 = vmatpush1.bf16.msra.mxu0 0
    %1055 = vmatprep.subr.bf16.mxu0 0
    %1056 = vmatpush1.bf16.msra.mxu0 0
    %1057 = vmatprep.subr.bf16.mxu0 0
    %1058 = vmatpush1.bf16.msra.mxu0 0
    %1059 = vmatprep.subr.bf16.mxu0 0
    %1060 = vmatpush1.bf16.msra.mxu0 0
    %1061 = vmatprep.subr.bf16.mxu0 0
    %1062 = vmatpush1.bf16.msra.mxu0 0
    %1063 = vmatprep.subr.bf16.mxu0 0
    %1064 = vmatpush1.bf16.msra.mxu0 0
    %1065 = vmatprep.subr.bf16.mxu0 0
    %1066 = vmatpush1.bf16.msra.mxu0 0
    %1067 = vmatprep.subr.bf16.mxu0 0
    %1068 = vmatpush1.bf16.msra.mxu0 0
    %1069 = vmatprep.subr.bf16.mxu0 0
    %1070 = vmatpush1.bf16.msra.mxu0 0
    %1071 = vmatprep.subr.bf16.mxu0 0
    %1072 = vmatpush1.bf16.msra.mxu0 0
    %1073 = vmatprep.subr.bf16.mxu0 0
    %1074 = vmatpush1.bf16.msra.mxu0 0
    %1075 = vmatprep.mubr.bf16.mxu0 0
    %1076 = vmatmul.mubr.bf16.gmra.mrb[0].mxu0 %v332
    %v1077 = vpop.f32.mrb[0].mxu0
    %v1078 = vadd.f32 0.0, %v1077
    %v1079 = vpop.f32.mrb[0].mxu0
    %v1080 = vpop.f32.mrb[0].mxu0
    %v1081 = vpop.f32.mrb[0].mxu0
    %1082 = vdwg.mxu0
    %v1083 = vadd.f32 %v997, %v1078
    %v1084 = vxor.u32 %v1083, 2147483648
    %v1085 = vmul.f32 %v1084, 1.442695
    %v1086 = vpow.pop %v1085
    %v1087 = vadd.f32 %v1086, 1.0
    %v1088 = vrcp.pop %v1087
    %v1089 = vmul.f32 1.0, %v1088
    %v1090 = vtanh.pop %v1083
    %v1091 = vmul.f32 %v1089, 0.0
    %1093 = vrot.lane.b32.xlu0 %v1090, 64
    %v1094 = vpop.permute.xlu0 %1093
    %v1096 = vmul.f32 %v1089, %v1094
    %1098 = vrot.lane.b32.xlu0 %v1096, 32
    %v1099 = vpop.permute.xlu0 %1098
    %v1101 = vadd.f32 %v1091, %v1099
    %v1102 = vtanh.pop %v1101
    %1104 = vrot.lane.b32.xlu0 %v1102, 64
    %v1105 = vpop.permute.xlu0 %1104
    %v1107 = vmul.f32 %v1089, %v1105
    %v1108 = vpack.c.bf16 %v1107, %v1107
    %1110 = vrot.lane.b32.xlu0 %v1108, 32
    %v1111 = vpop.permute.xlu0 %1110
    %v1113 = vsel %vm330, %v1111, 0
    %1115 = vmatprep.subr.bf16.mxu0 0
    %1116 = vmatpush1.bf16.msra.mxu0 %v1039
    %1117 = vmatprep.subr.bf16.mxu0 0
    %1118 = vmatpush1.bf16.msra.mxu0 %v1040
    %1119 = vmatprep.subr.bf16.mxu0 0
    %1120 = vmatpush1.bf16.msra.mxu0 0
    %1121 = vmatprep.subr.bf16.mxu0 0
    %1122 = vmatpush1.bf16.msra.mxu0 0
    %1123 = vmatprep.subr.bf16.mxu0 0
    %1124 = vmatpush1.bf16.msra.mxu0 0
    %1125 = vmatprep.subr.bf16.mxu0 0
    %1126 = vmatpush1.bf16.msra.mxu0 0
    %1127 = vmatprep.subr.bf16.mxu0 0
    %1128 = vmatpush1.bf16.msra.mxu0 0
    %1129 = vmatprep.subr.bf16.mxu0 0
    %1130 = vmatpush1.bf16.msra.mxu0 0
    %1131 = vmatprep.subr.bf16.mxu0 0
    %1132 = vmatpush1.bf16.msra.mxu0 0
    %1133 = vmatprep.subr.bf16.mxu0 0
    %1134 = vmatpush1.bf16.msra.mxu0 0
    %1135 = vmatprep.subr.bf16.mxu0 0
    %1136 = vmatpush1.bf16.msra.mxu0 0
    %1137 = vmatprep.subr.bf16.mxu0 0
    %1138 = vmatpush1.bf16.msra.mxu0 0
    %1139 = vmatprep.subr.bf16.mxu0 0
    %1140 = vmatpush1.bf16.msra.mxu0 0
    %1141 = vmatprep.subr.bf16.mxu0 0
    %1142 = vmatpush1.bf16.msra.mxu0 0
    %1143 = vmatprep.subr.bf16.mxu0 0
    %1144 = vmatpush1.bf16.msra.mxu0 0
    %1145 = vmatprep.subr.bf16.mxu0 0
    %1146 = vmatpush1.bf16.msra.mxu0 0
    %1147 = vmatprep.mubr.bf16.mxu0 0
    %1148 = vmatmul.mubr.bf16.gmra.mrb[0].mxu0 %v1113
    %v1149 = vpop.f32.mrb[0].mxu0
    %v1150 = vadd.f32 0.0, %v1149
    %v1151 = vpop.f32.mrb[0].mxu0
    %v1152 = vpop.f32.mrb[0].mxu0
    %v1153 = vpop.f32.mrb[0].mxu0
    %1154 = vdwg.mxu0
    %v1155 = vadd.f32 %v1000, %v1150
    %v1156 = vxor.u32 %v1155, 2147483648
    %v1157 = vmul.f32 %v1156, 1.442695
    %v1158 = vpow.pop %v1157
    %v1159 = vadd.f32 %v1158, 1.0
    %v1160 = vrcp.pop %v1159
    %v1161 = vmul.f32 1.0, %v1160
    %v1162 = vtanh.pop %v1155
    %v1163 = vmul.f32 %v1161, %v1101
    %1165 = vrot.lane.b32.xlu0 %v1162, 64
    %v1166 = vpop.permute.xlu0 %1165
    %v1168 = vmul.f32 %v1161, %v1166
    %1170 = vrot.lane.b32.xlu0 %v1168, 32
    %v1171 = vpop.permute.xlu0 %1170
    %v1173 = vadd.f32 %v1163, %v1171
    %v1174 = vtanh.pop %v1173
    %1176 = vrot.lane.b32.xlu0 %v1174, 64
    %v1177 = vpop.permute.xlu0 %1176
    %v1179 = vmul.f32 %v1161, %v1177
    %v1180 = vpack.c.bf16 %v1179, %v1179
    %1182 = vrot.lane.b32.xlu0 %v1180, 32
    %v1183 = vpop.permute.xlu0 %1182
    %v1185 = vsel %vm330, %v1183, 0
    %1187 = vmatprep.subr.bf16.mxu0 0
    %1188 = vmatpush1.bf16.msra.mxu0 %v1039
    %1189 = vmatprep.subr.bf16.mxu0 0
    %1190 = vmatpush1.bf16.msra.mxu0 %v1040
    %1191 = vmatprep.subr.bf16.mxu0 0
    %1192 = vmatpush1.bf16.msra.mxu0 0
    %1193 = vmatprep.subr.bf16.mxu0 0
    %1194 = vmatpush1.bf16.msra.mxu0 0
    %1195 = vmatprep.subr.bf16.mxu0 0
    %1196 = vmatpush1.bf16.msra.mxu0 0
    %1197 = vmatprep.subr.bf16.mxu0 0
    %1198 = vmatpush1.bf16.msra.mxu0 0
    %1199 = vmatprep.subr.bf16.mxu0 0
    %1200 = vmatpush1.bf16.msra.mxu0 0
    %1201 = vmatprep.subr.bf16.mxu0 0
    %1202 = vmatpush1.bf16.msra.mxu0 0
    %1203 = vmatprep.subr.bf16.mxu0 0
    %1204 = vmatpush1.bf16.msra.mxu0 0
    %1205 = vmatprep.subr.bf16.mxu0 0
    %1206 = vmatpush1.bf16.msra.mxu0 0
    %1207 = vmatprep.subr.bf16.mxu0 0
    %1208 = vmatpush1.bf16.msra.mxu0 0
    %1209 = vmatprep.subr.bf16.mxu0 0
    %1210 = vmatpush1.bf16.msra.mxu0 0
    %1211 = vmatprep.subr.bf16.mxu0 0
    %1212 = vmatpush1.bf16.msra.mxu0 0
    %1213 = vmatprep.subr.bf16.mxu0 0
    %1214 = vmatpush1.bf16.msra.mxu0 0
    %1215 = vmatprep.subr.bf16.mxu0 0
    %1216 = vmatpush1.bf16.msra.mxu0 0
    %1217 = vmatprep.subr.bf16.mxu0 0
    %1218 = vmatpush1.bf16.msra.mxu0 0
    %1219 = vmatprep.mubr.bf16.mxu0 0
    %1220 = vmatmul.mubr.bf16.gmra.mrb[0].mxu0 %v1185
    %v1221 = vpop.f32.mrb[0].mxu0
    %v1222 = vadd.f32 0.0, %v1221
    %v1223 = vpop.f32.mrb[0].mxu0
    %v1224 = vpop.f32.mrb[0].mxu0
    %v1225 = vpop.f32.mrb[0].mxu0
    %1226 = vdwg.mxu0
    %v1227 = vadd.f32 %v1005, %v1222
    %v1228 = vxor.u32 %v1227, 2147483648
    %v1229 = vmul.f32 %v1228, 1.442695
    %v1230 = vpow.pop %v1229
    %v1231 = vadd.f32 %v1230, 1.0
    %v1232 = vrcp.pop %v1231
    %v1233 = vmul.f32 1.0, %v1232
    %v1234 = vtanh.pop %v1227
    %v1235 = vmul.f32 %v1233, %v1173
    %1237 = vrot.lane.b32.xlu0 %v1234, 64
    %v1238 = vpop.permute.xlu0 %1237
    %v1240 = vmul.f32 %v1233, %v1238
    %1242 = vrot.lane.b32.xlu0 %v1240, 32
    %v1243 = vpop.permute.xlu0 %1242
    %v1245 = vadd.f32 %v1235, %v1243
    %v1246 = vtanh.pop %v1245
    %1248 = vrot.lane.b32.xlu0 %v1246, 64
    %v1249 = vpop.permute.xlu0 %1248
    %v1251 = vmul.f32 %v1233, %v1249
    %v1252 = vpack.c.bf16 %v1251, %v1251
    %1254 = vrot.lane.b32.xlu0 %v1252, 32
    %v1255 = vpop.permute.xlu0 %1254
    %v1257 = vsel %vm330, %v1255, 0
    %1259 = vmatprep.subr.bf16.mxu0 0
    %1260 = vmatpush1.bf16.msra.mxu0 %v1039
    %1261 = vmatprep.subr.bf16.mxu0 0
    %1262 = vmatpush1.bf16.msra.mxu0 %v1040
    %1263 = vmatprep.subr.bf16.mxu0 0
    %1264 = vmatpush1.bf16.msra.mxu0 0
    %1265 = vmatprep.subr.bf16.mxu0 0
    %1266 = vmatpush1.bf16.msra.mxu0 0
    %1267 = vmatprep.subr.bf16.mxu0 0
    %1268 = vmatpush1.bf16.msra.mxu0 0
    %1269 = vmatprep.subr.bf16.mxu0 0
    %1270 = vmatpush1.bf16.msra.mxu0 0
    %1271 = vmatprep.subr.bf16.mxu0 0
    %1272 = vmatpush1.bf16.msra.mxu0 0
    %1273 = vmatprep.subr.bf16.mxu0 0
    %1274 = vmatpush1.bf16.msra.mxu0 0
    %1275 = vmatprep.subr.bf16.mxu0 0
    %1276 = vmatpush1.bf16.msra.mxu0 0
    %1277 = vmatprep.subr.bf16.mxu0 0
    %1278 = vmatpush1.bf16.msra.mxu0 0
    %1279 = vmatprep.subr.bf16.mxu0 0
    %1280 = vmatpush1.bf16.msra.mxu0 0
    %1281 = vmatprep.subr.bf16.mxu0 0
    %1282 = vmatpush1.bf16.msra.mxu0 0
    %1283 = vmatprep.subr.bf16.mxu0 0
    %1284 = vmatpush1.bf16.msra.mxu0 0
    %1285 = vmatprep.subr.bf16.mxu0 0
    %1286 = vmatpush1.bf16.msra.mxu0 0
    %1287 = vmatprep.subr.bf16.mxu0 0
    %1288 = vmatpush1.bf16.msra.mxu0 0
    %1289 = vmatprep.subr.bf16.mxu0 0
    %1290 = vmatpush1.bf16.msra.mxu0 0
    %1291 = vmatprep.mubr.bf16.mxu0 0
    %1292 = vmatmul.mubr.bf16.gmra.mrb[0].mxu0 %v1257
    %v1293 = vpop.f32.mrb[0].mxu0
    %v1294 = vadd.f32 0.0, %v1293
    %v1295 = vpop.f32.mrb[0].mxu0
    %v1296 = vpop.f32.mrb[0].mxu0
    %v1297 = vpop.f32.mrb[0].mxu0
    %1298 = vdwg.mxu0
    %v1299 = vadd.f32 %v1008, %v1294
    %v1300 = vxor.u32 %v1299, 2147483648
    %v1301 = vmul.f32 %v1300, 1.442695
    %v1302 = vpow.pop %v1301
    %v1303 = vadd.f32 %v1302, 1.0
    %v1304 = vrcp.pop %v1303
    %v1305 = vmul.f32 1.0, %v1304
    %v1306 = vtanh.pop %v1299
    %v1307 = vmul.f32 %v1305, %v1245
    %1309 = vrot.lane.b32.xlu0 %v1306, 64
    %v1310 = vpop.permute.xlu0 %1309
    %v1312 = vmul.f32 %v1305, %v1310
    %1314 = vrot.lane.b32.xlu0 %v1312, 32
    %v1315 = vpop.permute.xlu0 %1314
    %v1317 = vadd.f32 %v1307, %v1315
    %v1318 = vtanh.pop %v1317
    %1320 = vrot.lane.b32.xlu0 %v1318, 64
    %v1321 = vpop.permute.xlu0 %1320
    %v1323 = vmul.f32 %v1305, %v1321
    %v1324 = vpack.c.bf16 %v1323, %v1323
    %1326 = vrot.lane.b32.xlu0 %v1324, 32
    %v1327 = vpop.permute.xlu0 %1326
    %v1329 = vsel %vm330, %v1327, 0
    %1331 = vmatprep.subr.bf16.mxu0 0
    %1332 = vmatpush1.bf16.msra.mxu0 %v1039
    %1333 = vmatprep.subr.bf16.mxu0 0
    %1334 = vmatpush1.bf16.msra.mxu0 %v1040
    %1335 = vmatprep.subr.bf16.mxu0 0
    %1336 = vmatpush1.bf16.msra.mxu0 0
    %1337 = vmatprep.subr.bf16.mxu0 0
    %1338 = vmatpush1.bf16.msra.mxu0 0
    %1339 = vmatprep.subr.bf16.mxu0 0
    %1340 = vmatpush1.bf16.msra.mxu0 0
    %1341 = vmatprep.subr.bf16.mxu0 0
    %1342 = vmatpush1.bf16.msra.mxu0 0
    %1343 = vmatprep.subr.bf16.mxu0 0
    %1344 = vmatpush1.bf16.msra.mxu0 0
    %1345 = vmatprep.subr.bf16.mxu0 0
    %1346 = vmatpush1.bf16.msra.mxu0 0
    %1347 = vmatprep.subr.bf16.mxu0 0
    %1348 = vmatpush1.bf16.msra.mxu0 0
    %1349 = vmatprep.subr.bf16.mxu0 0
    %1350 = vmatpush1.bf16.msra.mxu0 0
    %1351 = vmatprep.subr.bf16.mxu0 0
    %1352 = vmatpush1.bf16.msra.mxu0 0
    %1353 = vmatprep.subr.bf16.mxu0 0
    %1354 = vmatpush1.bf16.msra.mxu0 0
    %1355 = vmatprep.subr.bf16.mxu0 0
    %1356 = vmatpush1.bf16.msra.mxu0 0
    %1357 = vmatprep.subr.bf16.mxu0 0
    %1358 = vmatpush1.bf16.msra.mxu0 0
    %1359 = vmatprep.subr.bf16.mxu0 0
    %1360 = vmatpush1.bf16.msra.mxu0 0
    %1361 = vmatprep.subr.bf16.mxu0 0
    %1362 = vmatpush1.bf16.msra.mxu0 0
    %1363 = vmatprep.mubr.bf16.mxu0 0
    %1364 = vmatmul.mubr.bf16.gmra.mrb[0].mxu0 %v1329
    %v1365 = vpop.f32.mrb[0].mxu0
    %v1366 = vadd.f32 0.0, %v1365
    %v1367 = vpop.f32.mrb[0].mxu0
    %v1368 = vpop.f32.mrb[0].mxu0
    %v1369 = vpop.f32.mrb[0].mxu0
    %1370 = vdwg.mxu0
    %v1371 = vadd.f32 %v1013, %v1366
    %v1372 = vxor.u32 %v1371, 2147483648
    %v1373 = vmul.f32 %v1372, 1.442695
    %v1374 = vpow.pop %v1373
    %v1375 = vadd.f32 %v1374, 1.0
    %v1376 = vrcp.pop %v1375
    %v1377 = vmul.f32 1.0, %v1376
    %v1378 = vtanh.pop %v1371
    %v1379 = vmul.f32 %v1377, %v1317
    %1381 = vrot.lane.b32.xlu0 %v1378, 64
    %v1382 = vpop.permute.xlu0 %1381
    %v1384 = vmul.f32 %v1377, %v1382
    %1386 = vrot.lane.b32.xlu0 %v1384, 32
    %v1387 = vpop.permute.xlu0 %1386
    %v1389 = vadd.f32 %v1379, %v1387
    %v1390 = vtanh.pop %v1389
    %1392 = vrot.lane.b32.xlu0 %v1390, 64
    %v1393 = vpop.permute.xlu0 %1392
    %v1395 = vmul.f32 %v1377, %v1393
    %v1396 = vpack.c.bf16 %v1395, %v1395
    %1398 = vrot.lane.b32.xlu0 %v1396, 32
    %v1399 = vpop.permute.xlu0 %1398
    %v1401 = vsel %vm330, %v1399, 0
    %1403 = vmatprep.subr.bf16.mxu0 0
    %1404 = vmatpush1.bf16.msra.mxu0 %v1039
    %1405 = vmatprep.subr.bf16.mxu0 0
    %1406 = vmatpush1.bf16.msra.mxu0 %v1040
    %1407 = vmatprep.subr.bf16.mxu0 0
    %1408 = vmatpush1.bf16.msra.mxu0 0
    %1409 = vmatprep.subr.bf16.mxu0 0
    %1410 = vmatpush1.bf16.msra.mxu0 0
    %1411 = vmatprep.subr.bf16.mxu0 0
    %1412 = vmatpush1.bf16.msra.mxu0 0
    %1413 = vmatprep.subr.bf16.mxu0 0
    %1414 = vmatpush1.bf16.msra.mxu0 0
    %1415 = vmatprep.subr.bf16.mxu0 0
    %1416 = vmatpush1.bf16.msra.mxu0 0
    %1417 = vmatprep.subr.bf16.mxu0 0
    %1418 = vmatpush1.bf16.msra.mxu0 0
    %1419 = vmatprep.subr.bf16.mxu0 0
    %1420 = vmatpush1.bf16.msra.mxu0 0
    %1421 = vmatprep.subr.bf16.mxu0 0
    %1422 = vmatpush1.bf16.msra.mxu0 0
    %1423 = vmatprep.subr.bf16.mxu0 0
    %1424 = vmatpush1.bf16.msra.mxu0 0
    %1425 = vmatprep.subr.bf16.mxu0 0
    %1426 = vmatpush1.bf16.msra.mxu0 0
    %1427 = vmatprep.subr.bf16.mxu0 0
    %1428 = vmatpush1.bf16.msra.mxu0 0
    %1429 = vmatprep.subr.bf16.mxu0 0
    %1430 = vmatpush1.bf16.msra.mxu0 0
    %1431 = vmatprep.subr.bf16.mxu0 0
    %1432 = vmatpush1.bf16.msra.mxu0 0
    %1433 = vmatprep.subr.bf16.mxu0 0
    %1434 = vmatpush1.bf16.msra.mxu0 0
    %1435 = vmatprep.mubr.bf16.mxu0 0
    %1436 = vmatmul.mubr.bf16.gmra.mrb[0].mxu0 %v1401
    %v1437 = vpop.f32.mrb[0].mxu0
    %v1438 = vadd.f32 0.0, %v1437
    %v1439 = vpop.f32.mrb[0].mxu0
    %v1440 = vpop.f32.mrb[0].mxu0
    %v1441 = vpop.f32.mrb[0].mxu0
    %1442 = vdwg.mxu0
    %v1443 = vadd.f32 %v1016, %v1438
    %v1444 = vxor.u32 %v1443, 2147483648
    %v1445 = vmul.f32 %v1444, 1.442695
    %v1446 = vpow.pop %v1445
    %v1447 = vadd.f32 %v1446, 1.0
    %v1448 = vrcp.pop %v1447
    %v1449 = vmul.f32 1.0, %v1448
    %v1450 = vtanh.pop %v1443
    %v1451 = vmul.f32 %v1449, %v1389
    %1453 = vrot.lane.b32.xlu0 %v1450, 64
    %v1454 = vpop.permute.xlu0 %1453
    %v1456 = vmul.f32 %v1449, %v1454
    %1458 = vrot.lane.b32.xlu0 %v1456, 32
    %v1459 = vpop.permute.xlu0 %1458
    %v1461 = vadd.f32 %v1451, %v1459
    %v1462 = vtanh.pop %v1461
    %1464 = vrot.lane.b32.xlu0 %v1462, 64
    %v1465 = vpop.permute.xlu0 %1464
    %v1467 = vmul.f32 %v1449, %v1465
    %v1468 = vpack.c.bf16 %v1467, %v1467
    %1470 = vrot.lane.b32.xlu0 %v1468, 32
    %v1471 = vpop.permute.xlu0 %1470
    %v1473 = vsel %vm330, %v1471, 0
    %1475 = vmatprep.subr.bf16.mxu0 0
    %1476 = vmatpush1.bf16.msra.mxu0 %v1039
    %1477 = vmatprep.subr.bf16.mxu0 0
    %1478 = vmatpush1.bf16.msra.mxu0 %v1040
    %1479 = vmatprep.subr.bf16.mxu0 0
    %1480 = vmatpush1.bf16.msra.mxu0 0
    %1481 = vmatprep.subr.bf16.mxu0 0
    %1482 = vmatpush1.bf16.msra.mxu0 0
    %1483 = vmatprep.subr.bf16.mxu0 0
    %1484 = vmatpush1.bf16.msra.mxu0 0
    %1485 = vmatprep.subr.bf16.mxu0 0
    %1486 = vmatpush1.bf16.msra.mxu0 0
    %1487 = vmatprep.subr.bf16.mxu0 0
    %1488 = vmatpush1.bf16.msra.mxu0 0
    %1489 = vmatprep.subr.bf16.mxu0 0
    %1490 = vmatpush1.bf16.msra.mxu0 0
    %1491 = vmatprep.subr.bf16.mxu0 0
    %1492 = vmatpush1.bf16.msra.mxu0 0
    %1493 = vmatprep.subr.bf16.mxu0 0
    %1494 = vmatpush1.bf16.msra.mxu0 0
    %1495 = vmatprep.subr.bf16.mxu0 0
    %1496 = vmatpush1.bf16.msra.mxu0 0
    %1497 = vmatprep.subr.bf16.mxu0 0
    %1498 = vmatpush1.bf16.msra.mxu0 0
    %1499 = vmatprep.subr.bf16.mxu0 0
    %1500 = vmatpush1.bf16.msra.mxu0 0
    %1501 = vmatprep.subr.bf16.mxu0 0
    %1502 = vmatpush1.bf16.msra.mxu0 0
    %1503 = vmatprep.subr.bf16.mxu0 0
    %1504 = vmatpush1.bf16.msra.mxu0 0
    %1505 = vmatprep.subr.bf16.mxu0 0
    %1506 = vmatpush1.bf16.msra.mxu0 0
    %1507 = vmatprep.mubr.bf16.mxu0 0
    %1508 = vmatmul.mubr.bf16.gmra.mrb[0].mxu0 %v1473
    %v1509 = vpop.f32.mrb[0].mxu0
    %v1510 = vadd.f32 0.0, %v1509
    %v1511 = vpop.f32.mrb[0].mxu0
    %v1512 = vpop.f32.mrb[0].mxu0
    %v1513 = vpop.f32.mrb[0].mxu0
    %1514 = vdwg.mxu0
    %v1515 = vadd.f32 %v1021, %v1510
    %v1516 = vxor.u32 %v1515, 2147483648
    %v1517 = vmul.f32 %v1516, 1.442695
    %v1518 = vpow.pop %v1517
    %v1519 = vadd.f32 %v1518, 1.0
    %v1520 = vrcp.pop %v1519
    %v1521 = vmul.f32 1.0, %v1520
    %v1522 = vtanh.pop %v1515
    %v1523 = vmul.f32 %v1521, %v1461
    %1525 = vrot.lane.b32.xlu0 %v1522, 64
    %v1526 = vpop.permute.xlu0 %1525
    %v1528 = vmul.f32 %v1521, %v1526
    %1530 = vrot.lane.b32.xlu0 %v1528, 32
    %v1531 = vpop.permute.xlu0 %1530
    %v1533 = vadd.f32 %v1523, %v1531
    %v1534 = vtanh.pop %v1533
    %1536 = vrot.lane.b32.xlu0 %v1534, 64
    %v1537 = vpop.permute.xlu0 %1536
    %v1539 = vmul.f32 %v1521, %v1537
    %v1540 = vpack.c.bf16 %v1539, %v1539
    %1542 = vrot.lane.b32.xlu0 %v1540, 32
    %v1543 = vpop.permute.xlu0 %1542
    %v1545 = vsel %vm330, %v1543, 0
    %1547 = vmatprep.subr.bf16.mxu0 0
    %1548 = vmatpush1.bf16.msra.mxu0 %v1039
    %1549 = vmatprep.subr.bf16.mxu0 0
    %1550 = vmatpush1.bf16.msra.mxu0 %v1040
    %1551 = vmatprep.subr.bf16.mxu0 0
    %1552 = vmatpush1.bf16.msra.mxu0 0
    %1553 = vmatprep.subr.bf16.mxu0 0
    %1554 = vmatpush1.bf16.msra.mxu0 0
    %1555 = vmatprep.subr.bf16.mxu0 0
    %1556 = vmatpush1.bf16.msra.mxu0 0
    %1557 = vmatprep.subr.bf16.mxu0 0
    %1558 = vmatpush1.bf16.msra.mxu0 0
    %1559 = vmatprep.subr.bf16.mxu0 0
    %1560 = vmatpush1.bf16.msra.mxu0 0
    %1561 = vmatprep.subr.bf16.mxu0 0
    %1562 = vmatpush1.bf16.msra.mxu0 0
    %1563 = vmatprep.subr.bf16.mxu0 0
    %1564 = vmatpush1.bf16.msra.mxu0 0
    %1565 = vmatprep.subr.bf16.mxu0 0
    %1566 = vmatpush1.bf16.msra.mxu0 0
    %1567 = vmatprep.subr.bf16.mxu0 0
    %1568 = vmatpush1.bf16.msra.mxu0 0
    %1569 = vmatprep.subr.bf16.mxu0 0
    %1570 = vmatpush1.bf16.msra.mxu0 0
    %1571 = vmatprep.subr.bf16.mxu0 0
    %1572 = vmatpush1.bf16.msra.mxu0 0
    %1573 = vmatprep.subr.bf16.mxu0 0
    %1574 = vmatpush1.bf16.msra.mxu0 0
    %1575 = vmatprep.subr.bf16.mxu0 0
    %1576 = vmatpush1.bf16.msra.mxu0 0
    %1577 = vmatprep.subr.bf16.mxu0 0
    %1578 = vmatpush1.bf16.msra.mxu0 0
    %1579 = vmatprep.mubr.bf16.mxu0 0
    %1580 = vmatmul.mubr.bf16.gmra.mrb[0].mxu0 %v1545
    %v1581 = vpop.f32.mrb[0].mxu0
    %v1582 = vadd.f32 0.0, %v1581
    %v1583 = vpop.f32.mrb[0].mxu0
    %v1584 = vpop.f32.mrb[0].mxu0
    %v1585 = vpop.f32.mrb[0].mxu0
    %1586 = vdwg.mxu0
    %v1587 = vadd.f32 %v1024, %v1582
    %v1588 = vxor.u32 %v1587, 2147483648
    %v1589 = vmul.f32 %v1588, 1.442695
    %v1590 = vpow.pop %v1589
    %v1591 = vadd.f32 %v1590, 1.0
    %v1592 = vrcp.pop %v1591
    %v1593 = vmul.f32 1.0, %v1592
    %v1594 = vtanh.pop %v1587
    %v1595 = vmul.f32 %v1593, %v1533
    %1597 = vrot.lane.b32.xlu0 %v1594, 64
    %v1598 = vpop.permute.xlu0 %1597
    %v1600 = vmul.f32 %v1593, %v1598
    %1602 = vrot.lane.b32.xlu0 %v1600, 32
    %v1603 = vpop.permute.xlu0 %1602
    %v1605 = vadd.f32 %v1595, %v1603
    %v1606 = vtanh.pop %v1605
    %1608 = vrot.lane.b32.xlu0 %v1606, 64
    %v1609 = vpop.permute.xlu0 %1608
    %v1611 = vmul.f32 %v1593, %v1609
    %v1612 = vld [vmem:[%s5] sm:$0xff]
    %1614 = vset.pattern.permute.xlu0 0
    %1615 = vperm.xlu0 %1614, %v1612
    %v1616 = vpop.permute.xlu0 %1615
    %v1618 = vmul.f32 %v1611, %v1616
    %s1619 = scalar_lea.vmem %s3, 32
    %v1620 = vld [vmem:[%s1619] sm:$0xf]
    %v1621 = vld [vmem:[%s1619 + $0x4] sm:$0xf]
    %v1622 = vld [vmem:[%s1619 + $0x8] sm:$0xf]
    %v1623 = vld [vmem:[%s1619 + $0xc] sm:$0xf]
    %v1624 = vld [vmem:[%s1619 + $0x10] sm:$0xf]
    %v1625 = vld [vmem:[%s1619 + $0x14] sm:$0xf]
    %v1626 = vld [vmem:[%s1619 + $0x18] sm:$0xf]
    %v1627 = vld [vmem:[%s1619 + $0x1c] sm:$0xf]
    %s1628 = scalar_lea.vmem %s23, 8
    %v1629 = vld [vmem:[%s1628] sm:$0xf]
    %v1630 = vld [vmem:[%s1628 + $0x4] sm:$0x7]
    %s1631 = scalar_lea.vmem %s27, 1
    %v1632 = vld [vmem:[%s1631] sm:$0x1]
    %v1634 = vlaneseq
    %v1635 = vshrl.u32 %v1634, 7
    %v1636 = vsub.s32 0, %v1635
    %v1637 = vrot.slane %v1632, %v1636
    %v1647 = vunpack.c.l.b16 %v1620
    %v1648 = vunpack.c.l.b16 %v1621
    %v1649 = vunpack.c.l.b16 %v1622
    %v1650 = vunpack.c.l.b16 %v1623
    %v1651 = vunpack.c.l.b16 %v1624
    %v1652 = vunpack.c.l.b16 %v1625
    %v1653 = vunpack.c.l.b16 %v1626
    %v1654 = vunpack.c.l.b16 %v1627
    %v1655 = vpack.c.b16 %v1648, %v1647
    %v1656 = vpack.c.b16 %v1650, %v1649
    %v1657 = vpack.c.b16 %v1652, %v1651
    %v1658 = vpack.c.b16 %v1654, %v1653
    %v1661 = vunpack.c.l.b16 %v1629
    %v1662 = vunpack.c.l.b16 %v1630
    %v1663 = vpack.c.b16 %v1662, %v1661
    %v1665 = vsel %vm945, %v1655, 0
    %v1668 = vsel %vm945, %v1656, 0
    %v1671 = vsel %vm945, %v1657, 0
    %v1674 = vsel %vm945, %v1658, 0
    %v1677 = vsel %vm958, %v1663, 0
    %1679 = vmatprep.subr.bf16.mxu0 0
    %1680 = vmatpush1.bf16.msra.mxu0 %v1677
    %1681 = vmatprep.subr.bf16.mxu0 0
    %1682 = vmatpush1.bf16.msra.mxu0 0
    %1683 = vmatprep.subr.bf16.mxu0 0
    %1684 = vmatpush1.bf16.msra.mxu0 0
    %1685 = vmatprep.subr.bf16.mxu0 0
    %1686 = vmatpush1.bf16.msra.mxu0 0
    %1687 = vmatprep.subr.bf16.mxu0 0
    %1688 = vmatpush1.bf16.msra.mxu0 0
    %1689 = vmatprep.subr.bf16.mxu0 0
    %1690 = vmatpush1.bf16.msra.mxu0 0
    %1691 = vmatprep.subr.bf16.mxu0 0
    %1692 = vmatpush1.bf16.msra.mxu0 0
    %1693 = vmatprep.subr.bf16.mxu0 0
    %1694 = vmatpush1.bf16.msra.mxu0 0
    %1695 = vmatprep.subr.bf16.mxu0 0
    %1696 = vmatpush1.bf16.msra.mxu0 0
    %1697 = vmatprep.subr.bf16.mxu0 0
    %1698 = vmatpush1.bf16.msra.mxu0 0
    %1699 = vmatprep.subr.bf16.mxu0 0
    %1700 = vmatpush1.bf16.msra.mxu0 0
    %1701 = vmatprep.subr.bf16.mxu0 0
    %1702 = vmatpush1.bf16.msra.mxu0 0
    %1703 = vmatprep.subr.bf16.mxu0 0
    %1704 = vmatpush1.bf16.msra.mxu0 0
    %1705 = vmatprep.subr.bf16.mxu0 0
    %1706 = vmatpush1.bf16.msra.mxu0 0
    %1707 = vmatprep.subr.bf16.mxu0 0
    %1708 = vmatpush1.bf16.msra.mxu0 0
    %1709 = vmatprep.subr.bf16.mxu0 0
    %1710 = vmatpush1.bf16.msra.mxu0 0
    %1711 = vmatprep.mubr.bf16.mxu0 0
    %1712 = vmatmul.mubr.bf16.gmra.mrb[0].mxu0 %v1665
    %v1713 = vpop.f32.mrb[0].mxu0
    %v1714 = vadd.f32 %v1637, %v1713
    %v1715 = vpop.f32.mrb[0].mxu0
    %v1716 = vpop.f32.mrb[0].mxu0
    %v1717 = vadd.f32 %v1637, %v1716
    %v1718 = vpop.f32.mrb[0].mxu0
    %1719 = vmatprep.mubr.bf16.mxu0 0
    %1720 = vmatmul.mubr.bf16.gmra.mrb[0].mxu0 %v1668
    %v1721 = vpop.f32.mrb[0].mxu0
    %v1722 = vadd.f32 %v1637, %v1721
    %v1723 = vpop.f32.mrb[0].mxu0
    %v1724 = vpop.f32.mrb[0].mxu0
    %v1725 = vadd.f32 %v1637, %v1724
    %v1726 = vpop.f32.mrb[0].mxu0
    %1727 = vmatprep.mubr.bf16.mxu0 0
    %1728 = vmatmul.mubr.bf16.gmra.mrb[0].mxu0 %v1671
    %v1729 = vpop.f32.mrb[0].mxu0
    %v1730 = vadd.f32 %v1637, %v1729
    %v1731 = vpop.f32.mrb[0].mxu0
    %v1732 = vpop.f32.mrb[0].mxu0
    %v1733 = vadd.f32 %v1637, %v1732
    %v1734 = vpop.f32.mrb[0].mxu0
    %1735 = vmatprep.mubr.bf16.mxu0 0
    %1736 = vmatmul.mubr.bf16.gmra.mrb[0].mxu0 %v1674
    %v1737 = vpop.f32.mrb[0].mxu0
    %v1738 = vadd.f32 %v1637, %v1737
    %v1739 = vpop.f32.mrb[0].mxu0
    %v1740 = vpop.f32.mrb[0].mxu0
    %v1741 = vadd.f32 %v1637, %v1740
    %v1742 = vpop.f32.mrb[0].mxu0
    %1743 = vdwg.mxu0
    %s1744 = scalar_lea.vmem %s25, 16
    %v1745 = vld [vmem:[%s1744] sm:$0xf]
    %v1746 = vld [vmem:[%s1744 + $0x4] sm:$0xf]
    %v1747 = vld [vmem:[%s1744 + $0x8] sm:$0xf]
    %v1748 = vld [vmem:[%s1744 + $0xc] sm:$0xf]
    %v1753 = vunpack.c.l.b16 %v1745
    %v1754 = vunpack.c.l.b16 %v1746
    %v1755 = vunpack.c.l.b16 %v1747
    %v1756 = vunpack.c.l.b16 %v1748
    %v1757 = vpack.c.b16 %v1754, %v1753
    %v1758 = vpack.c.b16 %v1756, %v1755
    %1761 = vmatprep.subr.bf16.mxu0 0
    %1762 = vmatpush1.bf16.msra.mxu0 %v1757
    %1763 = vmatprep.subr.bf16.mxu0 0
    %1764 = vmatpush1.bf16.msra.mxu0 %v1758
    %1765 = vmatprep.subr.bf16.mxu0 0
    %1766 = vmatpush1.bf16.msra.mxu0 0
    %1767 = vmatprep.subr.bf16.mxu0 0
    %1768 = vmatpush1.bf16.msra.mxu0 0
    %1769 = vmatprep.subr.bf16.mxu0 0
    %1770 = vmatpush1.bf16.msra.mxu0 0
    %1771 = vmatprep.subr.bf16.mxu0 0
    %1772 = vmatpush1.bf16.msra.mxu0 0
    %1773 = vmatprep.subr.bf16.mxu0 0
    %1774 = vmatpush1.bf16.msra.mxu0 0
    %1775 = vmatprep.subr.bf16.mxu0 0
    %1776 = vmatpush1.bf16.msra.mxu0 0
    %1777 = vmatprep.subr.bf16.mxu0 0
    %1778 = vmatpush1.bf16.msra.mxu0 0
    %1779 = vmatprep.subr.bf16.mxu0 0
    %1780 = vmatpush1.bf16.msra.mxu0 0
    %1781 = vmatprep.subr.bf16.mxu0 0
    %1782 = vmatpush1.bf16.msra.mxu0 0
    %1783 = vmatprep.subr.bf16.mxu0 0
    %1784 = vmatpush1.bf16.msra.mxu0 0
    %1785 = vmatprep.subr.bf16.mxu0 0
    %1786 = vmatpush1.bf16.msra.mxu0 0
    %1787 = vmatprep.subr.bf16.mxu0 0
    %1788 = vmatpush1.bf16.msra.mxu0 0
    %1789 = vmatprep.subr.bf16.mxu0 0
    %1790 = vmatpush1.bf16.msra.mxu0 0
    %1791 = vmatprep.subr.bf16.mxu0 0
    %1792 = vmatpush1.bf16.msra.mxu0 0
    %1793 = vmatprep.mubr.bf16.mxu0 0
    %1794 = vmatmul.mubr.bf16.gmra.mrb[0].mxu0 %v332
    %v1795 = vpop.f32.mrb[0].mxu0
    %v1796 = vadd.f32 0.0, %v1795
    %v1797 = vpop.f32.mrb[0].mxu0
    %v1798 = vpop.f32.mrb[0].mxu0
    %v1799 = vpop.f32.mrb[0].mxu0
    %1800 = vdwg.mxu0
    %v1801 = vadd.f32 %v1714, %v1796
    %v1802 = vxor.u32 %v1801, 2147483648
    %v1803 = vmul.f32 %v1802, 1.442695
    %v1804 = vpow.pop %v1803
    %v1805 = vadd.f32 %v1804, 1.0
    %v1806 = vrcp.pop %v1805
    %v1807 = vmul.f32 1.0, %v1806
    %v1808 = vtanh.pop %v1801
    %v1809 = vmul.f32 %v1807, 0.0
    %1811 = vrot.lane.b32.xlu0 %v1808, 64
    %v1812 = vpop.permute.xlu0 %1811
    %v1814 = vmul.f32 %v1807, %v1812
    %1816 = vrot.lane.b32.xlu0 %v1814, 32
    %v1817 = vpop.permute.xlu0 %1816
    %v1819 = vadd.f32 %v1809, %v1817
    %v1820 = vtanh.pop %v1819
    %1822 = vrot.lane.b32.xlu0 %v1820, 64
    %v1823 = vpop.permute.xlu0 %1822
    %v1825 = vmul.f32 %v1807, %v1823
    %v1826 = vpack.c.bf16 %v1825, %v1825
    %1828 = vrot.lane.b32.xlu0 %v1826, 32
    %v1829 = vpop.permute.xlu0 %1828
    %v1831 = vsel %vm330, %v1829, 0
    %1833 = vmatprep.subr.bf16.mxu0 0
    %1834 = vmatpush1.bf16.msra.mxu0 %v1757
    %1835 = vmatprep.subr.bf16.mxu0 0
    %1836 = vmatpush1.bf16.msra.mxu0 %v1758
    %1837 = vmatprep.subr.bf16.mxu0 0
    %1838 = vmatpush1.bf16.msra.mxu0 0
    %1839 = vmatprep.subr.bf16.mxu0 0
    %1840 = vmatpush1.bf16.msra.mxu0 0
    %1841 = vmatprep.subr.bf16.mxu0 0
    %1842 = vmatpush1.bf16.msra.mxu0 0
    %1843 = vmatprep.subr.bf16.mxu0 0
    %1844 = vmatpush1.bf16.msra.mxu0 0
    %1845 = vmatprep.subr.bf16.mxu0 0
    %1846 = vmatpush1.bf16.msra.mxu0 0
    %1847 = vmatprep.subr.bf16.mxu0 0
    %1848 = vmatpush1.bf16.msra.mxu0 0
    %1849 = vmatprep.subr.bf16.mxu0 0
    %1850 = vmatpush1.bf16.msra.mxu0 0
    %1851 = vmatprep.subr.bf16.mxu0 0
    %1852 = vmatpush1.bf16.msra.mxu0 0
    %1853 = vmatprep.subr.bf16.mxu0 0
    %1854 = vmatpush1.bf16.msra.mxu0 0
    %1855 = vmatprep.subr.bf16.mxu0 0
    %1856 = vmatpush1.bf16.msra.mxu0 0
    %1857 = vmatprep.subr.bf16.mxu0 0
    %1858 = vmatpush1.bf16.msra.mxu0 0
    %1859 = vmatprep.subr.bf16.mxu0 0
    %1860 = vmatpush1.bf16.msra.mxu0 0
    %1861 = vmatprep.subr.bf16.mxu0 0
    %1862 = vmatpush1.bf16.msra.mxu0 0
    %1863 = vmatprep.subr.bf16.mxu0 0
    %1864 = vmatpush1.bf16.msra.mxu0 0
    %1865 = vmatprep.mubr.bf16.mxu0 0
    %1866 = vmatmul.mubr.bf16.gmra.mrb[0].mxu0 %v1831
    %v1867 = vpop.f32.mrb[0].mxu0
    %v1868 = vadd.f32 0.0, %v1867
    %v1869 = vpop.f32.mrb[0].mxu0
    %v1870 = vpop.f32.mrb[0].mxu0
    %v1871 = vpop.f32.mrb[0].mxu0
    %1872 = vdwg.mxu0
    %v1873 = vadd.f32 %v1717, %v1868
    %v1874 = vxor.u32 %v1873, 2147483648
    %v1875 = vmul.f32 %v1874, 1.442695
    %v1876 = vpow.pop %v1875
    %v1877 = vadd.f32 %v1876, 1.0
    %v1878 = vrcp.pop %v1877
    %v1879 = vmul.f32 1.0, %v1878
    %v1880 = vtanh.pop %v1873
    %v1881 = vmul.f32 %v1879, %v1819
    %1883 = vrot.lane.b32.xlu0 %v1880, 64
    %v1884 = vpop.permute.xlu0 %1883
    %v1886 = vmul.f32 %v1879, %v1884
    %1888 = vrot.lane.b32.xlu0 %v1886, 32
    %v1889 = vpop.permute.xlu0 %1888
    %v1891 = vadd.f32 %v1881, %v1889
    %v1892 = vtanh.pop %v1891
    %1894 = vrot.lane.b32.xlu0 %v1892, 64
    %v1895 = vpop.permute.xlu0 %1894
    %v1897 = vmul.f32 %v1879, %v1895
    %v1898 = vpack.c.bf16 %v1897, %v1897
    %1900 = vrot.lane.b32.xlu0 %v1898, 32
    %v1901 = vpop.permute.xlu0 %1900
    %v1903 = vsel %vm330, %v1901, 0
    %1905 = vmatprep.subr.bf16.mxu0 0
    %1906 = vmatpush1.bf16.msra.mxu0 %v1757
    %1907 = vmatprep.subr.bf16.mxu0 0
    %1908 = vmatpush1.bf16.msra.mxu0 %v1758
    %1909 = vmatprep.subr.bf16.mxu0 0
    %1910 = vmatpush1.bf16.msra.mxu0 0
    %1911 = vmatprep.subr.bf16.mxu0 0
    %1912 = vmatpush1.bf16.msra.mxu0 0
    %1913 = vmatprep.subr.bf16.mxu0 0
    %1914 = vmatpush1.bf16.msra.mxu0 0
    %1915 = vmatprep.subr.bf16.mxu0 0
    %1916 = vmatpush1.bf16.msra.mxu0 0
    %1917 = vmatprep.subr.bf16.mxu0 0
    %1918 = vmatpush1.bf16.msra.mxu0 0
    %1919 = vmatprep.subr.bf16.mxu0 0
    %1920 = vmatpush1.bf16.msra.mxu0 0
    %1921 = vmatprep.subr.bf16.mxu0 0
    %1922 = vmatpush1.bf16.msra.mxu0 0
    %1923 = vmatprep.subr.bf16.mxu0 0
    %1924 = vmatpush1.bf16.msra.mxu0 0
    %1925 = vmatprep.subr.bf16.mxu0 0
    %1926 = vmatpush1.bf16.msra.mxu0 0
    %1927 = vmatprep.subr.bf16.mxu0 0
    %1928 = vmatpush1.bf16.msra.mxu0 0
    %1929 = vmatprep.subr.bf16.mxu0 0
    %1930 = vmatpush1.bf16.msra.mxu0 0
    %1931 = vmatprep.subr.bf16.mxu0 0
    %1932 = vmatpush1.bf16.msra.mxu0 0
    %1933 = vmatprep.subr.bf16.mxu0 0
    %1934 = vmatpush1.bf16.msra.mxu0 0
    %1935 = vmatprep.subr.bf16.mxu0 0
    %1936 = vmatpush1.bf16.msra.mxu0 0
    %1937 = vmatprep.mubr.bf16.mxu0 0
    %1938 = vmatmul.mubr.bf16.gmra.mrb[0].mxu0 %v1903
    %v1939 = vpop.f32.mrb[0].mxu0
    %v1940 = vadd.f32 0.0, %v1939
    %v1941 = vpop.f32.mrb[0].mxu0
    %v1942 = vpop.f32.mrb[0].mxu0
    %v1943 = vpop.f32.mrb[0].mxu0
    %1944 = vdwg.mxu0
    %v1945 = vadd.f32 %v1722, %v1940
    %v1946 = vxor.u32 %v1945, 2147483648
    %v1947 = vmul.f32 %v1946, 1.442695
    %v1948 = vpow.pop %v1947
    %v1949 = vadd.f32 %v1948, 1.0
    %v1950 = vrcp.pop %v1949
    %v1951 = vmul.f32 1.0, %v1950
    %v1952 = vtanh.pop %v1945
    %v1953 = vmul.f32 %v1951, %v1891
    %1955 = vrot.lane.b32.xlu0 %v1952, 64
    %v1956 = vpop.permute.xlu0 %1955
    %v1958 = vmul.f32 %v1951, %v1956
    %1960 = vrot.lane.b32.xlu0 %v1958, 32
    %v1961 = vpop.permute.xlu0 %1960
    %v1963 = vadd.f32 %v1953, %v1961
    %v1964 = vtanh.pop %v1963
    %1966 = vrot.lane.b32.xlu0 %v1964, 64
    %v1967 = vpop.permute.xlu0 %1966
    %v1969 = vmul.f32 %v1951, %v1967
    %v1970 = vpack.c.bf16 %v1969, %v1969
    %1972 = vrot.lane.b32.xlu0 %v1970, 32
    %v1973 = vpop.permute.xlu0 %1972
    %v1975 = vsel %vm330, %v1973, 0
    %1977 = vmatprep.subr.bf16.mxu0 0
    %1978 = vmatpush1.bf16.msra.mxu0 %v1757
    %1979 = vmatprep.subr.bf16.mxu0 0
    %1980 = vmatpush1.bf16.msra.mxu0 %v1758
    %1981 = vmatprep.subr.bf16.mxu0 0
    %1982 = vmatpush1.bf16.msra.mxu0 0
    %1983 = vmatprep.subr.bf16.mxu0 0
    %1984 = vmatpush1.bf16.msra.mxu0 0
    %1985 = vmatprep.subr.bf16.mxu0 0
    %1986 = vmatpush1.bf16.msra.mxu0 0
    %1987 = vmatprep.subr.bf16.mxu0 0
    %1988 = vmatpush1.bf16.msra.mxu0 0
    %1989 = vmatprep.subr.bf16.mxu0 0
    %1990 = vmatpush1.bf16.msra.mxu0 0
    %1991 = vmatprep.subr.bf16.mxu0 0
    %1992 = vmatpush1.bf16.msra.mxu0 0
    %1993 = vmatprep.subr.bf16.mxu0 0
    %1994 = vmatpush1.bf16.msra.mxu0 0
    %1995 = vmatprep.subr.bf16.mxu0 0
    %1996 = vmatpush1.bf16.msra.mxu0 0
    %1997 = vmatprep.subr.bf16.mxu0 0
    %1998 = vmatpush1.bf16.msra.mxu0 0
    %1999 = vmatprep.subr.bf16.mxu0 0
    %2000 = vmatpush1.bf16.msra.mxu0 0
    %2001 = vmatprep.subr.bf16.mxu0 0
    %2002 = vmatpush1.bf16.msra.mxu0 0
    %2003 = vmatprep.subr.bf16.mxu0 0
    %2004 = vmatpush1.bf16.msra.mxu0 0
    %2005 = vmatprep.subr.bf16.mxu0 0
    %2006 = vmatpush1.bf16.msra.mxu0 0
    %2007 = vmatprep.subr.bf16.mxu0 0
    %2008 = vmatpush1.bf16.msra.mxu0 0
    %2009 = vmatprep.mubr.bf16.mxu0 0
    %2010 = vmatmul.mubr.bf16.gmra.mrb[0].mxu0 %v1975
    %v2011 = vpop.f32.mrb[0].mxu0
    %v2012 = vadd.f32 0.0, %v2011
    %v2013 = vpop.f32.mrb[0].mxu0
    %v2014 = vpop.f32.mrb[0].mxu0
    %v2015 = vpop.f32.mrb[0].mxu0
    %2016 = vdwg.mxu0
    %v2017 = vadd.f32 %v1725, %v2012
    %v2018 = vxor.u32 %v2017, 2147483648
    %v2019 = vmul.f32 %v2018, 1.442695
    %v2020 = vpow.pop %v2019
    %v2021 = vadd.f32 %v2020, 1.0
    %v2022 = vrcp.pop %v2021
    %v2023 = vmul.f32 1.0, %v2022
    %v2024 = vtanh.pop %v2017
    %v2025 = vmul.f32 %v2023, %v1963
    %2027 = vrot.lane.b32.xlu0 %v2024, 64
    %v2028 = vpop.permute.xlu0 %2027
    %v2030 = vmul.f32 %v2023, %v2028
    %2032 = vrot.lane.b32.xlu0 %v2030, 32
    %v2033 = vpop.permute.xlu0 %2032
    %v2035 = vadd.f32 %v2025, %v2033
    %v2036 = vtanh.pop %v2035
    %2038 = vrot.lane.b32.xlu0 %v2036, 64
    %v2039 = vpop.permute.xlu0 %2038
    %v2041 = vmul.f32 %v2023, %v2039
    %v2042 = vpack.c.bf16 %v2041, %v2041
    %2044 = vrot.lane.b32.xlu0 %v2042, 32
    %v2045 = vpop.permute.xlu0 %2044
    %v2047 = vsel %vm330, %v2045, 0
    %2049 = vmatprep.subr.bf16.mxu0 0
    %2050 = vmatpush1.bf16.msra.mxu0 %v1757
    %2051 = vmatprep.subr.bf16.mxu0 0
    %2052 = vmatpush1.bf16.msra.mxu0 %v1758
    %2053 = vmatprep.subr.bf16.mxu0 0
    %2054 = vmatpush1.bf16.msra.mxu0 0
    %2055 = vmatprep.subr.bf16.mxu0 0
    %2056 = vmatpush1.bf16.msra.mxu0 0
    %2057 = vmatprep.subr.bf16.mxu0 0
    %2058 = vmatpush1.bf16.msra.mxu0 0
    %2059 = vmatprep.subr.bf16.mxu0 0
    %2060 = vmatpush1.bf16.msra.mxu0 0
    %2061 = vmatprep.subr.bf16.mxu0 0
    %2062 = vmatpush1.bf16.msra.mxu0 0
    %2063 = vmatprep.subr.bf16.mxu0 0
    %2064 = vmatpush1.bf16.msra.mxu0 0
    %2065 = vmatprep.subr.bf16.mxu0 0
    %2066 = vmatpush1.bf16.msra.mxu0 0
    %2067 = vmatprep.subr.bf16.mxu0 0
    %2068 = vmatpush1.bf16.msra.mxu0 0
    %2069 = vmatprep.subr.bf16.mxu0 0
    %2070 = vmatpush1.bf16.msra.mxu0 0
    %2071 = vmatprep.subr.bf16.mxu0 0
    %2072 = vmatpush1.bf16.msra.mxu0 0
    %2073 = vmatprep.subr.bf16.mxu0 0
    %2074 = vmatpush1.bf16.msra.mxu0 0
    %2075 = vmatprep.subr.bf16.mxu0 0
    %2076 = vmatpush1.bf16.msra.mxu0 0
    %2077 = vmatprep.subr.bf16.mxu0 0
    %2078 = vmatpush1.bf16.msra.mxu0 0
    %2079 = vmatprep.subr.bf16.mxu0 0
    %2080 = vmatpush1.bf16.msra.mxu0 0
    %2081 = vmatprep.mubr.bf16.mxu0 0
    %2082 = vmatmul.mubr.bf16.gmra.mrb[0].mxu0 %v2047
    %v2083 = vpop.f32.mrb[0].mxu0
    %v2084 = vadd.f32 0.0, %v2083
    %v2085 = vpop.f32.mrb[0].mxu0
    %v2086 = vpop.f32.mrb[0].mxu0
    %v2087 = vpop.f32.mrb[0].mxu0
    %2088 = vdwg.mxu0
    %v2089 = vadd.f32 %v1730, %v2084
    %v2090 = vxor.u32 %v2089, 2147483648
    %v2091 = vmul.f32 %v2090, 1.442695
    %v2092 = vpow.pop %v2091
    %v2093 = vadd.f32 %v2092, 1.0
    %v2094 = vrcp.pop %v2093
    %v2095 = vmul.f32 1.0, %v2094
    %v2096 = vtanh.pop %v2089
    %v2097 = vmul.f32 %v2095, %v2035
    %2099 = vrot.lane.b32.xlu0 %v2096, 64
    %v2100 = vpop.permute.xlu0 %2099
    %v2102 = vmul.f32 %v2095, %v2100
    %2104 = vrot.lane.b32.xlu0 %v2102, 32
    %v2105 = vpop.permute.xlu0 %2104
    %v2107 = vadd.f32 %v2097, %v2105
    %v2108 = vtanh.pop %v2107
    %2110 = vrot.lane.b32.xlu0 %v2108, 64
    %v2111 = vpop.permute.xlu0 %2110
    %v2113 = vmul.f32 %v2095, %v2111
    %v2114 = vpack.c.bf16 %v2113, %v2113
    %2116 = vrot.lane.b32.xlu0 %v2114, 32
    %v2117 = vpop.permute.xlu0 %2116
    %v2119 = vsel %vm330, %v2117, 0
    %2121 = vmatprep.subr.bf16.mxu0 0
    %2122 = vmatpush1.bf16.msra.mxu0 %v1757
    %2123 = vmatprep.subr.bf16.mxu0 0
    %2124 = vmatpush1.bf16.msra.mxu0 %v1758
    %2125 = vmatprep.subr.bf16.mxu0 0
    %2126 = vmatpush1.bf16.msra.mxu0 0
    %2127 = vmatprep.subr.bf16.mxu0 0
    %2128 = vmatpush1.bf16.msra.mxu0 0
    %2129 = vmatprep.subr.bf16.mxu0 0
    %2130 = vmatpush1.bf16.msra.mxu0 0
    %2131 = vmatprep.subr.bf16.mxu0 0
    %2132 = vmatpush1.bf16.msra.mxu0 0
    %2133 = vmatprep.subr.bf16.mxu0 0
    %2134 = vmatpush1.bf16.msra.mxu0 0
    %2135 = vmatprep.subr.bf16.mxu0 0
    %2136 = vmatpush1.bf16.msra.mxu0 0
    %2137 = vmatprep.subr.bf16.mxu0 0
    %2138 = vmatpush1.bf16.msra.mxu0 0
    %2139 = vmatprep.subr.bf16.mxu0 0
    %2140 = vmatpush1.bf16.msra.mxu0 0
    %2141 = vmatprep.subr.bf16.mxu0 0
    %2142 = vmatpush1.bf16.msra.mxu0 0
    %2143 = vmatprep.subr.bf16.mxu0 0
    %2144 = vmatpush1.bf16.msra.mxu0 0
    %2145 = vmatprep.subr.bf16.mxu0 0
    %2146 = vmatpush1.bf16.msra.mxu0 0
    %2147 = vmatprep.subr.bf16.mxu0 0
    %2148 = vmatpush1.bf16.msra.mxu0 0
    %2149 = vmatprep.subr.bf16.mxu0 0
    %2150 = vmatpush1.bf16.msra.mxu0 0
    %2151 = vmatprep.subr.bf16.mxu0 0
    %2152 = vmatpush1.bf16.msra.mxu0 0
    %2153 = vmatprep.mubr.bf16.mxu0 0
    %2154 = vmatmul.mubr.bf16.gmra.mrb[0].mxu0 %v2119
    %v2155 = vpop.f32.mrb[0].mxu0
    %v2156 = vadd.f32 0.0, %v2155
    %v2157 = vpop.f32.mrb[0].mxu0
    %v2158 = vpop.f32.mrb[0].mxu0
    %v2159 = vpop.f32.mrb[0].mxu0
    %2160 = vdwg.mxu0
    %v2161 = vadd.f32 %v1733, %v2156
    %v2162 = vxor.u32 %v2161, 2147483648
    %v2163 = vmul.f32 %v2162, 1.442695
    %v2164 = vpow.pop %v2163
    %v2165 = vadd.f32 %v2164, 1.0
    %v2166 = vrcp.pop %v2165
    %v2167 = vmul.f32 1.0, %v2166
    %v2168 = vtanh.pop %v2161
    %v2169 = vmul.f32 %v2167, %v2107
    %2171 = vrot.lane.b32.xlu0 %v2168, 64
    %v2172 = vpop.permute.xlu0 %2171
    %v2174 = vmul.f32 %v2167, %v2172
    %2176 = vrot.lane.b32.xlu0 %v2174, 32
    %v2177 = vpop.permute.xlu0 %2176
    %v2179 = vadd.f32 %v2169, %v2177
    %v2180 = vtanh.pop %v2179
    %2182 = vrot.lane.b32.xlu0 %v2180, 64
    %v2183 = vpop.permute.xlu0 %2182
    %v2185 = vmul.f32 %v2167, %v2183
    %v2186 = vpack.c.bf16 %v2185, %v2185
    %2188 = vrot.lane.b32.xlu0 %v2186, 32
    %v2189 = vpop.permute.xlu0 %2188
    %v2191 = vsel %vm330, %v2189, 0
    %2193 = vmatprep.subr.bf16.mxu0 0
    %2194 = vmatpush1.bf16.msra.mxu0 %v1757
    %2195 = vmatprep.subr.bf16.mxu0 0
    %2196 = vmatpush1.bf16.msra.mxu0 %v1758
    %2197 = vmatprep.subr.bf16.mxu0 0
    %2198 = vmatpush1.bf16.msra.mxu0 0
    %2199 = vmatprep.subr.bf16.mxu0 0
    %2200 = vmatpush1.bf16.msra.mxu0 0
    %2201 = vmatprep.subr.bf16.mxu0 0
    %2202 = vmatpush1.bf16.msra.mxu0 0
    %2203 = vmatprep.subr.bf16.mxu0 0
    %2204 = vmatpush1.bf16.msra.mxu0 0
    %2205 = vmatprep.subr.bf16.mxu0 0
    %2206 = vmatpush1.bf16.msra.mxu0 0
    %2207 = vmatprep.subr.bf16.mxu0 0
    %2208 = vmatpush1.bf16.msra.mxu0 0
    %2209 = vmatprep.subr.bf16.mxu0 0
    %2210 = vmatpush1.bf16.msra.mxu0 0
    %2211 = vmatprep.subr.bf16.mxu0 0
    %2212 = vmatpush1.bf16.msra.mxu0 0
    %2213 = vmatprep.subr.bf16.mxu0 0
    %2214 = vmatpush1.bf16.msra.mxu0 0
    %2215 = vmatprep.subr.bf16.mxu0 0
    %2216 = vmatpush1.bf16.msra.mxu0 0
    %2217 = vmatprep.subr.bf16.mxu0 0
    %2218 = vmatpush1.bf16.msra.mxu0 0
    %2219 = vmatprep.subr.bf16.mxu0 0
    %2220 = vmatpush1.bf16.msra.mxu0 0
    %2221 = vmatprep.subr.bf16.mxu0 0
    %2222 = vmatpush1.bf16.msra.mxu0 0
    %2223 = vmatprep.subr.bf16.mxu0 0
    %2224 = vmatpush1.bf16.msra.mxu0 0
    %2225 = vmatprep.mubr.bf16.mxu0 0
    %2226 = vmatmul.mubr.bf16.gmra.mrb[0].mxu0 %v2191
    %v2227 = vpop.f32.mrb[0].mxu0
    %v2228 = vadd.f32 0.0, %v2227
    %v2229 = vpop.f32.mrb[0].mxu0
    %v2230 = vpop.f32.mrb[0].mxu0
    %v2231 = vpop.f32.mrb[0].mxu0
    %2232 = vdwg.mxu0
    %v2233 = vadd.f32 %v1738, %v2228
    %v2234 = vxor.u32 %v2233, 2147483648
    %v2235 = vmul.f32 %v2234, 1.442695
    %v2236 = vpow.pop %v2235
    %v2237 = vadd.f32 %v2236, 1.0
    %v2238 = vrcp.pop %v2237
    %v2239 = vmul.f32 1.0, %v2238
    %v2240 = vtanh.pop %v2233
    %v2241 = vmul.f32 %v2239, %v2179
    %2243 = vrot.lane.b32.xlu0 %v2240, 64
    %v2244 = vpop.permute.xlu0 %2243
    %v2246 = vmul.f32 %v2239, %v2244
    %2248 = vrot.lane.b32.xlu0 %v2246, 32
    %v2249 = vpop.permute.xlu0 %2248
    %v2251 = vadd.f32 %v2241, %v2249
    %v2252 = vtanh.pop %v2251
    %2254 = vrot.lane.b32.xlu0 %v2252, 64
    %v2255 = vpop.permute.xlu0 %2254
    %v2257 = vmul.f32 %v2239, %v2255
    %v2258 = vpack.c.bf16 %v2257, %v2257
    %2260 = vrot.lane.b32.xlu0 %v2258, 32
    %v2261 = vpop.permute.xlu0 %2260
    %v2263 = vsel %vm330, %v2261, 0
    %2265 = vmatprep.subr.bf16.mxu0 0
    %2266 = vmatpush1.bf16.msra.mxu0 %v1757
    %2267 = vmatprep.subr.bf16.mxu0 0
    %2268 = vmatpush1.bf16.msra.mxu0 %v1758
    %2269 = vmatprep.subr.bf16.mxu0 0
    %2270 = vmatpush1.bf16.msra.mxu0 0
    %2271 = vmatprep.subr.bf16.mxu0 0
    %2272 = vmatpush1.bf16.msra.mxu0 0
    %2273 = vmatprep.subr.bf16.mxu0 0
    %2274 = vmatpush1.bf16.msra.mxu0 0
    %2275 = vmatprep.subr.bf16.mxu0 0
    %2276 = vmatpush1.bf16.msra.mxu0 0
    %2277 = vmatprep.subr.bf16.mxu0 0
    %2278 = vmatpush1.bf16.msra.mxu0 0
    %2279 = vmatprep.subr.bf16.mxu0 0
    %2280 = vmatpush1.bf16.msra.mxu0 0
    %2281 = vmatprep.subr.bf16.mxu0 0
    %2282 = vmatpush1.bf16.msra.mxu0 0
    %2283 = vmatprep.subr.bf16.mxu0 0
    %2284 = vmatpush1.bf16.msra.mxu0 0
    %2285 = vmatprep.subr.bf16.mxu0 0
    %2286 = vmatpush1.bf16.msra.mxu0 0
    %2287 = vmatprep.subr.bf16.mxu0 0
    %2288 = vmatpush1.bf16.msra.mxu0 0
    %2289 = vmatprep.subr.bf16.mxu0 0
    %2290 = vmatpush1.bf16.msra.mxu0 0
    %2291 = vmatprep.subr.bf16.mxu0 0
    %2292 = vmatpush1.bf16.msra.mxu0 0
    %2293 = vmatprep.subr.bf16.mxu0 0
    %2294 = vmatpush1.bf16.msra.mxu0 0
    %2295 = vmatprep.subr.bf16.mxu0 0
    %2296 = vmatpush1.bf16.msra.mxu0 0
    %2297 = vmatprep.mubr.bf16.mxu0 0
    %2298 = vmatmul.mubr.bf16.gmra.mrb[0].mxu0 %v2263
    %v2299 = vpop.f32.mrb[0].mxu0
    %v2300 = vadd.f32 0.0, %v2299
    %v2301 = vpop.f32.mrb[0].mxu0
    %v2302 = vpop.f32.mrb[0].mxu0
    %v2303 = vpop.f32.mrb[0].mxu0
    %2304 = vdwg.mxu0
    %v2305 = vadd.f32 %v1741, %v2300
    %v2306 = vxor.u32 %v2305, 2147483648
    %v2307 = vmul.f32 %v2306, 1.442695
    %v2308 = vpow.pop %v2307
    %v2309 = vadd.f32 %v2308, 1.0
    %v2310 = vrcp.pop %v2309
    %v2311 = vmul.f32 1.0, %v2310
    %v2312 = vtanh.pop %v2305
    %v2313 = vmul.f32 %v2311, %v2251
    %2315 = vrot.lane.b32.xlu0 %v2312, 64
    %v2316 = vpop.permute.xlu0 %2315
    %v2318 = vmul.f32 %v2311, %v2316
    %2320 = vrot.lane.b32.xlu0 %v2318, 32
    %v2321 = vpop.permute.xlu0 %2320
    %v2323 = vadd.f32 %v2313, %v2321
    %v2324 = vtanh.pop %v2323
    %2326 = vrot.lane.b32.xlu0 %v2324, 64
    %v2327 = vpop.permute.xlu0 %2326
    %v2329 = vmul.f32 %v2311, %v2327
    %s2330 = scalar_lea.vmem %s5, 8
    %v2331 = vld [vmem:[%s2330] sm:$0xff]
    %2333 = vset.pattern.permute.xlu0 0
    %2334 = vperm.xlu0 %2333, %v2331
    %v2335 = vpop.permute.xlu0 %2334
    %v2337 = vmul.f32 %v2329, %v2335
    %v2338 = vpack.c.bf16 %v902, %v902
    %v2339 = vld [vmem:[%s29] sm:$0xf]
    %v2340 = vld [vmem:[%s29 + $0x4] sm:$0xf]
    %v2341 = vld [vmem:[%s29 + $0x8] sm:$0xf]
    %v2342 = vld [vmem:[%s29 + $0xc] sm:$0xf]
    %2344 = vrot.lane.b32.xlu0 %v2338, 32
    %v2345 = vpop.permute.xlu0 %2344
    %v2350 = vunpack.c.l.b16 %v2339
    %v2351 = vunpack.c.l.b16 %v2340
    %v2352 = vunpack.c.l.b16 %v2341
    %v2353 = vunpack.c.l.b16 %v2342
    %v2354 = vpack.c.b16 %v2351, %v2350
    %v2355 = vpack.c.b16 %v2353, %v2352
    %v2359 = vsel %vm330, %v2345, 0
    %2361 = vmatprep.subr.bf16.mxu0 0
    %2362 = vmatpush1.bf16.msra.mxu0 %v2354
    %2363 = vmatprep.subr.bf16.mxu0 0
    %2364 = vmatpush1.bf16.msra.mxu0 %v2355
    %2365 = vmatprep.subr.bf16.mxu0 0
    %2366 = vmatpush1.bf16.msra.mxu0 0
    %2367 = vmatprep.subr.bf16.mxu0 0
    %2368 = vmatpush1.bf16.msra.mxu0 0
    %2369 = vmatprep.subr.bf16.mxu0 0
    %2370 = vmatpush1.bf16.msra.mxu0 0
    %2371 = vmatprep.subr.bf16.mxu0 0
    %2372 = vmatpush1.bf16.msra.mxu0 0
    %2373 = vmatprep.subr.bf16.mxu0 0
    %2374 = vmatpush1.bf16.msra.mxu0 0
    %2375 = vmatprep.subr.bf16.mxu0 0
    %2376 = vmatpush1.bf16.msra.mxu0 0
    %2377 = vmatprep.subr.bf16.mxu0 0
    %2378 = vmatpush1.bf16.msra.mxu0 0
    %2379 = vmatprep.subr.bf16.mxu0 0
    %2380 = vmatpush1.bf16.msra.mxu0 0
    %2381 = vmatprep.subr.bf16.mxu0 0
    %2382 = vmatpush1.bf16.msra.mxu0 0
    %2383 = vmatprep.subr.bf16.mxu0 0
    %2384 = vmatpush1.bf16.msra.mxu0 0
    %2385 = vmatprep.subr.bf16.mxu0 0
    %2386 = vmatpush1.bf16.msra.mxu0 0
    %2387 = vmatprep.subr.bf16.mxu0 0
    %2388 = vmatpush1.bf16.msra.mxu0 0
    %2389 = vmatprep.subr.bf16.mxu0 0
    %2390 = vmatpush1.bf16.msra.mxu0 0
    %2391 = vmatprep.subr.bf16.mxu0 0
    %2392 = vmatpush1.bf16.msra.mxu0 0
    %2393 = vmatprep.mubr.bf16.mxu0 0
    %2394 = vmatmul.mubr.bf16.gmra.mrb[0].mxu0 %v2359
    %v2395 = vpop.f32.mrb[0].mxu0
    %v2396 = vadd.f32 0.0, %v2395
    %v2397 = vpop.f32.mrb[0].mxu0
    %v2398 = vpop.f32.mrb[0].mxu0
    %v2399 = vpop.f32.mrb[0].mxu0
    %2400 = vdwg.mxu0
    %v2401 = vpack.c.bf16 %v2337, %v1618
    %v2402 = vld [vmem:[%s31] sm:$0xf]
    %v2403 = vld [vmem:[%s31 + $0x4] sm:$0xf]
    %v2404 = vld [vmem:[%s31 + $0x8] sm:$0xf]
    %v2405 = vld [vmem:[%s31 + $0xc] sm:$0xf]
    %2407 = vrot.lane.b32.xlu0 %v2401, 32
    %v2408 = vpop.permute.xlu0 %2407
    %v2413 = vunpack.c.l.b16 %v2402
    %v2414 = vunpack.c.l.b16 %v2403
    %v2415 = vunpack.c.l.b16 %v2404
    %v2416 = vunpack.c.l.b16 %v2405
    %v2417 = vpack.c.b16 %v2414, %v2413
    %v2418 = vpack.c.b16 %v2416, %v2415
    %v2422 = vsel %vm330, %v2408, 0
    %2424 = vmatprep.subr.bf16.mxu0 0
    %2425 = vmatpush1.bf16.msra.mxu0 %v2417
    %2426 = vmatprep.subr.bf16.mxu0 0
    %2427 = vmatpush1.bf16.msra.mxu0 %v2418
    %2428 = vmatprep.subr.bf16.mxu0 0
    %2429 = vmatpush1.bf16.msra.mxu0 0
    %2430 = vmatprep.subr.bf16.mxu0 0
    %2431 = vmatpush1.bf16.msra.mxu0 0
    %2432 = vmatprep.subr.bf16.mxu0 0
    %2433 = vmatpush1.bf16.msra.mxu0 0
    %2434 = vmatprep.subr.bf16.mxu0 0
    %2435 = vmatpush1.bf16.msra.mxu0 0
    %2436 = vmatprep.subr.bf16.mxu0 0
    %2437 = vmatpush1.bf16.msra.mxu0 0
    %2438 = vmatprep.subr.bf16.mxu0 0
    %2439 = vmatpush1.bf16.msra.mxu0 0
    %2440 = vmatprep.subr.bf16.mxu0 0
    %2441 = vmatpush1.bf16.msra.mxu0 0
    %2442 = vmatprep.subr.bf16.mxu0 0
    %2443 = vmatpush1.bf16.msra.mxu0 0
    %2444 = vmatprep.subr.bf16.mxu0 0
    %2445 = vmatpush1.bf16.msra.mxu0 0
    %2446 = vmatprep.subr.bf16.mxu0 0
    %2447 = vmatpush1.bf16.msra.mxu0 0
    %2448 = vmatprep.subr.bf16.mxu0 0
    %2449 = vmatpush1.bf16.msra.mxu0 0
    %2450 = vmatprep.subr.bf16.mxu0 0
    %2451 = vmatpush1.bf16.msra.mxu0 0
    %2452 = vmatprep.subr.bf16.mxu0 0
    %2453 = vmatpush1.bf16.msra.mxu0 0
    %2454 = vmatprep.subr.bf16.mxu0 0
    %2455 = vmatpush1.bf16.msra.mxu0 0
    %2456 = vmatprep.mubr.bf16.mxu0 0
    %2457 = vmatmul.mubr.bf16.gmra.mrb[0].mxu0 %v2422
    %v2458 = vpop.f32.mrb[0].mxu0
    %v2459 = vadd.f32 0.0, %v2458
    %v2460 = vpop.f32.mrb[0].mxu0
    %v2461 = vpop.f32.mrb[0].mxu0
    %v2462 = vadd.f32 0.0, %v2461
    %v2463 = vpop.f32.mrb[0].mxu0
    %2464 = vdwg.mxu0
    %v2465 = vld [vmem:[%s33] sm:$0x1]
    %v2466 = vadd.f32 %v2396, %v2459
    %v2467 = vtanh.pop %v2466
    %v2469 = vlaneseq
    %v2470 = vshrl.u32 %v2469, 7
    %v2471 = vsub.s32 0, %v2470
    %v2472 = vrot.slane %v2465, %v2471
    %v2474 = vmul.f32 %v2467, %v2472
    %v2475 = vsel %vm330, %v2474, 0.0
    %2476 = vadd.xlane.f32.xlu0 %v2475
    %v2477 = vpop.xlane.xlu0 %2476
    %v2478 = vadd.f32 %v2396, %v2462
    %v2479 = vtanh.pop %v2478
    %v2480 = vmul.f32 %v2479, %v2472
    %v2481 = vsel %vm330, %v2480, 0.0
    %2482 = vadd.xlane.f32.xlu0 %v2481
    %v2483 = vpop.xlane.xlu0 %2482
    %v2484 = vmax.f32 %v2477, %v2483
    %v2485 = vsub.f32 %v2477, %v2484
    %v2486 = vmul.f32 %v2485, 1.442695
    %v2487 = vpow.pop %v2486
    %v2488 = vsub.f32 %v2483, %v2484
    %v2489 = vmul.f32 %v2488, 1.442695
    %v2490 = vpow.pop %v2489
    %v2491 = vadd.f32 %v2487, %v2490
    %v2492 = vmul.f32 %v2487, %v1618
    %v2493 = vmul.f32 %v2490, %v2337
    %v2494 = vadd.f32 %v2492, %v2493
    %v2495 = vrcp.pop %v2491
    %v2496 = vmul.f32 %v2494, %v2495
    %v2497 = vld [vmem:[%s7] sm:$0xf]
    %v2498 = vld [vmem:[%s7 + $0x4] sm:$0xf]
    %v2499 = vld [vmem:[%s7 + $0x8] sm:$0xf]
    %v2500 = vld [vmem:[%s7 + $0xc] sm:$0xf]
    %v2501 = vld [vmem:[%s7 + $0x10] sm:$0xf]
    %v2502 = vld [vmem:[%s7 + $0x14] sm:$0xf]
    %v2503 = vld [vmem:[%s7 + $0x18] sm:$0xf]
    %v2504 = vld [vmem:[%s7 + $0x1c] sm:$0xf]
    %v2505 = vld [vmem:[%s7 + $0x20] sm:$0xf]
    %v2506 = vld [vmem:[%s7 + $0x24] sm:$0xf]
    %v2507 = vld [vmem:[%s7 + $0x28] sm:$0xf]
    %v2508 = vld [vmem:[%s7 + $0x2c] sm:$0xf]
    %v2509 = vld [vmem:[%s7 + $0x30] sm:$0xf]
    %v2510 = vld [vmem:[%s7 + $0x34] sm:$0xf]
    %v2511 = vld [vmem:[%s7 + $0x38] sm:$0xf]
    %v2512 = vld [vmem:[%s7 + $0x3c] sm:$0xf]
    %v2513 = vld [vmem:[%s7 + $0x40] sm:$0xf]
    %v2514 = vld [vmem:[%s7 + $0x44] sm:$0xf]
    %v2515 = vld [vmem:[%s7 + $0x48] sm:$0xf]
    %v2516 = vld [vmem:[%s7 + $0x4c] sm:$0xf]
    %v2517 = vld [vmem:[%s7 + $0x50] sm:$0xf]
    %v2518 = vld [vmem:[%s7 + $0x54] sm:$0xf]
    %v2519 = vld [vmem:[%s7 + $0x58] sm:$0xf]
    %v2520 = vld [vmem:[%s7 + $0x5c] sm:$0xf]
    %v2521 = vld [vmem:[%s7 + $0x60] sm:$0xf]
    %v2522 = vld [vmem:[%s7 + $0x64] sm:$0xf]
    %v2523 = vld [vmem:[%s7 + $0x68] sm:$0xf]
    %v2524 = vld [vmem:[%s7 + $0x6c] sm:$0xf]
    %v2525 = vld [vmem:[%s7 + $0x70] sm:$0xf]
    %v2526 = vld [vmem:[%s7 + $0x74] sm:$0xf]
    %v2527 = vld [vmem:[%s7 + $0x78] sm:$0xf]
    %v2528 = vld [vmem:[%s7 + $0x7c] sm:$0xf]
    %v2529 = vld [vmem:[%s7 + $0x80] sm:$0xf]
    %v2530 = vld [vmem:[%s7 + $0x84] sm:$0xf]
    %v2531 = vld [vmem:[%s7 + $0x88] sm:$0xf]
    %v2532 = vld [vmem:[%s7 + $0x8c] sm:$0xf]
    %v2533 = vld [vmem:[%s35] sm:$0xf]
    %v2534 = vld [vmem:[%s35 + $0x4] sm:$0xf]
    %v2535 = vld [vmem:[%s35 + $0x8] sm:$0xf]
    %v2536 = vld [vmem:[%s35 + $0xc] sm:$0xf]
    %v2537 = vld [vmem:[%s35 + $0x10] sm:$0xf]
    %v2538 = vld [vmem:[%s35 + $0x14] sm:$0xf]
    %v2539 = vld [vmem:[%s35 + $0x18] sm:$0xf]
    %v2540 = vld [vmem:[%s35 + $0x1c] sm:$0xf]
    %v2541 = vld [vmem:[%s35 + $0x20] sm:$0xf]
    %v2542 = vld [vmem:[%s35 + $0x24] sm:$0x3]
    %v2543 = vld [vmem:[%s37] sm:$0x1]
    %v2545 = vlaneseq
    %v2546 = vshrl.u32 %v2545, 7
    %v2547 = vsub.s32 0, %v2546
    %v2548 = vrot.slane %v2543, %v2547
    %v2586 = vunpack.c.l.b16 %v2497
    %v2587 = vunpack.c.l.b16 %v2498
    %v2588 = vunpack.c.l.b16 %v2499
    %v2589 = vunpack.c.l.b16 %v2500
    %v2590 = vunpack.c.l.b16 %v2501
    %v2591 = vunpack.c.l.b16 %v2502
    %v2592 = vunpack.c.l.b16 %v2503
    %v2593 = vunpack.c.l.b16 %v2504
    %v2594 = vunpack.c.l.b16 %v2505
    %v2595 = vunpack.c.l.b16 %v2506
    %v2596 = vunpack.c.l.b16 %v2507
    %v2597 = vunpack.c.l.b16 %v2508
    %v2598 = vunpack.c.l.b16 %v2509
    %v2599 = vunpack.c.l.b16 %v2510
    %v2600 = vunpack.c.l.b16 %v2511
    %v2601 = vunpack.c.l.b16 %v2512
    %v2602 = vunpack.c.l.b16 %v2513
    %v2603 = vunpack.c.l.b16 %v2514
    %v2604 = vunpack.c.l.b16 %v2515
    %v2605 = vunpack.c.l.b16 %v2516
    %v2606 = vunpack.c.l.b16 %v2517
    %v2607 = vunpack.c.l.b16 %v2518
    %v2608 = vunpack.c.l.b16 %v2519
    %v2609 = vunpack.c.l.b16 %v2520
    %v2610 = vunpack.c.l.b16 %v2521
    %v2611 = vunpack.c.l.b16 %v2522
    %v2612 = vunpack.c.l.b16 %v2523
    %v2613 = vunpack.c.l.b16 %v2524
    %v2614 = vunpack.c.l.b16 %v2525
    %v2615 = vunpack.c.l.b16 %v2526
    %v2616 = vunpack.c.l.b16 %v2527
    %v2617 = vunpack.c.l.b16 %v2528
    %v2618 = vunpack.c.l.b16 %v2529
    %v2619 = vunpack.c.l.b16 %v2530
    %v2620 = vunpack.c.l.b16 %v2531
    %v2621 = vunpack.c.l.b16 %v2532
    %v2622 = vpack.c.b16 %v2587, %v2586
    %v2623 = vpack.c.b16 %v2589, %v2588
    %v2624 = vpack.c.b16 %v2591, %v2590
    %v2625 = vpack.c.b16 %v2593, %v2592
    %v2626 = vpack.c.b16 %v2595, %v2594
    %v2627 = vpack.c.b16 %v2597, %v2596
    %v2628 = vpack.c.b16 %v2599, %v2598
    %v2629 = vpack.c.b16 %v2601, %v2600
    %v2630 = vpack.c.b16 %v2603, %v2602
    %v2631 = vpack.c.b16 %v2605, %v2604
    %v2632 = vpack.c.b16 %v2607, %v2606
    %v2633 = vpack.c.b16 %v2609, %v2608
    %v2634 = vpack.c.b16 %v2611, %v2610
    %v2635 = vpack.c.b16 %v2613, %v2612
    %v2636 = vpack.c.b16 %v2615, %v2614
    %v2637 = vpack.c.b16 %v2617, %v2616
    %v2638 = vpack.c.b16 %v2619, %v2618
    %v2639 = vpack.c.b16 %v2621, %v2620
    %v2650 = vunpack.c.l.b16 %v2533
    %v2651 = vunpack.c.l.b16 %v2534
    %v2652 = vunpack.c.l.b16 %v2535
    %v2653 = vunpack.c.l.b16 %v2536
    %v2654 = vunpack.c.l.b16 %v2537
    %v2655 = vunpack.c.l.b16 %v2538
    %v2656 = vunpack.c.l.b16 %v2539
    %v2657 = vunpack.c.l.b16 %v2540
    %v2658 = vunpack.c.l.b16 %v2541
    %v2659 = vunpack.c.l.b16 %v2542
    %v2660 = vpack.c.b16 %v2651, %v2650
    %v2661 = vpack.c.b16 %v2653, %v2652
    %v2662 = vpack.c.b16 %v2655, %v2654
    %v2663 = vpack.c.b16 %v2657, %v2656
    %v2664 = vpack.c.b16 %v2659, %v2658
    %vm2669 = vcmask 613376
    %v2671 = vsel %vm2669, %v2622, 0
    %v2674 = vsel %vm2669, %v2623, 0
    %v2677 = vsel %vm2669, %v2624, 0
    %v2680 = vsel %vm2669, %v2625, 0
    %v2683 = vsel %vm2669, %v2626, 0
    %v2686 = vsel %vm2669, %v2627, 0
    %v2689 = vsel %vm2669, %v2628, 0
    %v2692 = vsel %vm2669, %v2629, 0
    %v2695 = vsel %vm2669, %v2630, 0
    %v2698 = vsel %vm2669, %v2631, 0
    %v2701 = vsel %vm2669, %v2632, 0
    %v2704 = vsel %vm2669, %v2633, 0
    %v2707 = vsel %vm2669, %v2634, 0
    %v2710 = vsel %vm2669, %v2635, 0
    %v2713 = vsel %vm2669, %v2636, 0
    %v2716 = vsel %vm2669, %v2637, 0
    %v2719 = vsel %vm2669, %v2638, 0
    %v2722 = vsel %vm2669, %v2639, 0
    %vm2724 = vcmask 1044480
    %vm2725 = vcmask 1045504
    %v2726 = vsel %vm2724, 4294967295, 65535
    %v2727 = vsel %vm2725, %v2726, 0
    %v2729 = vand.u32 %v2664, %v2727
    %2731 = vmatprep.subr.bf16.mxu0 0
    %2732 = vmatpush1.bf16.msra.mxu0 %v2660
    %2733 = vmatprep.subr.bf16.mxu0 0
    %2734 = vmatpush1.bf16.msra.mxu0 %v2661
    %2735 = vmatprep.subr.bf16.mxu0 0
    %2736 = vmatpush1.bf16.msra.mxu0 %v2662
    %2737 = vmatprep.subr.bf16.mxu0 0
    %2738 = vmatpush1.bf16.msra.mxu0 %v2663
    %2739 = vmatprep.subr.bf16.mxu0 0
    %2740 = vmatpush1.bf16.msra.mxu0 %v2729
    %2741 = vmatprep.subr.bf16.mxu0 0
    %2742 = vmatpush1.bf16.msra.mxu0 0
    %2743 = vmatprep.subr.bf16.mxu0 0
    %2744 = vmatpush1.bf16.msra.mxu0 0
    %2745 = vmatprep.subr.bf16.mxu0 0
    %2746 = vmatpush1.bf16.msra.mxu0 0
    %2747 = vmatprep.subr.bf16.mxu0 0
    %2748 = vmatpush1.bf16.msra.mxu0 0
    %2749 = vmatprep.subr.bf16.mxu0 0
    %2750 = vmatpush1.bf16.msra.mxu0 0
    %2751 = vmatprep.subr.bf16.mxu0 0
    %2752 = vmatpush1.bf16.msra.mxu0 0
    %2753 = vmatprep.subr.bf16.mxu0 0
    %2754 = vmatpush1.bf16.msra.mxu0 0
    %2755 = vmatprep.subr.bf16.mxu0 0
    %2756 = vmatpush1.bf16.msra.mxu0 0
    %2757 = vmatprep.subr.bf16.mxu0 0
    %2758 = vmatpush1.bf16.msra.mxu0 0
    %2759 = vmatprep.subr.bf16.mxu0 0
    %2760 = vmatpush1.bf16.msra.mxu0 0
    %2761 = vmatprep.subr.bf16.mxu0 0
    %2762 = vmatpush1.bf16.msra.mxu0 0
    %2763 = vmatprep.mubr.bf16.mxu0 0
    %2764 = vmatmul.mubr.bf16.gmra.mrb[0].mxu0 %v2671
    %v2765 = vpop.f32.mrb[0].mxu0
    %v2766 = vadd.f32 %v2548, %v2765
    %v2767 = vpop.f32.mrb[0].mxu0
    %v2768 = vpop.f32.mrb[0].mxu0
    %v2769 = vadd.f32 %v2548, %v2768
    %v2770 = vpop.f32.mrb[0].mxu0
    %2771 = vmatprep.mubr.bf16.mxu0 0
    %2772 = vmatmul.mubr.bf16.gmra.mrb[0].mxu0 %v2674
    %v2773 = vpop.f32.mrb[0].mxu0
    %v2774 = vadd.f32 %v2548, %v2773
    %v2775 = vpop.f32.mrb[0].mxu0
    %v2776 = vpop.f32.mrb[0].mxu0
    %v2777 = vadd.f32 %v2548, %v2776
    %v2778 = vpop.f32.mrb[0].mxu0
    %2779 = vmatprep.mubr.bf16.mxu0 0
    %2780 = vmatmul.mubr.bf16.gmra.mrb[0].mxu0 %v2677
    %v2781 = vpop.f32.mrb[0].mxu0
    %v2782 = vadd.f32 %v2548, %v2781
    %v2783 = vpop.f32.mrb[0].mxu0
    %v2784 = vpop.f32.mrb[0].mxu0
    %v2785 = vpop.f32.mrb[0].mxu0
    %2786 = vmatprep.mubr.bf16.mxu0 0
    %2787 = vmatmul.mubr.bf16.gmra.mrb[0].mxu0 %v2680
    %v2788 = vpop.f32.mrb[0].mxu0
    %v2789 = vadd.f32 %v2548, %v2788
    %v2790 = vpop.f32.mrb[0].mxu0
    %v2791 = vpop.f32.mrb[0].mxu0
    %v2792 = vadd.f32 %v2548, %v2791
    %v2793 = vpop.f32.mrb[0].mxu0
    %2794 = vmatprep.mubr.bf16.mxu0 0
    %2795 = vmatmul.mubr.bf16.gmra.mrb[0].mxu0 %v2683
    %v2796 = vpop.f32.mrb[0].mxu0
    %v2797 = vadd.f32 %v2548, %v2796
    %v2798 = vpop.f32.mrb[0].mxu0
    %v2799 = vpop.f32.mrb[0].mxu0
    %v2800 = vadd.f32 %v2548, %v2799
    %v2801 = vpop.f32.mrb[0].mxu0
    %2802 = vmatprep.mubr.bf16.mxu0 0
    %2803 = vmatmul.mubr.bf16.gmra.mrb[0].mxu0 %v2686
    %v2804 = vpop.f32.mrb[0].mxu0
    %v2805 = vadd.f32 %v2548, %v2804
    %v2806 = vpop.f32.mrb[0].mxu0
    %v2807 = vpop.f32.mrb[0].mxu0
    %v2808 = vpop.f32.mrb[0].mxu0
    %2809 = vmatprep.mubr.bf16.mxu0 0
    %2810 = vmatmul.mubr.bf16.gmra.mrb[0].mxu0 %v2689
    %v2811 = vpop.f32.mrb[0].mxu0
    %v2812 = vadd.f32 %v2548, %v2811
    %v2813 = vpop.f32.mrb[0].mxu0
    %v2814 = vpop.f32.mrb[0].mxu0
    %v2815 = vadd.f32 %v2548, %v2814
    %v2816 = vpop.f32.mrb[0].mxu0
    %2817 = vmatprep.mubr.bf16.mxu0 0
    %2818 = vmatmul.mubr.bf16.gmra.mrb[0].mxu0 %v2692
    %v2819 = vpop.f32.mrb[0].mxu0
    %v2820 = vadd.f32 %v2548, %v2819
    %v2821 = vpop.f32.mrb[0].mxu0
    %v2822 = vpop.f32.mrb[0].mxu0
    %v2823 = vadd.f32 %v2548, %v2822
    %v2824 = vpop.f32.mrb[0].mxu0
    %2825 = vmatprep.mubr.bf16.mxu0 0
    %2826 = vmatmul.mubr.bf16.gmra.mrb[0].mxu0 %v2695
    %v2827 = vpop.f32.mrb[0].mxu0
    %v2828 = vadd.f32 %v2548, %v2827
    %v2829 = vpop.f32.mrb[0].mxu0
    %v2830 = vpop.f32.mrb[0].mxu0
    %v2831 = vpop.f32.mrb[0].mxu0
    %2832 = vmatprep.mubr.bf16.mxu0 0
    %2833 = vmatmul.mubr.bf16.gmra.mrb[0].mxu0 %v2698
    %v2834 = vpop.f32.mrb[0].mxu0
    %v2835 = vadd.f32 %v2548, %v2834
    %v2836 = vpop.f32.mrb[0].mxu0
    %v2837 = vpop.f32.mrb[0].mxu0
    %v2838 = vadd.f32 %v2548, %v2837
    %v2839 = vpop.f32.mrb[0].mxu0
    %2840 = vmatprep.mubr.bf16.mxu0 0
    %2841 = vmatmul.mubr.bf16.gmra.mrb[0].mxu0 %v2701
    %v2842 = vpop.f32.mrb[0].mxu0
    %v2843 = vadd.f32 %v2548, %v2842
    %v2844 = vpop.f32.mrb[0].mxu0
    %v2845 = vpop.f32.mrb[0].mxu0
    %v2846 = vadd.f32 %v2548, %v2845
    %v2847 = vpop.f32.mrb[0].mxu0
    %2848 = vmatprep.mubr.bf16.mxu0 0
    %2849 = vmatmul.mubr.bf16.gmra.mrb[0].mxu0 %v2704
    %v2850 = vpop.f32.mrb[0].mxu0
    %v2851 = vadd.f32 %v2548, %v2850
    %v2852 = vpop.f32.mrb[0].mxu0
    %v2853 = vpop.f32.mrb[0].mxu0
    %v2854 = vpop.f32.mrb[0].mxu0
    %2855 = vmatprep.mubr.bf16.mxu0 0
    %2856 = vmatmul.mubr.bf16.gmra.mrb[0].mxu0 %v2707
    %v2857 = vpop.f32.mrb[0].mxu0
    %v2858 = vadd.f32 %v2548, %v2857
    %v2859 = vpop.f32.mrb[0].mxu0
    %v2860 = vpop.f32.mrb[0].mxu0
    %v2861 = vadd.f32 %v2548, %v2860
    %v2862 = vpop.f32.mrb[0].mxu0
    %2863 = vmatprep.mubr.bf16.mxu0 0
    %2864 = vmatmul.mubr.bf16.gmra.mrb[0].mxu0 %v2710
    %v2865 = vpop.f32.mrb[0].mxu0
    %v2866 = vadd.f32 %v2548, %v2865
    %v2867 = vpop.f32.mrb[0].mxu0
    %v2868 = vpop.f32.mrb[0].mxu0
    %v2869 = vadd.f32 %v2548, %v2868
    %v2870 = vpop.f32.mrb[0].mxu0
    %2871 = vmatprep.mubr.bf16.mxu0 0
    %2872 = vmatmul.mubr.bf16.gmra.mrb[0].mxu0 %v2713
    %v2873 = vpop.f32.mrb[0].mxu0
    %v2874 = vadd.f32 %v2548, %v2873
    %v2875 = vpop.f32.mrb[0].mxu0
    %v2876 = vpop.f32.mrb[0].mxu0
    %v2877 = vpop.f32.mrb[0].mxu0
    %2878 = vmatprep.mubr.bf16.mxu0 0
    %2879 = vmatmul.mubr.bf16.gmra.mrb[0].mxu0 %v2716
    %v2880 = vpop.f32.mrb[0].mxu0
    %v2881 = vpop.f32.mrb[0].mxu0
    %v2882 = vpop.f32.mrb[0].mxu0
    %v2883 = vpop.f32.mrb[0].mxu0
    %2884 = vmatprep.mubr.bf16.mxu0 0
    %2885 = vmatmul.mubr.bf16.gmra.mrb[0].mxu0 %v2719
    %v2886 = vpop.f32.mrb[0].mxu0
    %v2887 = vpop.f32.mrb[0].mxu0
    %v2888 = vpop.f32.mrb[0].mxu0
    %v2889 = vpop.f32.mrb[0].mxu0
    %2890 = vmatprep.mubr.bf16.mxu0 0
    %2891 = vmatmul.mubr.bf16.gmra.mrb[0].mxu0 %v2722
    %v2892 = vpop.f32.mrb[0].mxu0
    %v2893 = vpop.f32.mrb[0].mxu0
    %v2894 = vpop.f32.mrb[0].mxu0
    %v2895 = vpop.f32.mrb[0].mxu0
    %2896 = vdwg.mxu0
    %v2897 = vmax.f32 %v2766, 0.0
    %v2898 = vmax.f32 %v2769, 0.0
    %v2899 = vmax.f32 %v2774, 0.0
    %v2900 = vmax.f32 %v2777, 0.0
    %v2901 = vmax.f32 %v2782, 0.0
    %v2902 = vmax.f32 %v2789, 0.0
    %v2903 = vmax.f32 %v2792, 0.0
    %v2904 = vmax.f32 %v2797, 0.0
    %v2905 = vmax.f32 %v2800, 0.0
    %v2906 = vmax.f32 %v2805, 0.0
    %v2907 = vmax.f32 %v2812, 0.0
    %v2908 = vmax.f32 %v2815, 0.0
    %v2909 = vmax.f32 %v2820, 0.0
    %v2910 = vmax.f32 %v2823, 0.0
    %v2911 = vmax.f32 %v2828, 0.0
    %v2912 = vmax.f32 %v2835, 0.0
    %v2913 = vmax.f32 %v2838, 0.0
    %v2914 = vmax.f32 %v2843, 0.0
    %v2915 = vmax.f32 %v2846, 0.0
    %v2916 = vmax.f32 %v2851, 0.0
    %v2917 = vmax.f32 %v2858, 0.0
    %v2918 = vmax.f32 %v2861, 0.0
    %v2919 = vmax.f32 %v2866, 0.0
    %v2920 = vmax.f32 %v2869, 0.0
    %v2921 = vmax.f32 %v2874, 0.0
    %2923 = vrot.lane.b32.xlu0 %v2898, 8
    %v2924 = vpop.permute.xlu0 %2923
    %2927 = vrot.lane.b32.xlu0 %v2899, 16
    %v2928 = vpop.permute.xlu0 %2927
    %2931 = vrot.lane.b32.xlu0 %v2902, 24
    %v2932 = vpop.permute.xlu0 %2931
    %2935 = vrot.lane.b32.xlu0 %v2903, 32
    %v2936 = vpop.permute.xlu0 %2935
    %2939 = vrot.lane.b32.xlu0 %v2904, 40
    %v2940 = vpop.permute.xlu0 %2939
    %2943 = vrot.lane.b32.xlu0 %v2907, 48
    %v2944 = vpop.permute.xlu0 %2943
    %2947 = vrot.lane.b32.xlu0 %v2908, 56
    %v2948 = vpop.permute.xlu0 %2947
    %2951 = vrot.lane.b32.xlu0 %v2909, 64
    %v2952 = vpop.permute.xlu0 %2951
    %vm2954 = vcmask 64512
    %v2955 = vsel %vm2954, %v2897, %v2924
    %vm2956 = vcmask 130048
    %v2957 = vsel %vm2956, %v2955, %v2928
    %vm2958 = vcmask 195584
    %v2959 = vsel %vm2958, %v2957, %v2932
    %v2960 = vsel %vm330, %v2959, %v2936
    %vm2961 = vcmask 326656
    %v2962 = vsel %vm2961, %v2960, %v2940
    %vm2963 = vcmask 392192
    %v2964 = vsel %vm2963, %v2962, %v2944
    %vm2965 = vcmask 457728
    %v2966 = vsel %vm2965, %v2964, %v2948
    %vm2967 = vcmask 523264
    %v2968 = vsel %vm2967, %v2966, %v2952
    %2970 = vrot.lane.b32.xlu0 %v2900, 8
    %v2971 = vpop.permute.xlu0 %2970
    %2974 = vrot.lane.b32.xlu0 %v2901, 16
    %v2975 = vpop.permute.xlu0 %2974
    %2977 = vrot.lane.b32.xlu0 %v2904, 24
    %v2978 = vpop.permute.xlu0 %2977
    %2981 = vrot.lane.b32.xlu0 %v2905, 32
    %v2982 = vpop.permute.xlu0 %2981
    %2985 = vrot.lane.b32.xlu0 %v2906, 40
    %v2986 = vpop.permute.xlu0 %2985
    %2988 = vrot.lane.b32.xlu0 %v2909, 48
    %v2989 = vpop.permute.xlu0 %2988
    %2992 = vrot.lane.b32.xlu0 %v2910, 56
    %v2993 = vpop.permute.xlu0 %2992
    %2996 = vrot.lane.b32.xlu0 %v2911, 64
    %v2997 = vpop.permute.xlu0 %2996
    %v2999 = vsel %vm2954, %v2899, %v2971
    %v3000 = vsel %vm2956, %v2999, %v2975
    %v3001 = vsel %vm2958, %v3000, %v2978
    %v3002 = vsel %vm330, %v3001, %v2982
    %v3003 = vsel %vm2961, %v3002, %v2986
    %v3004 = vsel %vm2963, %v3003, %v2989
    %v3005 = vsel %vm2965, %v3004, %v2993
    %v3006 = vsel %vm2967, %v3005, %v2997
    %3007 = vrot.lane.b32.xlu0 %v2908, 8
    %v3008 = vpop.permute.xlu0 %3007
    %3010 = vrot.lane.b32.xlu0 %v2909, 16
    %v3011 = vpop.permute.xlu0 %3010
    %3014 = vrot.lane.b32.xlu0 %v2912, 24
    %v3015 = vpop.permute.xlu0 %3014
    %3018 = vrot.lane.b32.xlu0 %v2913, 32
    %v3019 = vpop.permute.xlu0 %3018
    %3022 = vrot.lane.b32.xlu0 %v2914, 40
    %v3023 = vpop.permute.xlu0 %3022
    %3026 = vrot.lane.b32.xlu0 %v2917, 48
    %v3027 = vpop.permute.xlu0 %3026
    %3030 = vrot.lane.b32.xlu0 %v2918, 56
    %v3031 = vpop.permute.xlu0 %3030
    %3034 = vrot.lane.b32.xlu0 %v2919, 64
    %v3035 = vpop.permute.xlu0 %3034
    %v3037 = vsel %vm2954, %v2907, %v3008
    %v3038 = vsel %vm2956, %v3037, %v3011
    %v3039 = vsel %vm2958, %v3038, %v3015
    %v3040 = vsel %vm330, %v3039, %v3019
    %v3041 = vsel %vm2961, %v3040, %v3023
    %v3042 = vsel %vm2963, %v3041, %v3027
    %v3043 = vsel %vm2965, %v3042, %v3031
    %v3044 = vsel %vm2967, %v3043, %v3035
    %3045 = vrot.lane.b32.xlu0 %v2910, 8
    %v3046 = vpop.permute.xlu0 %3045
    %3048 = vrot.lane.b32.xlu0 %v2911, 16
    %v3049 = vpop.permute.xlu0 %3048
    %3051 = vrot.lane.b32.xlu0 %v2914, 24
    %v3052 = vpop.permute.xlu0 %3051
    %3055 = vrot.lane.b32.xlu0 %v2915, 32
    %v3056 = vpop.permute.xlu0 %3055
    %3059 = vrot.lane.b32.xlu0 %v2916, 40
    %v3060 = vpop.permute.xlu0 %3059
    %3062 = vrot.lane.b32.xlu0 %v2919, 48
    %v3063 = vpop.permute.xlu0 %3062
    %3066 = vrot.lane.b32.xlu0 %v2920, 56
    %v3067 = vpop.permute.xlu0 %3066
    %3070 = vrot.lane.b32.xlu0 %v2921, 64
    %v3071 = vpop.permute.xlu0 %3070
    %v3073 = vsel %vm2954, %v2909, %v3046
    %v3074 = vsel %vm2956, %v3073, %v3049
    %v3075 = vsel %vm2958, %v3074, %v3052
    %v3076 = vsel %vm330, %v3075, %v3056
    %v3077 = vsel %vm2961, %v3076, %v3060
    %v3078 = vsel %vm2963, %v3077, %v3063
    %v3079 = vsel %vm2965, %v3078, %v3067
    %v3080 = vsel %vm2967, %v3079, %v3071
    %v3081 = vpack.c.bf16 %v3006, %v2968
    %v3082 = vpack.c.bf16 %v3080, %v3044
    %v3083 = vld [vmem:[%s39] sm:$0xf]
    %v3084 = vld [vmem:[%s39 + $0x4] sm:$0xf]
    %v3085 = vld [vmem:[%s39 + $0x8] sm:$0xf]
    %v3086 = vld [vmem:[%s39 + $0xc] sm:$0xf]
    %v3087 = vld [vmem:[%s39 + $0x10] sm:$0xf]
    %v3088 = vld [vmem:[%s39 + $0x14] sm:$0xf]
    %v3089 = vld [vmem:[%s39 + $0x18] sm:$0xf]
    %v3090 = vld [vmem:[%s39 + $0x1c] sm:$0xf]
    %v3091 = vld [vmem:[%s39 + $0x20] sm:$0xf]
    %v3092 = vld [vmem:[%s41] sm:$0x1]
    %v3094 = vlaneseq
    %v3095 = vshrl.u32 %v3094, 7
    %v3096 = vsub.s32 0, %v3095
    %v3097 = vrot.slane %v3092, %v3096
    %v3108 = vunpack.c.l.b16 %v3083
    %v3109 = vunpack.c.l.b16 %v3084
    %v3110 = vunpack.c.l.b16 %v3085
    %v3111 = vunpack.c.l.b16 %v3086
    %v3112 = vunpack.c.l.b16 %v3087
    %v3113 = vunpack.c.l.b16 %v3088
    %v3114 = vunpack.c.l.b16 %v3089
    %v3115 = vunpack.c.l.b16 %v3090
    %v3116 = vunpack.c.l.b16 %v3091
    %v3117 = vpack.c.b16 %v3109, %v3108
    %v3118 = vpack.c.b16 %v3111, %v3110
    %v3119 = vpack.c.b16 %v3113, %v3112
    %v3120 = vpack.c.b16 %v3115, %v3114
    %v3121 = vpack.c.b16 %v3116, %v3116
    %vm3126 = vcmask 588800
    %v3128 = vsel %vm3126, %v3081, 0
    %v3131 = vsel %vm3126, %v3082, 0
    %vm3133 = vcmask 1043456
    %v3135 = vsel %vm3133, %v3121, 0
    %3137 = vmatprep.subr.bf16.mxu0 0
    %3138 = vmatpush1.bf16.msra.mxu0 %v3117
    %3139 = vmatprep.subr.bf16.mxu0 0
    %3140 = vmatpush1.bf16.msra.mxu0 %v3118
    %3141 = vmatprep.subr.bf16.mxu0 0
    %3142 = vmatpush1.bf16.msra.mxu0 %v3119
    %3143 = vmatprep.subr.bf16.mxu0 0
    %3144 = vmatpush1.bf16.msra.mxu0 %v3120
    %3145 = vmatprep.subr.bf16.mxu0 0
    %3146 = vmatpush1.bf16.msra.mxu0 %v3135
    %3147 = vmatprep.subr.bf16.mxu0 0
    %3148 = vmatpush1.bf16.msra.mxu0 0
    %3149 = vmatprep.subr.bf16.mxu0 0
    %3150 = vmatpush1.bf16.msra.mxu0 0
    %3151 = vmatprep.subr.bf16.mxu0 0
    %3152 = vmatpush1.bf16.msra.mxu0 0
    %3153 = vmatprep.subr.bf16.mxu0 0
    %3154 = vmatpush1.bf16.msra.mxu0 0
    %3155 = vmatprep.subr.bf16.mxu0 0
    %3156 = vmatpush1.bf16.msra.mxu0 0
    %3157 = vmatprep.subr.bf16.mxu0 0
    %3158 = vmatpush1.bf16.msra.mxu0 0
    %3159 = vmatprep.subr.bf16.mxu0 0
    %3160 = vmatpush1.bf16.msra.mxu0 0
    %3161 = vmatprep.subr.bf16.mxu0 0
    %3162 = vmatpush1.bf16.msra.mxu0 0
    %3163 = vmatprep.subr.bf16.mxu0 0
    %3164 = vmatpush1.bf16.msra.mxu0 0
    %3165 = vmatprep.subr.bf16.mxu0 0
    %3166 = vmatpush1.bf16.msra.mxu0 0
    %3167 = vmatprep.subr.bf16.mxu0 0
    %3168 = vmatpush1.bf16.msra.mxu0 0
    %3169 = vmatprep.mubr.bf16.mxu0 0
    %3170 = vmatmul.mubr.bf16.gmra.mrb[0].mxu0 %v3128
    %v3171 = vpop.f32.mrb[0].mxu0
    %v3172 = vadd.f32 %v3097, %v3171
    %v3173 = vpop.f32.mrb[0].mxu0
    %v3174 = vpop.f32.mrb[0].mxu0
    %v3175 = vadd.f32 %v3097, %v3174
    %v3176 = vpop.f32.mrb[0].mxu0
    %3177 = vmatprep.mubr.bf16.mxu0 0
    %3178 = vmatmul.mubr.bf16.gmra.mrb[0].mxu0 %v3131
    %v3179 = vpop.f32.mrb[0].mxu0
    %v3180 = vadd.f32 %v3097, %v3179
    %v3181 = vpop.f32.mrb[0].mxu0
    %v3182 = vpop.f32.mrb[0].mxu0
    %v3183 = vadd.f32 %v3097, %v3182
    %v3184 = vpop.f32.mrb[0].mxu0
    %3185 = vdwg.mxu0
    %v3186 = vmax.f32 %v3172, 0.0
    %v3187 = vmax.f32 %v3175, 0.0
    %v3188 = vmax.f32 %v3180, 0.0
    %v3189 = vmax.f32 %v3183, 0.0
    %3191 = vrot.lane.b32.xlu0 %v3187, 16
    %v3192 = vpop.permute.xlu0 %3191
    %3195 = vrot.lane.b32.xlu0 %v3188, 32
    %v3196 = vpop.permute.xlu0 %3195
    %3199 = vrot.lane.b32.xlu0 %v3189, 48
    %v3200 = vpop.permute.xlu0 %3199
    %v3202 = vsel %vm2956, %v3186, %v3192
    %v3203 = vsel %vm330, %v3202, %v3196
    %v3204 = vsel %vm2963, %v3203, %v3200
    %v3205 = vpack.c.bf16 %v3204, %v3204
    %v3206 = vld [vmem:[%s43] sm:$0xf]
    %v3207 = vld [vmem:[%s43 + $0x4] sm:$0xf]
    %v3208 = vld [vmem:[%s43 + $0x8] sm:$0xf]
    %v3209 = vld [vmem:[%s43 + $0xc] sm:$0xf]
    %v3210 = vld [vmem:[%s43 + $0x10] sm:$0xf]
    %v3211 = vld [vmem:[%s43 + $0x14] sm:$0xf]
    %v3212 = vld [vmem:[%s43 + $0x18] sm:$0xf]
    %v3213 = vld [vmem:[%s43 + $0x1c] sm:$0xf]
    %v3214 = vld [vmem:[%s45] sm:$0x1]
    %v3216 = vlaneseq
    %v3217 = vshrl.u32 %v3216, 7
    %v3218 = vsub.s32 0, %v3217
    %v3219 = vrot.slane %v3214, %v3218
    %v3229 = vunpack.c.l.b16 %v3206
    %v3230 = vunpack.c.l.b16 %v3207
    %v3231 = vunpack.c.l.b16 %v3208
    %v3232 = vunpack.c.l.b16 %v3209
    %v3233 = vunpack.c.l.b16 %v3210
    %v3234 = vunpack.c.l.b16 %v3211
    %v3235 = vunpack.c.l.b16 %v3212
    %v3236 = vunpack.c.l.b16 %v3213
    %v3237 = vpack.c.b16 %v3230, %v3229
    %v3238 = vpack.c.b16 %v3232, %v3231
    %v3239 = vpack.c.b16 %v3234, %v3233
    %v3240 = vpack.c.b16 %v3236, %v3235
    %v3246 = vsel %vm2967, %v3205, 0
    %3248 = vmatprep.subr.bf16.mxu0 0
    %3249 = vmatpush1.bf16.msra.mxu0 %v3237
    %3250 = vmatprep.subr.bf16.mxu0 0
    %3251 = vmatpush1.bf16.msra.mxu0 %v3238
    %3252 = vmatprep.subr.bf16.mxu0 0
    %3253 = vmatpush1.bf16.msra.mxu0 %v3239
    %3254 = vmatprep.subr.bf16.mxu0 0
    %3255 = vmatpush1.bf16.msra.mxu0 %v3240
    %3256 = vmatprep.subr.bf16.mxu0 0
    %3257 = vmatpush1.bf16.msra.mxu0 0
    %3258 = vmatprep.subr.bf16.mxu0 0
    %3259 = vmatpush1.bf16.msra.mxu0 0
    %3260 = vmatprep.subr.bf16.mxu0 0
    %3261 = vmatpush1.bf16.msra.mxu0 0
    %3262 = vmatprep.subr.bf16.mxu0 0
    %3263 = vmatpush1.bf16.msra.mxu0 0
    %3264 = vmatprep.subr.bf16.mxu0 0
    %3265 = vmatpush1.bf16.msra.mxu0 0
    %3266 = vmatprep.subr.bf16.mxu0 0
    %3267 = vmatpush1.bf16.msra.mxu0 0
    %3268 = vmatprep.subr.bf16.mxu0 0
    %3269 = vmatpush1.bf16.msra.mxu0 0
    %3270 = vmatprep.subr.bf16.mxu0 0
    %3271 = vmatpush1.bf16.msra.mxu0 0
    %3272 = vmatprep.subr.bf16.mxu0 0
    %3273 = vmatpush1.bf16.msra.mxu0 0
    %3274 = vmatprep.subr.bf16.mxu0 0
    %3275 = vmatpush1.bf16.msra.mxu0 0
    %3276 = vmatprep.subr.bf16.mxu0 0
    %3277 = vmatpush1.bf16.msra.mxu0 0
    %3278 = vmatprep.subr.bf16.mxu0 0
    %3279 = vmatpush1.bf16.msra.mxu0 0
    %3280 = vmatprep.mubr.bf16.mxu0 0
    %3281 = vmatmul.mubr.bf16.gmra.mrb[0].mxu0 %v3246
    %v3282 = vpop.f32.mrb[0].mxu0
    %v3283 = vadd.f32 %v3219, %v3282
    %v3284 = vpop.f32.mrb[0].mxu0
    %v3285 = vpop.f32.mrb[0].mxu0
    %v3286 = vpop.f32.mrb[0].mxu0
    %3287 = vdwg.mxu0
    %v3288 = vmax.f32 %v3283, 0.0
    %v3289 = vld [vmem:[%s9] sm:$0xf]
    %v3290 = vld [vmem:[%s47] sm:$0xf]
    %v3291 = vld [vmem:[%s49] sm:$0x1]
    %v3293 = vlaneseq
    %v3294 = vshrl.u32 %v3293, 7
    %v3295 = vsub.s32 0, %v3294
    %v3296 = vrot.slane %v3291, %v3295
    %v3299 = vsel %vm2954, %v3289, 0
    %v3302 = vsel %vm3133, %v3290, 0
    %3304 = vmatprep.subr.bf16.mxu0 0
    %3305 = vmatpush1.bf16.msra.mxu0 %v3302
    %3306 = vmatprep.subr.bf16.mxu0 0
    %3307 = vmatpush1.bf16.msra.mxu0 0
    %3308 = vmatprep.subr.bf16.mxu0 0
    %3309 = vmatpush1.bf16.msra.mxu0 0
    %3310 = vmatprep.subr.bf16.mxu0 0
    %3311 = vmatpush1.bf16.msra.mxu0 0
    %3312 = vmatprep.subr.bf16.mxu0 0
    %3313 = vmatpush1.bf16.msra.mxu0 0
    %3314 = vmatprep.subr.bf16.mxu0 0
    %3315 = vmatpush1.bf16.msra.mxu0 0
    %3316 = vmatprep.subr.bf16.mxu0 0
    %3317 = vmatpush1.bf16.msra.mxu0 0
    %3318 = vmatprep.subr.bf16.mxu0 0
    %3319 = vmatpush1.bf16.msra.mxu0 0
    %3320 = vmatprep.subr.bf16.mxu0 0
    %3321 = vmatpush1.bf16.msra.mxu0 0
    %3322 = vmatprep.subr.bf16.mxu0 0
    %3323 = vmatpush1.bf16.msra.mxu0 0
    %3324 = vmatprep.subr.bf16.mxu0 0
    %3325 = vmatpush1.bf16.msra.mxu0 0
    %3326 = vmatprep.subr.bf16.mxu0 0
    %3327 = vmatpush1.bf16.msra.mxu0 0
    %3328 = vmatprep.subr.bf16.mxu0 0
    %3329 = vmatpush1.bf16.msra.mxu0 0
    %3330 = vmatprep.subr.bf16.mxu0 0
    %3331 = vmatpush1.bf16.msra.mxu0 0
    %3332 = vmatprep.subr.bf16.mxu0 0
    %3333 = vmatpush1.bf16.msra.mxu0 0
    %3334 = vmatprep.subr.bf16.mxu0 0
    %3335 = vmatpush1.bf16.msra.mxu0 0
    %3336 = vmatprep.mubr.bf16.mxu0 0
    %3337 = vmatmul.mubr.bf16.gmra.mrb[0].mxu0 %v3299
    %v3338 = vpop.f32.mrb[0].mxu0
    %v3339 = vadd.f32 %v3296, %v3338
    %v3340 = vpop.f32.mrb[0].mxu0
    %v3341 = vpop.f32.mrb[0].mxu0
    %v3342 = vpop.f32.mrb[0].mxu0
    %3343 = vdwg.mxu0
    %v3344 = vld [vmem:[%s51] sm:$0xf]
    %v3345 = vld [vmem:[%s53] sm:$0x1]
    %v3347 = vlaneseq
    %v3348 = vshrl.u32 %v3347, 7
    %v3349 = vsub.s32 0, %v3348
    %v3350 = vrot.slane %v3345, %v3349
    %v3353 = vsel %vm3133, %v3344, 0
    %3355 = vmatprep.subr.bf16.mxu0 0
    %3356 = vmatpush1.bf16.msra.mxu0 %v3353
    %3357 = vmatprep.subr.bf16.mxu0 0
    %3358 = vmatpush1.bf16.msra.mxu0 0
    %3359 = vmatprep.subr.bf16.mxu0 0
    %3360 = vmatpush1.bf16.msra.mxu0 0
    %3361 = vmatprep.subr.bf16.mxu0 0
    %3362 = vmatpush1.bf16.msra.mxu0 0
    %3363 = vmatprep.subr.bf16.mxu0 0
    %3364 = vmatpush1.bf16.msra.mxu0 0
    %3365 = vmatprep.subr.bf16.mxu0 0
    %3366 = vmatpush1.bf16.msra.mxu0 0
    %3367 = vmatprep.subr.bf16.mxu0 0
    %3368 = vmatpush1.bf16.msra.mxu0 0
    %3369 = vmatprep.subr.bf16.mxu0 0
    %3370 = vmatpush1.bf16.msra.mxu0 0
    %3371 = vmatprep.subr.bf16.mxu0 0
    %3372 = vmatpush1.bf16.msra.mxu0 0
    %3373 = vmatprep.subr.bf16.mxu0 0
    %3374 = vmatpush1.bf16.msra.mxu0 0
    %3375 = vmatprep.subr.bf16.mxu0 0
    %3376 = vmatpush1.bf16.msra.mxu0 0
    %3377 = vmatprep.subr.bf16.mxu0 0
    %3378 = vmatpush1.bf16.msra.mxu0 0
    %3379 = vmatprep.subr.bf16.mxu0 0
    %3380 = vmatpush1.bf16.msra.mxu0 0
    %3381 = vmatprep.subr.bf16.mxu0 0
    %3382 = vmatpush1.bf16.msra.mxu0 0
    %3383 = vmatprep.subr.bf16.mxu0 0
    %3384 = vmatpush1.bf16.msra.mxu0 0
    %3385 = vmatprep.subr.bf16.mxu0 0
    %3386 = vmatpush1.bf16.msra.mxu0 0
    %3387 = vmatprep.mubr.bf16.mxu0 0
    %3388 = vmatmul.mubr.bf16.gmra.mrb[0].mxu0 %v3299
    %v3389 = vpop.f32.mrb[0].mxu0
    %v3390 = vadd.f32 %v3350, %v3389
    %v3391 = vpop.f32.mrb[0].mxu0
    %v3392 = vpop.f32.mrb[0].mxu0
    %v3393 = vpop.f32.mrb[0].mxu0
    %3394 = vdwg.mxu0
    %v3395 = vld [vmem:[%s11] sm:$0xf]
    %v3396 = vld [vmem:[%s11 + $0x4] sm:$0xf]
    %v3397 = vld [vmem:[%s11 + $0x8] sm:$0xf]
    %v3398 = vld [vmem:[%s11 + $0xc] sm:$0xf]
    %v3399 = vld [vmem:[%s11 + $0x10] sm:$0xf]
    %v3400 = vld [vmem:[%s11 + $0x14] sm:$0xf]
    %v3401 = vld [vmem:[%s55] sm:$0xf]
    %v3402 = vld [vmem:[%s59] sm:$0x1]
    %v3404 = vlaneseq
    %v3405 = vshrl.u32 %v3404, 7
    %v3406 = vsub.s32 0, %v3405
    %v3407 = vrot.slane %v3402, %v3406
    %v3415 = vunpack.c.l.b16 %v3395
    %v3416 = vunpack.c.l.b16 %v3396
    %v3417 = vunpack.c.l.b16 %v3397
    %v3418 = vunpack.c.l.b16 %v3398
    %v3419 = vunpack.c.l.b16 %v3399
    %v3420 = vunpack.c.l.b16 %v3400
    %v3421 = vpack.c.b16 %v3416, %v3415
    %v3422 = vpack.c.b16 %v3418, %v3417
    %v3423 = vpack.c.b16 %v3420, %v3419
    %v3425 = vsel %vm2954, %v3421, 0
    %v3428 = vsel %vm2954, %v3422, 0
    %v3431 = vsel %vm2954, %v3423, 0
    %v3434 = vsel %vm3133, %v3401, 0
    %3436 = vmatprep.subr.bf16.mxu0 0
    %3437 = vmatpush1.bf16.msra.mxu0 %v3434
    %3438 = vmatprep.subr.bf16.mxu0 0
    %3439 = vmatpush1.bf16.msra.mxu0 0
    %3440 = vmatprep.subr.bf16.mxu0 0
    %3441 = vmatpush1.bf16.msra.mxu0 0
    %3442 = vmatprep.subr.bf16.mxu0 0
    %3443 = vmatpush1.bf16.msra.mxu0 0
    %3444 = vmatprep.subr.bf16.mxu0 0
    %3445 = vmatpush1.bf16.msra.mxu0 0
    %3446 = vmatprep.subr.bf16.mxu0 0
    %3447 = vmatpush1.bf16.msra.mxu0 0
    %3448 = vmatprep.subr.bf16.mxu0 0
    %3449 = vmatpush1.bf16.msra.mxu0 0
    %3450 = vmatprep.subr.bf16.mxu0 0
    %3451 = vmatpush1.bf16.msra.mxu0 0
    %3452 = vmatprep.subr.bf16.mxu0 0
    %3453 = vmatpush1.bf16.msra.mxu0 0
    %3454 = vmatprep.subr.bf16.mxu0 0
    %3455 = vmatpush1.bf16.msra.mxu0 0
    %3456 = vmatprep.subr.bf16.mxu0 0
    %3457 = vmatpush1.bf16.msra.mxu0 0
    %3458 = vmatprep.subr.bf16.mxu0 0
    %3459 = vmatpush1.bf16.msra.mxu0 0
    %3460 = vmatprep.subr.bf16.mxu0 0
    %3461 = vmatpush1.bf16.msra.mxu0 0
    %3462 = vmatprep.subr.bf16.mxu0 0
    %3463 = vmatpush1.bf16.msra.mxu0 0
    %3464 = vmatprep.subr.bf16.mxu0 0
    %3465 = vmatpush1.bf16.msra.mxu0 0
    %3466 = vmatprep.subr.bf16.mxu0 0
    %3467 = vmatpush1.bf16.msra.mxu0 0
    %3468 = vmatprep.mubr.bf16.mxu0 0
    %3469 = vmatmul.mubr.bf16.gmra.mrb[0].mxu0 %v3425
    %v3470 = vpop.f32.mrb[0].mxu0
    %v3471 = vadd.f32 %v3407, %v3470
    %v3472 = vpop.f32.mrb[0].mxu0
    %v3473 = vpop.f32.mrb[0].mxu0
    %v3474 = vadd.f32 %v3407, %v3473
    %v3475 = vpop.f32.mrb[0].mxu0
    %3476 = vmatprep.mubr.bf16.mxu0 0
    %3477 = vmatmul.mubr.bf16.gmra.mrb[0].mxu0 %v3428
    %v3478 = vpop.f32.mrb[0].mxu0
    %v3479 = vadd.f32 %v3407, %v3478
    %v3480 = vpop.f32.mrb[0].mxu0
    %v3481 = vpop.f32.mrb[0].mxu0
    %v3482 = vadd.f32 %v3407, %v3481
    %v3483 = vpop.f32.mrb[0].mxu0
    %3484 = vmatprep.mubr.bf16.mxu0 0
    %3485 = vmatmul.mubr.bf16.gmra.mrb[0].mxu0 %v3431
    %v3486 = vpop.f32.mrb[0].mxu0
    %v3487 = vadd.f32 %v3407, %v3486
    %v3488 = vpop.f32.mrb[0].mxu0
    %v3489 = vpop.f32.mrb[0].mxu0
    %v3490 = vadd.f32 %v3407, %v3489
    %v3491 = vpop.f32.mrb[0].mxu0
    %3492 = vdwg.mxu0
    %v3493 = vld [vmem:[%s61] sm:$0xf]
    %v3494 = vld [vmem:[%s65] sm:$0x1]
    %v3496 = vlaneseq
    %v3497 = vshrl.u32 %v3496, 7
    %v3498 = vsub.s32 0, %v3497
    %v3499 = vrot.slane %v3494, %v3498
    %v3502 = vsel %vm3133, %v3493, 0
    %3504 = vmatprep.subr.bf16.mxu0 0
    %3505 = vmatpush1.bf16.msra.mxu0 %v3502
    %3506 = vmatprep.subr.bf16.mxu0 0
    %3507 = vmatpush1.bf16.msra.mxu0 0
    %3508 = vmatprep.subr.bf16.mxu0 0
    %3509 = vmatpush1.bf16.msra.mxu0 0
    %3510 = vmatprep.subr.bf16.mxu0 0
    %3511 = vmatpush1.bf16.msra.mxu0 0
    %3512 = vmatprep.subr.bf16.mxu0 0
    %3513 = vmatpush1.bf16.msra.mxu0 0
    %3514 = vmatprep.subr.bf16.mxu0 0
    %3515 = vmatpush1.bf16.msra.mxu0 0
    %3516 = vmatprep.subr.bf16.mxu0 0
    %3517 = vmatpush1.bf16.msra.mxu0 0
    %3518 = vmatprep.subr.bf16.mxu0 0
    %3519 = vmatpush1.bf16.msra.mxu0 0
    %3520 = vmatprep.subr.bf16.mxu0 0
    %3521 = vmatpush1.bf16.msra.mxu0 0
    %3522 = vmatprep.subr.bf16.mxu0 0
    %3523 = vmatpush1.bf16.msra.mxu0 0
    %3524 = vmatprep.subr.bf16.mxu0 0
    %3525 = vmatpush1.bf16.msra.mxu0 0
    %3526 = vmatprep.subr.bf16.mxu0 0
    %3527 = vmatpush1.bf16.msra.mxu0 0
    %3528 = vmatprep.subr.bf16.mxu0 0
    %3529 = vmatpush1.bf16.msra.mxu0 0
    %3530 = vmatprep.subr.bf16.mxu0 0
    %3531 = vmatpush1.bf16.msra.mxu0 0
    %3532 = vmatprep.subr.bf16.mxu0 0
    %3533 = vmatpush1.bf16.msra.mxu0 0
    %3534 = vmatprep.subr.bf16.mxu0 0
    %3535 = vmatpush1.bf16.msra.mxu0 0
    %3536 = vmatprep.mubr.bf16.mxu0 0
    %3537 = vmatmul.mubr.bf16.gmra.mrb[0].mxu0 %v3425
    %v3538 = vpop.f32.mrb[0].mxu0
    %v3539 = vadd.f32 %v3499, %v3538
    %v3540 = vpop.f32.mrb[0].mxu0
    %v3541 = vpop.f32.mrb[0].mxu0
    %v3542 = vadd.f32 %v3499, %v3541
    %v3543 = vpop.f32.mrb[0].mxu0
    %3544 = vmatprep.mubr.bf16.mxu0 0
    %3545 = vmatmul.mubr.bf16.gmra.mrb[0].mxu0 %v3428
    %v3546 = vpop.f32.mrb[0].mxu0
    %v3547 = vadd.f32 %v3499, %v3546
    %v3548 = vpop.f32.mrb[0].mxu0
    %v3549 = vpop.f32.mrb[0].mxu0
    %v3550 = vadd.f32 %v3499, %v3549
    %v3551 = vpop.f32.mrb[0].mxu0
    %3552 = vmatprep.mubr.bf16.mxu0 0
    %3553 = vmatmul.mubr.bf16.gmra.mrb[0].mxu0 %v3431
    %v3554 = vpop.f32.mrb[0].mxu0
    %v3555 = vadd.f32 %v3499, %v3554
    %v3556 = vpop.f32.mrb[0].mxu0
    %v3557 = vpop.f32.mrb[0].mxu0
    %v3558 = vadd.f32 %v3499, %v3557
    %v3559 = vpop.f32.mrb[0].mxu0
    %3560 = vdwg.mxu0
    %v3561 = vld [vmem:[%s57] sm:$0xf]
    %v3562 = vld [vmem:[%s57 + $0x4] sm:$0xf]
    %v3563 = vld [vmem:[%s57 + $0x8] sm:$0xf]
    %v3564 = vld [vmem:[%s57 + $0xc] sm:$0xf]
    %v3565 = vpack.c.bf16 %v3339, %v3339
    %v3570 = vunpack.c.l.b16 %v3561
    %v3571 = vunpack.c.l.b16 %v3562
    %v3572 = vunpack.c.l.b16 %v3563
    %v3573 = vunpack.c.l.b16 %v3564
    %v3574 = vpack.c.b16 %v3571, %v3570
    %v3575 = vpack.c.b16 %v3573, %v3572
    %v3579 = vsel %vm330, %v3565, 0
    %3581 = vmatprep.subr.bf16.mxu0 0
    %3582 = vmatpush1.bf16.msra.mxu0 %v3574
    %3583 = vmatprep.subr.bf16.mxu0 0
    %3584 = vmatpush1.bf16.msra.mxu0 %v3575
    %3585 = vmatprep.subr.bf16.mxu0 0
    %3586 = vmatpush1.bf16.msra.mxu0 0
    %3587 = vmatprep.subr.bf16.mxu0 0
    %3588 = vmatpush1.bf16.msra.mxu0 0
    %3589 = vmatprep.subr.bf16.mxu0 0
    %3590 = vmatpush1.bf16.msra.mxu0 0
    %3591 = vmatprep.subr.bf16.mxu0 0
    %3592 = vmatpush1.bf16.msra.mxu0 0
    %3593 = vmatprep.subr.bf16.mxu0 0
    %3594 = vmatpush1.bf16.msra.mxu0 0
    %3595 = vmatprep.subr.bf16.mxu0 0
    %3596 = vmatpush1.bf16.msra.mxu0 0
    %3597 = vmatprep.subr.bf16.mxu0 0
    %3598 = vmatpush1.bf16.msra.mxu0 0
    %3599 = vmatprep.subr.bf16.mxu0 0
    %3600 = vmatpush1.bf16.msra.mxu0 0
    %3601 = vmatprep.subr.bf16.mxu0 0
    %3602 = vmatpush1.bf16.msra.mxu0 0
    %3603 = vmatprep.subr.bf16.mxu0 0
    %3604 = vmatpush1.bf16.msra.mxu0 0
    %3605 = vmatprep.subr.bf16.mxu0 0
    %3606 = vmatpush1.bf16.msra.mxu0 0
    %3607 = vmatprep.subr.bf16.mxu0 0
    %3608 = vmatpush1.bf16.msra.mxu0 0
    %3609 = vmatprep.subr.bf16.mxu0 0
    %3610 = vmatpush1.bf16.msra.mxu0 0
    %3611 = vmatprep.subr.bf16.mxu0 0
    %3612 = vmatpush1.bf16.msra.mxu0 0
    %3613 = vmatprep.mubr.bf16.mxu0 0
    %3614 = vmatmul.mubr.bf16.gmra.mrb[0].mxu0 %v3579
    %v3615 = vpop.f32.mrb[0].mxu0
    %v3616 = vadd.f32 0.0, %v3615
    %v3617 = vpop.f32.mrb[0].mxu0
    %v3618 = vpop.f32.mrb[0].mxu0
    %v3619 = vpop.f32.mrb[0].mxu0
    %3620 = vdwg.mxu0
    %v3621 = vadd.f32 %v3471, %v3616
    %v3622 = vxor.u32 %v3621, 2147483648
    %v3623 = vmul.f32 %v3622, 1.442695
    %v3624 = vpow.pop %v3623
    %v3625 = vadd.f32 %v3624, 1.0
    %v3626 = vrcp.pop %v3625
    %v3627 = vmul.f32 1.0, %v3626
    %v3628 = vtanh.pop %v3621
    %3630 = vrot.lane.b32.xlu0 %v3390, 32
    %v3631 = vpop.permute.xlu0 %3630
    %v3633 = vmul.f32 %v3627, %v3631
    %3635 = vrot.lane.b32.xlu0 %v3628, 64
    %v3636 = vpop.permute.xlu0 %3635
    %v3638 = vmul.f32 %v3627, %v3636
    %3640 = vrot.lane.b32.xlu0 %v3638, 32
    %v3641 = vpop.permute.xlu0 %3640
    %v3643 = vadd.f32 %v3633, %v3641
    %v3644 = vtanh.pop %v3643
    %3646 = vrot.lane.b32.xlu0 %v3644, 64
    %v3647 = vpop.permute.xlu0 %3646
    %v3649 = vmul.f32 %v3627, %v3647
    %v3650 = vpack.c.bf16 %v3649, %v3649
    %3652 = vrot.lane.b32.xlu0 %v3650, 32
    %v3653 = vpop.permute.xlu0 %3652
    %v3655 = vsel %vm330, %v3653, 0
    %3657 = vmatprep.subr.bf16.mxu0 0
    %3658 = vmatpush1.bf16.msra.mxu0 %v3574
    %3659 = vmatprep.subr.bf16.mxu0 0
    %3660 = vmatpush1.bf16.msra.mxu0 %v3575
    %3661 = vmatprep.subr.bf16.mxu0 0
    %3662 = vmatpush1.bf16.msra.mxu0 0
    %3663 = vmatprep.subr.bf16.mxu0 0
    %3664 = vmatpush1.bf16.msra.mxu0 0
    %3665 = vmatprep.subr.bf16.mxu0 0
    %3666 = vmatpush1.bf16.msra.mxu0 0
    %3667 = vmatprep.subr.bf16.mxu0 0
    %3668 = vmatpush1.bf16.msra.mxu0 0
    %3669 = vmatprep.subr.bf16.mxu0 0
    %3670 = vmatpush1.bf16.msra.mxu0 0
    %3671 = vmatprep.subr.bf16.mxu0 0
    %3672 = vmatpush1.bf16.msra.mxu0 0
    %3673 = vmatprep.subr.bf16.mxu0 0
    %3674 = vmatpush1.bf16.msra.mxu0 0
    %3675 = vmatprep.subr.bf16.mxu0 0
    %3676 = vmatpush1.bf16.msra.mxu0 0
    %3677 = vmatprep.subr.bf16.mxu0 0
    %3678 = vmatpush1.bf16.msra.mxu0 0
    %3679 = vmatprep.subr.bf16.mxu0 0
    %3680 = vmatpush1.bf16.msra.mxu0 0
    %3681 = vmatprep.subr.bf16.mxu0 0
    %3682 = vmatpush1.bf16.msra.mxu0 0
    %3683 = vmatprep.subr.bf16.mxu0 0
    %3684 = vmatpush1.bf16.msra.mxu0 0
    %3685 = vmatprep.subr.bf16.mxu0 0
    %3686 = vmatpush1.bf16.msra.mxu0 0
    %3687 = vmatprep.subr.bf16.mxu0 0
    %3688 = vmatpush1.bf16.msra.mxu0 0
    %3689 = vmatprep.mubr.bf16.mxu0 0
    %3690 = vmatmul.mubr.bf16.gmra.mrb[0].mxu0 %v3655
    %v3691 = vpop.f32.mrb[0].mxu0
    %v3692 = vadd.f32 0.0, %v3691
    %v3693 = vpop.f32.mrb[0].mxu0
    %v3694 = vpop.f32.mrb[0].mxu0
    %v3695 = vpop.f32.mrb[0].mxu0
    %3696 = vdwg.mxu0
    %v3697 = vadd.f32 %v3474, %v3692
    %v3698 = vxor.u32 %v3697, 2147483648
    %v3699 = vmul.f32 %v3698, 1.442695
    %v3700 = vpow.pop %v3699
    %v3701 = vadd.f32 %v3700, 1.0
    %v3702 = vrcp.pop %v3701
    %v3703 = vmul.f32 1.0, %v3702
    %v3704 = vtanh.pop %v3697
    %v3705 = vmul.f32 %v3703, %v3643
    %3707 = vrot.lane.b32.xlu0 %v3704, 64
    %v3708 = vpop.permute.xlu0 %3707
    %v3710 = vmul.f32 %v3703, %v3708
    %3712 = vrot.lane.b32.xlu0 %v3710, 32
    %v3713 = vpop.permute.xlu0 %3712
    %v3715 = vadd.f32 %v3705, %v3713
    %v3716 = vtanh.pop %v3715
    %3718 = vrot.lane.b32.xlu0 %v3716, 64
    %v3719 = vpop.permute.xlu0 %3718
    %v3721 = vmul.f32 %v3703, %v3719
    %v3722 = vpack.c.bf16 %v3721, %v3721
    %3724 = vrot.lane.b32.xlu0 %v3722, 32
    %v3725 = vpop.permute.xlu0 %3724
    %v3727 = vsel %vm330, %v3725, 0
    %3729 = vmatprep.subr.bf16.mxu0 0
    %3730 = vmatpush1.bf16.msra.mxu0 %v3574
    %3731 = vmatprep.subr.bf16.mxu0 0
    %3732 = vmatpush1.bf16.msra.mxu0 %v3575
    %3733 = vmatprep.subr.bf16.mxu0 0
    %3734 = vmatpush1.bf16.msra.mxu0 0
    %3735 = vmatprep.subr.bf16.mxu0 0
    %3736 = vmatpush1.bf16.msra.mxu0 0
    %3737 = vmatprep.subr.bf16.mxu0 0
    %3738 = vmatpush1.bf16.msra.mxu0 0
    %3739 = vmatprep.subr.bf16.mxu0 0
    %3740 = vmatpush1.bf16.msra.mxu0 0
    %3741 = vmatprep.subr.bf16.mxu0 0
    %3742 = vmatpush1.bf16.msra.mxu0 0
    %3743 = vmatprep.subr.bf16.mxu0 0
    %3744 = vmatpush1.bf16.msra.mxu0 0
    %3745 = vmatprep.subr.bf16.mxu0 0
    %3746 = vmatpush1.bf16.msra.mxu0 0
    %3747 = vmatprep.subr.bf16.mxu0 0
    %3748 = vmatpush1.bf16.msra.mxu0 0
    %3749 = vmatprep.subr.bf16.mxu0 0
    %3750 = vmatpush1.bf16.msra.mxu0 0
    %3751 = vmatprep.subr.bf16.mxu0 0
    %3752 = vmatpush1.bf16.msra.mxu0 0
    %3753 = vmatprep.subr.bf16.mxu0 0
    %3754 = vmatpush1.bf16.msra.mxu0 0
    %3755 = vmatprep.subr.bf16.mxu0 0
    %3756 = vmatpush1.bf16.msra.mxu0 0
    %3757 = vmatprep.subr.bf16.mxu0 0
    %3758 = vmatpush1.bf16.msra.mxu0 0
    %3759 = vmatprep.subr.bf16.mxu0 0
    %3760 = vmatpush1.bf16.msra.mxu0 0
    %3761 = vmatprep.mubr.bf16.mxu0 0
    %3762 = vmatmul.mubr.bf16.gmra.mrb[0].mxu0 %v3727
    %v3763 = vpop.f32.mrb[0].mxu0
    %v3764 = vadd.f32 0.0, %v3763
    %v3765 = vpop.f32.mrb[0].mxu0
    %v3766 = vpop.f32.mrb[0].mxu0
    %v3767 = vpop.f32.mrb[0].mxu0
    %3768 = vdwg.mxu0
    %v3769 = vadd.f32 %v3479, %v3764
    %v3770 = vxor.u32 %v3769, 2147483648
    %v3771 = vmul.f32 %v3770, 1.442695
    %v3772 = vpow.pop %v3771
    %v3773 = vadd.f32 %v3772, 1.0
    %v3774 = vrcp.pop %v3773
    %v3775 = vmul.f32 1.0, %v3774
    %v3776 = vtanh.pop %v3769
    %v3777 = vmul.f32 %v3775, %v3715
    %3779 = vrot.lane.b32.xlu0 %v3776, 64
    %v3780 = vpop.permute.xlu0 %3779
    %v3782 = vmul.f32 %v3775, %v3780
    %3784 = vrot.lane.b32.xlu0 %v3782, 32
    %v3785 = vpop.permute.xlu0 %3784
    %v3787 = vadd.f32 %v3777, %v3785
    %v3788 = vtanh.pop %v3787
    %3790 = vrot.lane.b32.xlu0 %v3788, 64
    %v3791 = vpop.permute.xlu0 %3790
    %v3793 = vmul.f32 %v3775, %v3791
    %v3794 = vpack.c.bf16 %v3793, %v3793
    %3796 = vrot.lane.b32.xlu0 %v3794, 32
    %v3797 = vpop.permute.xlu0 %3796
    %v3799 = vsel %vm330, %v3797, 0
    %3801 = vmatprep.subr.bf16.mxu0 0
    %3802 = vmatpush1.bf16.msra.mxu0 %v3574
    %3803 = vmatprep.subr.bf16.mxu0 0
    %3804 = vmatpush1.bf16.msra.mxu0 %v3575
    %3805 = vmatprep.subr.bf16.mxu0 0
    %3806 = vmatpush1.bf16.msra.mxu0 0
    %3807 = vmatprep.subr.bf16.mxu0 0
    %3808 = vmatpush1.bf16.msra.mxu0 0
    %3809 = vmatprep.subr.bf16.mxu0 0
    %3810 = vmatpush1.bf16.msra.mxu0 0
    %3811 = vmatprep.subr.bf16.mxu0 0
    %3812 = vmatpush1.bf16.msra.mxu0 0
    %3813 = vmatprep.subr.bf16.mxu0 0
    %3814 = vmatpush1.bf16.msra.mxu0 0
    %3815 = vmatprep.subr.bf16.mxu0 0
    %3816 = vmatpush1.bf16.msra.mxu0 0
    %3817 = vmatprep.subr.bf16.mxu0 0
    %3818 = vmatpush1.bf16.msra.mxu0 0
    %3819 = vmatprep.subr.bf16.mxu0 0
    %3820 = vmatpush1.bf16.msra.mxu0 0
    %3821 = vmatprep.subr.bf16.mxu0 0
    %3822 = vmatpush1.bf16.msra.mxu0 0
    %3823 = vmatprep.subr.bf16.mxu0 0
    %3824 = vmatpush1.bf16.msra.mxu0 0
    %3825 = vmatprep.subr.bf16.mxu0 0
    %3826 = vmatpush1.bf16.msra.mxu0 0
    %3827 = vmatprep.subr.bf16.mxu0 0
    %3828 = vmatpush1.bf16.msra.mxu0 0
    %3829 = vmatprep.subr.bf16.mxu0 0
    %3830 = vmatpush1.bf16.msra.mxu0 0
    %3831 = vmatprep.subr.bf16.mxu0 0
    %3832 = vmatpush1.bf16.msra.mxu0 0
    %3833 = vmatprep.mubr.bf16.mxu0 0
    %3834 = vmatmul.mubr.bf16.gmra.mrb[0].mxu0 %v3799
    %v3835 = vpop.f32.mrb[0].mxu0
    %v3836 = vadd.f32 0.0, %v3835
    %v3837 = vpop.f32.mrb[0].mxu0
    %v3838 = vpop.f32.mrb[0].mxu0
    %v3839 = vpop.f32.mrb[0].mxu0
    %3840 = vdwg.mxu0
    %v3841 = vadd.f32 %v3482, %v3836
    %v3842 = vxor.u32 %v3841, 2147483648
    %v3843 = vmul.f32 %v3842, 1.442695
    %v3844 = vpow.pop %v3843
    %v3845 = vadd.f32 %v3844, 1.0
    %v3846 = vrcp.pop %v3845
    %v3847 = vmul.f32 1.0, %v3846
    %v3848 = vtanh.pop %v3841
    %v3849 = vmul.f32 %v3847, %v3787
    %3851 = vrot.lane.b32.xlu0 %v3848, 64
    %v3852 = vpop.permute.xlu0 %3851
    %v3854 = vmul.f32 %v3847, %v3852
    %3856 = vrot.lane.b32.xlu0 %v3854, 32
    %v3857 = vpop.permute.xlu0 %3856
    %v3859 = vadd.f32 %v3849, %v3857
    %v3860 = vtanh.pop %v3859
    %3862 = vrot.lane.b32.xlu0 %v3860, 64
    %v3863 = vpop.permute.xlu0 %3862
    %v3865 = vmul.f32 %v3847, %v3863
    %v3866 = vpack.c.bf16 %v3865, %v3865
    %3868 = vrot.lane.b32.xlu0 %v3866, 32
    %v3869 = vpop.permute.xlu0 %3868
    %v3871 = vsel %vm330, %v3869, 0
    %3873 = vmatprep.subr.bf16.mxu0 0
    %3874 = vmatpush1.bf16.msra.mxu0 %v3574
    %3875 = vmatprep.subr.bf16.mxu0 0
    %3876 = vmatpush1.bf16.msra.mxu0 %v3575
    %3877 = vmatprep.subr.bf16.mxu0 0
    %3878 = vmatpush1.bf16.msra.mxu0 0
    %3879 = vmatprep.subr.bf16.mxu0 0
    %3880 = vmatpush1.bf16.msra.mxu0 0
    %3881 = vmatprep.subr.bf16.mxu0 0
    %3882 = vmatpush1.bf16.msra.mxu0 0
    %3883 = vmatprep.subr.bf16.mxu0 0
    %3884 = vmatpush1.bf16.msra.mxu0 0
    %3885 = vmatprep.subr.bf16.mxu0 0
    %3886 = vmatpush1.bf16.msra.mxu0 0
    %3887 = vmatprep.subr.bf16.mxu0 0
    %3888 = vmatpush1.bf16.msra.mxu0 0
    %3889 = vmatprep.subr.bf16.mxu0 0
    %3890 = vmatpush1.bf16.msra.mxu0 0
    %3891 = vmatprep.subr.bf16.mxu0 0
    %3892 = vmatpush1.bf16.msra.mxu0 0
    %3893 = vmatprep.subr.bf16.mxu0 0
    %3894 = vmatpush1.bf16.msra.mxu0 0
    %3895 = vmatprep.subr.bf16.mxu0 0
    %3896 = vmatpush1.bf16.msra.mxu0 0
    %3897 = vmatprep.subr.bf16.mxu0 0
    %3898 = vmatpush1.bf16.msra.mxu0 0
    %3899 = vmatprep.subr.bf16.mxu0 0
    %3900 = vmatpush1.bf16.msra.mxu0 0
    %3901 = vmatprep.subr.bf16.mxu0 0
    %3902 = vmatpush1.bf16.msra.mxu0 0
    %3903 = vmatprep.subr.bf16.mxu0 0
    %3904 = vmatpush1.bf16.msra.mxu0 0
    %3905 = vmatprep.mubr.bf16.mxu0 0
    %3906 = vmatmul.mubr.bf16.gmra.mrb[0].mxu0 %v3871
    %v3907 = vpop.f32.mrb[0].mxu0
    %v3908 = vadd.f32 0.0, %v3907
    %v3909 = vpop.f32.mrb[0].mxu0
    %v3910 = vpop.f32.mrb[0].mxu0
    %v3911 = vpop.f32.mrb[0].mxu0
    %3912 = vdwg.mxu0
    %v3913 = vadd.f32 %v3487, %v3908
    %v3914 = vxor.u32 %v3913, 2147483648
    %v3915 = vmul.f32 %v3914, 1.442695
    %v3916 = vpow.pop %v3915
    %v3917 = vadd.f32 %v3916, 1.0
    %v3918 = vrcp.pop %v3917
    %v3919 = vmul.f32 1.0, %v3918
    %v3920 = vtanh.pop %v3913
    %v3921 = vmul.f32 %v3919, %v3859
    %3923 = vrot.lane.b32.xlu0 %v3920, 64
    %v3924 = vpop.permute.xlu0 %3923
    %v3926 = vmul.f32 %v3919, %v3924
    %3928 = vrot.lane.b32.xlu0 %v3926, 32
    %v3929 = vpop.permute.xlu0 %3928
    %v3931 = vadd.f32 %v3921, %v3929
    %v3932 = vtanh.pop %v3931
    %3934 = vrot.lane.b32.xlu0 %v3932, 64
    %v3935 = vpop.permute.xlu0 %3934
    %v3937 = vmul.f32 %v3919, %v3935
    %v3938 = vpack.c.bf16 %v3937, %v3937
    %3940 = vrot.lane.b32.xlu0 %v3938, 32
    %v3941 = vpop.permute.xlu0 %3940
    %v3943 = vsel %vm330, %v3941, 0
    %3945 = vmatprep.subr.bf16.mxu0 0
    %3946 = vmatpush1.bf16.msra.mxu0 %v3574
    %3947 = vmatprep.subr.bf16.mxu0 0
    %3948 = vmatpush1.bf16.msra.mxu0 %v3575
    %3949 = vmatprep.subr.bf16.mxu0 0
    %3950 = vmatpush1.bf16.msra.mxu0 0
    %3951 = vmatprep.subr.bf16.mxu0 0
    %3952 = vmatpush1.bf16.msra.mxu0 0
    %3953 = vmatprep.subr.bf16.mxu0 0
    %3954 = vmatpush1.bf16.msra.mxu0 0
    %3955 = vmatprep.subr.bf16.mxu0 0
    %3956 = vmatpush1.bf16.msra.mxu0 0
    %3957 = vmatprep.subr.bf16.mxu0 0
    %3958 = vmatpush1.bf16.msra.mxu0 0
    %3959 = vmatprep.subr.bf16.mxu0 0
    %3960 = vmatpush1.bf16.msra.mxu0 0
    %3961 = vmatprep.subr.bf16.mxu0 0
    %3962 = vmatpush1.bf16.msra.mxu0 0
    %3963 = vmatprep.subr.bf16.mxu0 0
    %3964 = vmatpush1.bf16.msra.mxu0 0
    %3965 = vmatprep.subr.bf16.mxu0 0
    %3966 = vmatpush1.bf16.msra.mxu0 0
    %3967 = vmatprep.subr.bf16.mxu0 0
    %3968 = vmatpush1.bf16.msra.mxu0 0
    %3969 = vmatprep.subr.bf16.mxu0 0
    %3970 = vmatpush1.bf16.msra.mxu0 0
    %3971 = vmatprep.subr.bf16.mxu0 0
    %3972 = vmatpush1.bf16.msra.mxu0 0
    %3973 = vmatprep.subr.bf16.mxu0 0
    %3974 = vmatpush1.bf16.msra.mxu0 0
    %3975 = vmatprep.subr.bf16.mxu0 0
    %3976 = vmatpush1.bf16.msra.mxu0 0
    %3977 = vmatprep.mubr.bf16.mxu0 0
    %3978 = vmatmul.mubr.bf16.gmra.mrb[0].mxu0 %v3943
    %v3979 = vpop.f32.mrb[0].mxu0
    %v3980 = vadd.f32 0.0, %v3979
    %v3981 = vpop.f32.mrb[0].mxu0
    %v3982 = vpop.f32.mrb[0].mxu0
    %v3983 = vpop.f32.mrb[0].mxu0
    %3984 = vdwg.mxu0
    %v3985 = vadd.f32 %v3490, %v3980
    %v3986 = vxor.u32 %v3985, 2147483648
    %v3987 = vmul.f32 %v3986, 1.442695
    %v3988 = vpow.pop %v3987
    %v3989 = vadd.f32 %v3988, 1.0
    %v3990 = vrcp.pop %v3989
    %v3991 = vmul.f32 1.0, %v3990
    %v3992 = vtanh.pop %v3985
    %v3993 = vmul.f32 %v3991, %v3931
    %3995 = vrot.lane.b32.xlu0 %v3992, 64
    %v3996 = vpop.permute.xlu0 %3995
    %v3998 = vmul.f32 %v3991, %v3996
    %4000 = vrot.lane.b32.xlu0 %v3998, 32
    %v4001 = vpop.permute.xlu0 %4000
    %v4003 = vadd.f32 %v3993, %v4001
    %v4004 = vtanh.pop %v4003
    %4006 = vrot.lane.b32.xlu0 %v4004, 64
    %v4007 = vpop.permute.xlu0 %4006
    %v4009 = vmul.f32 %v3991, %v4007
    %v4010 = vld [vmem:[%s63] sm:$0xf]
    %v4011 = vld [vmem:[%s63 + $0x4] sm:$0xf]
    %v4012 = vld [vmem:[%s63 + $0x8] sm:$0xf]
    %v4013 = vld [vmem:[%s63 + $0xc] sm:$0xf]
    %v4018 = vunpack.c.l.b16 %v4010
    %v4019 = vunpack.c.l.b16 %v4011
    %v4020 = vunpack.c.l.b16 %v4012
    %v4021 = vunpack.c.l.b16 %v4013
    %v4022 = vpack.c.b16 %v4019, %v4018
    %v4023 = vpack.c.b16 %v4021, %v4020
    %4026 = vmatprep.subr.bf16.mxu0 0
    %4027 = vmatpush1.bf16.msra.mxu0 %v4022
    %4028 = vmatprep.subr.bf16.mxu0 0
    %4029 = vmatpush1.bf16.msra.mxu0 %v4023
    %4030 = vmatprep.subr.bf16.mxu0 0
    %4031 = vmatpush1.bf16.msra.mxu0 0
    %4032 = vmatprep.subr.bf16.mxu0 0
    %4033 = vmatpush1.bf16.msra.mxu0 0
    %4034 = vmatprep.subr.bf16.mxu0 0
    %4035 = vmatpush1.bf16.msra.mxu0 0
    %4036 = vmatprep.subr.bf16.mxu0 0
    %4037 = vmatpush1.bf16.msra.mxu0 0
    %4038 = vmatprep.subr.bf16.mxu0 0
    %4039 = vmatpush1.bf16.msra.mxu0 0
    %4040 = vmatprep.subr.bf16.mxu0 0
    %4041 = vmatpush1.bf16.msra.mxu0 0
    %4042 = vmatprep.subr.bf16.mxu0 0
    %4043 = vmatpush1.bf16.msra.mxu0 0
    %4044 = vmatprep.subr.bf16.mxu0 0
    %4045 = vmatpush1.bf16.msra.mxu0 0
    %4046 = vmatprep.subr.bf16.mxu0 0
    %4047 = vmatpush1.bf16.msra.mxu0 0
    %4048 = vmatprep.subr.bf16.mxu0 0
    %4049 = vmatpush1.bf16.msra.mxu0 0
    %4050 = vmatprep.subr.bf16.mxu0 0
    %4051 = vmatpush1.bf16.msra.mxu0 0
    %4052 = vmatprep.subr.bf16.mxu0 0
    %4053 = vmatpush1.bf16.msra.mxu0 0
    %4054 = vmatprep.subr.bf16.mxu0 0
    %4055 = vmatpush1.bf16.msra.mxu0 0
    %4056 = vmatprep.subr.bf16.mxu0 0
    %4057 = vmatpush1.bf16.msra.mxu0 0
    %4058 = vmatprep.mubr.bf16.mxu0 0
    %4059 = vmatmul.mubr.bf16.gmra.mrb[0].mxu0 %v3579
    %v4060 = vpop.f32.mrb[0].mxu0
    %v4061 = vadd.f32 0.0, %v4060
    %v4062 = vpop.f32.mrb[0].mxu0
    %v4063 = vpop.f32.mrb[0].mxu0
    %v4064 = vpop.f32.mrb[0].mxu0
    %4065 = vdwg.mxu0
    %v4066 = vadd.f32 %v3558, %v4061
    %v4067 = vxor.u32 %v4066, 2147483648
    %v4068 = vmul.f32 %v4067, 1.442695
    %v4069 = vpow.pop %v4068
    %v4070 = vadd.f32 %v4069, 1.0
    %v4071 = vrcp.pop %v4070
    %v4072 = vmul.f32 1.0, %v4071
    %v4073 = vtanh.pop %v4066
    %v4074 = vmul.f32 %v4072, %v3631
    %4076 = vrot.lane.b32.xlu0 %v4073, 64
    %v4077 = vpop.permute.xlu0 %4076
    %v4079 = vmul.f32 %v4072, %v4077
    %4081 = vrot.lane.b32.xlu0 %v4079, 32
    %v4082 = vpop.permute.xlu0 %4081
    %v4084 = vadd.f32 %v4074, %v4082
    %v4085 = vtanh.pop %v4084
    %4087 = vrot.lane.b32.xlu0 %v4085, 64
    %v4088 = vpop.permute.xlu0 %4087
    %v4090 = vmul.f32 %v4072, %v4088
    %v4091 = vpack.c.bf16 %v4090, %v4090
    %4093 = vrot.lane.b32.xlu0 %v4091, 32
    %v4094 = vpop.permute.xlu0 %4093
    %v4096 = vsel %vm330, %v4094, 0
    %4098 = vmatprep.subr.bf16.mxu0 0
    %4099 = vmatpush1.bf16.msra.mxu0 %v4022
    %4100 = vmatprep.subr.bf16.mxu0 0
    %4101 = vmatpush1.bf16.msra.mxu0 %v4023
    %4102 = vmatprep.subr.bf16.mxu0 0
    %4103 = vmatpush1.bf16.msra.mxu0 0
    %4104 = vmatprep.subr.bf16.mxu0 0
    %4105 = vmatpush1.bf16.msra.mxu0 0
    %4106 = vmatprep.subr.bf16.mxu0 0
    %4107 = vmatpush1.bf16.msra.mxu0 0
    %4108 = vmatprep.subr.bf16.mxu0 0
    %4109 = vmatpush1.bf16.msra.mxu0 0
    %4110 = vmatprep.subr.bf16.mxu0 0
    %4111 = vmatpush1.bf16.msra.mxu0 0
    %4112 = vmatprep.subr.bf16.mxu0 0
    %4113 = vmatpush1.bf16.msra.mxu0 0
    %4114 = vmatprep.subr.bf16.mxu0 0
    %4115 = vmatpush1.bf16.msra.mxu0 0
    %4116 = vmatprep.subr.bf16.mxu0 0
    %4117 = vmatpush1.bf16.msra.mxu0 0
    %4118 = vmatprep.subr.bf16.mxu0 0
    %4119 = vmatpush1.bf16.msra.mxu0 0
    %4120 = vmatprep.subr.bf16.mxu0 0
    %4121 = vmatpush1.bf16.msra.mxu0 0
    %4122 = vmatprep.subr.bf16.mxu0 0
    %4123 = vmatpush1.bf16.msra.mxu0 0
    %4124 = vmatprep.subr.bf16.mxu0 0
    %4125 = vmatpush1.bf16.msra.mxu0 0
    %4126 = vmatprep.subr.bf16.mxu0 0
    %4127 = vmatpush1.bf16.msra.mxu0 0
    %4128 = vmatprep.subr.bf16.mxu0 0
    %4129 = vmatpush1.bf16.msra.mxu0 0
    %4130 = vmatprep.mubr.bf16.mxu0 0
    %4131 = vmatmul.mubr.bf16.gmra.mrb[0].mxu0 %v4096
    %v4132 = vpop.f32.mrb[0].mxu0
    %v4133 = vadd.f32 0.0, %v4132
    %v4134 = vpop.f32.mrb[0].mxu0
    %v4135 = vpop.f32.mrb[0].mxu0
    %v4136 = vpop.f32.mrb[0].mxu0
    %4137 = vdwg.mxu0
    %v4138 = vadd.f32 %v3555, %v4133
    %v4139 = vxor.u32 %v4138, 2147483648
    %v4140 = vmul.f32 %v4139, 1.442695
    %v4141 = vpow.pop %v4140
    %v4142 = vadd.f32 %v4141, 1.0
    %v4143 = vrcp.pop %v4142
    %v4144 = vmul.f32 1.0, %v4143
    %v4145 = vtanh.pop %v4138
    %v4146 = vmul.f32 %v4144, %v4084
    %4148 = vrot.lane.b32.xlu0 %v4145, 64
    %v4149 = vpop.permute.xlu0 %4148
    %v4151 = vmul.f32 %v4144, %v4149
    %4153 = vrot.lane.b32.xlu0 %v4151, 32
    %v4154 = vpop.permute.xlu0 %4153
    %v4156 = vadd.f32 %v4146, %v4154
    %v4157 = vtanh.pop %v4156
    %4159 = vrot.lane.b32.xlu0 %v4157, 64
    %v4160 = vpop.permute.xlu0 %4159
    %v4162 = vmul.f32 %v4144, %v4160
    %v4163 = vpack.c.bf16 %v4162, %v4162
    %4165 = vrot.lane.b32.xlu0 %v4163, 32
    %v4166 = vpop.permute.xlu0 %4165
    %v4168 = vsel %vm330, %v4166, 0
    %4170 = vmatprep.subr.bf16.mxu0 0
    %4171 = vmatpush1.bf16.msra.mxu0 %v4022
    %4172 = vmatprep.subr.bf16.mxu0 0
    %4173 = vmatpush1.bf16.msra.mxu0 %v4023
    %4174 = vmatprep.subr.bf16.mxu0 0
    %4175 = vmatpush1.bf16.msra.mxu0 0
    %4176 = vmatprep.subr.bf16.mxu0 0
    %4177 = vmatpush1.bf16.msra.mxu0 0
    %4178 = vmatprep.subr.bf16.mxu0 0
    %4179 = vmatpush1.bf16.msra.mxu0 0
    %4180 = vmatprep.subr.bf16.mxu0 0
    %4181 = vmatpush1.bf16.msra.mxu0 0
    %4182 = vmatprep.subr.bf16.mxu0 0
    %4183 = vmatpush1.bf16.msra.mxu0 0
    %4184 = vmatprep.subr.bf16.mxu0 0
    %4185 = vmatpush1.bf16.msra.mxu0 0
    %4186 = vmatprep.subr.bf16.mxu0 0
    %4187 = vmatpush1.bf16.msra.mxu0 0
    %4188 = vmatprep.subr.bf16.mxu0 0
    %4189 = vmatpush1.bf16.msra.mxu0 0
    %4190 = vmatprep.subr.bf16.mxu0 0
    %4191 = vmatpush1.bf16.msra.mxu0 0
    %4192 = vmatprep.subr.bf16.mxu0 0
    %4193 = vmatpush1.bf16.msra.mxu0 0
    %4194 = vmatprep.subr.bf16.mxu0 0
    %4195 = vmatpush1.bf16.msra.mxu0 0
    %4196 = vmatprep.subr.bf16.mxu0 0
    %4197 = vmatpush1.bf16.msra.mxu0 0
    %4198 = vmatprep.subr.bf16.mxu0 0
    %4199 = vmatpush1.bf16.msra.mxu0 0
    %4200 = vmatprep.subr.bf16.mxu0 0
    %4201 = vmatpush1.bf16.msra.mxu0 0
    %4202 = vmatprep.mubr.bf16.mxu0 0
    %4203 = vmatmul.mubr.bf16.gmra.mrb[0].mxu0 %v4168
    %v4204 = vpop.f32.mrb[0].mxu0
    %v4205 = vadd.f32 0.0, %v4204
    %v4206 = vpop.f32.mrb[0].mxu0
    %v4207 = vpop.f32.mrb[0].mxu0
    %v4208 = vpop.f32.mrb[0].mxu0
    %4209 = vdwg.mxu0
    %v4210 = vadd.f32 %v3550, %v4205
    %v4211 = vxor.u32 %v4210, 2147483648
    %v4212 = vmul.f32 %v4211, 1.442695
    %v4213 = vpow.pop %v4212
    %v4214 = vadd.f32 %v4213, 1.0
    %v4215 = vrcp.pop %v4214
    %v4216 = vmul.f32 1.0, %v4215
    %v4217 = vtanh.pop %v4210
    %v4218 = vmul.f32 %v4216, %v4156
    %4220 = vrot.lane.b32.xlu0 %v4217, 64
    %v4221 = vpop.permute.xlu0 %4220
    %v4223 = vmul.f32 %v4216, %v4221
    %4225 = vrot.lane.b32.xlu0 %v4223, 32
    %v4226 = vpop.permute.xlu0 %4225
    %v4228 = vadd.f32 %v4218, %v4226
    %v4229 = vtanh.pop %v4228
    %4231 = vrot.lane.b32.xlu0 %v4229, 64
    %v4232 = vpop.permute.xlu0 %4231
    %v4234 = vmul.f32 %v4216, %v4232
    %v4235 = vpack.c.bf16 %v4234, %v4234
    %4237 = vrot.lane.b32.xlu0 %v4235, 32
    %v4238 = vpop.permute.xlu0 %4237
    %v4240 = vsel %vm330, %v4238, 0
    %4242 = vmatprep.subr.bf16.mxu0 0
    %4243 = vmatpush1.bf16.msra.mxu0 %v4022
    %4244 = vmatprep.subr.bf16.mxu0 0
    %4245 = vmatpush1.bf16.msra.mxu0 %v4023
    %4246 = vmatprep.subr.bf16.mxu0 0
    %4247 = vmatpush1.bf16.msra.mxu0 0
    %4248 = vmatprep.subr.bf16.mxu0 0
    %4249 = vmatpush1.bf16.msra.mxu0 0
    %4250 = vmatprep.subr.bf16.mxu0 0
    %4251 = vmatpush1.bf16.msra.mxu0 0
    %4252 = vmatprep.subr.bf16.mxu0 0
    %4253 = vmatpush1.bf16.msra.mxu0 0
    %4254 = vmatprep.subr.bf16.mxu0 0
    %4255 = vmatpush1.bf16.msra.mxu0 0
    %4256 = vmatprep.subr.bf16.mxu0 0
    %4257 = vmatpush1.bf16.msra.mxu0 0
    %4258 = vmatprep.subr.bf16.mxu0 0
    %4259 = vmatpush1.bf16.msra.mxu0 0
    %4260 = vmatprep.subr.bf16.mxu0 0
    %4261 = vmatpush1.bf16.msra.mxu0 0
    %4262 = vmatprep.subr.bf16.mxu0 0
    %4263 = vmatpush1.bf16.msra.mxu0 0
    %4264 = vmatprep.subr.bf16.mxu0 0
    %4265 = vmatpush1.bf16.msra.mxu0 0
    %4266 = vmatprep.subr.bf16.mxu0 0
    %4267 = vmatpush1.bf16.msra.mxu0 0
    %4268 = vmatprep.subr.bf16.mxu0 0
    %4269 = vmatpush1.bf16.msra.mxu0 0
    %4270 = vmatprep.subr.bf16.mxu0 0
    %4271 = vmatpush1.bf16.msra.mxu0 0
    %4272 = vmatprep.subr.bf16.mxu0 0
    %4273 = vmatpush1.bf16.msra.mxu0 0
    %4274 = vmatprep.mubr.bf16.mxu0 0
    %4275 = vmatmul.mubr.bf16.gmra.mrb[0].mxu0 %v4240
    %v4276 = vpop.f32.mrb[0].mxu0
    %v4277 = vadd.f32 0.0, %v4276
    %v4278 = vpop.f32.mrb[0].mxu0
    %v4279 = vpop.f32.mrb[0].mxu0
    %v4280 = vpop.f32.mrb[0].mxu0
    %4281 = vdwg.mxu0
    %v4282 = vadd.f32 %v3547, %v4277
    %v4283 = vxor.u32 %v4282, 2147483648
    %v4284 = vmul.f32 %v4283, 1.442695
    %v4285 = vpow.pop %v4284
    %v4286 = vadd.f32 %v4285, 1.0
    %v4287 = vrcp.pop %v4286
    %v4288 = vmul.f32 1.0, %v4287
    %v4289 = vtanh.pop %v4282
    %v4290 = vmul.f32 %v4288, %v4228
    %4292 = vrot.lane.b32.xlu0 %v4289, 64
    %v4293 = vpop.permute.xlu0 %4292
    %v4295 = vmul.f32 %v4288, %v4293
    %4297 = vrot.lane.b32.xlu0 %v4295, 32
    %v4298 = vpop.permute.xlu0 %4297
    %v4300 = vadd.f32 %v4290, %v4298
    %v4301 = vtanh.pop %v4300
    %4303 = vrot.lane.b32.xlu0 %v4301, 64
    %v4304 = vpop.permute.xlu0 %4303
    %v4306 = vmul.f32 %v4288, %v4304
    %v4307 = vpack.c.bf16 %v4306, %v4306
    %4309 = vrot.lane.b32.xlu0 %v4307, 32
    %v4310 = vpop.permute.xlu0 %4309
    %v4312 = vsel %vm330, %v4310, 0
    %4314 = vmatprep.subr.bf16.mxu0 0
    %4315 = vmatpush1.bf16.msra.mxu0 %v4022
    %4316 = vmatprep.subr.bf16.mxu0 0
    %4317 = vmatpush1.bf16.msra.mxu0 %v4023
    %4318 = vmatprep.subr.bf16.mxu0 0
    %4319 = vmatpush1.bf16.msra.mxu0 0
    %4320 = vmatprep.subr.bf16.mxu0 0
    %4321 = vmatpush1.bf16.msra.mxu0 0
    %4322 = vmatprep.subr.bf16.mxu0 0
    %4323 = vmatpush1.bf16.msra.mxu0 0
    %4324 = vmatprep.subr.bf16.mxu0 0
    %4325 = vmatpush1.bf16.msra.mxu0 0
    %4326 = vmatprep.subr.bf16.mxu0 0
    %4327 = vmatpush1.bf16.msra.mxu0 0
    %4328 = vmatprep.subr.bf16.mxu0 0
    %4329 = vmatpush1.bf16.msra.mxu0 0
    %4330 = vmatprep.subr.bf16.mxu0 0
    %4331 = vmatpush1.bf16.msra.mxu0 0
    %4332 = vmatprep.subr.bf16.mxu0 0
    %4333 = vmatpush1.bf16.msra.mxu0 0
    %4334 = vmatprep.subr.bf16.mxu0 0
    %4335 = vmatpush1.bf16.msra.mxu0 0
    %4336 = vmatprep.subr.bf16.mxu0 0
    %4337 = vmatpush1.bf16.msra.mxu0 0
    %4338 = vmatprep.subr.bf16.mxu0 0
    %4339 = vmatpush1.bf16.msra.mxu0 0
    %4340 = vmatprep.subr.bf16.mxu0 0
    %4341 = vmatpush1.bf16.msra.mxu0 0
    %4342 = vmatprep.subr.bf16.mxu0 0
    %4343 = vmatpush1.bf16.msra.mxu0 0
    %4344 = vmatprep.subr.bf16.mxu0 0
    %4345 = vmatpush1.bf16.msra.mxu0 0
    %4346 = vmatprep.mubr.bf16.mxu0 0
    %4347 = vmatmul.mubr.bf16.gmra.mrb[0].mxu0 %v4312
    %v4348 = vpop.f32.mrb[0].mxu0
    %v4349 = vadd.f32 0.0, %v4348
    %v4350 = vpop.f32.mrb[0].mxu0
    %v4351 = vpop.f32.mrb[0].mxu0
    %v4352 = vpop.f32.mrb[0].mxu0
    %4353 = vdwg.mxu0
    %v4354 = vadd.f32 %v3542, %v4349
    %v4355 = vxor.u32 %v4354, 2147483648
    %v4356 = vmul.f32 %v4355, 1.442695
    %v4357 = vpow.pop %v4356
    %v4358 = vadd.f32 %v4357, 1.0
    %v4359 = vrcp.pop %v4358
    %v4360 = vmul.f32 1.0, %v4359
    %v4361 = vtanh.pop %v4354
    %v4362 = vmul.f32 %v4360, %v4300
    %4364 = vrot.lane.b32.xlu0 %v4361, 64
    %v4365 = vpop.permute.xlu0 %4364
    %v4367 = vmul.f32 %v4360, %v4365
    %4369 = vrot.lane.b32.xlu0 %v4367, 32
    %v4370 = vpop.permute.xlu0 %4369
    %v4372 = vadd.f32 %v4362, %v4370
    %v4373 = vtanh.pop %v4372
    %4375 = vrot.lane.b32.xlu0 %v4373, 64
    %v4376 = vpop.permute.xlu0 %4375
    %v4378 = vmul.f32 %v4360, %v4376
    %v4379 = vpack.c.bf16 %v4378, %v4378
    %4381 = vrot.lane.b32.xlu0 %v4379, 32
    %v4382 = vpop.permute.xlu0 %4381
    %v4384 = vsel %vm330, %v4382, 0
    %4386 = vmatprep.subr.bf16.mxu0 0
    %4387 = vmatpush1.bf16.msra.mxu0 %v4022
    %4388 = vmatprep.subr.bf16.mxu0 0
    %4389 = vmatpush1.bf16.msra.mxu0 %v4023
    %4390 = vmatprep.subr.bf16.mxu0 0
    %4391 = vmatpush1.bf16.msra.mxu0 0
    %4392 = vmatprep.subr.bf16.mxu0 0
    %4393 = vmatpush1.bf16.msra.mxu0 0
    %4394 = vmatprep.subr.bf16.mxu0 0
    %4395 = vmatpush1.bf16.msra.mxu0 0
    %4396 = vmatprep.subr.bf16.mxu0 0
    %4397 = vmatpush1.bf16.msra.mxu0 0
    %4398 = vmatprep.subr.bf16.mxu0 0
    %4399 = vmatpush1.bf16.msra.mxu0 0
    %4400 = vmatprep.subr.bf16.mxu0 0
    %4401 = vmatpush1.bf16.msra.mxu0 0
    %4402 = vmatprep.subr.bf16.mxu0 0
    %4403 = vmatpush1.bf16.msra.mxu0 0
    %4404 = vmatprep.subr.bf16.mxu0 0
    %4405 = vmatpush1.bf16.msra.mxu0 0
    %4406 = vmatprep.subr.bf16.mxu0 0
    %4407 = vmatpush1.bf16.msra.mxu0 0
    %4408 = vmatprep.subr.bf16.mxu0 0
    %4409 = vmatpush1.bf16.msra.mxu0 0
    %4410 = vmatprep.subr.bf16.mxu0 0
    %4411 = vmatpush1.bf16.msra.mxu0 0
    %4412 = vmatprep.subr.bf16.mxu0 0
    %4413 = vmatpush1.bf16.msra.mxu0 0
    %4414 = vmatprep.subr.bf16.mxu0 0
    %4415 = vmatpush1.bf16.msra.mxu0 0
    %4416 = vmatprep.subr.bf16.mxu0 0
    %4417 = vmatpush1.bf16.msra.mxu0 0
    %4418 = vmatprep.mubr.bf16.mxu0 0
    %4419 = vmatmul.mubr.bf16.gmra.mrb[0].mxu0 %v4384
    %v4420 = vpop.f32.mrb[0].mxu0
    %v4421 = vadd.f32 0.0, %v4420
    %v4422 = vpop.f32.mrb[0].mxu0
    %v4423 = vpop.f32.mrb[0].mxu0
    %v4424 = vpop.f32.mrb[0].mxu0
    %4425 = vdwg.mxu0
    %v4426 = vadd.f32 %v3539, %v4421
    %v4427 = vxor.u32 %v4426, 2147483648
    %v4428 = vmul.f32 %v4427, 1.442695
    %v4429 = vpow.pop %v4428
    %v4430 = vadd.f32 %v4429, 1.0
    %v4431 = vrcp.pop %v4430
    %v4432 = vmul.f32 1.0, %v4431
    %v4433 = vtanh.pop %v4426
    %v4434 = vmul.f32 %v4432, %v4372
    %4436 = vrot.lane.b32.xlu0 %v4433, 64
    %v4437 = vpop.permute.xlu0 %4436
    %v4439 = vmul.f32 %v4432, %v4437
    %4441 = vrot.lane.b32.xlu0 %v4439, 32
    %v4442 = vpop.permute.xlu0 %4441
    %v4444 = vadd.f32 %v4434, %v4442
    %v4445 = vtanh.pop %v4444
    %4447 = vrot.lane.b32.xlu0 %v4445, 64
    %v4448 = vpop.permute.xlu0 %4447
    %v4450 = vmul.f32 %v4432, %v4448
    %4452 = vrot.lane.b32.xlu0 %v4009, 32
    %v4453 = vpop.permute.xlu0 %4452
    %4456 = vrot.lane.b32.xlu0 %v4450, 64
    %v4457 = vpop.permute.xlu0 %4456
    %4460 = vrot.lane.b32.xlu0 %v4003, 32
    %v4461 = vpop.permute.xlu0 %4460
    %4464 = vrot.lane.b32.xlu0 %v4444, 64
    %v4465 = vpop.permute.xlu0 %4464
    %v4467 = vsel %vm330, %v4453, %v4457
    %v4468 = vsel %vm2967, %v4467, %v4461
    %vm4469 = vcmask 785408
    %v4470 = vsel %vm4469, %v4468, %v4465
    %4472 = vrot.lane.b32.xlu0 %v902, 32
    %v4473 = vpop.permute.xlu0 %4472
    %4476 = vrot.lane.b32.xlu0 %v2496, 64
    %v4477 = vpop.permute.xlu0 %4476
    %4480 = vrot.lane.b32.xlu0 %v3288, 64
    %v4481 = vpop.permute.xlu0 %4480
    %4484 = vrot.lane.b32.xlu0 %v4470, 96
    %v4485 = vpop.permute.xlu0 %4484
    %v4487 = vsel %vm330, %v4473, %v4477
    %v4488 = vsel %vm2967, %v4487, %v4481
    %v4489 = vsel %vm4469, %v4488, %v4485
    %v4490 = vpack.c.bf16 %v4489, %v4489
    %v4491 = vpack.c.bf16 %v4485, %v4485
    %v4492 = vld [vmem:[%s67] sm:$0xf]
    %v4493 = vld [vmem:[%s67 + $0x4] sm:$0xf]
    %v4494 = vld [vmem:[%s67 + $0x8] sm:$0xf]
    %v4495 = vld [vmem:[%s67 + $0xc] sm:$0xf]
    %v4496 = vld [vmem:[%s67 + $0x10] sm:$0xf]
    %v4497 = vld [vmem:[%s67 + $0x14] sm:$0xf]
    %v4498 = vld [vmem:[%s67 + $0x18] sm:$0xf]
    %v4499 = vld [vmem:[%s67 + $0x1c] sm:$0xf]
    %v4500 = vld [vmem:[%s67 + $0x20] sm:$0xf]
    %v4501 = vld [vmem:[%s67 + $0x24] sm:$0xf]
    %v4502 = vld [vmem:[%s67 + $0x28] sm:$0xf]
    %v4503 = vld [vmem:[%s67 + $0x2c] sm:$0xf]
    %v4504 = vld [vmem:[%s67 + $0x30] sm:$0xf]
    %v4505 = vld [vmem:[%s67 + $0x34] sm:$0xf]
    %v4506 = vld [vmem:[%s67 + $0x38] sm:$0xf]
    %v4507 = vld [vmem:[%s67 + $0x3c] sm:$0xf]
    %v4508 = vld [vmem:[%s67 + $0x40] sm:$0xf]
    %v4509 = vld [vmem:[%s67 + $0x44] sm:$0xf]
    %v4510 = vld [vmem:[%s67 + $0x48] sm:$0xf]
    %v4511 = vld [vmem:[%s67 + $0x4c] sm:$0xf]
    %v4512 = vld [vmem:[%s67 + $0x50] sm:$0xf]
    %v4513 = vld [vmem:[%s67 + $0x54] sm:$0xf]
    %v4514 = vld [vmem:[%s67 + $0x58] sm:$0xf]
    %v4515 = vld [vmem:[%s67 + $0x5c] sm:$0xf]
    %v4516 = vld [vmem:[%s67 + $0x60] sm:$0xf]
    %v4517 = vld [vmem:[%s67 + $0x64] sm:$0xf]
    %v4518 = vld [vmem:[%s67 + $0x68] sm:$0xf]
    %v4519 = vld [vmem:[%s67 + $0x6c] sm:$0xf]
    %v4520 = vld [vmem:[%s69] sm:$0x1]
    %v4522 = vlaneseq
    %v4523 = vshrl.u32 %v4522, 7
    %v4524 = vsub.s32 0, %v4523
    %v4525 = vrot.slane %v4520, %v4524
    %v4555 = vunpack.c.l.b16 %v4492
    %v4556 = vunpack.c.l.b16 %v4493
    %v4557 = vunpack.c.l.b16 %v4494
    %v4558 = vunpack.c.l.b16 %v4495
    %v4559 = vunpack.c.l.b16 %v4496
    %v4560 = vunpack.c.l.b16 %v4497
    %v4561 = vunpack.c.l.b16 %v4498
    %v4562 = vunpack.c.l.b16 %v4499
    %v4563 = vunpack.c.l.b16 %v4500
    %v4564 = vunpack.c.l.b16 %v4501
    %v4565 = vunpack.c.l.b16 %v4502
    %v4566 = vunpack.c.l.b16 %v4503
    %v4567 = vunpack.c.l.b16 %v4504
    %v4568 = vunpack.c.l.b16 %v4505
    %v4569 = vunpack.c.l.b16 %v4506
    %v4570 = vunpack.c.l.b16 %v4507
    %v4571 = vunpack.c.l.b16 %v4508
    %v4572 = vunpack.c.l.b16 %v4509
    %v4573 = vunpack.c.l.b16 %v4510
    %v4574 = vunpack.c.l.b16 %v4511
    %v4575 = vunpack.c.l.b16 %v4512
    %v4576 = vunpack.c.l.b16 %v4513
    %v4577 = vunpack.c.l.b16 %v4514
    %v4578 = vunpack.c.l.b16 %v4515
    %v4579 = vunpack.c.l.b16 %v4516
    %v4580 = vunpack.c.l.b16 %v4517
    %v4581 = vunpack.c.l.b16 %v4518
    %v4582 = vunpack.c.l.b16 %v4519
    %v4583 = vpack.c.b16 %v4556, %v4555
    %v4584 = vpack.c.b16 %v4558, %v4557
    %v4585 = vpack.c.b16 %v4560, %v4559
    %v4586 = vpack.c.b16 %v4562, %v4561
    %v4587 = vpack.c.b16 %v4564, %v4563
    %v4588 = vpack.c.b16 %v4566, %v4565
    %v4589 = vpack.c.b16 %v4568, %v4567
    %v4590 = vpack.c.b16 %v4570, %v4569
    %v4591 = vpack.c.b16 %v4572, %v4571
    %v4592 = vpack.c.b16 %v4574, %v4573
    %v4593 = vpack.c.b16 %v4576, %v4575
    %v4594 = vpack.c.b16 %v4578, %v4577
    %v4595 = vpack.c.b16 %v4580, %v4579
    %v4596 = vpack.c.b16 %v4582, %v4581
    %v4612 = vsel %vm4469, %v4491, 0
    %4614 = vmatprep.subr.bf16.mxu0 0
    %4615 = vmatpush1.bf16.msra.mxu0 %v4583
    %4616 = vmatprep.subr.bf16.mxu0 0
    %4617 = vmatpush1.bf16.msra.mxu0 %v4584
    %4618 = vmatprep.subr.bf16.mxu0 0
    %4619 = vmatpush1.bf16.msra.mxu0 %v4585
    %4620 = vmatprep.subr.bf16.mxu0 0
    %4621 = vmatpush1.bf16.msra.mxu0 %v4586
    %4622 = vmatprep.subr.bf16.mxu0 0
    %4623 = vmatpush1.bf16.msra.mxu0 %v4587
    %4624 = vmatprep.subr.bf16.mxu0 0
    %4625 = vmatpush1.bf16.msra.mxu0 %v4588
    %4626 = vmatprep.subr.bf16.mxu0 0
    %4627 = vmatpush1.bf16.msra.mxu0 %v4589
    %4628 = vmatprep.subr.bf16.mxu0 0
    %4629 = vmatpush1.bf16.msra.mxu0 %v4590
    %4630 = vmatprep.subr.bf16.mxu0 0
    %4631 = vmatpush1.bf16.msra.mxu0 %v4591
    %4632 = vmatprep.subr.bf16.mxu0 0
    %4633 = vmatpush1.bf16.msra.mxu0 %v4592
    %4634 = vmatprep.subr.bf16.mxu0 0
    %4635 = vmatpush1.bf16.msra.mxu0 %v4593
    %4636 = vmatprep.subr.bf16.mxu0 0
    %4637 = vmatpush1.bf16.msra.mxu0 %v4594
    %4638 = vmatprep.subr.bf16.mxu0 0
    %4639 = vmatpush1.bf16.msra.mxu0 %v4595
    %4640 = vmatprep.subr.bf16.mxu0 0
    %4641 = vmatpush1.bf16.msra.mxu0 %v4596
    %4642 = vmatprep.subr.bf16.mxu0 0
    %4643 = vmatpush1.bf16.msra.mxu0 0
    %4644 = vmatprep.subr.bf16.mxu0 0
    %4645 = vmatpush1.bf16.msra.mxu0 0
    %4646 = vmatprep.mubr.bf16.mxu0 %v4612
    %4647 = vmatmul.mubr.bf16.gmra.mrb[0].mxu0 %v4490
    %v4648 = vpop.f32.mrb[0].mxu0
    %v4649 = vadd.f32 %v4525, %v4648
    %v4650 = vpop.f32.mrb[0].mxu0
    %v4651 = vpop.f32.mrb[0].mxu0
    %v4652 = vpop.f32.mrb[0].mxu0
    %4653 = vdwg.mxu0
    %v4654 = vmax.f32 %v4649, 0.0
    %v4655 = vpack.c.bf16 %v4654, %v4654
    %v4656 = vld [vmem:[%s71] sm:$0xf]
    %v4657 = vld [vmem:[%s71 + $0x4] sm:$0xf]
    %v4658 = vld [vmem:[%s71 + $0x8] sm:$0xf]
    %v4659 = vld [vmem:[%s71 + $0xc] sm:$0xf]
    %v4660 = vld [vmem:[%s73] sm:$0x1]
    %v4662 = vlaneseq
    %v4663 = vshrl.u32 %v4662, 7
    %v4664 = vsub.s32 0, %v4663
    %v4665 = vrot.slane %v4660, %v4664
    %v4671 = vunpack.c.l.b16 %v4656
    %v4672 = vunpack.c.l.b16 %v4657
    %v4673 = vunpack.c.l.b16 %v4658
    %v4674 = vunpack.c.l.b16 %v4659
    %v4675 = vpack.c.b16 %v4672, %v4671
    %v4676 = vpack.c.b16 %v4674, %v4673
    %v4680 = vsel %vm330, %v4655, 0
    %4682 = vmatprep.subr.bf16.mxu0 0
    %4683 = vmatpush1.bf16.msra.mxu0 %v4675
    %4684 = vmatprep.subr.bf16.mxu0 0
    %4685 = vmatpush1.bf16.msra.mxu0 %v4676
    %4686 = vmatprep.subr.bf16.mxu0 0
    %4687 = vmatpush1.bf16.msra.mxu0 0
    %4688 = vmatprep.subr.bf16.mxu0 0
    %4689 = vmatpush1.bf16.msra.mxu0 0
    %4690 = vmatprep.subr.bf16.mxu0 0
    %4691 = vmatpush1.bf16.msra.mxu0 0
    %4692 = vmatprep.subr.bf16.mxu0 0
    %4693 = vmatpush1.bf16.msra.mxu0 0
    %4694 = vmatprep.subr.bf16.mxu0 0
    %4695 = vmatpush1.bf16.msra.mxu0 0
    %4696 = vmatprep.subr.bf16.mxu0 0
    %4697 = vmatpush1.bf16.msra.mxu0 0
    %4698 = vmatprep.subr.bf16.mxu0 0
    %4699 = vmatpush1.bf16.msra.mxu0 0
    %4700 = vmatprep.subr.bf16.mxu0 0
    %4701 = vmatpush1.bf16.msra.mxu0 0
    %4702 = vmatprep.subr.bf16.mxu0 0
    %4703 = vmatpush1.bf16.msra.mxu0 0
    %4704 = vmatprep.subr.bf16.mxu0 0
    %4705 = vmatpush1.bf16.msra.mxu0 0
    %4706 = vmatprep.subr.bf16.mxu0 0
    %4707 = vmatpush1.bf16.msra.mxu0 0
    %4708 = vmatprep.subr.bf16.mxu0 0
    %4709 = vmatpush1.bf16.msra.mxu0 0
    %4710 = vmatprep.subr.bf16.mxu0 0
    %4711 = vmatpush1.bf16.msra.mxu0 0
    %4712 = vmatprep.subr.bf16.mxu0 0
    %4713 = vmatpush1.bf16.msra.mxu0 0
    %4714 = vmatprep.mubr.bf16.mxu0 0
    %4715 = vmatmul.mubr.bf16.gmra.mrb[0].mxu0 %v4680
    %v4716 = vpop.f32.mrb[0].mxu0
    %v4717 = vadd.f32 %v4665, %v4716
    %v4718 = vpop.f32.mrb[0].mxu0
    %v4719 = vpop.f32.mrb[0].mxu0
    %v4720 = vpop.f32.mrb[0].mxu0
    %4721 = vdwg.mxu0
    %vm4722 = vcmask 39936
    %v4723 = vsel %vm4722, %v4717, -inf
    %4724 = vmax.xlane.f32.xlu0 %v4723
    %v4725 = vpop.xlane.xlu0 %4724
    %v4726 = vlaneseq
    %v4727 = vand.u32 %v4726, 127
    %vm4728 = vcmp.ge.f32.partialorder %v4717, %v4725
    %v4729 = vsel %vm4728, %v4727, 5
    %v4730 = vsel %vm4722, %v4729, 2147483647
    %v4731 = vand.u32 %v4730, 65535
    %v4732 = vshra.s32 %v4730, 16
    %v4733 = vcvt.s32.f32 %v4731
    %v4734 = vcvt.s32.f32 %v4732
    %4735 = vmin.xlane.f32.xlu0 %v4734
    %v4736 = vpop.xlane.xlu0 %4735
    %vm4737 = vcmp.eq.f32.partialorder %v4734, %v4736
    %v4738 = vsel %vm4737, %v4733, inf
    %4739 = vmin.xlane.f32.xlu0 %v4738
    %v4740 = vpop.xlane.xlu0 %4739
    %v4741 = vcvt.f32.s32 %v4740
    %v4742 = vcvt.f32.s32 %v4736
    %v4743 = vshll.u32 %v4742, 16
    %v4744 = vadd.s32 %v4743, %v4741
    %vm4745 = vcmp.eq.s32.totalorder %v4727, %v4744
    %v4746 = vsel %vm4745, 1, 0
    %v4747 = vcvt.s32.f32 %v4746
    %4749 = vrot.lane.b32.xlu0 %v4747, 96
    %v4750 = vpop.permute.xlu0 %4749
    %v4752 = vsel %vm4469, %v4485, %v4750
    %v4753 = vpack.c.bf16 %v4752, %v4752
    %v4754 = vld [vmem:[%s75] sm:$0xf]
    %v4755 = vld [vmem:[%s75 + $0x4] sm:$0xf]
    %v4756 = vld [vmem:[%s75 + $0x8] sm:$0xf]
    %v4757 = vld [vmem:[%s75 + $0xc] sm:$0xf]
    %v4758 = vld [vmem:[%s75 + $0x10] sm:$0xf]
    %v4759 = vld [vmem:[%s75 + $0x14] sm:$0xf]
    %v4760 = vld [vmem:[%s75 + $0x18] sm:$0xf]
    %v4761 = vld [vmem:[%s75 + $0x1c] sm:$0xf]
    %v4762 = vld [vmem:[%s75 + $0x20] sm:$0xf]
    %v4763 = vld [vmem:[%s75 + $0x24] sm:$0xf]
    %v4764 = vld [vmem:[%s75 + $0x28] sm:$0xf]
    %v4765 = vld [vmem:[%s75 + $0x2c] sm:$0xf]
    %v4766 = vld [vmem:[%s75 + $0x30] sm:$0xf]
    %v4767 = vld [vmem:[%s75 + $0x34] sm:$0xf]
    %v4768 = vld [vmem:[%s75 + $0x38] sm:$0xf]
    %v4769 = vld [vmem:[%s75 + $0x3c] sm:$0xf]
    %v4770 = vld [vmem:[%s75 + $0x40] sm:$0xf]
    %v4771 = vld [vmem:[%s75 + $0x44] sm:$0xf]
    %v4772 = vld [vmem:[%s75 + $0x48] sm:$0xf]
    %v4773 = vld [vmem:[%s75 + $0x4c] sm:$0xf]
    %v4774 = vld [vmem:[%s75 + $0x50] sm:$0xf]
    %v4775 = vld [vmem:[%s75 + $0x54] sm:$0xf]
    %v4776 = vld [vmem:[%s75 + $0x58] sm:$0xf]
    %v4777 = vld [vmem:[%s75 + $0x5c] sm:$0xf]
    %v4778 = vld [vmem:[%s75 + $0x60] sm:$0xf]
    %v4779 = vld [vmem:[%s75 + $0x64] sm:$0xf]
    %v4780 = vld [vmem:[%s75 + $0x68] sm:$0xf]
    %v4781 = vld [vmem:[%s75 + $0x6c] sm:$0xf]
    %v4782 = vld [vmem:[%s75 + $0x70] sm:$0x7]
    %v4783 = vld [vmem:[%s77] sm:$0x1]
    %v4785 = vlaneseq
    %v4786 = vshrl.u32 %v4785, 7
    %v4787 = vsub.s32 0, %v4786
    %v4788 = vrot.slane %v4783, %v4787
    %v4819 = vunpack.c.l.b16 %v4754
    %v4820 = vunpack.c.l.b16 %v4755
    %v4821 = vunpack.c.l.b16 %v4756
    %v4822 = vunpack.c.l.b16 %v4757
    %v4823 = vunpack.c.l.b16 %v4758
    %v4824 = vunpack.c.l.b16 %v4759
    %v4825 = vunpack.c.l.b16 %v4760
    %v4826 = vunpack.c.l.b16 %v4761
    %v4827 = vunpack.c.l.b16 %v4762
    %v4828 = vunpack.c.l.b16 %v4763
    %v4829 = vunpack.c.l.b16 %v4764
    %v4830 = vunpack.c.l.b16 %v4765
    %v4831 = vunpack.c.l.b16 %v4766
    %v4832 = vunpack.c.l.b16 %v4767
    %v4833 = vunpack.c.l.b16 %v4768
    %v4834 = vunpack.c.l.b16 %v4769
    %v4835 = vunpack.c.l.b16 %v4770
    %v4836 = vunpack.c.l.b16 %v4771
    %v4837 = vunpack.c.l.b16 %v4772
    %v4838 = vunpack.c.l.b16 %v4773
    %v4839 = vunpack.c.l.b16 %v4774
    %v4840 = vunpack.c.l.b16 %v4775
    %v4841 = vunpack.c.l.b16 %v4776
    %v4842 = vunpack.c.l.b16 %v4777
    %v4843 = vunpack.c.l.b16 %v4778
    %v4844 = vunpack.c.l.b16 %v4779
    %v4845 = vunpack.c.l.b16 %v4780
    %v4846 = vunpack.c.l.b16 %v4781
    %v4847 = vunpack.c.l.b16 %v4782
    %v4848 = vpack.c.b16 %v4820, %v4819
    %v4849 = vpack.c.b16 %v4822, %v4821
    %v4850 = vpack.c.b16 %v4824, %v4823
    %v4851 = vpack.c.b16 %v4826, %v4825
    %v4852 = vpack.c.b16 %v4828, %v4827
    %v4853 = vpack.c.b16 %v4830, %v4829
    %v4854 = vpack.c.b16 %v4832, %v4831
    %v4855 = vpack.c.b16 %v4834, %v4833
    %v4856 = vpack.c.b16 %v4836, %v4835
    %v4857 = vpack.c.b16 %v4838, %v4837
    %v4858 = vpack.c.b16 %v4840, %v4839
    %v4859 = vpack.c.b16 %v4842, %v4841
    %v4860 = vpack.c.b16 %v4844, %v4843
    %v4861 = vpack.c.b16 %v4846, %v4845
    %v4862 = vpack.c.b16 %v4847, %v4847
    %vm4877 = vcmask 826368
    %v4879 = vsel %vm4877, %v4753, 0
    %vm4881 = vcmask 1041408
    %v4882 = vsel %vm4881, 4294967295, 65535
    %v4883 = vsel %vm245, %v4882, 0
    %v4885 = vand.u32 %v4862, %v4883
    %4887 = vmatprep.subr.bf16.mxu0 0
    %4888 = vmatpush1.bf16.msra.mxu0 %v4848
    %4889 = vmatprep.subr.bf16.mxu0 0
    %4890 = vmatpush1.bf16.msra.mxu0 %v4849
    %4891 = vmatprep.subr.bf16.mxu0 0
    %4892 = vmatpush1.bf16.msra.mxu0 %v4850
    %4893 = vmatprep.subr.bf16.mxu0 0
    %4894 = vmatpush1.bf16.msra.mxu0 %v4851
    %4895 = vmatprep.subr.bf16.mxu0 0
    %4896 = vmatpush1.bf16.msra.mxu0 %v4852
    %4897 = vmatprep.subr.bf16.mxu0 0
    %4898 = vmatpush1.bf16.msra.mxu0 %v4853
    %4899 = vmatprep.subr.bf16.mxu0 0
    %4900 = vmatpush1.bf16.msra.mxu0 %v4854
    %4901 = vmatprep.subr.bf16.mxu0 0
    %4902 = vmatpush1.bf16.msra.mxu0 %v4855
    %4903 = vmatprep.subr.bf16.mxu0 0
    %4904 = vmatpush1.bf16.msra.mxu0 %v4856
    %4905 = vmatprep.subr.bf16.mxu0 0
    %4906 = vmatpush1.bf16.msra.mxu0 %v4857
    %4907 = vmatprep.subr.bf16.mxu0 0
    %4908 = vmatpush1.bf16.msra.mxu0 %v4858
    %4909 = vmatprep.subr.bf16.mxu0 0
    %4910 = vmatpush1.bf16.msra.mxu0 %v4859
    %4911 = vmatprep.subr.bf16.mxu0 0
    %4912 = vmatpush1.bf16.msra.mxu0 %v4860
    %4913 = vmatprep.subr.bf16.mxu0 0
    %4914 = vmatpush1.bf16.msra.mxu0 %v4861
    %4915 = vmatprep.subr.bf16.mxu0 0
    %4916 = vmatpush1.bf16.msra.mxu0 %v4885
    %4917 = vmatprep.subr.bf16.mxu0 0
    %4918 = vmatpush1.bf16.msra.mxu0 0
    %4919 = vmatprep.mubr.bf16.mxu0 %v4879
    %4920 = vmatmul.mubr.bf16.gmra.mrb[0].mxu0 %v4490
    %v4921 = vpop.f32.mrb[0].mxu0
    %v4922 = vadd.f32 %v4788, %v4921
    %v4923 = vpop.f32.mrb[0].mxu0
    %v4924 = vpop.f32.mrb[0].mxu0
    %v4925 = vpop.f32.mrb[0].mxu0
    %4926 = vdwg.mxu0
    %v4927 = vtanh.pop %v4922
    %v4928 = vld [vmem:[%s83] sm:$0xf]
    %v4929 = vld [vmem:[%s83 + $0x4] sm:$0xf]
    %v4930 = vld [vmem:[%s83 + $0x8] sm:$0xf]
    %v4931 = vld [vmem:[%s83 + $0xc] sm:$0xf]
    %v4932 = vld [vmem:[%s89] sm:$0xf]
    %v4933 = vld [vmem:[%s89 + $0x4] sm:$0xf]
    %v4934 = vld [vmem:[%s89 + $0x8] sm:$0xf]
    %v4935 = vld [vmem:[%s89 + $0xc] sm:$0xf]
    %v4936 = vld [vmem:[%s79] sm:$0xf]
    %v4937 = vld [vmem:[%s79 + $0x4] sm:$0xf]
    %v4938 = vld [vmem:[%s79 + $0x8] sm:$0xf]
    %v4939 = vld [vmem:[%s79 + $0xc] sm:$0xf]
    %v4940 = vld [vmem:[%s79 + $0x10] sm:$0xf]
    %v4941 = vld [vmem:[%s79 + $0x14] sm:$0xf]
    %v4942 = vld [vmem:[%s79 + $0x18] sm:$0xf]
    %v4943 = vld [vmem:[%s79 + $0x1c] sm:$0xf]
    %v4944 = vld [vmem:[%s79 + $0x20] sm:$0xf]
    %v4945 = vld [vmem:[%s79 + $0x24] sm:$0xf]
    %v4946 = vld [vmem:[%s79 + $0x28] sm:$0xf]
    %v4947 = vld [vmem:[%s79 + $0x2c] sm:$0xf]
    %v4948 = vld [vmem:[%s79 + $0x30] sm:$0xf]
    %v4949 = vld [vmem:[%s79 + $0x34] sm:$0xf]
    %v4950 = vld [vmem:[%s79 + $0x38] sm:$0xf]
    %v4951 = vld [vmem:[%s79 + $0x3c] sm:$0xf]
    %v4952 = vld [vmem:[%s79 + $0x40] sm:$0xf]
    %v4953 = vld [vmem:[%s79 + $0x44] sm:$0xf]
    %v4954 = vld [vmem:[%s79 + $0x48] sm:$0xf]
    %v4955 = vld [vmem:[%s79 + $0x4c] sm:$0xf]
    %v4956 = vld [vmem:[%s79 + $0x50] sm:$0xf]
    %v4957 = vld [vmem:[%s79 + $0x54] sm:$0xf]
    %v4958 = vld [vmem:[%s79 + $0x58] sm:$0xf]
    %v4959 = vld [vmem:[%s79 + $0x5c] sm:$0xf]
    %v4960 = vld [vmem:[%s79 + $0x60] sm:$0xf]
    %v4961 = vld [vmem:[%s79 + $0x64] sm:$0xf]
    %v4962 = vld [vmem:[%s79 + $0x68] sm:$0xf]
    %v4963 = vld [vmem:[%s79 + $0x6c] sm:$0xf]
    %v4964 = vld [vmem:[%s79 + $0x70] sm:$0x7]
    %v4965 = vld [vmem:[%s85] sm:$0x1]
    %v4967 = vlaneseq
    %v4968 = vshrl.u32 %v4967, 7
    %v4969 = vsub.s32 0, %v4968
    %v4970 = vrot.slane %v4965, %v4969
    %v5001 = vunpack.c.l.b16 %v4936
    %v5002 = vunpack.c.l.b16 %v4937
    %v5003 = vunpack.c.l.b16 %v4938
    %v5004 = vunpack.c.l.b16 %v4939
    %v5005 = vunpack.c.l.b16 %v4940
    %v5006 = vunpack.c.l.b16 %v4941
    %v5007 = vunpack.c.l.b16 %v4942
    %v5008 = vunpack.c.l.b16 %v4943
    %v5009 = vunpack.c.l.b16 %v4944
    %v5010 = vunpack.c.l.b16 %v4945
    %v5011 = vunpack.c.l.b16 %v4946
    %v5012 = vunpack.c.l.b16 %v4947
    %v5013 = vunpack.c.l.b16 %v4948
    %v5014 = vunpack.c.l.b16 %v4949
    %v5015 = vunpack.c.l.b16 %v4950
    %v5016 = vunpack.c.l.b16 %v4951
    %v5017 = vunpack.c.l.b16 %v4952
    %v5018 = vunpack.c.l.b16 %v4953
    %v5019 = vunpack.c.l.b16 %v4954
    %v5020 = vunpack.c.l.b16 %v4955
    %v5021 = vunpack.c.l.b16 %v4956
    %v5022 = vunpack.c.l.b16 %v4957
    %v5023 = vunpack.c.l.b16 %v4958
    %v5024 = vunpack.c.l.b16 %v4959
    %v5025 = vunpack.c.l.b16 %v4960
    %v5026 = vunpack.c.l.b16 %v4961
    %v5027 = vunpack.c.l.b16 %v4962
    %v5028 = vunpack.c.l.b16 %v4963
    %v5029 = vunpack.c.l.b16 %v4964
    %v5030 = vpack.c.b16 %v5002, %v5001
    %v5031 = vpack.c.b16 %v5004, %v5003
    %v5032 = vpack.c.b16 %v5006, %v5005
    %v5033 = vpack.c.b16 %v5008, %v5007
    %v5034 = vpack.c.b16 %v5010, %v5009
    %v5035 = vpack.c.b16 %v5012, %v5011
    %v5036 = vpack.c.b16 %v5014, %v5013
    %v5037 = vpack.c.b16 %v5016, %v5015
    %v5038 = vpack.c.b16 %v5018, %v5017
    %v5039 = vpack.c.b16 %v5020, %v5019
    %v5040 = vpack.c.b16 %v5022, %v5021
    %v5041 = vpack.c.b16 %v5024, %v5023
    %v5042 = vpack.c.b16 %v5026, %v5025
    %v5043 = vpack.c.b16 %v5028, %v5027
    %v5044 = vpack.c.b16 %v5029, %v5029
    %v5060 = vand.u32 %v5044, %v4883
    %5062 = vmatprep.subr.bf16.mxu0 0
    %5063 = vmatpush1.bf16.msra.mxu0 %v5030
    %5064 = vmatprep.subr.bf16.mxu0 0
    %5065 = vmatpush1.bf16.msra.mxu0 %v5031
    %5066 = vmatprep.subr.bf16.mxu0 0
    %5067 = vmatpush1.bf16.msra.mxu0 %v5032
    %5068 = vmatprep.subr.bf16.mxu0 0
    %5069 = vmatpush1.bf16.msra.mxu0 %v5033
    %5070 = vmatprep.subr.bf16.mxu0 0
    %5071 = vmatpush1.bf16.msra.mxu0 %v5034
    %5072 = vmatprep.subr.bf16.mxu0 0
    %5073 = vmatpush1.bf16.msra.mxu0 %v5035
    %5074 = vmatprep.subr.bf16.mxu0 0
    %5075 = vmatpush1.bf16.msra.mxu0 %v5036
    %5076 = vmatprep.subr.bf16.mxu0 0
    %5077 = vmatpush1.bf16.msra.mxu0 %v5037
    %5078 = vmatprep.subr.bf16.mxu0 0
    %5079 = vmatpush1.bf16.msra.mxu0 %v5038
    %5080 = vmatprep.subr.bf16.mxu0 0
    %5081 = vmatpush1.bf16.msra.mxu0 %v5039
    %5082 = vmatprep.subr.bf16.mxu0 0
    %5083 = vmatpush1.bf16.msra.mxu0 %v5040
    %5084 = vmatprep.subr.bf16.mxu0 0
    %5085 = vmatpush1.bf16.msra.mxu0 %v5041
    %5086 = vmatprep.subr.bf16.mxu0 0
    %5087 = vmatpush1.bf16.msra.mxu0 %v5042
    %5088 = vmatprep.subr.bf16.mxu0 0
    %5089 = vmatpush1.bf16.msra.mxu0 %v5043
    %5090 = vmatprep.subr.bf16.mxu0 0
    %5091 = vmatpush1.bf16.msra.mxu0 %v5060
    %5092 = vmatprep.subr.bf16.mxu0 0
    %5093 = vmatpush1.bf16.msra.mxu0 0
    %5094 = vmatprep.mubr.bf16.mxu0 %v4879
    %5095 = vmatmul.mubr.bf16.gmra.mrb[0].mxu0 %v4490
    %v5096 = vpop.f32.mrb[0].mxu0
    %v5097 = vadd.f32 %v4970, %v5096
    %v5098 = vpop.f32.mrb[0].mxu0
    %v5099 = vpop.f32.mrb[0].mxu0
    %v5100 = vpop.f32.mrb[0].mxu0
    %5101 = vdwg.mxu0
    %v5102 = vld [vmem:[%s87] sm:$0x1]
    %v5104 = vlaneseq
    %v5105 = vshrl.u32 %v5104, 7
    %v5106 = vsub.s32 0, %v5105
    %v5107 = vrot.slane %v5102, %v5106
    %v5109 = vld [vmem:[%s91] sm:$0x1]
    %v5111 = vlaneseq
    %v5112 = vshrl.u32 %v5111, 7
    %v5113 = vsub.s32 0, %v5112
    %v5114 = vrot.slane %v5109, %v5113
    %v5116 = vld [vmem:[%s81] sm:$0x1]
    %v5117 = vunpack.c.l.bf16 %v5116
    %v5118 = vlaneseq
    %v5119 = vshrl.u32 %v5118, 7
    %v5120 = vsub.s32 0, %v5119
    %v5121 = vrot.slane %v5117, %v5120
    %v5122 = vlaneseq
    %v5123 = vshrl.u32 %v5122, 7
    %v5124 = vsub.s32 1, %v5123
    %v5125 = vrot.slane %v5117, %v5124
    %v5126 = vld [vmem:[%s13] sm:$0xff]
    %v5127 = vld [vmem:[%s15] sm:$0xff]
    %5129 = vset.pattern.permute.xlu0 0
    %5130 = vperm.xlu0 %5129, %v5126
    %v5131 = vpop.permute.xlu0 %5130
    %v5133 = vmul.f32 %v5131, %v5121
    %v5134 = vadd.f32 %v5097, %v5133
    %5135 = vset.pattern.permute.xlu0 1
    %5136 = vperm.xlu0 %5135, %v5126
    %v5137 = vpop.permute.xlu0 %5136
    %v5139 = vmul.f32 %v5137, %v5125
    %v5140 = vadd.f32 %v5134, %v5139
    %v5141 = vpack.c.bf16 %v4927, %v4927
    %v5146 = vunpack.c.l.b16 %v4928
    %v5147 = vunpack.c.l.b16 %v4929
    %v5148 = vunpack.c.l.b16 %v4930
    %v5149 = vunpack.c.l.b16 %v4931
    %v5150 = vpack.c.b16 %v5147, %v5146
    %v5151 = vpack.c.b16 %v5149, %v5148
    %v5155 = vsel %vm330, %v5141, 0
    %5157 = vmatprep.subr.bf16.mxu0 0
    %5158 = vmatpush1.bf16.msra.mxu0 %v5150
    %5159 = vmatprep.subr.bf16.mxu0 0
    %5160 = vmatpush1.bf16.msra.mxu0 %v5151
    %5161 = vmatprep.subr.bf16.mxu0 0
    %5162 = vmatpush1.bf16.msra.mxu0 0
    %5163 = vmatprep.subr.bf16.mxu0 0
    %5164 = vmatpush1.bf16.msra.mxu0 0
    %5165 = vmatprep.subr.bf16.mxu0 0
    %5166 = vmatpush1.bf16.msra.mxu0 0
    %5167 = vmatprep.subr.bf16.mxu0 0
    %5168 = vmatpush1.bf16.msra.mxu0 0
    %5169 = vmatprep.subr.bf16.mxu0 0
    %5170 = vmatpush1.bf16.msra.mxu0 0
    %5171 = vmatprep.subr.bf16.mxu0 0
    %5172 = vmatpush1.bf16.msra.mxu0 0
    %5173 = vmatprep.subr.bf16.mxu0 0
    %5174 = vmatpush1.bf16.msra.mxu0 0
    %5175 = vmatprep.subr.bf16.mxu0 0
    %5176 = vmatpush1.bf16.msra.mxu0 0
    %5177 = vmatprep.subr.bf16.mxu0 0
    %5178 = vmatpush1.bf16.msra.mxu0 0
    %5179 = vmatprep.subr.bf16.mxu0 0
    %5180 = vmatpush1.bf16.msra.mxu0 0
    %5181 = vmatprep.subr.bf16.mxu0 0
    %5182 = vmatpush1.bf16.msra.mxu0 0
    %5183 = vmatprep.subr.bf16.mxu0 0
    %5184 = vmatpush1.bf16.msra.mxu0 0
    %5185 = vmatprep.subr.bf16.mxu0 0
    %5186 = vmatpush1.bf16.msra.mxu0 0
    %5187 = vmatprep.subr.bf16.mxu0 0
    %5188 = vmatpush1.bf16.msra.mxu0 0
    %5189 = vmatprep.mubr.bf16.mxu0 0
    %5190 = vmatmul.mubr.bf16.gmra.mrb[0].mxu0 %v5155
    %v5191 = vpop.f32.mrb[0].mxu0
    %v5192 = vadd.f32 %v5107, %v5191
    %v5193 = vpop.f32.mrb[0].mxu0
    %v5194 = vpop.f32.mrb[0].mxu0
    %v5195 = vpop.f32.mrb[0].mxu0
    %5196 = vdwg.mxu0
    %v5197 = vadd.f32 %v5140, %v5192
    %v5198 = vxor.u32 %v5197, 2147483648
    %v5199 = vmul.f32 %v5198, 1.442695
    %v5200 = vpow.pop %v5199
    %v5201 = vadd.f32 %v5200, 1.0
    %v5202 = vrcp.pop %v5201
    %v5203 = vmul.f32 1.0, %v5202
    %5205 = vrot.lane.b32.xlu0 %v5192, 64
    %v5206 = vpop.permute.xlu0 %5205
    %v5208 = vmul.f32 %v5203, %v5206
    %5210 = vrot.lane.b32.xlu0 %v5208, 64
    %v5211 = vpop.permute.xlu0 %5210
    %v5213 = vadd.f32 %v5140, %v5211
    %v5214 = vtanh.pop %v5213
    %v5215 = vsub.f32 1.0, %v5203
    %5217 = vrot.lane.b32.xlu0 %v5214, 96
    %v5218 = vpop.permute.xlu0 %5217
    %v5220 = vmul.f32 %v5215, %v5218
    %5222 = vrot.lane.b32.xlu0 %v4927, 32
    %v5223 = vpop.permute.xlu0 %5222
    %v5225 = vmul.f32 %v5203, %v5223
    %v5226 = vadd.f32 %v5220, %v5225
    %v5227 = vpack.c.bf16 %v5226, %v5226
    %5229 = vrot.lane.b32.xlu0 %v5227, 96
    %v5230 = vpop.permute.xlu0 %5229
    %v5235 = vunpack.c.l.b16 %v4932
    %v5236 = vunpack.c.l.b16 %v4933
    %v5237 = vunpack.c.l.b16 %v4934
    %v5238 = vunpack.c.l.b16 %v4935
    %v5239 = vpack.c.b16 %v5236, %v5235
    %v5240 = vpack.c.b16 %v5238, %v5237
    %v5244 = vsel %vm330, %v5230, 0
    %5246 = vmatprep.subr.bf16.mxu0 0
    %5247 = vmatpush1.bf16.msra.mxu0 %v5239
    %5248 = vmatprep.subr.bf16.mxu0 0
    %5249 = vmatpush1.bf16.msra.mxu0 %v5240
    %5250 = vmatprep.subr.bf16.mxu0 0
    %5251 = vmatpush1.bf16.msra.mxu0 0
    %5252 = vmatprep.subr.bf16.mxu0 0
    %5253 = vmatpush1.bf16.msra.mxu0 0
    %5254 = vmatprep.subr.bf16.mxu0 0
    %5255 = vmatpush1.bf16.msra.mxu0 0
    %5256 = vmatprep.subr.bf16.mxu0 0
    %5257 = vmatpush1.bf16.msra.mxu0 0
    %5258 = vmatprep.subr.bf16.mxu0 0
    %5259 = vmatpush1.bf16.msra.mxu0 0
    %5260 = vmatprep.subr.bf16.mxu0 0
    %5261 = vmatpush1.bf16.msra.mxu0 0
    %5262 = vmatprep.subr.bf16.mxu0 0
    %5263 = vmatpush1.bf16.msra.mxu0 0
    %5264 = vmatprep.subr.bf16.mxu0 0
    %5265 = vmatpush1.bf16.msra.mxu0 0
    %5266 = vmatprep.subr.bf16.mxu0 0
    %5267 = vmatpush1.bf16.msra.mxu0 0
    %5268 = vmatprep.subr.bf16.mxu0 0
    %5269 = vmatpush1.bf16.msra.mxu0 0
    %5270 = vmatprep.subr.bf16.mxu0 0
    %5271 = vmatpush1.bf16.msra.mxu0 0
    %5272 = vmatprep.subr.bf16.mxu0 0
    %5273 = vmatpush1.bf16.msra.mxu0 0
    %5274 = vmatprep.subr.bf16.mxu0 0
    %5275 = vmatpush1.bf16.msra.mxu0 0
    %5276 = vmatprep.subr.bf16.mxu0 0
    %5277 = vmatpush1.bf16.msra.mxu0 0
    %5278 = vmatprep.mubr.bf16.mxu0 0
    %5279 = vmatmul.mubr.bf16.gmra.mrb[0].mxu0 %v5244
    %v5280 = vpop.f32.mrb[0].mxu0
    %v5281 = vadd.f32 %v5114, %v5280
    %v5282 = vpop.f32.mrb[0].mxu0
    %v5283 = vpop.f32.mrb[0].mxu0
    %v5284 = vpop.f32.mrb[0].mxu0
    %5285 = vdwg.mxu0
    %v5286 = vmul.f32 %v5281, 0.4
    %5288 = vrot.lane.b32.xlu0 %v5286, 127
    %v5289 = vpop.permute.xlu0 %5288
    %v5291 = vadd.f32 %v5127, %v5289
    %5293 = vset.pattern.permute.xlu0 1
    %5294 = vperm.xlu0 %5293, %v5281
    %v5295 = vpop.permute.xlu0 %5294
    %v5297 = vmul.f32 %v5295, %v5121
    %v5298 = vadd.f32 %v5097, %v5297
    %5299 = vset.pattern.permute.xlu0 2
    %5300 = vperm.xlu0 %5299, %v5281
    %v5301 = vpop.permute.xlu0 %5300
    %v5303 = vmul.f32 %v5301, %v5125
    %v5304 = vadd.f32 %v5298, %v5303
    %5305 = vmatprep.subr.bf16.mxu0 0
    %5306 = vmatpush1.bf16.msra.mxu0 %v5150
    %5307 = vmatprep.subr.bf16.mxu0 0
    %5308 = vmatpush1.bf16.msra.mxu0 %v5151
    %5309 = vmatprep.subr.bf16.mxu0 0
    %5310 = vmatpush1.bf16.msra.mxu0 0
    %5311 = vmatprep.subr.bf16.mxu0 0
    %5312 = vmatpush1.bf16.msra.mxu0 0
    %5313 = vmatprep.subr.bf16.mxu0 0
    %5314 = vmatpush1.bf16.msra.mxu0 0
    %5315 = vmatprep.subr.bf16.mxu0 0
    %5316 = vmatpush1.bf16.msra.mxu0 0
    %5317 = vmatprep.subr.bf16.mxu0 0
    %5318 = vmatpush1.bf16.msra.mxu0 0
    %5319 = vmatprep.subr.bf16.mxu0 0
    %5320 = vmatpush1.bf16.msra.mxu0 0
    %5321 = vmatprep.subr.bf16.mxu0 0
    %5322 = vmatpush1.bf16.msra.mxu0 0
    %5323 = vmatprep.subr.bf16.mxu0 0
    %5324 = vmatpush1.bf16.msra.mxu0 0
    %5325 = vmatprep.subr.bf16.mxu0 0
    %5326 = vmatpush1.bf16.msra.mxu0 0
    %5327 = vmatprep.subr.bf16.mxu0 0
    %5328 = vmatpush1.bf16.msra.mxu0 0
    %5329 = vmatprep.subr.bf16.mxu0 0
    %5330 = vmatpush1.bf16.msra.mxu0 0
    %5331 = vmatprep.subr.bf16.mxu0 0
    %5332 = vmatpush1.bf16.msra.mxu0 0
    %5333 = vmatprep.subr.bf16.mxu0 0
    %5334 = vmatpush1.bf16.msra.mxu0 0
    %5335 = vmatprep.subr.bf16.mxu0 0
    %5336 = vmatpush1.bf16.msra.mxu0 0
    %5337 = vmatprep.mubr.bf16.mxu0 0
    %5338 = vmatmul.mubr.bf16.gmra.mrb[0].mxu0 %v5244
    %v5339 = vpop.f32.mrb[0].mxu0
    %v5340 = vadd.f32 %v5107, %v5339
    %v5341 = vpop.f32.mrb[0].mxu0
    %v5342 = vpop.f32.mrb[0].mxu0
    %v5343 = vpop.f32.mrb[0].mxu0
    %5344 = vdwg.mxu0
    %v5345 = vadd.f32 %v5304, %v5340
    %v5346 = vxor.u32 %v5345, 2147483648
    %v5347 = vmul.f32 %v5346, 1.442695
    %v5348 = vpow.pop %v5347
    %v5349 = vadd.f32 %v5348, 1.0
    %v5350 = vrcp.pop %v5349
    %v5351 = vmul.f32 1.0, %v5350
    %5353 = vrot.lane.b32.xlu0 %v5340, 64
    %v5354 = vpop.permute.xlu0 %5353
    %v5356 = vmul.f32 %v5351, %v5354
    %5358 = vrot.lane.b32.xlu0 %v5356, 64
    %v5359 = vpop.permute.xlu0 %5358
    %v5361 = vadd.f32 %v5304, %v5359
    %v5362 = vtanh.pop %v5361
    %v5363 = vsub.f32 1.0, %v5351
    %5365 = vrot.lane.b32.xlu0 %v5362, 96
    %v5366 = vpop.permute.xlu0 %5365
    %v5368 = vmul.f32 %v5363, %v5366
    %v5369 = vmul.f32 %v5351, %v5226
    %v5370 = vadd.f32 %v5368, %v5369
    %v5371 = vpack.c.bf16 %v5370, %v5370
    %5373 = vrot.lane.b32.xlu0 %v5371, 96
    %v5374 = vpop.permute.xlu0 %5373
    %v5376 = vsel %vm330, %v5374, 0
    %5378 = vmatprep.subr.bf16.mxu0 0
    %5379 = vmatpush1.bf16.msra.mxu0 %v5239
    %5380 = vmatprep.subr.bf16.mxu0 0
    %5381 = vmatpush1.bf16.msra.mxu0 %v5240
    %5382 = vmatprep.subr.bf16.mxu0 0
    %5383 = vmatpush1.bf16.msra.mxu0 0
    %5384 = vmatprep.subr.bf16.mxu0 0
    %5385 = vmatpush1.bf16.msra.mxu0 0
    %5386 = vmatprep.subr.bf16.mxu0 0
    %5387 = vmatpush1.bf16.msra.mxu0 0
    %5388 = vmatprep.subr.bf16.mxu0 0
    %5389 = vmatpush1.bf16.msra.mxu0 0
    %5390 = vmatprep.subr.bf16.mxu0 0
    %5391 = vmatpush1.bf16.msra.mxu0 0
    %5392 = vmatprep.subr.bf16.mxu0 0
    %5393 = vmatpush1.bf16.msra.mxu0 0
    %5394 = vmatprep.subr.bf16.mxu0 0
    %5395 = vmatpush1.bf16.msra.mxu0 0
    %5396 = vmatprep.subr.bf16.mxu0 0
    %5397 = vmatpush1.bf16.msra.mxu0 0
    %5398 = vmatprep.subr.bf16.mxu0 0
    %5399 = vmatpush1.bf16.msra.mxu0 0
    %5400 = vmatprep.subr.bf16.mxu0 0
    %5401 = vmatpush1.bf16.msra.mxu0 0
    %5402 = vmatprep.subr.bf16.mxu0 0
    %5403 = vmatpush1.bf16.msra.mxu0 0
    %5404 = vmatprep.subr.bf16.mxu0 0
    %5405 = vmatpush1.bf16.msra.mxu0 0
    %5406 = vmatprep.subr.bf16.mxu0 0
    %5407 = vmatpush1.bf16.msra.mxu0 0
    %5408 = vmatprep.subr.bf16.mxu0 0
    %5409 = vmatpush1.bf16.msra.mxu0 0
    %5410 = vmatprep.mubr.bf16.mxu0 0
    %5411 = vmatmul.mubr.bf16.gmra.mrb[0].mxu0 %v5376
    %v5412 = vpop.f32.mrb[0].mxu0
    %v5413 = vadd.f32 %v5114, %v5412
    %v5414 = vpop.f32.mrb[0].mxu0
    %v5415 = vpop.f32.mrb[0].mxu0
    %v5416 = vpop.f32.mrb[0].mxu0
    %5417 = vdwg.mxu0
    %v5418 = vmul.f32 %v5413, 0.4
    %5420 = vrot.lane.b32.xlu0 %v5418, 127
    %v5421 = vpop.permute.xlu0 %5420
    %v5423 = vadd.f32 %v5291, %v5421
    %5425 = vset.pattern.permute.xlu0 1
    %5426 = vperm.xlu0 %5425, %v5413
    %v5427 = vpop.permute.xlu0 %5426
    %v5429 = vmul.f32 %v5427, %v5121
    %v5430 = vadd.f32 %v5097, %v5429
    %5431 = vset.pattern.permute.xlu0 2
    %5432 = vperm.xlu0 %5431, %v5413
    %v5433 = vpop.permute.xlu0 %5432
    %v5435 = vmul.f32 %v5433, %v5125
    %v5436 = vadd.f32 %v5430, %v5435
    %5437 = vmatprep.subr.bf16.mxu0 0
    %5438 = vmatpush1.bf16.msra.mxu0 %v5150
    %5439 = vmatprep.subr.bf16.mxu0 0
    %5440 = vmatpush1.bf16.msra.mxu0 %v5151
    %5441 = vmatprep.subr.bf16.mxu0 0
    %5442 = vmatpush1.bf16.msra.mxu0 0
    %5443 = vmatprep.subr.bf16.mxu0 0
    %5444 = vmatpush1.bf16.msra.mxu0 0
    %5445 = vmatprep.subr.bf16.mxu0 0
    %5446 = vmatpush1.bf16.msra.mxu0 0
    %5447 = vmatprep.subr.bf16.mxu0 0
    %5448 = vmatpush1.bf16.msra.mxu0 0
    %5449 = vmatprep.subr.bf16.mxu0 0
    %5450 = vmatpush1.bf16.msra.mxu0 0
    %5451 = vmatprep.subr.bf16.mxu0 0
    %5452 = vmatpush1.bf16.msra.mxu0 0
    %5453 = vmatprep.subr.bf16.mxu0 0
    %5454 = vmatpush1.bf16.msra.mxu0 0
    %5455 = vmatprep.subr.bf16.mxu0 0
    %5456 = vmatpush1.bf16.msra.mxu0 0
    %5457 = vmatprep.subr.bf16.mxu0 0
    %5458 = vmatpush1.bf16.msra.mxu0 0
    %5459 = vmatprep.subr.bf16.mxu0 0
    %5460 = vmatpush1.bf16.msra.mxu0 0
    %5461 = vmatprep.subr.bf16.mxu0 0
    %5462 = vmatpush1.bf16.msra.mxu0 0
    %5463 = vmatprep.subr.bf16.mxu0 0
    %5464 = vmatpush1.bf16.msra.mxu0 0
    %5465 = vmatprep.subr.bf16.mxu0 0
    %5466 = vmatpush1.bf16.msra.mxu0 0
    %5467 = vmatprep.subr.bf16.mxu0 0
    %5468 = vmatpush1.bf16.msra.mxu0 0
    %5469 = vmatprep.mubr.bf16.mxu0 0
    %5470 = vmatmul.mubr.bf16.gmra.mrb[0].mxu0 %v5376
    %v5471 = vpop.f32.mrb[0].mxu0
    %v5472 = vadd.f32 %v5107, %v5471
    %v5473 = vpop.f32.mrb[0].mxu0
    %v5474 = vpop.f32.mrb[0].mxu0
    %v5475 = vpop.f32.mrb[0].mxu0
    %5476 = vdwg.mxu0
    %v5477 = vadd.f32 %v5436, %v5472
    %v5478 = vxor.u32 %v5477, 2147483648
    %v5479 = vmul.f32 %v5478, 1.442695
    %v5480 = vpow.pop %v5479
    %v5481 = vadd.f32 %v5480, 1.0
    %v5482 = vrcp.pop %v5481
    %v5483 = vmul.f32 1.0, %v5482
    %5485 = vrot.lane.b32.xlu0 %v5472, 64
    %v5486 = vpop.permute.xlu0 %5485
    %v5488 = vmul.f32 %v5483, %v5486
    %5490 = vrot.lane.b32.xlu0 %v5488, 64
    %v5491 = vpop.permute.xlu0 %5490
    %v5493 = vadd.f32 %v5436, %v5491
    %v5494 = vtanh.pop %v5493
    %v5495 = vsub.f32 1.0, %v5483
    %5497 = vrot.lane.b32.xlu0 %v5494, 96
    %v5498 = vpop.permute.xlu0 %5497
    %v5500 = vmul.f32 %v5495, %v5498
    %v5501 = vmul.f32 %v5483, %v5370
    %v5502 = vadd.f32 %v5500, %v5501
    %v5503 = vpack.c.bf16 %v5502, %v5502
    %5505 = vrot.lane.b32.xlu0 %v5503, 96
    %v5506 = vpop.permute.xlu0 %5505
    %v5508 = vsel %vm330, %v5506, 0
    %5510 = vmatprep.subr.bf16.mxu0 0
    %5511 = vmatpush1.bf16.msra.mxu0 %v5239
    %5512 = vmatprep.subr.bf16.mxu0 0
    %5513 = vmatpush1.bf16.msra.mxu0 %v5240
    %5514 = vmatprep.subr.bf16.mxu0 0
    %5515 = vmatpush1.bf16.msra.mxu0 0
    %5516 = vmatprep.subr.bf16.mxu0 0
    %5517 = vmatpush1.bf16.msra.mxu0 0
    %5518 = vmatprep.subr.bf16.mxu0 0
    %5519 = vmatpush1.bf16.msra.mxu0 0
    %5520 = vmatprep.subr.bf16.mxu0 0
    %5521 = vmatpush1.bf16.msra.mxu0 0
    %5522 = vmatprep.subr.bf16.mxu0 0
    %5523 = vmatpush1.bf16.msra.mxu0 0
    %5524 = vmatprep.subr.bf16.mxu0 0
    %5525 = vmatpush1.bf16.msra.mxu0 0
    %5526 = vmatprep.subr.bf16.mxu0 0
    %5527 = vmatpush1.bf16.msra.mxu0 0
    %5528 = vmatprep.subr.bf16.mxu0 0
    %5529 = vmatpush1.bf16.msra.mxu0 0
    %5530 = vmatprep.subr.bf16.mxu0 0
    %5531 = vmatpush1.bf16.msra.mxu0 0
    %5532 = vmatprep.subr.bf16.mxu0 0
    %5533 = vmatpush1.bf16.msra.mxu0 0
    %5534 = vmatprep.subr.bf16.mxu0 0
    %5535 = vmatpush1.bf16.msra.mxu0 0
    %5536 = vmatprep.subr.bf16.mxu0 0
    %5537 = vmatpush1.bf16.msra.mxu0 0
    %5538 = vmatprep.subr.bf16.mxu0 0
    %5539 = vmatpush1.bf16.msra.mxu0 0
    %5540 = vmatprep.subr.bf16.mxu0 0
    %5541 = vmatpush1.bf16.msra.mxu0 0
    %5542 = vmatprep.mubr.bf16.mxu0 0
    %5543 = vmatmul.mubr.bf16.gmra.mrb[0].mxu0 %v5508
    %v5544 = vpop.f32.mrb[0].mxu0
    %v5545 = vadd.f32 %v5114, %v5544
    %v5546 = vpop.f32.mrb[0].mxu0
    %v5547 = vpop.f32.mrb[0].mxu0
    %v5548 = vpop.f32.mrb[0].mxu0
    %5549 = vdwg.mxu0
    %v5550 = vmul.f32 %v5545, 0.4
    %5552 = vrot.lane.b32.xlu0 %v5550, 127
    %v5553 = vpop.permute.xlu0 %5552
    %v5555 = vadd.f32 %v5423, %v5553
    %5557 = vset.pattern.permute.xlu0 1
    %5558 = vperm.xlu0 %5557, %v5545
    %v5559 = vpop.permute.xlu0 %5558
    %v5561 = vmul.f32 %v5559, %v5121
    %v5562 = vadd.f32 %v5097, %v5561
    %5563 = vset.pattern.permute.xlu0 2
    %5564 = vperm.xlu0 %5563, %v5545
    %v5565 = vpop.permute.xlu0 %5564
    %v5567 = vmul.f32 %v5565, %v5125
    %v5568 = vadd.f32 %v5562, %v5567
    %5569 = vmatprep.subr.bf16.mxu0 0
    %5570 = vmatpush1.bf16.msra.mxu0 %v5150
    %5571 = vmatprep.subr.bf16.mxu0 0
    %5572 = vmatpush1.bf16.msra.mxu0 %v5151
    %5573 = vmatprep.subr.bf16.mxu0 0
    %5574 = vmatpush1.bf16.msra.mxu0 0
    %5575 = vmatprep.subr.bf16.mxu0 0
    %5576 = vmatpush1.bf16.msra.mxu0 0
    %5577 = vmatprep.subr.bf16.mxu0 0
    %5578 = vmatpush1.bf16.msra.mxu0 0
    %5579 = vmatprep.subr.bf16.mxu0 0
    %5580 = vmatpush1.bf16.msra.mxu0 0
    %5581 = vmatprep.subr.bf16.mxu0 0
    %5582 = vmatpush1.bf16.msra.mxu0 0
    %5583 = vmatprep.subr.bf16.mxu0 0
    %5584 = vmatpush1.bf16.msra.mxu0 0
    %5585 = vmatprep.subr.bf16.mxu0 0
    %5586 = vmatpush1.bf16.msra.mxu0 0
    %5587 = vmatprep.subr.bf16.mxu0 0
    %5588 = vmatpush1.bf16.msra.mxu0 0
    %5589 = vmatprep.subr.bf16.mxu0 0
    %5590 = vmatpush1.bf16.msra.mxu0 0
    %5591 = vmatprep.subr.bf16.mxu0 0
    %5592 = vmatpush1.bf16.msra.mxu0 0
    %5593 = vmatprep.subr.bf16.mxu0 0
    %5594 = vmatpush1.bf16.msra.mxu0 0
    %5595 = vmatprep.subr.bf16.mxu0 0
    %5596 = vmatpush1.bf16.msra.mxu0 0
    %5597 = vmatprep.subr.bf16.mxu0 0
    %5598 = vmatpush1.bf16.msra.mxu0 0
    %5599 = vmatprep.subr.bf16.mxu0 0
    %5600 = vmatpush1.bf16.msra.mxu0 0
    %5601 = vmatprep.mubr.bf16.mxu0 0
    %5602 = vmatmul.mubr.bf16.gmra.mrb[0].mxu0 %v5508
    %v5603 = vpop.f32.mrb[0].mxu0
    %v5604 = vadd.f32 %v5107, %v5603
    %v5605 = vpop.f32.mrb[0].mxu0
    %v5606 = vpop.f32.mrb[0].mxu0
    %v5607 = vpop.f32.mrb[0].mxu0
    %5608 = vdwg.mxu0
    %v5609 = vadd.f32 %v5568, %v5604
    %v5610 = vxor.u32 %v5609, 2147483648
    %v5611 = vmul.f32 %v5610, 1.442695
    %v5612 = vpow.pop %v5611
    %v5613 = vadd.f32 %v5612, 1.0
    %v5614 = vrcp.pop %v5613
    %v5615 = vmul.f32 1.0, %v5614
    %5617 = vrot.lane.b32.xlu0 %v5604, 64
    %v5618 = vpop.permute.xlu0 %5617
    %v5620 = vmul.f32 %v5615, %v5618
    %5622 = vrot.lane.b32.xlu0 %v5620, 64
    %v5623 = vpop.permute.xlu0 %5622
    %v5625 = vadd.f32 %v5568, %v5623
    %v5626 = vtanh.pop %v5625
    %v5627 = vsub.f32 1.0, %v5615
    %5629 = vrot.lane.b32.xlu0 %v5626, 96
    %v5630 = vpop.permute.xlu0 %5629
    %v5632 = vmul.f32 %v5627, %v5630
    %v5633 = vmul.f32 %v5615, %v5502
    %v5634 = vadd.f32 %v5632, %v5633
    %v5635 = vpack.c.bf16 %v5634, %v5634
    %5637 = vrot.lane.b32.xlu0 %v5635, 96
    %v5638 = vpop.permute.xlu0 %5637
    %v5640 = vsel %vm330, %v5638, 0
    %5642 = vmatprep.subr.bf16.mxu0 0
    %5643 = vmatpush1.bf16.msra.mxu0 %v5239
    %5644 = vmatprep.subr.bf16.mxu0 0
    %5645 = vmatpush1.bf16.msra.mxu0 %v5240
    %5646 = vmatprep.subr.bf16.mxu0 0
    %5647 = vmatpush1.bf16.msra.mxu0 0
    %5648 = vmatprep.subr.bf16.mxu0 0
    %5649 = vmatpush1.bf16.msra.mxu0 0
    %5650 = vmatprep.subr.bf16.mxu0 0
    %5651 = vmatpush1.bf16.msra.mxu0 0
    %5652 = vmatprep.subr.bf16.mxu0 0
    %5653 = vmatpush1.bf16.msra.mxu0 0
    %5654 = vmatprep.subr.bf16.mxu0 0
    %5655 = vmatpush1.bf16.msra.mxu0 0
    %5656 = vmatprep.subr.bf16.mxu0 0
    %5657 = vmatpush1.bf16.msra.mxu0 0
    %5658 = vmatprep.subr.bf16.mxu0 0
    %5659 = vmatpush1.bf16.msra.mxu0 0
    %5660 = vmatprep.subr.bf16.mxu0 0
    %5661 = vmatpush1.bf16.msra.mxu0 0
    %5662 = vmatprep.subr.bf16.mxu0 0
    %5663 = vmatpush1.bf16.msra.mxu0 0
    %5664 = vmatprep.subr.bf16.mxu0 0
    %5665 = vmatpush1.bf16.msra.mxu0 0
    %5666 = vmatprep.subr.bf16.mxu0 0
    %5667 = vmatpush1.bf16.msra.mxu0 0
    %5668 = vmatprep.subr.bf16.mxu0 0
    %5669 = vmatpush1.bf16.msra.mxu0 0
    %5670 = vmatprep.subr.bf16.mxu0 0
    %5671 = vmatpush1.bf16.msra.mxu0 0
    %5672 = vmatprep.subr.bf16.mxu0 0
    %5673 = vmatpush1.bf16.msra.mxu0 0
    %5674 = vmatprep.mubr.bf16.mxu0 0
    %5675 = vmatmul.mubr.bf16.gmra.mrb[0].mxu0 %v5640
    %v5676 = vpop.f32.mrb[0].mxu0
    %v5677 = vadd.f32 %v5114, %v5676
    %v5678 = vpop.f32.mrb[0].mxu0
    %v5679 = vpop.f32.mrb[0].mxu0
    %v5680 = vpop.f32.mrb[0].mxu0
    %5681 = vdwg.mxu0
    %v5682 = vmul.f32 %v5677, 0.4
    %5684 = vrot.lane.b32.xlu0 %v5682, 127
    %v5685 = vpop.permute.xlu0 %5684
    %v5687 = vadd.f32 %v5555, %v5685
    %5689 = vset.pattern.permute.xlu0 1
    %5690 = vperm.xlu0 %5689, %v5677
    %v5691 = vpop.permute.xlu0 %5690
    %v5693 = vmul.f32 %v5691, %v5121
    %v5694 = vadd.f32 %v5097, %v5693
    %5695 = vset.pattern.permute.xlu0 2
    %5696 = vperm.xlu0 %5695, %v5677
    %v5697 = vpop.permute.xlu0 %5696
    %v5699 = vmul.f32 %v5697, %v5125
    %v5700 = vadd.f32 %v5694, %v5699
    %5701 = vmatprep.subr.bf16.mxu0 0
    %5702 = vmatpush1.bf16.msra.mxu0 %v5150
    %5703 = vmatprep.subr.bf16.mxu0 0
    %5704 = vmatpush1.bf16.msra.mxu0 %v5151
    %5705 = vmatprep.subr.bf16.mxu0 0
    %5706 = vmatpush1.bf16.msra.mxu0 0
    %5707 = vmatprep.subr.bf16.mxu0 0
    %5708 = vmatpush1.bf16.msra.mxu0 0
    %5709 = vmatprep.subr.bf16.mxu0 0
    %5710 = vmatpush1.bf16.msra.mxu0 0
    %5711 = vmatprep.subr.bf16.mxu0 0
    %5712 = vmatpush1.bf16.msra.mxu0 0
    %5713 = vmatprep.subr.bf16.mxu0 0
    %5714 = vmatpush1.bf16.msra.mxu0 0
    %5715 = vmatprep.subr.bf16.mxu0 0
    %5716 = vmatpush1.bf16.msra.mxu0 0
    %5717 = vmatprep.subr.bf16.mxu0 0
    %5718 = vmatpush1.bf16.msra.mxu0 0
    %5719 = vmatprep.subr.bf16.mxu0 0
    %5720 = vmatpush1.bf16.msra.mxu0 0
    %5721 = vmatprep.subr.bf16.mxu0 0
    %5722 = vmatpush1.bf16.msra.mxu0 0
    %5723 = vmatprep.subr.bf16.mxu0 0
    %5724 = vmatpush1.bf16.msra.mxu0 0
    %5725 = vmatprep.subr.bf16.mxu0 0
    %5726 = vmatpush1.bf16.msra.mxu0 0
    %5727 = vmatprep.subr.bf16.mxu0 0
    %5728 = vmatpush1.bf16.msra.mxu0 0
    %5729 = vmatprep.subr.bf16.mxu0 0
    %5730 = vmatpush1.bf16.msra.mxu0 0
    %5731 = vmatprep.subr.bf16.mxu0 0
    %5732 = vmatpush1.bf16.msra.mxu0 0
    %5733 = vmatprep.mubr.bf16.mxu0 0
    %5734 = vmatmul.mubr.bf16.gmra.mrb[0].mxu0 %v5640
    %v5735 = vpop.f32.mrb[0].mxu0
    %v5736 = vadd.f32 %v5107, %v5735
    %v5737 = vpop.f32.mrb[0].mxu0
    %v5738 = vpop.f32.mrb[0].mxu0
    %v5739 = vpop.f32.mrb[0].mxu0
    %5740 = vdwg.mxu0
    %v5741 = vadd.f32 %v5700, %v5736
    %v5742 = vxor.u32 %v5741, 2147483648
    %v5743 = vmul.f32 %v5742, 1.442695
    %v5744 = vpow.pop %v5743
    %v5745 = vadd.f32 %v5744, 1.0
    %v5746 = vrcp.pop %v5745
    %v5747 = vmul.f32 1.0, %v5746
    %5749 = vrot.lane.b32.xlu0 %v5736, 64
    %v5750 = vpop.permute.xlu0 %5749
    %v5752 = vmul.f32 %v5747, %v5750
    %5754 = vrot.lane.b32.xlu0 %v5752, 64
    %v5755 = vpop.permute.xlu0 %5754
    %v5757 = vadd.f32 %v5700, %v5755
    %v5758 = vtanh.pop %v5757
    %v5759 = vsub.f32 1.0, %v5747
    %5761 = vrot.lane.b32.xlu0 %v5758, 96
    %v5762 = vpop.permute.xlu0 %5761
    %v5764 = vmul.f32 %v5759, %v5762
    %v5765 = vmul.f32 %v5747, %v5634
    %v5766 = vadd.f32 %v5764, %v5765
    %v5767 = vpack.c.bf16 %v5766, %v5766
    %5769 = vrot.lane.b32.xlu0 %v5767, 96
    %v5770 = vpop.permute.xlu0 %5769
    %v5772 = vsel %vm330, %v5770, 0
    %5774 = vmatprep.subr.bf16.mxu0 0
    %5775 = vmatpush1.bf16.msra.mxu0 %v5239
    %5776 = vmatprep.subr.bf16.mxu0 0
    %5777 = vmatpush1.bf16.msra.mxu0 %v5240
    %5778 = vmatprep.subr.bf16.mxu0 0
    %5779 = vmatpush1.bf16.msra.mxu0 0
    %5780 = vmatprep.subr.bf16.mxu0 0
    %5781 = vmatpush1.bf16.msra.mxu0 0
    %5782 = vmatprep.subr.bf16.mxu0 0
    %5783 = vmatpush1.bf16.msra.mxu0 0
    %5784 = vmatprep.subr.bf16.mxu0 0
    %5785 = vmatpush1.bf16.msra.mxu0 0
    %5786 = vmatprep.subr.bf16.mxu0 0
    %5787 = vmatpush1.bf16.msra.mxu0 0
    %5788 = vmatprep.subr.bf16.mxu0 0
    %5789 = vmatpush1.bf16.msra.mxu0 0
    %5790 = vmatprep.subr.bf16.mxu0 0
    %5791 = vmatpush1.bf16.msra.mxu0 0
    %5792 = vmatprep.subr.bf16.mxu0 0
    %5793 = vmatpush1.bf16.msra.mxu0 0
    %5794 = vmatprep.subr.bf16.mxu0 0
    %5795 = vmatpush1.bf16.msra.mxu0 0
    %5796 = vmatprep.subr.bf16.mxu0 0
    %5797 = vmatpush1.bf16.msra.mxu0 0
    %5798 = vmatprep.subr.bf16.mxu0 0
    %5799 = vmatpush1.bf16.msra.mxu0 0
    %5800 = vmatprep.subr.bf16.mxu0 0
    %5801 = vmatpush1.bf16.msra.mxu0 0
    %5802 = vmatprep.subr.bf16.mxu0 0
    %5803 = vmatpush1.bf16.msra.mxu0 0
    %5804 = vmatprep.subr.bf16.mxu0 0
    %5805 = vmatpush1.bf16.msra.mxu0 0
    %5806 = vmatprep.mubr.bf16.mxu0 0
    %5807 = vmatmul.mubr.bf16.gmra.mrb[0].mxu0 %v5772
    %v5808 = vpop.f32.mrb[0].mxu0
    %v5809 = vadd.f32 %v5114, %v5808
    %v5810 = vpop.f32.mrb[0].mxu0
    %v5811 = vpop.f32.mrb[0].mxu0
    %v5812 = vpop.f32.mrb[0].mxu0
    %5813 = vdwg.mxu0
    %v5814 = vmul.f32 %v5809, 0.4
    %5816 = vrot.lane.b32.xlu0 %v5814, 127
    %v5817 = vpop.permute.xlu0 %5816
    %v5819 = vadd.f32 %v5687, %v5817
    %5821 = vset.pattern.permute.xlu0 1
    %5822 = vperm.xlu0 %5821, %v5809
    %v5823 = vpop.permute.xlu0 %5822
    %v5825 = vmul.f32 %v5823, %v5121
    %v5826 = vadd.f32 %v5097, %v5825
    %5827 = vset.pattern.permute.xlu0 2
    %5828 = vperm.xlu0 %5827, %v5809
    %v5829 = vpop.permute.xlu0 %5828
    %v5831 = vmul.f32 %v5829, %v5125
    %v5832 = vadd.f32 %v5826, %v5831
    %5833 = vmatprep.subr.bf16.mxu0 0
    %5834 = vmatpush1.bf16.msra.mxu0 %v5150
    %5835 = vmatprep.subr.bf16.mxu0 0
    %5836 = vmatpush1.bf16.msra.mxu0 %v5151
    %5837 = vmatprep.subr.bf16.mxu0 0
    %5838 = vmatpush1.bf16.msra.mxu0 0
    %5839 = vmatprep.subr.bf16.mxu0 0
    %5840 = vmatpush1.bf16.msra.mxu0 0
    %5841 = vmatprep.subr.bf16.mxu0 0
    %5842 = vmatpush1.bf16.msra.mxu0 0
    %5843 = vmatprep.subr.bf16.mxu0 0
    %5844 = vmatpush1.bf16.msra.mxu0 0
    %5845 = vmatprep.subr.bf16.mxu0 0
    %5846 = vmatpush1.bf16.msra.mxu0 0
    %5847 = vmatprep.subr.bf16.mxu0 0
    %5848 = vmatpush1.bf16.msra.mxu0 0
    %5849 = vmatprep.subr.bf16.mxu0 0
    %5850 = vmatpush1.bf16.msra.mxu0 0
    %5851 = vmatprep.subr.bf16.mxu0 0
    %5852 = vmatpush1.bf16.msra.mxu0 0
    %5853 = vmatprep.subr.bf16.mxu0 0
    %5854 = vmatpush1.bf16.msra.mxu0 0
    %5855 = vmatprep.subr.bf16.mxu0 0
    %5856 = vmatpush1.bf16.msra.mxu0 0
    %5857 = vmatprep.subr.bf16.mxu0 0
    %5858 = vmatpush1.bf16.msra.mxu0 0
    %5859 = vmatprep.subr.bf16.mxu0 0
    %5860 = vmatpush1.bf16.msra.mxu0 0
    %5861 = vmatprep.subr.bf16.mxu0 0
    %5862 = vmatpush1.bf16.msra.mxu0 0
    %5863 = vmatprep.subr.bf16.mxu0 0
    %5864 = vmatpush1.bf16.msra.mxu0 0
    %5865 = vmatprep.mubr.bf16.mxu0 0
    %5866 = vmatmul.mubr.bf16.gmra.mrb[0].mxu0 %v5772
    %v5867 = vpop.f32.mrb[0].mxu0
    %v5868 = vadd.f32 %v5107, %v5867
    %v5869 = vpop.f32.mrb[0].mxu0
    %v5870 = vpop.f32.mrb[0].mxu0
    %v5871 = vpop.f32.mrb[0].mxu0
    %5872 = vdwg.mxu0
    %v5873 = vadd.f32 %v5832, %v5868
    %v5874 = vxor.u32 %v5873, 2147483648
    %v5875 = vmul.f32 %v5874, 1.442695
    %v5876 = vpow.pop %v5875
    %v5877 = vadd.f32 %v5876, 1.0
    %v5878 = vrcp.pop %v5877
    %v5879 = vmul.f32 1.0, %v5878
    %5881 = vrot.lane.b32.xlu0 %v5868, 64
    %v5882 = vpop.permute.xlu0 %5881
    %v5884 = vmul.f32 %v5879, %v5882
    %5886 = vrot.lane.b32.xlu0 %v5884, 64
    %v5887 = vpop.permute.xlu0 %5886
    %v5889 = vadd.f32 %v5832, %v5887
    %v5890 = vtanh.pop %v5889
    %v5891 = vsub.f32 1.0, %v5879
    %5893 = vrot.lane.b32.xlu0 %v5890, 96
    %v5894 = vpop.permute.xlu0 %5893
    %v5896 = vmul.f32 %v5891, %v5894
    %v5897 = vmul.f32 %v5879, %v5766
    %v5898 = vadd.f32 %v5896, %v5897
    %v5899 = vpack.c.bf16 %v5898, %v5898
    %5901 = vrot.lane.b32.xlu0 %v5899, 96
    %v5902 = vpop.permute.xlu0 %5901
    %v5904 = vsel %vm330, %v5902, 0
    %5906 = vmatprep.subr.bf16.mxu0 0
    %5907 = vmatpush1.bf16.msra.mxu0 %v5239
    %5908 = vmatprep.subr.bf16.mxu0 0
    %5909 = vmatpush1.bf16.msra.mxu0 %v5240
    %5910 = vmatprep.subr.bf16.mxu0 0
    %5911 = vmatpush1.bf16.msra.mxu0 0
    %5912 = vmatprep.subr.bf16.mxu0 0
    %5913 = vmatpush1.bf16.msra.mxu0 0
    %5914 = vmatprep.subr.bf16.mxu0 0
    %5915 = vmatpush1.bf16.msra.mxu0 0
    %5916 = vmatprep.subr.bf16.mxu0 0
    %5917 = vmatpush1.bf16.msra.mxu0 0
    %5918 = vmatprep.subr.bf16.mxu0 0
    %5919 = vmatpush1.bf16.msra.mxu0 0
    %5920 = vmatprep.subr.bf16.mxu0 0
    %5921 = vmatpush1.bf16.msra.mxu0 0
    %5922 = vmatprep.subr.bf16.mxu0 0
    %5923 = vmatpush1.bf16.msra.mxu0 0
    %5924 = vmatprep.subr.bf16.mxu0 0
    %5925 = vmatpush1.bf16.msra.mxu0 0
    %5926 = vmatprep.subr.bf16.mxu0 0
    %5927 = vmatpush1.bf16.msra.mxu0 0
    %5928 = vmatprep.subr.bf16.mxu0 0
    %5929 = vmatpush1.bf16.msra.mxu0 0
    %5930 = vmatprep.subr.bf16.mxu0 0
    %5931 = vmatpush1.bf16.msra.mxu0 0
    %5932 = vmatprep.subr.bf16.mxu0 0
    %5933 = vmatpush1.bf16.msra.mxu0 0
    %5934 = vmatprep.subr.bf16.mxu0 0
    %5935 = vmatpush1.bf16.msra.mxu0 0
    %5936 = vmatprep.subr.bf16.mxu0 0
    %5937 = vmatpush1.bf16.msra.mxu0 0
    %5938 = vmatprep.mubr.bf16.mxu0 0
    %5939 = vmatmul.mubr.bf16.gmra.mrb[0].mxu0 %v5904
    %v5940 = vpop.f32.mrb[0].mxu0
    %v5941 = vadd.f32 %v5114, %v5940
    %v5942 = vpop.f32.mrb[0].mxu0
    %v5943 = vpop.f32.mrb[0].mxu0
    %v5944 = vpop.f32.mrb[0].mxu0
    %5945 = vdwg.mxu0
    %v5946 = vmul.f32 %v5941, 0.4
    %5948 = vrot.lane.b32.xlu0 %v5946, 127
    %v5949 = vpop.permute.xlu0 %5948
    %v5951 = vadd.f32 %v5819, %v5949
    %5952 = vrot.lane.b32.xlu0 %v5413, 6
    %v5953 = vpop.permute.xlu0 %5952
    %5955 = vrot.lane.b32.xlu0 %v5545, 12
    %v5956 = vpop.permute.xlu0 %5955
    %5958 = vrot.lane.b32.xlu0 %v5677, 18
    %v5959 = vpop.permute.xlu0 %5958
    %5961 = vrot.lane.b32.xlu0 %v5809, 24
    %v5962 = vpop.permute.xlu0 %5961
    %5965 = vrot.lane.b32.xlu0 %v5941, 30
    %v5966 = vpop.permute.xlu0 %5965
    %v5968 = vsel %vm232, %v5281, %v5953
    %vm5969 = vcmask 97280
    %v5970 = vsel %vm5969, %v5968, %v5956
    %vm5971 = vcmask 146432
    %v5972 = vsel %vm5971, %v5970, %v5959
    %v5973 = vsel %vm2958, %v5972, %v5962
    %vm5974 = vcmask 244736
    %v5975 = vsel %vm5974, %v5973, %v5966
    %vm5976 = vcmask 293888
    %5977 = vst.msk [vmem:[#allocation2] sm:$0xff] %vm5976, %v5975
    %5979 = vrot.lane.b32.xlu0 %v5423, 2
    %v5980 = vpop.permute.xlu0 %5979
    %5983 = vrot.lane.b32.xlu0 %v5555, 4
    %v5984 = vpop.permute.xlu0 %5983
    %5987 = vrot.lane.b32.xlu0 %v5687, 6
    %v5988 = vpop.permute.xlu0 %5987
    %5991 = vrot.lane.b32.xlu0 %v5819, 8
    %v5992 = vpop.permute.xlu0 %5991
    %5995 = vrot.lane.b32.xlu0 %v5951, 10
    %v5996 = vpop.permute.xlu0 %5995
    %vm5998 = vcmask 15360
    %v5999 = vsel %vm5998, %v5291, %v5980
    %vm6000 = vcmask 31744
    %v6001 = vsel %vm6000, %v5999, %v5984
    %v6002 = vsel %vm232, %v6001, %v5988
    %v6003 = vsel %vm2954, %v6002, %v5992
    %vm6004 = vcmask 80896
    %v6005 = vsel %vm6004, %v6003, %v5996
    %6006 = vst.msk [vmem:[#allocation4] sm:$0xff] %vm5969, %v6005
    // Predicated region
    $region186: #{tpu_custom_call.1} parent=1 // pred_check
      _
    $region187: #{tpu_custom_call.1} parent=1 // pred_check_branch
      %6008 = sbr.rel (0) target = $region189
    $region188: #{tpu_custom_call.1} parent=1 // pred_region
      %s6010 = ssub.s32 128, 128
      %6011 = vsyncadd [#allocation3], %s6010
      %s6013 = sshll.u32 [#allocation2], 4
      %s6014 = int_to_ptr.vmem [resolvable:$true] %s6013
      %6016 = dma.vmem_to_hbm [thread:$0]  %s6014, 128, %s93, [#allocation3]
    $region189: #{tpu_custom_call.1} parent=1 // pred_fallthru
      _
    // Predicated region
    $region190: #{tpu_custom_call.1} parent=1 // pred_check
      _
    $region191: #{tpu_custom_call.1} parent=1 // pred_check_branch
      %6018 = sbr.rel (0) target = $region193
    $region192: #{tpu_custom_call.1} parent=1 // pred_region
      %s6020 = ssub.s32 128, 128
      %6021 = vsyncadd [#allocation5], %s6020
      %s6023 = sshll.u32 [#allocation4], 4
      %s6024 = int_to_ptr.vmem [resolvable:$true] %s6023
      %6026 = dma.vmem_to_hbm [thread:$0]  %s6024, 128, %s95, [#allocation5]
    $region193: #{tpu_custom_call.1} parent=1 // pred_fallthru
      _
    // Predicated region
    $region194: #{tpu_custom_call.1} parent=1 // pred_check
      _
    $region195: #{tpu_custom_call.1} parent=1 // pred_check_branch
      %6028 = sbr.rel (0) target = $region197
    $region196: #{tpu_custom_call.1} parent=1 // pred_region
      %6029 = dma.done [#allocation3], 128
    $region197: #{tpu_custom_call.1} parent=1 // pred_fallthru
      _
    // Predicated region
    $region198: #{tpu_custom_call.1} parent=1 // pred_check
      _
    $region199: #{tpu_custom_call.1} parent=1 // pred_check_branch
      %6031 = sbr.rel (0) target = $region201
    $region200: #{tpu_custom_call.1} parent=1 // pred_region
      %6032 = dma.done [#allocation5], 128
    $region201: #{tpu_custom_call.1} parent=1 // pred_fallthru
      _
    %6033 = vsyncpa [#allocation3], 1
    %6034 = vsyncpa [#allocation5], 1

</llo_original>
